<compile_context>
chip_gen: v5e
topology: v5e:2x2
jax: 0.10.0
libtpu: 0.0.40
codegen_flags: <defaults>
</compile_context>

<pallas_src>
import math
import functools

import jax
import jax.numpy as jnp
from jax.experimental import pallas as pl
from jax.experimental.pallas import tpu as pltpu


def _attention_kernel(hq_ref, hfull_ref, mask_ref, dist_ref,
                      wq_ref, bq_ref, wkv_ref, bkv_ref,
                      wo_ref, bo_ref, gamma_ref, beta_ref,
                      *rest,
                      num_heads, head_dim, hidden, ln_eps, emit_probs):
    if emit_probs:
        out_ref, probs_ref, k_sc, v_sc = rest
    else:
        out_ref, k_sc, v_sc = rest
        probs_ref = None

    seq = k_sc.shape[1]

    # --- K/V projection: once per batch element (qi == 0); kept resident in
    # bf16 VMEM scratch and reused by every query tile of this batch element.
    @pl.when(pl.program_id(1) == 0)
    def _():
        hf = hfull_ref[0].astype(jnp.bfloat16)                           # (S, H)
        kv = jnp.dot(hf, wkv_ref[...],
                     preferred_element_type=jnp.float32) + bkv_ref[...]  # (S, 2H) f32
        kv = kv.astype(jnp.bfloat16)
        k = kv[:, :hidden].reshape(seq, num_heads, head_dim)
        v = kv[:, hidden:].reshape(seq, num_heads, head_dim)
        k_sc[...] = jnp.swapaxes(k, 0, 1)                                # (NH, S, d)
        v_sc[...] = jnp.swapaxes(v, 0, 1)                                # (NH, S, d)

    # --- Q projection for this query tile.  The 1/sqrt(d) scale is folded
    # into wq/bq at weight-prep time (touches H elems per row, not S).
    hq = hq_ref[0]                                                       # (tq, H) f32
    q = jnp.dot(hq.astype(jnp.bfloat16), wq_ref[...],
                preferred_element_type=jnp.float32) + bq_ref[...]        # (tq, H) f32
    tq = q.shape[0]
    qh = jnp.swapaxes(q.astype(jnp.bfloat16).reshape(tq, num_heads, head_dim),
                      0, 1)                                              # (NH, tq, d)

    # dist + additive mask bias, hoisted out of the head dimension.
    bias = dist_ref[0] + mask_ref[0]                                     # (tq, S)

    # Batched-over-heads score matmul (bf16 operands, f32 accumulation); K's
    # last dim is contracted directly (no explicit K transpose materialized).
    scores = jnp.einsum("hqd,hkd->hqk", qh, k_sc[...],
                        preferred_element_type=jnp.float32)              # (NH, tq, S)
    scores = scores + bias[None]

    # Numerically-stable softmax over keys (f32 stats).
    m = jnp.max(scores, axis=-1, keepdims=True)
    e = jnp.exp(scores - m)
    denom = jnp.sum(e, axis=-1, keepdims=True)
    # EUP approximate reciprocal + one Newton-Raphson step (~f32 accurate,
    # avoids the slow VPU divide).
    r = pl.reciprocal(denom, approx=True)
    r = r * (2.0 - denom * r)
    probs = e * r                                                        # (NH, tq, S)

    if probs_ref is not None:
        probs_ref[0] = probs.astype(probs_ref.dtype)                     # bf16 writeback

    # Batched-over-heads context matmul (bf16 operands, f32 accumulation).
    ctx = jnp.einsum("hqk,hkd->hqd", probs.astype(jnp.bfloat16), v_sc[...],
                     preferred_element_type=jnp.float32)                 # (NH, tq, d)

    # Head merge fused into the output projection: per-head (tq,d)x(d,H)
    # matmuls accumulated in f32 — identical MXU FLOPs to the merged
    # (tq,H)x(H,H) matmul, with no (NH,tq,d)->(tq,H) relayout and no VMEM
    # scratch round-trip.
    proj = jnp.dot(ctx[0].astype(jnp.bfloat16), wo_ref[0],
                   preferred_element_type=jnp.float32)
    for h in range(1, num_heads):
        proj = proj + jnp.dot(ctx[h].astype(jnp.bfloat16), wo_ref[h],
                              preferred_element_type=jnp.float32)
    proj = proj + bo_ref[...]

    # BertSelfOutput: dense -> (dropout == identity in eval) -> residual -> LN.
    res = proj + hq
    mean = jnp.mean(res, axis=-1, keepdims=True)
    cen = res - mean
    var = jnp.mean(cen * cen, axis=-1, keepdims=True)
    out_ref[0] = (cen * jax.lax.rsqrt(var + ln_eps)
                  * gamma_ref[...] + beta_ref[...]).astype(out_ref.dtype)


def spatial_bert_attention(hidden_states, attention_mask, distance_matrix, params,
                           *, num_heads, ln_eps=1e-12, return_probs=True,
                           q_tile=None, probs_dtype=jnp.bfloat16):
    """hidden_states: (B,S,H); attention_mask: (B,1,1,S) additive mask;
    distance_matrix: (B,S,S).  Returns (attention_output, attention_probs)
    if return_probs else (attention_output,)."""
    B, S, H = hidden_states.shape
    head_dim = H // num_heads

    if q_tile is None:
        q_tile = S
        for t in (512, 256, 128):
            if S % t == 0:
                q_tile = t
                break
    assert S % q_tile == 0
    num_q_tiles = S // q_tile

    hidden_states = hidden_states.astype(jnp.float32)
    mask3d = attention_mask.reshape(B, 1, S).astype(jnp.float32)
    dist = distance_matrix.astype(jnp.float32)

    # Weight prep: bf16 MXU operands; 1/sqrt(d) folded into the query weights.
    scale = 1.0 / math.sqrt(head_dim)
    wq = (params["wq"] * scale).astype(jnp.bfloat16)                     # (H, H)
    bq = (params["bq"] * scale).reshape(1, H).astype(jnp.float32)
    wkv = jnp.concatenate([params["wk"], params["wv"]], axis=1).astype(jnp.bfloat16)  # (H, 2H)
    bkv = jnp.concatenate([params["bk"], params["bv"]]).reshape(1, 2 * H).astype(jnp.float32)
    wo = params["wo"].reshape(num_heads, head_dim, H).astype(jnp.bfloat16)  # (NH, d, H)
    bo = params["bo"].reshape(1, H).astype(jnp.float32)
    gamma = params["gamma"].reshape(1, H).astype(jnp.float32)
    beta = params["beta"].reshape(1, H).astype(jnp.float32)

    kernel = functools.partial(
        _attention_kernel, num_heads=num_heads, head_dim=head_dim,
        hidden=H, ln_eps=ln_eps, emit_probs=return_probs)

    out_shapes = [jax.ShapeDtypeStruct((B, S, H), jnp.float32)]
    out_specs = [pl.BlockSpec((1, q_tile, H), lambda b, qi: (b, qi, 0))]
    if return_probs:
        out_shapes.append(jax.ShapeDtypeStruct((B, num_heads, S, S), probs_dtype))
        out_specs.append(
            pl.BlockSpec((1, num_heads, q_tile, S), lambda b, qi: (b, 0, qi, 0)))

    in_specs = [
        pl.BlockSpec((1, q_tile, H), lambda b, qi: (b, qi, 0)),      # hidden (query tile)
        pl.BlockSpec((1, S, H), lambda b, qi: (b, 0, 0)),            # hidden (full seq, K/V)
        pl.BlockSpec((1, 1, S), lambda b, qi: (b, 0, 0)),            # additive mask
        pl.BlockSpec((1, q_tile, S), lambda b, qi: (b, qi, 0)),      # distance matrix
        pl.BlockSpec((H, H), lambda b, qi: (0, 0)),                  # wq (scaled, bf16)
        pl.BlockSpec((1, H), lambda b, qi: (0, 0)),                  # bq (scaled)
        pl.BlockSpec((H, 2 * H), lambda b, qi: (0, 0)),              # wkv (bf16)
        pl.BlockSpec((1, 2 * H), lambda b, qi: (0, 0)),              # bkv
        pl.BlockSpec((num_heads, head_dim, H), lambda b, qi: (0, 0, 0)),  # wo per-head (bf16)
        pl.BlockSpec((1, H), lambda b, qi: (0, 0)),                  # bo
        pl.BlockSpec((1, H), lambda b, qi: (0, 0)),                  # gamma
        pl.BlockSpec((1, H), lambda b, qi: (0, 0)),                  # beta
    ]

    results = pl.pallas_call(
        kernel,
        out_shape=tuple(out_shapes),
        grid_spec=pltpu.PrefetchScalarGridSpec(
            num_scalar_prefetch=0,
            grid=(B, num_q_tiles),
            in_specs=in_specs,
            out_specs=out_specs,
            scratch_shapes=[
                pltpu.VMEM((num_heads, S, head_dim), jnp.bfloat16),  # K heads (persistent)
                pltpu.VMEM((num_heads, S, head_dim), jnp.bfloat16),  # V heads (persistent)
            ]),
        compiler_params=pltpu.CompilerParams(
            # Batch axis parallel (megacore); query-tile axis must be sequential
            # because the K/V scratch computed at qi==0 is reused across tiles.
            dimension_semantics=("parallel", "arbitrary"),
            vmem_limit_bytes=48 * 1024 * 1024),
    )(hidden_states, hidden_states, mask3d, dist,
      wq, bq, wkv, bkv, wo, bo, gamma, beta)

    if return_probs:
        return results[0], results[1]
    return (results[0],)


def _reference(hidden_states, attention_mask, distance_matrix, params,
               *, num_heads, ln_eps=1e-12):
    B, S, H = hidden_states.shape
    d = H // num_heads
    q = hidden_states @ params["wq"] + params["bq"]
    k = hidden_states @ params["wk"] + params["bk"]
    v = hidden_states @ params["wv"] + params["bv"]

    def split(x):
        return x.reshape(B, S, num_heads, d).transpose(0, 2, 1, 3)

    q, k, v = split(q), split(k), split(v)
    scores = jnp.einsum("bhqd,bhkd->bhqk", q, k) / math.sqrt(d)
    scores = scores + distance_matrix[:, None, :, :]
    scores = scores + attention_mask
    probs = jax.nn.softmax(scores, axis=-1)
    ctx = jnp.einsum("bhqk,bhkd->bhqd", probs, v)
    ctx = ctx.transpose(0, 2, 1, 3).reshape(B, S, H)
    proj = ctx @ params["wo"] + params["bo"]
    res = proj + hidden_states
    mean = res.mean(-1, keepdims=True)
    var = ((res - mean) ** 2).mean(-1, keepdims=True)
    out = (res - mean) / jnp.sqrt(var + ln_eps) * params["gamma"] + params["beta"]
    return out, probs


if __name__ == "__main__":
    # TPU-friendly sizes: head_dim = 128 (lane-aligned), two query tiles per
    # batch element so the flash-style q axis and the persistent K/V scratch
    # path are both exercised.
    B, S, H, NH = 2, 256, 256, 2

    key = jax.random.PRNGKey(0)
    ks = jax.random.split(key, 12)

    hidden_states = jax.random.normal(ks[0], (B, S, H), dtype=jnp.float32)
    distance_matrix = 0.1 * jax.random.normal(ks[1], (B, S, S), dtype=jnp.float32)
    # Additive BERT mask: 0 where attended, -10000 where masked
    # (last 32 keys of batch element 1 are masked out).
    keep = jnp.ones((B, S), dtype=jnp.float32).at[1, -32:].set(0.0)
    attention_mask = ((1.0 - keep) * -10000.0)[:, None, None, :]   # (B,1,1,S)

    wscale = 0.02
    params = {
        "wq": wscale * jax.random.normal(ks[2], (H, H), dtype=jnp.float32),
        "bq": wscale * jax.random.normal(ks[3], (H,), dtype=jnp.float32),
        "wk": wscale * jax.random.normal(ks[4], (H, H), dtype=jnp.float32),
        "bk": wscale * jax.random.normal(ks[5], (H,), dtype=jnp.float32),
        "wv": wscale * jax.random.normal(ks[6], (H, H), dtype=jnp.float32),
        "bv": wscale * jax.random.normal(ks[7], (H,), dtype=jnp.float32),
        "wo": wscale * jax.random.normal(ks[8], (H, H), dtype=jnp.float32),
        "bo": wscale * jax.random.normal(ks[9], (H,), dtype=jnp.float32),
        "gamma": jnp.ones((H,), dtype=jnp.float32)
                 + 0.01 * jax.random.normal(ks[10], (H,), dtype=jnp.float32),
        "beta": 0.01 * jax.random.normal(ks[11], (H,), dtype=jnp.float32),
    }

    out, probs = spatial_bert_attention(hidden_states, attention_mask,
                                        distance_matrix, params,
                                        num_heads=NH, q_tile=128,
                                        return_probs=True)
    out = jax.block_until_ready(out)
    probs = jax.block_until_ready(probs)

    with jax.default_matmul_precision("highest"):
        ref_out, ref_probs = _reference(hidden_states, attention_mask,
                                        distance_matrix, params, num_heads=NH)
        ref_out = jax.block_until_ready(ref_out)
        ref_probs = jax.block_until_ready(ref_probs)

    # bf16 MXU operands + bf16 probs writeback -> relaxed tolerances vs the
    # full-f32 reference.
    assert jnp.allclose(out, ref_out, atol=3e-2, rtol=3e-2), (
        float(jnp.max(jnp.abs(out - ref_out))))
    assert jnp.allclose(probs.astype(jnp.float32), ref_probs, atol=2e-2), (
        float(jnp.max(jnp.abs(probs.astype(jnp.float32) - ref_probs))))

    # Probs-elided fast path (skips the dominant (B,NH,S,S) HBM writeback).
    (out2,) = spatial_bert_attention(hidden_states, attention_mask,
                                     distance_matrix, params,
                                     num_heads=NH, q_tile=128,
                                     return_probs=False)
    out2 = jax.block_until_ready(out2)
    assert jnp.allclose(out2, ref_out, atol=3e-2, rtol=3e-2)

    print("KERNEL_OK")
</pallas_src>

<mosaic_0001>
module attributes {stable_mosaic.version = 11 : i64} {
  func.func @_attention_kernel(%arg0: i32, %arg1: i32, %arg2: memref<1x128x256xf32, #tpu.memory_space<vmem>>, %arg3: memref<1x256x256xf32, #tpu.memory_space<vmem>>, %arg4: memref<1x1x256xf32, #tpu.memory_space<vmem>>, %arg5: memref<1x128x256xf32, #tpu.memory_space<vmem>>, %arg6: memref<256x256xbf16, #tpu.memory_space<vmem>>, %arg7: memref<1x256xf32, #tpu.memory_space<vmem>>, %arg8: memref<256x512xbf16, #tpu.memory_space<vmem>>, %arg9: memref<1x512xf32, #tpu.memory_space<vmem>>, %arg10: memref<2x128x256xbf16, #tpu.memory_space<vmem>>, %arg11: memref<1x256xf32, #tpu.memory_space<vmem>>, %arg12: memref<1x256xf32, #tpu.memory_space<vmem>>, %arg13: memref<1x256xf32, #tpu.memory_space<vmem>>, %arg14: memref<1x128x256xf32, #tpu.memory_space<vmem>>, %arg15: memref<1x2x128x256xbf16, #tpu.memory_space<vmem>>, %arg16: memref<2x256x128xbf16, #tpu.memory_space<vmem>>, %arg17: memref<2x256x128xbf16, #tpu.memory_space<vmem>>) attributes {dimension_semantics = [#tpu.dimension_semantics<parallel>, #tpu.dimension_semantics<arbitrary>], iteration_bounds = array<i64: 2, 2>, scalar_prefetch = 0 : i64, scratch_operands = 2 : i64, tpu.core_type = #tpu.core_type<tc>, window_params = [{transform_indices = @transform_0, window_bounds = array<i64: 1, 128, 256>}, {transform_indices = @transform_1, window_bounds = array<i64: 1, 256, 256>}, {transform_indices = @transform_2, window_bounds = array<i64: 1, 1, 256>}, {transform_indices = @transform_3, window_bounds = array<i64: 1, 128, 256>}, {pipeline_mode = #tpu.pipeline_mode<synchronous>, transform_indices = @transform_4, window_bounds = array<i64: 256, 256>}, {pipeline_mode = #tpu.pipeline_mode<synchronous>, transform_indices = @transform_5, window_bounds = array<i64: 1, 256>}, {pipeline_mode = #tpu.pipeline_mode<synchronous>, transform_indices = @transform_6, window_bounds = array<i64: 256, 512>}, {pipeline_mode = #tpu.pipeline_mode<synchronous>, transform_indices = @transform_7, window_bounds = array<i64: 1, 512>}, {pipeline_mode = #tpu.pipeline_mode<synchronous>, transform_indices = @transform_8, window_bounds = array<i64: 2, 128, 256>}, {pipeline_mode = #tpu.pipeline_mode<synchronous>, transform_indices = @transform_9, window_bounds = array<i64: 1, 256>}, {pipeline_mode = #tpu.pipeline_mode<synchronous>, transform_indices = @transform_10, window_bounds = array<i64: 1, 256>}, {pipeline_mode = #tpu.pipeline_mode<synchronous>, transform_indices = @transform_11, window_bounds = array<i64: 1, 256>}, {transform_indices = @transform_12, window_bounds = array<i64: 1, 128, 256>}, {transform_indices = @transform_13, window_bounds = array<i64: 1, 2, 128, 256>}]} {
    %c0_i32 = arith.constant 0 : i32
    %0 = arith.cmpi eq, %arg1, %c0_i32 : i32
    %1 = arith.extui %0 : i1 to i32
    %c0_i32_0 = arith.constant 0 : i32
    %2 = arith.cmpi ne, %1, %c0_i32_0 : i32
    scf.if %2 {
      %c0_49 = arith.constant 0 : index
      %c0_50 = arith.constant 0 : index
      %c0_51 = arith.constant 0 : index
      %88 = vector.load %arg3[%c0_49, %c0_50, %c0_51] : memref<1x256x256xf32, #tpu.memory_space<vmem>>, vector<1x256x256xf32>
      %89 = vector.shape_cast %88 : vector<1x256x256xf32> to vector<256x256xf32>
      %90 = arith.truncf %89 : vector<256x256xf32> to vector<256x256xbf16>
      %c0_52 = arith.constant 0 : index
      %c0_53 = arith.constant 0 : index
      %91 = vector.load %arg8[%c0_52, %c0_53] : memref<256x512xbf16, #tpu.memory_space<vmem>>, vector<256x512xbf16>
      %cst_54 = arith.constant dense<0.000000e+00> : vector<256x512xf32>
      %92 = tpu.matmul %90, %91, %cst_54 {dimension_numbers = #tpu.dot_dimension_numbers<[1], [0], [0], [1], [0, 0, 1, 1], [], []>} : vector<256x256xbf16>, vector<256x512xbf16>, vector<256x512xf32> -> vector<256x512xf32>
      %c0_55 = arith.constant 0 : index
      %c0_56 = arith.constant 0 : index
      %93 = vector.load %arg9[%c0_55, %c0_56] : memref<1x512xf32, #tpu.memory_space<vmem>>, vector<1x512xf32>
      %94 = vector.broadcast %93 : vector<1x512xf32> to vector<256x512xf32>
      %95 = arith.addf %92, %94 : vector<256x512xf32>
      %96 = arith.truncf %95 : vector<256x512xf32> to vector<256x512xbf16>
      %97 = vector.extract_strided_slice %96 {offsets = [0, 0], sizes = [256, 256], strides = [1, 1]} : vector<256x512xbf16> to vector<256x256xbf16>
      %98 = vector.shape_cast %97 : vector<256x256xbf16> to vector<256x2x128xbf16>
      %99 = vector.extract_strided_slice %96 {offsets = [0, 256], sizes = [256, 256], strides = [1, 1]} : vector<256x512xbf16> to vector<256x256xbf16>
      %100 = vector.shape_cast %99 : vector<256x256xbf16> to vector<256x2x128xbf16>
      %101 = tpu.transpose %98, [1, 0, 2] : vector<256x2x128xbf16> -> vector<2x256x128xbf16>
      %c0_57 = arith.constant 0 : index
      %c0_58 = arith.constant 0 : index
      %c0_59 = arith.constant 0 : index
      %102 = vector.load %arg16[%c0_57, %c0_58, %c0_59] : memref<2x256x128xbf16, #tpu.memory_space<vmem>>, vector<2x256x128xbf16>
      tpu.vector_store %arg16[%c0_57, %c0_58, %c0_59], %101 {strides = array<i32>} : memref<2x256x128xbf16, #tpu.memory_space<vmem>>, vector<2x256x128xbf16>,
      %103 = tpu.transpose %100, [1, 0, 2] : vector<256x2x128xbf16> -> vector<2x256x128xbf16>
      %c0_60 = arith.constant 0 : index
      %c0_61 = arith.constant 0 : index
      %c0_62 = arith.constant 0 : index
      %104 = vector.load %arg17[%c0_60, %c0_61, %c0_62] : memref<2x256x128xbf16, #tpu.memory_space<vmem>>, vector<2x256x128xbf16>
      tpu.vector_store %arg17[%c0_60, %c0_61, %c0_62], %103 {strides = array<i32>} : memref<2x256x128xbf16, #tpu.memory_space<vmem>>, vector<2x256x128xbf16>,
    } else {
    }
    %c0 = arith.constant 0 : index
    %c0_1 = arith.constant 0 : index
    %c0_2 = arith.constant 0 : index
    %3 = vector.load %arg2[%c0, %c0_1, %c0_2] : memref<1x128x256xf32, #tpu.memory_space<vmem>>, vector<1x128x256xf32>
    %4 = vector.shape_cast %3 : vector<1x128x256xf32> to vector<128x256xf32>
    %5 = arith.truncf %4 : vector<128x256xf32> to vector<128x256xbf16>
    %c0_3 = arith.constant 0 : index
    %c0_4 = arith.constant 0 : index
    %6 = vector.load %arg6[%c0_3, %c0_4] : memref<256x256xbf16, #tpu.memory_space<vmem>>, vector<256x256xbf16>
    %cst = arith.constant dense<0.000000e+00> : vector<128x256xf32>
    %7 = tpu.matmul %5, %6, %cst {dimension_numbers = #tpu.dot_dimension_numbers<[1], [0], [0], [1], [0, 0, 1, 1], [], []>} : vector<128x256xbf16>, vector<256x256xbf16>, vector<128x256xf32> -> vector<128x256xf32>
    %c0_5 = arith.constant 0 : index
    %c0_6 = arith.constant 0 : index
    %8 = vector.load %arg7[%c0_5, %c0_6] : memref<1x256xf32, #tpu.memory_space<vmem>>, vector<1x256xf32>
    %9 = vector.broadcast %8 : vector<1x256xf32> to vector<128x256xf32>
    %10 = arith.addf %7, %9 : vector<128x256xf32>
    %11 = arith.truncf %10 : vector<128x256xf32> to vector<128x256xbf16>
    %12 = vector.shape_cast %11 : vector<128x256xbf16> to vector<128x2x128xbf16>
    %13 = tpu.transpose %12, [1, 0, 2] : vector<128x2x128xbf16> -> vector<2x128x128xbf16>
    %c0_7 = arith.constant 0 : index
    %c0_8 = arith.constant 0 : index
    %c0_9 = arith.constant 0 : index
    %14 = vector.load %arg5[%c0_7, %c0_8, %c0_9] : memref<1x128x256xf32, #tpu.memory_space<vmem>>, vector<1x128x256xf32>
    %15 = vector.shape_cast %14 : vector<1x128x256xf32> to vector<128x256xf32>
    %c0_10 = arith.constant 0 : index
    %c0_11 = arith.constant 0 : index
    %c0_12 = arith.constant 0 : index
    %16 = vector.load %arg4[%c0_10, %c0_11, %c0_12] : memref<1x1x256xf32, #tpu.memory_space<vmem>>, vector<1x1x256xf32>
    %17 = vector.shape_cast %16 : vector<1x1x256xf32> to vector<1x256xf32>
    %18 = vector.broadcast %17 : vector<1x256xf32> to vector<128x256xf32>
    %19 = arith.addf %15, %18 : vector<128x256xf32>
    %c0_13 = arith.constant 0 : index
    %c0_14 = arith.constant 0 : index
    %c0_15 = arith.constant 0 : index
    %20 = vector.load %arg16[%c0_13, %c0_14, %c0_15] : memref<2x256x128xbf16, #tpu.memory_space<vmem>>, vector<2x256x128xbf16>
    "tpu.trace_start"() <{level = 10 : i32, message = "hqd,hkd->hqk"}> : () -> ()
    %cst_16 = arith.constant dense<0.000000e+00> : vector<2x128x256xf32>
    %21 = tpu.matmul %13, %20, %cst_16 {dimension_numbers = #tpu.dot_dimension_numbers<[2], [2], [1], [1], [0, 0, 0, 1, 1, 1], [0], [0]>} : vector<2x128x128xbf16>, vector<2x256x128xbf16>, vector<2x128x256xf32> -> vector<2x128x256xf32>
    "tpu.trace_stop"() : () -> ()
    %22 = vector.shape_cast %19 : vector<128x256xf32> to vector<1x128x256xf32>
    %23 = vector.broadcast %22 : vector<1x128x256xf32> to vector<2x128x256xf32>
    %24 = arith.addf %21, %23 : vector<2x128x256xf32>
    %cst_17 = arith.constant dense<0xFF800000> : vector<2x128xf32>
    %25 = vector.multi_reduction <maximumf>, %24, %cst_17 [2] : vector<2x128x256xf32> to vector<2x128xf32>
    %26 = vector.shape_cast %25 : vector<2x128xf32> to vector<2x128x1xf32>
    %27 = vector.broadcast %26 : vector<2x128x1xf32> to vector<2x128x256xf32>
    %28 = arith.subf %24, %27 : vector<2x128x256xf32>
    %29 = math.exp %28 : vector<2x128x256xf32>
    %cst_18 = arith.constant dense<0.000000e+00> : vector<2x128xf32>
    %30 = vector.multi_reduction <add>, %29, %cst_18 [2] : vector<2x128x256xf32> to vector<2x128xf32>
    %31 = vector.shape_cast %30 : vector<2x128xf32> to vector<2x128x1xf32>
    %32 = tpu.reciprocal %31 {approx = true} : vector<2x128x1xf32> -> vector<2x128x1xf32>
    %33 = arith.mulf %31, %32 : vector<2x128x1xf32>
    %cst_19 = arith.constant 2.000000e+00 : f32
    %34 = vector.broadcast %cst_19 : f32 to vector<2x128x1xf32>
    %35 = arith.subf %34, %33 : vector<2x128x1xf32>
    %36 = arith.mulf %32, %35 : vector<2x128x1xf32>
    %37 = vector.broadcast %36 : vector<2x128x1xf32> to vector<2x128x256xf32>
    %38 = arith.mulf %29, %37 : vector<2x128x256xf32>
    %39 = arith.truncf %38 : vector<2x128x256xf32> to vector<2x128x256xbf16>
    %c0_20 = arith.constant 0 : index
    %c0_21 = arith.constant 0 : index
    %c0_22 = arith.constant 0 : index
    %c0_23 = arith.constant 0 : index
    %40 = vector.load %arg15[%c0_20, %c0_21, %c0_22, %c0_23] : memref<1x2x128x256xbf16, #tpu.memory_space<vmem>>, vector<1x2x128x256xbf16>
    %41 = vector.shape_cast %40 : vector<1x2x128x256xbf16> to vector<2x128x256xbf16>
    %42 = vector.shape_cast %39 : vector<2x128x256xbf16> to vector<1x2x128x256xbf16>
    tpu.vector_store %arg15[%c0_20, %c0_21, %c0_22, %c0_23], %42 {strides = array<i32>} : memref<1x2x128x256xbf16, #tpu.memory_space<vmem>>, vector<1x2x128x256xbf16>,
    %43 = arith.truncf %38 : vector<2x128x256xf32> to vector<2x128x256xbf16>
    %c0_24 = arith.constant 0 : index
    %c0_25 = arith.constant 0 : index
    %c0_26 = arith.constant 0 : index
    %44 = vector.load %arg17[%c0_24, %c0_25, %c0_26] : memref<2x256x128xbf16, #tpu.memory_space<vmem>>, vector<2x256x128xbf16>
    "tpu.trace_start"() <{level = 10 : i32, message = "hqk,hkd->hqd"}> : () -> ()
    %cst_27 = arith.constant dense<0.000000e+00> : vector<2x128x128xf32>
    %45 = tpu.matmul %43, %44, %cst_27 {dimension_numbers = #tpu.dot_dimension_numbers<[2], [1], [1], [2], [0, 0, 0, 1, 1, 2], [0], [0]>} : vector<2x128x256xbf16>, vector<2x256x128xbf16>, vector<2x128x128xf32> -> vector<2x128x128xf32>
    "tpu.trace_stop"() : () -> ()
    %46 = vector.extract_strided_slice %45 {offsets = [0, 0, 0], sizes = [1, 128, 128], strides = [1, 1, 1]} : vector<2x128x128xf32> to vector<1x128x128xf32>
    %47 = vector.shape_cast %46 : vector<1x128x128xf32> to vector<128x128xf32>
    %48 = arith.truncf %47 : vector<128x128xf32> to vector<128x128xbf16>
    %c0_28 = arith.constant 0 : index
    %c0_29 = arith.constant 0 : index
    %c0_30 = arith.constant 0 : index
    %49 = vector.load %arg10[%c0_28, %c0_29, %c0_30] : memref<2x128x256xbf16, #tpu.memory_space<vmem>>, vector<1x128x256xbf16>
    %50 = vector.shape_cast %49 : vector<1x128x256xbf16> to vector<128x256xbf16>
    %cst_31 = arith.constant dense<0.000000e+00> : vector<128x256xf32>
    %51 = tpu.matmul %48, %50, %cst_31 {dimension_numbers = #tpu.dot_dimension_numbers<[1], [0], [0], [1], [0, 0, 1, 1], [], []>} : vector<128x128xbf16>, vector<128x256xbf16>, vector<128x256xf32> -> vector<128x256xf32>
    %52 = vector.extract_strided_slice %45 {offsets = [1, 0, 0], sizes = [1, 128, 128], strides = [1, 1, 1]} : vector<2x128x128xf32> to vector<1x128x128xf32>
    %53 = vector.shape_cast %52 : vector<1x128x128xf32> to vector<128x128xf32>
    %54 = arith.truncf %53 : vector<128x128xf32> to vector<128x128xbf16>
    %c1 = arith.constant 1 : index
    %c0_32 = arith.constant 0 : index
    %c0_33 = arith.constant 0 : index
    %55 = vector.load %arg10[%c1, %c0_32, %c0_33] : memref<2x128x256xbf16, #tpu.memory_space<vmem>>, vector<1x128x256xbf16>
    %56 = vector.shape_cast %55 : vector<1x128x256xbf16> to vector<128x256xbf16>
    %cst_34 = arith.constant dense<0.000000e+00> : vector<128x256xf32>
    %57 = tpu.matmul %54, %56, %cst_34 {dimension_numbers = #tpu.dot_dimension_numbers<[1], [0], [0], [1], [0, 0, 1, 1], [], []>} : vector<128x128xbf16>, vector<128x256xbf16>, vector<128x256xf32> -> vector<128x256xf32>
    %58 = arith.addf %51, %57 : vector<128x256xf32>
    %c0_35 = arith.constant 0 : index
    %c0_36 = arith.constant 0 : index
    %59 = vector.load %arg11[%c0_35, %c0_36] : memref<1x256xf32, #tpu.memory_space<vmem>>, vector<1x256xf32>
    %60 = vector.broadcast %59 : vector<1x256xf32> to vector<128x256xf32>
    %61 = arith.addf %58, %60 : vector<128x256xf32>
    %62 = arith.addf %61, %4 : vector<128x256xf32>
    %cst_37 = arith.constant dense<0.000000e+00> : vector<128xf32>
    %63 = vector.multi_reduction <add>, %62, %cst_37 [1] : vector<128x256xf32> to vector<128xf32>
    %64 = vector.shape_cast %63 : vector<128xf32> to vector<128x1xf32>
    %cst_38 = arith.constant 2.560000e+02 : f32
    %65 = vector.broadcast %cst_38 : f32 to vector<128x1xf32>
    %66 = arith.divf %64, %65 : vector<128x1xf32>
    %67 = vector.broadcast %66 : vector<128x1xf32> to vector<128x256xf32>
    %68 = arith.subf %62, %67 : vector<128x256xf32>
    %69 = arith.mulf %68, %68 : vector<128x256xf32>
    %cst_39 = arith.constant dense<0.000000e+00> : vector<128xf32>
    %70 = vector.multi_reduction <add>, %69, %cst_39 [1] : vector<128x256xf32> to vector<128xf32>
    %71 = vector.shape_cast %70 : vector<128xf32> to vector<128x1xf32>
    %cst_40 = arith.constant 2.560000e+02 : f32
    %72 = vector.broadcast %cst_40 : f32 to vector<128x1xf32>
    %73 = arith.divf %71, %72 : vector<128x1xf32>
    %cst_41 = arith.constant 9.99999996E-13 : f32
    %74 = vector.broadcast %cst_41 : f32 to vector<128x1xf32>
    %75 = arith.addf %73, %74 : vector<128x1xf32>
    %76 = math.rsqrt %75 : vector<128x1xf32>
    %77 = vector.broadcast %76 : vector<128x1xf32> to vector<128x256xf32>
    %78 = arith.mulf %68, %77 : vector<128x256xf32>
    %c0_42 = arith.constant 0 : index
    %c0_43 = arith.constant 0 : index
    %79 = vector.load %arg12[%c0_42, %c0_43] : memref<1x256xf32, #tpu.memory_space<vmem>>, vector<1x256xf32>
    %80 = vector.broadcast %79 : vector<1x256xf32> to vector<128x256xf32>
    %81 = arith.mulf %78, %80 : vector<128x256xf32>
    %c0_44 = arith.constant 0 : index
    %c0_45 = arith.constant 0 : index
    %82 = vector.load %arg13[%c0_44, %c0_45] : memref<1x256xf32, #tpu.memory_space<vmem>>, vector<1x256xf32>
    %83 = vector.broadcast %82 : vector<1x256xf32> to vector<128x256xf32>
    %84 = arith.addf %81, %83 : vector<128x256xf32>
    %c0_46 = arith.constant 0 : index
    %c0_47 = arith.constant 0 : index
    %c0_48 = arith.constant 0 : index
    %85 = vector.load %arg14[%c0_46, %c0_47, %c0_48] : memref<1x128x256xf32, #tpu.memory_space<vmem>>, vector<1x128x256xf32>
    %86 = vector.shape_cast %85 : vector<1x128x256xf32> to vector<128x256xf32>
    %87 = vector.shape_cast %84 : vector<128x256xf32> to vector<1x128x256xf32>
    tpu.vector_store %arg14[%c0_46, %c0_47, %c0_48], %87 {strides = array<i32>} : memref<1x128x256xf32, #tpu.memory_space<vmem>>, vector<1x128x256xf32>,
    return
  }
  func.func @transform_0(%arg0: i32, %arg1: i32) -> (i32, i32, i32) {
    %c0_i32 = arith.constant 0 : i32
    %c0_i32_0 = arith.constant 0 : i32
    return %arg0, %arg1, %c0_i32 : i32, i32, i32
  }
  func.func @transform_1(%arg0: i32, %arg1: i32) -> (i32, i32, i32) {
    %c0_i32 = arith.constant 0 : i32
    %c0_i32_0 = arith.constant 0 : i32
    %c0_i32_1 = arith.constant 0 : i32
    return %arg0, %c0_i32, %c0_i32_0 : i32, i32, i32
  }
  func.func @transform_2(%arg0: i32, %arg1: i32) -> (i32, i32, i32) {
    %c0_i32 = arith.constant 0 : i32
    %c0_i32_0 = arith.constant 0 : i32
    %c0_i32_1 = arith.constant 0 : i32
    return %arg0, %c0_i32, %c0_i32_0 : i32, i32, i32
  }
  func.func @transform_3(%arg0: i32, %arg1: i32) -> (i32, i32, i32) {
    %c0_i32 = arith.constant 0 : i32
    %c0_i32_0 = arith.constant 0 : i32
    return %arg0, %arg1, %c0_i32 : i32, i32, i32
  }
  func.func @transform_4(%arg0: i32, %arg1: i32) -> (i32, i32) {
    %c0_i32 = arith.constant 0 : i32
    %c0_i32_0 = arith.constant 0 : i32
    %c0_i32_1 = arith.constant 0 : i32
    return %c0_i32, %c0_i32_0 : i32, i32
  }
  func.func @transform_5(%arg0: i32, %arg1: i32) -> (i32, i32) {
    %c0_i32 = arith.constant 0 : i32
    %c0_i32_0 = arith.constant 0 : i32
    %c0_i32_1 = arith.constant 0 : i32
    return %c0_i32, %c0_i32_0 : i32, i32
  }
  func.func @transform_6(%arg0: i32, %arg1: i32) -> (i32, i32) {
    %c0_i32 = arith.constant 0 : i32
    %c0_i32_0 = arith.constant 0 : i32
    %c0_i32_1 = arith.constant 0 : i32
    return %c0_i32, %c0_i32_0 : i32, i32
  }
  func.func @transform_7(%arg0: i32, %arg1: i32) -> (i32, i32) {
    %c0_i32 = arith.constant 0 : i32
    %c0_i32_0 = arith.constant 0 : i32
    %c0_i32_1 = arith.constant 0 : i32
    return %c0_i32, %c0_i32_0 : i32, i32
  }
  func.func @transform_8(%arg0: i32, %arg1: i32) -> (i32, i32, i32) {
    %c0_i32 = arith.constant 0 : i32
    %c0_i32_0 = arith.constant 0 : i32
    %c0_i32_1 = arith.constant 0 : i32
    %c0_i32_2 = arith.constant 0 : i32
    return %c0_i32, %c0_i32_0, %c0_i32_1 : i32, i32, i32
  }
  func.func @transform_9(%arg0: i32, %arg1: i32) -> (i32, i32) {
    %c0_i32 = arith.constant 0 : i32
    %c0_i32_0 = arith.constant 0 : i32
    %c0_i32_1 = arith.constant 0 : i32
    return %c0_i32, %c0_i32_0 : i32, i32
  }
  func.func @transform_10(%arg0: i32, %arg1: i32) -> (i32, i32) {
    %c0_i32 = arith.constant 0 : i32
    %c0_i32_0 = arith.constant 0 : i32
    %c0_i32_1 = arith.constant 0 : i32
    return %c0_i32, %c0_i32_0 : i32, i32
  }
  func.func @transform_11(%arg0: i32, %arg1: i32) -> (i32, i32) {
    %c0_i32 = arith.constant 0 : i32
    %c0_i32_0 = arith.constant 0 : i32
    %c0_i32_1 = arith.constant 0 : i32
    return %c0_i32, %c0_i32_0 : i32, i32
  }
  func.func @transform_12(%arg0: i32, %arg1: i32) -> (i32, i32, i32) {
    %c0_i32 = arith.constant 0 : i32
    %c0_i32_0 = arith.constant 0 : i32
    return %arg0, %arg1, %c0_i32 : i32, i32, i32
  }
  func.func @transform_13(%arg0: i32, %arg1: i32) -> (i32, i32, i32, i32) {
    %c0_i32 = arith.constant 0 : i32
    %c0_i32_0 = arith.constant 0 : i32
    %c0_i32_1 = arith.constant 0 : i32
    return %arg0, %c0_i32, %arg1, %c0_i32_0 : i32, i32, i32, i32
  }
}

</mosaic_0001>

<llo_original>
// kernel: tpu_custom_call.1
$region0: #{tpu_custom_call.1}
  #allocation0 [shape = 'u32[]', space=smem, size = 0x4, offset = 0x4, fixed_abs, tag = 'smem constant byte address 0x4 - core index']
  #allocation1 [shape = 'u32[72,128]{1,0:T(1,128)}', space=vmem, size = 0x9000, scoped, tag = 'internal scratch']
  #allocation2 [shape = 'bf16[2,256,128]{2,1,0:T(8,128)(2,1)}', space=vmem, size = 0x20000, scoped, tag = 'scratch operand']
  #allocation3 [shape = 'bf16[2,256,128]{2,1,0:T(8,128)(2,1)}', space=vmem, size = 0x20000, scoped, tag = 'scratch operand']
  #allocation21 [shape = 's32[]', space=sflag, size = 0x4, offset = 0, fixed_abs, tag = 'sflag constant byte address 0x0 - dummy sync flag']
  %s0 = inlined_call_operand.hbm [shape: f32[2,256,256], index: 0, kind: input, shape index: {}]
  %s1 = inlined_call_operand.hbm [shape: f32[2,256,256], index: 1, kind: input, shape index: {}]
  %s2 = inlined_call_operand.hbm [shape: f32[2,1,256], index: 2, kind: input, shape index: {}]
  %s3 = inlined_call_operand.hbm [shape: f32[2,256,256], index: 3, kind: input, shape index: {}]
  %s4 = inlined_call_operand.hbm [shape: bf16[256,256], index: 4, kind: input, shape index: {}]
  %s5 = inlined_call_operand.vmem [shape: f32[1,256], index: 5, kind: input, shape index: {}]
  %s6 = inlined_call_operand.hbm [shape: bf16[256,512], index: 6, kind: input, shape index: {}]
  %s7 = inlined_call_operand.vmem [shape: f32[1,512], index: 7, kind: input, shape index: {}]
  %s8 = inlined_call_operand.hbm [shape: bf16[2,128,256], index: 8, kind: input, shape index: {}]
  %s9 = inlined_call_operand.vmem [shape: f32[1,256], index: 9, kind: input, shape index: {}]
  %s10 = inlined_call_operand.hbm [shape: f32[1,256], index: 10, kind: input, shape index: {}]
  %s11 = inlined_call_operand.vmem [shape: f32[1,256], index: 11, kind: input, shape index: {}]
  %s12 = inlined_call_operand.hbm [shape: f32[2,256,256], index: 12, kind: output, shape index: {0}]
  %s13 = inlined_call_operand.hbm [shape: bf16[2,2,256,256], index: 13, kind: output, shape index: {1}]
  %14 = xla_tuple %s12, %s13
  %s15 = sld [smem:[#allocation0]]
  $region125: #{tpu_custom_call.1} parent=0
    _
  %s17 = ssub.s32 1, %s15
  %s18 = scalar_select 0, %s17, %s15
  $region1: #{tpu_custom_call.1} parent=0
    #allocation4 [shape = 'u8[262144]{0}', space=vmem, size = 0x40000, scoped, tag = 'input window, operand 0']
    #allocation5 [shape = 's32[2]{0}', space=sflag, size = 0x8, scoped, tag = 'scoped memory for tpu_custom_call.1']
    #allocation6 [shape = 's32[2]{0}', space=sflag, size = 0x8, scoped, tag = 'scoped memory for tpu_custom_call.1']
    #allocation7 [shape = 'u8[524288]{0}', space=vmem, size = 0x80000, scoped, tag = 'input window, operand 1']
    #allocation8 [shape = 's32[2]{0}', space=sflag, size = 0x8, scoped, tag = 'scoped memory for tpu_custom_call.1']
    #allocation9 [shape = 'u8[2048]{0}', space=vmem, size = 0x800, scoped, tag = 'input window, operand 2']
    #allocation10 [shape = 'u8[262144]{0}', space=vmem, size = 0x40000, scoped, tag = 'input window, operand 3']
    #allocation11 [shape = 's32[2]{0}', space=sflag, size = 0x8, scoped, tag = 'scoped memory for tpu_custom_call.1']
    #allocation12 [shape = 'u8[131072]{0}', space=vmem, size = 0x20000, scoped, tag = 'input window, operand 4, single buffered']
    #allocation13 [shape = 'u8[262144]{0}', space=vmem, size = 0x40000, scoped, tag = 'input window, operand 6, single buffered']
    #allocation14 [shape = 's32[1]{0}', space=sflag, size = 0x4, scoped, tag = 'scoped memory for tpu_custom_call.1']
    #allocation15 [shape = 'u8[131072]{0}', space=vmem, size = 0x20000, scoped, tag = 'input window, operand 8, single buffered']
    #allocation16 [shape = 'u8[1024]{0}', space=vmem, size = 0x400, scoped, tag = 'input window, operand 10, single buffered']
    #allocation17 [shape = 's32[1]{0}', space=sflag, size = 0x4, scoped, tag = 'scoped memory for tpu_custom_call.1']
    #allocation18 [shape = 'u8[262144]{0}', space=vmem, size = 0x40000, scoped, tag = 'output window, operand 0']
    #allocation19 [shape = 'u8[262144]{0}', space=vmem, size = 0x40000, scoped, tag = 'output window, operand 1']
    #allocation20 [shape = 's32[2]{0}', space=sflag, size = 0x8, scoped, tag = 'scoped memory for tpu_custom_call.1']
    %19 = vsyncpa [#allocation5], 0
    %s20 = scalar_lea.sflag [#allocation5], 1
    %21 = vsyncpa %s20, 0
    %22 = vsyncpa [#allocation8], 0
    %s23 = scalar_lea.sflag [#allocation8], 1
    %24 = vsyncpa %s23, 0
    %25 = vsyncpa [#allocation11], 0
    %s26 = scalar_lea.sflag [#allocation11], 1
    %27 = vsyncpa %s26, 0
    %28 = vsyncpa [#allocation14], 0
    %29 = vsyncpa [#allocation17], 0
    %30 = vsyncpa [#allocation6], 0
    %s31 = scalar_lea.sflag [#allocation6], 1
    %32 = vsyncpa %s31, 0
    %33 = vsyncpa [#allocation20], 0
    %s34 = scalar_lea.sflag [#allocation20], 1
    %35 = vsyncpa %s34, 0
    loop: start=0, step=1, limit=6
    $region2: #{tpu_custom_call.1} parent=1 // loop_pre_header
      _
    $region3: #{tpu_custom_call.1} parent=1 // loop_header
      %s37 = sphi 0, %s41
      %p38 = scmp.ge.s32.totalorder %s37, 6
      %s44 = sphi 0, %s56
      %s45 = sphi 0, %s52
      %s46 = sphi 0, %s44
      %s47 = sphi 0, %s45
      %s48 = sphi 0, %s46
      %s49 = sphi 0, %s47
      %s61 = sphi 0, %s63
      %s64 = sphi 0, %s61
      %s65 = sphi 0, %s64
      %s81 = sphi 0, %s65
      %s87 = sphi 0, %s89
      %s90 = sphi 0, %s87
      %s91 = sphi 0, %s90
      %s107 = sphi 0, %s91
      %s113 = sphi 0, %s115
      %s116 = sphi 0, %s113
      %s117 = sphi 0, %s116
      %s133 = sphi 0, %s117
      %s141 = sphi 0, %s143
      %s144 = sphi 0, %s141
      %s145 = sphi 0, %s144
      %s161 = sphi 0, %s145
      %s165 = sphi 0, %s165
      %s167 = sphi 0, %s165
      %s168 = sphi 0, %s167
      %s182 = sphi 0, %s168
      %s186 = sphi 0, %s186
      %s188 = sphi 0, %s186
      %s189 = sphi 0, %s188
      %s203 = sphi 0, %s189
      %s207 = sphi 0, %s207
      %s209 = sphi 0, %s207
      %s210 = sphi 0, %s209
      %s224 = sphi 0, %s210
      %s228 = sphi 0, %s228
      %s230 = sphi 0, %s228
      %s231 = sphi 0, %s230
      %s245 = sphi 0, %s231
      %s249 = sphi 0, %s249
      %s251 = sphi 0, %s249
      %s252 = sphi 0, %s251
      %s266 = sphi 0, %s252
      %s270 = sphi 0, %s270
      %s272 = sphi 0, %s270
      %s273 = sphi 0, %s272
      %s287 = sphi 0, %s273
      %s291 = sphi 0, %s291
      %s293 = sphi 0, %s291
      %s294 = sphi 0, %s293
      %s308 = sphi 0, %s294
      %s312 = sphi 0, %s312
      %s314 = sphi 0, %s312
      %s315 = sphi 0, %s314
      %s329 = sphi 0, %s315
      %s337 = sphi 0, %s339
      %s340 = sphi 0, %s337
      %s341 = sphi 0, %s340
      %s357 = sphi 0, %s341
      %s365 = sphi 0, %s367
      %s368 = sphi 0, %s365
      %s369 = sphi 0, %s368
      %s385 = sphi 0, %s369
    $region4: #{tpu_custom_call.1} parent=1 // loop_header_branch
      %40 = sbr.rel (%p38) target = $region8
    $region5: #{tpu_custom_call.1} parent=1 // loop_body
      %s42 = ssub.s32 %s37, 1
      %s43 = ssub.s32 %s37, 2
      %s50 = sadd.s32 1, %s45
      %p51 = scmp.ge.s32.totalorder %s50, 2
      %s52 = scalar_select %p51, 0, %s50
      %s53 = sadd.s32 1, %s44
      %s54 = scalar_select %p51, %s53, %s44
      %p55 = scmp.ge.s32.totalorder %s54, 2
      %s56 = scalar_select %p55, 0, %s54
      %s57 = ssub.s32 %s44, %s56
      %s58 = ssub.s32 %s45, %s52
      %s59 = sor.u32 %s57, %s58
      %p60 = scmp.eq.s32.totalorder %s59, 0
      %s62 = sadd.s32 %s61, 1
      %s63 = scalar_select %p60, %s61, %s62
      %p66 = pneg %p60
      %p67 = scmp.eq.s32.totalorder %s37, 3
      %p68 = por %p66, %p67
      %p69 = scmp.ne.s32.totalorder %s61, %s64
      %p70 = scmp.eq.s32.totalorder %s37, 0
      %p71 = por %p69, %p70
      %p72 = scmp.ne.s32.totalorder %s61, %s64
      %p73 = scmp.eq.s32.totalorder %s42, 3
      %p74 = por %p72, %p73
      %p75 = scmp.ne.s32.totalorder %s64, %s65
      %p76 = scmp.eq.s32.totalorder %s42, 0
      %p77 = por %p75, %p76
      %p78 = scmp.ne.s32.totalorder %s64, %s65
      %p79 = scmp.eq.s32.totalorder %s43, 3
      %p80 = por %p78, %p79
      %p82 = scmp.ne.s32.totalorder %s65, %s81
      %p83 = scmp.eq.s32.totalorder %s43, 0
      %p84 = por %p82, %p83
      %s85 = ssub.s32 %s44, %s56
      %p86 = scmp.eq.s32.totalorder %s85, 0
      %s88 = sadd.s32 %s87, 1
      %s89 = scalar_select %p86, %s87, %s88
      %p92 = pneg %p86
      %p93 = scmp.eq.s32.totalorder %s37, 3
      %p94 = por %p92, %p93
      %p95 = scmp.ne.s32.totalorder %s87, %s90
      %p96 = scmp.eq.s32.totalorder %s37, 0
      %p97 = por %p95, %p96
      %p98 = scmp.ne.s32.totalorder %s87, %s90
      %p99 = scmp.eq.s32.totalorder %s42, 3
      %p100 = por %p98, %p99
      %p101 = scmp.ne.s32.totalorder %s90, %s91
      %p102 = scmp.eq.s32.totalorder %s42, 0
      %p103 = por %p101, %p102
      %p104 = scmp.ne.s32.totalorder %s90, %s91
      %p105 = scmp.eq.s32.totalorder %s43, 3
      %p106 = por %p104, %p105
      %p108 = scmp.ne.s32.totalorder %s91, %s107
      %p109 = scmp.eq.s32.totalorder %s43, 0
      %p110 = por %p108, %p109
      %s111 = ssub.s32 %s44, %s56
      %p112 = scmp.eq.s32.totalorder %s111, 0
      %s114 = sadd.s32 %s113, 1
      %s115 = scalar_select %p112, %s113, %s114
      %p118 = pneg %p112
      %p119 = scmp.eq.s32.totalorder %s37, 3
      %p120 = por %p118, %p119
      %p121 = scmp.ne.s32.totalorder %s113, %s116
      %p122 = scmp.eq.s32.totalorder %s37, 0
      %p123 = por %p121, %p122
      %p124 = scmp.ne.s32.totalorder %s113, %s116
      %p125 = scmp.eq.s32.totalorder %s42, 3
      %p126 = por %p124, %p125
      %p127 = scmp.ne.s32.totalorder %s116, %s117
      %p128 = scmp.eq.s32.totalorder %s42, 0
      %p129 = por %p127, %p128
      %p130 = scmp.ne.s32.totalorder %s116, %s117
      %p131 = scmp.eq.s32.totalorder %s43, 3
      %p132 = por %p130, %p131
      %p134 = scmp.ne.s32.totalorder %s117, %s133
      %p135 = scmp.eq.s32.totalorder %s43, 0
      %p136 = por %p134, %p135
      %s137 = ssub.s32 %s44, %s56
      %s138 = ssub.s32 %s45, %s52
      %s139 = sor.u32 %s137, %s138
      %p140 = scmp.eq.s32.totalorder %s139, 0
      %s142 = sadd.s32 %s141, 1
      %s143 = scalar_select %p140, %s141, %s142
      %p146 = pneg %p140
      %p147 = scmp.eq.s32.totalorder %s37, 3
      %p148 = por %p146, %p147
      %p149 = scmp.ne.s32.totalorder %s141, %s144
      %p150 = scmp.eq.s32.totalorder %s37, 0
      %p151 = por %p149, %p150
      %p152 = scmp.ne.s32.totalorder %s141, %s144
      %p153 = scmp.eq.s32.totalorder %s42, 3
      %p154 = por %p152, %p153
      %p155 = scmp.ne.s32.totalorder %s144, %s145
      %p156 = scmp.eq.s32.totalorder %s42, 0
      %p157 = por %p155, %p156
      %p158 = scmp.ne.s32.totalorder %s144, %s145
      %p159 = scmp.eq.s32.totalorder %s43, 3
      %p160 = por %p158, %p159
      %p162 = scmp.ne.s32.totalorder %s145, %s161
      %p163 = scmp.eq.s32.totalorder %s43, 0
      %p164 = por %p162, %p163
      %s166 = sadd.s32 %s165, 1
      %p169 = scmp.eq.s32.totalorder %s37, 3
      %p170 = scmp.ne.s32.totalorder %s165, %s167
      %p171 = scmp.eq.s32.totalorder %s37, 0
      %p172 = por %p170, %p171
      %p173 = scmp.ne.s32.totalorder %s165, %s167
      %p174 = scmp.eq.s32.totalorder %s42, 3
      %p175 = por %p173, %p174
      %p176 = scmp.ne.s32.totalorder %s167, %s168
      %p177 = scmp.eq.s32.totalorder %s42, 0
      %p178 = por %p176, %p177
      %p179 = scmp.ne.s32.totalorder %s167, %s168
      %p180 = scmp.eq.s32.totalorder %s43, 3
      %p181 = por %p179, %p180
      %p183 = scmp.ne.s32.totalorder %s168, %s182
      %p184 = scmp.eq.s32.totalorder %s43, 0
      %p185 = por %p183, %p184
      %s187 = sadd.s32 %s186, 1
      %p190 = scmp.eq.s32.totalorder %s37, 3
      %p191 = scmp.ne.s32.totalorder %s186, %s188
      %p192 = scmp.eq.s32.totalorder %s37, 0
      %p193 = por %p191, %p192
      %p194 = scmp.ne.s32.totalorder %s186, %s188
      %p195 = scmp.eq.s32.totalorder %s42, 3
      %p196 = por %p194, %p195
      %p197 = scmp.ne.s32.totalorder %s188, %s189
      %p198 = scmp.eq.s32.totalorder %s42, 0
      %p199 = por %p197, %p198
      %p200 = scmp.ne.s32.totalorder %s188, %s189
      %p201 = scmp.eq.s32.totalorder %s43, 3
      %p202 = por %p200, %p201
      %p204 = scmp.ne.s32.totalorder %s189, %s203
      %p205 = scmp.eq.s32.totalorder %s43, 0
      %p206 = por %p204, %p205
      %s208 = sadd.s32 %s207, 1
      %p211 = scmp.eq.s32.totalorder %s37, 3
      %p212 = scmp.ne.s32.totalorder %s207, %s209
      %p213 = scmp.eq.s32.totalorder %s37, 0
      %p214 = por %p212, %p213
      %p215 = scmp.ne.s32.totalorder %s207, %s209
      %p216 = scmp.eq.s32.totalorder %s42, 3
      %p217 = por %p215, %p216
      %p218 = scmp.ne.s32.totalorder %s209, %s210
      %p219 = scmp.eq.s32.totalorder %s42, 0
      %p220 = por %p218, %p219
      %p221 = scmp.ne.s32.totalorder %s209, %s210
      %p222 = scmp.eq.s32.totalorder %s43, 3
      %p223 = por %p221, %p222
      %p225 = scmp.ne.s32.totalorder %s210, %s224
      %p226 = scmp.eq.s32.totalorder %s43, 0
      %p227 = por %p225, %p226
      %s229 = sadd.s32 %s228, 1
      %p232 = scmp.eq.s32.totalorder %s37, 3
      %p233 = scmp.ne.s32.totalorder %s228, %s230
      %p234 = scmp.eq.s32.totalorder %s37, 0
      %p235 = por %p233, %p234
      %p236 = scmp.ne.s32.totalorder %s228, %s230
      %p237 = scmp.eq.s32.totalorder %s42, 3
      %p238 = por %p236, %p237
      %p239 = scmp.ne.s32.totalorder %s230, %s231
      %p240 = scmp.eq.s32.totalorder %s42, 0
      %p241 = por %p239, %p240
      %p242 = scmp.ne.s32.totalorder %s230, %s231
      %p243 = scmp.eq.s32.totalorder %s43, 3
      %p244 = por %p242, %p243
      %p246 = scmp.ne.s32.totalorder %s231, %s245
      %p247 = scmp.eq.s32.totalorder %s43, 0
      %p248 = por %p246, %p247
      %s250 = sadd.s32 %s249, 1
      %p253 = scmp.eq.s32.totalorder %s37, 3
      %p254 = scmp.ne.s32.totalorder %s249, %s251
      %p255 = scmp.eq.s32.totalorder %s37, 0
      %p256 = por %p254, %p255
      %p257 = scmp.ne.s32.totalorder %s249, %s251
      %p258 = scmp.eq.s32.totalorder %s42, 3
      %p259 = por %p257, %p258
      %p260 = scmp.ne.s32.totalorder %s251, %s252
      %p261 = scmp.eq.s32.totalorder %s42, 0
      %p262 = por %p260, %p261
      %p263 = scmp.ne.s32.totalorder %s251, %s252
      %p264 = scmp.eq.s32.totalorder %s43, 3
      %p265 = por %p263, %p264
      %p267 = scmp.ne.s32.totalorder %s252, %s266
      %p268 = scmp.eq.s32.totalorder %s43, 0
      %p269 = por %p267, %p268
      %s271 = sadd.s32 %s270, 1
      %p274 = scmp.eq.s32.totalorder %s37, 3
      %p275 = scmp.ne.s32.totalorder %s270, %s272
      %p276 = scmp.eq.s32.totalorder %s37, 0
      %p277 = por %p275, %p276
      %p278 = scmp.ne.s32.totalorder %s270, %s272
      %p279 = scmp.eq.s32.totalorder %s42, 3
      %p280 = por %p278, %p279
      %p281 = scmp.ne.s32.totalorder %s272, %s273
      %p282 = scmp.eq.s32.totalorder %s42, 0
      %p283 = por %p281, %p282
      %p284 = scmp.ne.s32.totalorder %s272, %s273
      %p285 = scmp.eq.s32.totalorder %s43, 3
      %p286 = por %p284, %p285
      %p288 = scmp.ne.s32.totalorder %s273, %s287
      %p289 = scmp.eq.s32.totalorder %s43, 0
      %p290 = por %p288, %p289
      %s292 = sadd.s32 %s291, 1
      %p295 = scmp.eq.s32.totalorder %s37, 3
      %p296 = scmp.ne.s32.totalorder %s291, %s293
      %p297 = scmp.eq.s32.totalorder %s37, 0
      %p298 = por %p296, %p297
      %p299 = scmp.ne.s32.totalorder %s291, %s293
      %p300 = scmp.eq.s32.totalorder %s42, 3
      %p301 = por %p299, %p300
      %p302 = scmp.ne.s32.totalorder %s293, %s294
      %p303 = scmp.eq.s32.totalorder %s42, 0
      %p304 = por %p302, %p303
      %p305 = scmp.ne.s32.totalorder %s293, %s294
      %p306 = scmp.eq.s32.totalorder %s43, 3
      %p307 = por %p305, %p306
      %p309 = scmp.ne.s32.totalorder %s294, %s308
      %p310 = scmp.eq.s32.totalorder %s43, 0
      %p311 = por %p309, %p310
      %s313 = sadd.s32 %s312, 1
      %p316 = scmp.eq.s32.totalorder %s37, 3
      %p317 = scmp.ne.s32.totalorder %s312, %s314
      %p318 = scmp.eq.s32.totalorder %s37, 0
      %p319 = por %p317, %p318
      %p320 = scmp.ne.s32.totalorder %s312, %s314
      %p321 = scmp.eq.s32.totalorder %s42, 3
      %p322 = por %p320, %p321
      %p323 = scmp.ne.s32.totalorder %s314, %s315
      %p324 = scmp.eq.s32.totalorder %s42, 0
      %p325 = por %p323, %p324
      %p326 = scmp.ne.s32.totalorder %s314, %s315
      %p327 = scmp.eq.s32.totalorder %s43, 3
      %p328 = por %p326, %p327
      %p330 = scmp.ne.s32.totalorder %s315, %s329
      %p331 = scmp.eq.s32.totalorder %s43, 0
      %p332 = por %p330, %p331
      %s333 = ssub.s32 %s44, %s56
      %s334 = ssub.s32 %s45, %s52
      %s335 = sor.u32 %s333, %s334
      %p336 = scmp.eq.s32.totalorder %s335, 0
      %s338 = sadd.s32 %s337, 1
      %s339 = scalar_select %p336, %s337, %s338
      %p342 = pneg %p336
      %p343 = scmp.eq.s32.totalorder %s37, 3
      %p344 = por %p342, %p343
      %p345 = scmp.ne.s32.totalorder %s337, %s340
      %p346 = scmp.eq.s32.totalorder %s37, 0
      %p347 = por %p345, %p346
      %p348 = scmp.ne.s32.totalorder %s337, %s340
      %p349 = scmp.eq.s32.totalorder %s42, 3
      %p350 = por %p348, %p349
      %p351 = scmp.ne.s32.totalorder %s340, %s341
      %p352 = scmp.eq.s32.totalorder %s42, 0
      %p353 = por %p351, %p352
      %p354 = scmp.ne.s32.totalorder %s340, %s341
      %p355 = scmp.eq.s32.totalorder %s43, 3
      %p356 = por %p354, %p355
      %p358 = scmp.ne.s32.totalorder %s341, %s357
      %p359 = scmp.eq.s32.totalorder %s43, 0
      %p360 = por %p358, %p359
      %s361 = ssub.s32 %s44, %s56
      %s362 = ssub.s32 %s45, %s52
      %s363 = sor.u32 %s361, %s362
      %p364 = scmp.eq.s32.totalorder %s363, 0
      %s366 = sadd.s32 %s365, 1
      %s367 = scalar_select %p364, %s365, %s366
      %p370 = pneg %p364
      %p371 = scmp.eq.s32.totalorder %s37, 3
      %p372 = por %p370, %p371
      %p373 = scmp.ne.s32.totalorder %s365, %s368
      %p374 = scmp.eq.s32.totalorder %s37, 0
      %p375 = por %p373, %p374
      %p376 = scmp.ne.s32.totalorder %s365, %s368
      %p377 = scmp.eq.s32.totalorder %s42, 3
      %p378 = por %p376, %p377
      %p379 = scmp.ne.s32.totalorder %s368, %s369
      %p380 = scmp.eq.s32.totalorder %s42, 0
      %p381 = por %p379, %p380
      %p382 = scmp.ne.s32.totalorder %s368, %s369
      %p383 = scmp.eq.s32.totalorder %s43, 3
      %p384 = por %p382, %p383
      %p386 = scmp.ne.s32.totalorder %s369, %s385
      %p387 = scmp.eq.s32.totalorder %s43, 0
      %p388 = por %p386, %p387
      %p389 = scmp.le.s32.totalorder 1, %s37
      %p390 = scmp.lt.s32.totalorder %s37, 5
      %p391 = pnand %p389, %p390
      %p392 = pneg %p391
      // Predicated region
      $region9: #{tpu_custom_call.1} parent=5 // pred_check
        _
      $region10: #{tpu_custom_call.1} parent=5 // pred_check_branch
        %394 = sbr.rel (%p391) target = $region12
      $region11: #{tpu_custom_call.1} parent=5 // pred_region
        %s395 = ssub.s32 %s37, 1
        // Predicated region
        $region13: #{tpu_custom_call.1} parent=11 // pred_check
          %p396 = pneg %p178
        $region14: #{tpu_custom_call.1} parent=11 // pred_check_branch
          %398 = sbr.rel (%p396) target = $region16
        $region15: #{tpu_custom_call.1} parent=11 // pred_region
          %400 = vsyncadd [#allocation11], 0
          %s401 = sshll.u32 %s4, 4
          %s402 = int_to_ptr.hbm [resolvable:$true] %s401
          %s403 = sshll.u32 [#allocation12], 4
          %s404 = int_to_ptr.vmem [resolvable:$true] %s403
          %409 = dma.hbm_to_vmem [thread:$0]  %s402, 4096, %s404, [#allocation11], 128, 128, 8
        $region16: #{tpu_custom_call.1} parent=11 // pred_fallthru
          _
        // Predicated region
        $region17: #{tpu_custom_call.1} parent=11 // pred_check
          %p410 = pneg %p199
        $region18: #{tpu_custom_call.1} parent=11 // pred_check_branch
          %412 = sbr.rel (%p410) target = $region20
        $region19: #{tpu_custom_call.1} parent=11 // pred_region
          _
        $region20: #{tpu_custom_call.1} parent=11 // pred_fallthru
          _
        // Predicated region
        $region21: #{tpu_custom_call.1} parent=11 // pred_check
          %p413 = pneg %p220
        $region22: #{tpu_custom_call.1} parent=11 // pred_check_branch
          %415 = sbr.rel (%p413) target = $region24
        $region23: #{tpu_custom_call.1} parent=11 // pred_region
          %417 = vsyncadd [#allocation14], 0
          %s418 = sshll.u32 %s6, 4
          %s419 = int_to_ptr.hbm [resolvable:$true] %s418
          %s420 = sshll.u32 [#allocation13], 4
          %s421 = int_to_ptr.vmem [resolvable:$true] %s420
          %426 = dma.hbm_to_vmem [thread:$0]  %s419, 8192, %s421, [#allocation14], 256, 256, 16
        $region24: #{tpu_custom_call.1} parent=11 // pred_fallthru
          _
        // Predicated region
        $region25: #{tpu_custom_call.1} parent=11 // pred_check
          %p427 = pneg %p241
        $region26: #{tpu_custom_call.1} parent=11 // pred_check_branch
          %429 = sbr.rel (%p427) target = $region28
        $region27: #{tpu_custom_call.1} parent=11 // pred_region
          _
        $region28: #{tpu_custom_call.1} parent=11 // pred_fallthru
          _
        // Predicated region
        $region29: #{tpu_custom_call.1} parent=11 // pred_check
          %p430 = pneg %p262
        $region30: #{tpu_custom_call.1} parent=11 // pred_check_branch
          %432 = sbr.rel (%p430) target = $region32
        $region31: #{tpu_custom_call.1} parent=11 // pred_region
          %434 = vsyncadd [#allocation14], 0
          %s435 = sshll.u32 %s8, 4
          %s436 = int_to_ptr.hbm [resolvable:$true] %s435
          %s437 = sshll.u32 [#allocation15], 4
          %s438 = int_to_ptr.vmem [resolvable:$true] %s437
          %443 = dma.hbm_to_vmem [thread:$0]  %s436, 4096, %s438, [#allocation14], 128, 128, 8
        $region32: #{tpu_custom_call.1} parent=11 // pred_fallthru
          _
        // Predicated region
        $region33: #{tpu_custom_call.1} parent=11 // pred_check
          %p444 = pneg %p283
        $region34: #{tpu_custom_call.1} parent=11 // pred_check_branch
          %446 = sbr.rel (%p444) target = $region36
        $region35: #{tpu_custom_call.1} parent=11 // pred_region
          _
        $region36: #{tpu_custom_call.1} parent=11 // pred_fallthru
          _
        // Predicated region
        $region37: #{tpu_custom_call.1} parent=11 // pred_check
          %p447 = pneg %p304
        $region38: #{tpu_custom_call.1} parent=11 // pred_check_branch
          %449 = sbr.rel (%p447) target = $region40
        $region39: #{tpu_custom_call.1} parent=11 // pred_region
          %451 = vsyncadd [#allocation17], 0
          %s453 = sshll.u32 %s10, 4
          %s454 = int_to_ptr.hbm [resolvable:$true] %s453
          %s455 = sshll.u32 [#allocation16], 4
          %s456 = int_to_ptr.vmem [resolvable:$true] %s455
          %458 = dma.hbm_to_vmem [thread:$0]  %s454, 32, %s456, [#allocation17]
        $region40: #{tpu_custom_call.1} parent=11 // pred_fallthru
          _
        // Predicated region
        $region41: #{tpu_custom_call.1} parent=11 // pred_check
          %p459 = pneg %p325
        $region42: #{tpu_custom_call.1} parent=11 // pred_check_branch
          %461 = sbr.rel (%p459) target = $region44
        $region43: #{tpu_custom_call.1} parent=11 // pred_region
          _
        $region44: #{tpu_custom_call.1} parent=11 // pred_fallthru
          _
      $region12: #{tpu_custom_call.1} parent=5 // pred_fallthru
        _
      %p462 = scmp.lt.s32.totalorder %s37, 4
      // Predicated region
      $region45: #{tpu_custom_call.1} parent=5 // pred_check
        %p463 = pneg %p462
      $region46: #{tpu_custom_call.1} parent=5 // pred_check_branch
        %465 = sbr.rel (%p463) target = $region48
      $region47: #{tpu_custom_call.1} parent=5 // pred_region
        // Predicated region
        $region49: #{tpu_custom_call.1} parent=47 // pred_check
          %p466 = pneg %p71
        $region50: #{tpu_custom_call.1} parent=47 // pred_check_branch
          %468 = sbr.rel (%p466) target = $region52
        $region51: #{tpu_custom_call.1} parent=47 // pred_region
          %s469 = sand.u32 %s61, 1
          %s470 = scalar_lea.sflag [#allocation5], %s469
          %s471 = sand.u32 %s61, 1
          %s472 = smul.addr %s471, 256
          %s473 = scalar_lea.vmem [#allocation4], %s472
          %s474 = smul.u32 16, %s45
          %476 = vsyncadd %s470, 0
          %s477 = smul.addr %s474, 2
          %s478 = smul.addr %s44, 64
          %s479 = sadd.s32 %s477, %s478
          %s480 = smul.addr %s479, 8
          %s481 = scalar_lea.hbm %s0, %s480
          %s482 = sshll.u32 %s481, 4
          %s483 = int_to_ptr.hbm [resolvable:$true] %s482
          %s484 = sshll.u32 %s473, 4
          %s485 = int_to_ptr.vmem [resolvable:$true] %s484
          %490 = dma.hbm_to_vmem [thread:$0]  %s483, 4096, %s485, %s470, 256, 256, 16
        $region52: #{tpu_custom_call.1} parent=47 // pred_fallthru
          _
        // Predicated region
        $region53: #{tpu_custom_call.1} parent=47 // pred_check
          %p491 = pneg %p97
        $region54: #{tpu_custom_call.1} parent=47 // pred_check_branch
          %493 = sbr.rel (%p491) target = $region56
        $region55: #{tpu_custom_call.1} parent=47 // pred_region
          %s494 = sand.u32 %s37, 1
          %s495 = scalar_lea.sflag [#allocation8], %s494
          %s496 = sand.u32 %s87, 1
          %s497 = smul.addr %s496, 512
          %s498 = scalar_lea.vmem [#allocation7], %s497
          %500 = vsyncadd %s495, 0
          %s501 = smul.addr %s44, 64
          %s502 = smul.addr %s501, 8
          %s503 = scalar_lea.hbm %s1, %s502
          %s504 = sshll.u32 %s503, 4
          %s505 = int_to_ptr.hbm [resolvable:$true] %s504
          %s506 = sshll.u32 %s498, 4
          %s507 = int_to_ptr.vmem [resolvable:$true] %s506
          %512 = dma.hbm_to_vmem [thread:$0]  %s505, 8192, %s507, %s495, 256, 256, 16
        $region56: #{tpu_custom_call.1} parent=47 // pred_fallthru
          _
        // Predicated region
        $region57: #{tpu_custom_call.1} parent=47 // pred_check
          %p513 = pneg %p123
        $region58: #{tpu_custom_call.1} parent=47 // pred_check_branch
          %515 = sbr.rel (%p513) target = $region60
        $region59: #{tpu_custom_call.1} parent=47 // pred_region
          %s516 = sand.u32 %s37, 1
          %s517 = scalar_lea.sflag [#allocation8], %s516
          %s518 = sand.u32 %s113, 1
          %s519 = smul.addr %s518, 2
          %s520 = scalar_lea.vmem [#allocation9], %s519
          %522 = vsyncadd %s517, 0
          %s523 = smul.addr %s44, 2
          %s524 = scalar_lea.hbm %s2, %s523
          %s526 = sshll.u32 %s524, 4
          %s527 = int_to_ptr.hbm [resolvable:$true] %s526
          %s528 = sshll.u32 %s520, 4
          %s529 = int_to_ptr.vmem [resolvable:$true] %s528
          %531 = dma.hbm_to_vmem [thread:$0]  %s527, 32, %s529, %s517
        $region60: #{tpu_custom_call.1} parent=47 // pred_fallthru
          _
        // Predicated region
        $region61: #{tpu_custom_call.1} parent=47 // pred_check
          %p532 = pneg %p151
        $region62: #{tpu_custom_call.1} parent=47 // pred_check_branch
          %534 = sbr.rel (%p532) target = $region64
        $region63: #{tpu_custom_call.1} parent=47 // pred_region
          %s535 = sand.u32 %s37, 1
          %s536 = scalar_lea.sflag [#allocation11], %s535
          %s537 = sand.u32 %s141, 1
          %s538 = smul.addr %s537, 256
          %s539 = scalar_lea.vmem [#allocation10], %s538
          %s540 = smul.u32 16, %s45
          %542 = vsyncadd %s536, 0
          %s543 = smul.addr %s540, 2
          %s544 = smul.addr %s44, 64
          %s545 = sadd.s32 %s543, %s544
          %s546 = smul.addr %s545, 8
          %s547 = scalar_lea.hbm %s3, %s546
          %s548 = sshll.u32 %s547, 4
          %s549 = int_to_ptr.hbm [resolvable:$true] %s548
          %s550 = sshll.u32 %s539, 4
          %s551 = int_to_ptr.vmem [resolvable:$true] %s550
          %556 = dma.hbm_to_vmem [thread:$0]  %s549, 4096, %s551, %s536, 256, 256, 16
        $region64: #{tpu_custom_call.1} parent=47 // pred_fallthru
          _
      $region48: #{tpu_custom_call.1} parent=5 // pred_fallthru
        _
      %p557 = scmp.le.s32.totalorder 1, %s37
      %p558 = scmp.lt.s32.totalorder %s37, 5
      %p559 = pnand %p557, %p558
      %p560 = pneg %p559
      // Predicated region
      $region65: #{tpu_custom_call.1} parent=5 // pred_check
        _
      $region66: #{tpu_custom_call.1} parent=5 // pred_check_branch
        %562 = sbr.rel (%p559) target = $region68
      $region67: #{tpu_custom_call.1} parent=5 // pred_region
        %s563 = ssub.s32 %s37, 1
        %s564 = sand.u32 %s64, 1
        %s565 = scalar_lea.sflag [#allocation5], %s564
        %s566 = sand.u32 %s64, 1
        %s567 = smul.addr %s566, 256
        %s568 = scalar_lea.vmem [#allocation4], %s567
        // Predicated region
        $region69: #{tpu_custom_call.1} parent=67 // pred_check
          %p569 = pneg %p77
        $region70: #{tpu_custom_call.1} parent=67 // pred_check_branch
          %571 = sbr.rel (%p569) target = $region72
        $region71: #{tpu_custom_call.1} parent=67 // pred_region
          %573 = dma.done %s565, 4096
        $region72: #{tpu_custom_call.1} parent=67 // pred_fallthru
          _
        %s574 = sand.u32 %s42, 1
        %s575 = scalar_lea.sflag [#allocation8], %s574
        %s576 = sand.u32 %s90, 1
        %s577 = smul.addr %s576, 512
        %s578 = scalar_lea.vmem [#allocation7], %s577
        // Predicated region
        $region73: #{tpu_custom_call.1} parent=67 // pred_check
          %p579 = pneg %p103
        $region74: #{tpu_custom_call.1} parent=67 // pred_check_branch
          %581 = sbr.rel (%p579) target = $region76
        $region75: #{tpu_custom_call.1} parent=67 // pred_region
          %583 = dma.done %s575, 8192
        $region76: #{tpu_custom_call.1} parent=67 // pred_fallthru
          _
        %s584 = sand.u32 %s42, 1
        %s585 = scalar_lea.sflag [#allocation8], %s584
        %s586 = sand.u32 %s116, 1
        %s587 = smul.addr %s586, 2
        %s588 = scalar_lea.vmem [#allocation9], %s587
        // Predicated region
        $region77: #{tpu_custom_call.1} parent=67 // pred_check
          %p589 = pneg %p129
        $region78: #{tpu_custom_call.1} parent=67 // pred_check_branch
          %591 = sbr.rel (%p589) target = $region80
        $region79: #{tpu_custom_call.1} parent=67 // pred_region
          %593 = dma.done %s585, 32
        $region80: #{tpu_custom_call.1} parent=67 // pred_fallthru
          _
        %s594 = sand.u32 %s42, 1
        %s595 = scalar_lea.sflag [#allocation11], %s594
        %s596 = sand.u32 %s144, 1
        %s597 = smul.addr %s596, 256
        %s598 = scalar_lea.vmem [#allocation10], %s597
        // Predicated region
        $region81: #{tpu_custom_call.1} parent=67 // pred_check
          %p599 = pneg %p157
        $region82: #{tpu_custom_call.1} parent=67 // pred_check_branch
          %601 = sbr.rel (%p599) target = $region84
        $region83: #{tpu_custom_call.1} parent=67 // pred_region
          %603 = dma.done %s595, 4096
        $region84: #{tpu_custom_call.1} parent=67 // pred_fallthru
          _
        // Predicated region
        $region85: #{tpu_custom_call.1} parent=67 // pred_check
          %p604 = pneg %p178
        $region86: #{tpu_custom_call.1} parent=67 // pred_check_branch
          %606 = sbr.rel (%p604) target = $region88
        $region87: #{tpu_custom_call.1} parent=67 // pred_region
          %608 = dma.done [#allocation11], 4096
        $region88: #{tpu_custom_call.1} parent=67 // pred_fallthru
          _
        // Predicated region
        $region89: #{tpu_custom_call.1} parent=67 // pred_check
          %p609 = pneg %p220
        $region90: #{tpu_custom_call.1} parent=67 // pred_check_branch
          %611 = sbr.rel (%p609) target = $region92
        $region91: #{tpu_custom_call.1} parent=67 // pred_region
          %613 = dma.done [#allocation14], 8192
        $region92: #{tpu_custom_call.1} parent=67 // pred_fallthru
          _
        // Predicated region
        $region93: #{tpu_custom_call.1} parent=67 // pred_check
          %p614 = pneg %p262
        $region94: #{tpu_custom_call.1} parent=67 // pred_check_branch
          %616 = sbr.rel (%p614) target = $region96
        $region95: #{tpu_custom_call.1} parent=67 // pred_region
          %618 = dma.done [#allocation14], 4096
        $region96: #{tpu_custom_call.1} parent=67 // pred_fallthru
          _
        // Predicated region
        $region97: #{tpu_custom_call.1} parent=67 // pred_check
          %p619 = pneg %p304
        $region98: #{tpu_custom_call.1} parent=67 // pred_check_branch
          %621 = sbr.rel (%p619) target = $region100
        $region99: #{tpu_custom_call.1} parent=67 // pred_region
          %623 = dma.done [#allocation17], 32
        $region100: #{tpu_custom_call.1} parent=67 // pred_fallthru
          _
        %s624 = sand.u32 %s64, 1
        %s625 = scalar_lea.sflag [#allocation5], %s624
        %s626 = sand.u32 %s64, 1
        %s627 = smul.addr %s626, 256
        %s628 = scalar_lea.vmem [#allocation4], %s627
        %p629 = pneg %p77
        %p630 = pneg %p74
        %s631 = sand.u32 %s42, 1
        %s632 = scalar_lea.sflag [#allocation8], %s631
        %s633 = sand.u32 %s90, 1
        %s634 = smul.addr %s633, 512
        %s635 = scalar_lea.vmem [#allocation7], %s634
        %p636 = pneg %p103
        %p637 = pneg %p100
        %s638 = sand.u32 %s42, 1
        %s639 = scalar_lea.sflag [#allocation8], %s638
        %s640 = sand.u32 %s116, 1
        %s641 = smul.addr %s640, 2
        %s642 = scalar_lea.vmem [#allocation9], %s641
        %p643 = pneg %p129
        %p644 = pneg %p126
        %s645 = sand.u32 %s42, 1
        %s646 = scalar_lea.sflag [#allocation11], %s645
        %s647 = sand.u32 %s144, 1
        %s648 = smul.addr %s647, 256
        %s649 = scalar_lea.vmem [#allocation10], %s648
        %p650 = pneg %p157
        %p651 = pneg %p154
        %p652 = pneg %p178
        %p653 = pneg %p175
        %p654 = pneg %p199
        %p655 = pneg %p196
        %p656 = pneg %p220
        %p657 = pneg %p217
        %p658 = pneg %p241
        %p659 = pneg %p238
        %p660 = pneg %p262
        %p661 = pneg %p259
        %p662 = pneg %p283
        %p663 = pneg %p280
        %p664 = pneg %p304
        %p665 = pneg %p301
        %p666 = pneg %p325
        %p667 = pneg %p322
        %p668 = pneg %p353
        %p669 = pneg %p350
        %s670 = sand.u32 %s340, 1
        %s671 = scalar_lea.sflag [#allocation6], %s670
        %s672 = sand.u32 %s340, 1
        %s673 = smul.addr %s672, 256
        %s674 = scalar_lea.vmem [#allocation18], %s673
        %p675 = pneg %p381
        %p676 = pneg %p378
        %s677 = sand.u32 %s368, 1
        %s678 = scalar_lea.sflag [#allocation20], %s677
        %s679 = sand.u32 %s368, 1
        %s680 = smul.addr %s679, 256
        %s681 = scalar_lea.vmem [#allocation19], %s680
        %s682 = smul.u32 16, %s47
        %s683 = smul.u32 16, %s47
        %s684 = smul.u32 16, %s47
        %s685 = smul.u32 16, %s47
        %p687 = scmp.eq.s32.totalorder %s47, 0
        // Predicated region
        $region101: #{tpu_custom_call.1} parent=67 // pred_check
          %p688 = pneg %p687
        $region102: #{tpu_custom_call.1} parent=67 // pred_check_branch
          %690 = sbr.rel (%p688) target = $region104
        $region103: #{tpu_custom_call.1} parent=67 // pred_region
          %v691 = vld [vmem:[%s578] sm:$0xff]
          %v692 = vld [vmem:[%s578 + $0x8] sm:$0xff]
          %v693 = vld [vmem:[%s578 + $0x10] sm:$0xff]
          %v694 = vld [vmem:[%s578 + $0x18] sm:$0xff]
          %v695 = vld [vmem:[%s578 + $0x20] sm:$0xff]
          %v696 = vld [vmem:[%s578 + $0x28] sm:$0xff]
          %v697 = vld [vmem:[%s578 + $0x30] sm:$0xff]
          %v698 = vld [vmem:[%s578 + $0x38] sm:$0xff]
          %v699 = vld [vmem:[%s578 + $0x40] sm:$0xff]
          %v700 = vld [vmem:[%s578 + $0x48] sm:$0xff]
          %v701 = vld [vmem:[%s578 + $0x50] sm:$0xff]
          %v702 = vld [vmem:[%s578 + $0x58] sm:$0xff]
          %v703 = vld [vmem:[%s578 + $0x60] sm:$0xff]
          %v704 = vld [vmem:[%s578 + $0x68] sm:$0xff]
          %v705 = vld [vmem:[%s578 + $0x70] sm:$0xff]
          %v706 = vld [vmem:[%s578 + $0x78] sm:$0xff]
          %v707 = vld [vmem:[%s578 + $0x80] sm:$0xff]
          %v708 = vld [vmem:[%s578 + $0x88] sm:$0xff]
          %v709 = vld [vmem:[%s578 + $0x90] sm:$0xff]
          %v710 = vld [vmem:[%s578 + $0x98] sm:$0xff]
          %v711 = vld [vmem:[%s578 + $0xa0] sm:$0xff]
          %v712 = vld [vmem:[%s578 + $0xa8] sm:$0xff]
          %v713 = vld [vmem:[%s578 + $0xb0] sm:$0xff]
          %v714 = vld [vmem:[%s578 + $0xb8] sm:$0xff]
          %v715 = vld [vmem:[%s578 + $0xc0] sm:$0xff]
          %v716 = vld [vmem:[%s578 + $0xc8] sm:$0xff]
          %v717 = vld [vmem:[%s578 + $0xd0] sm:$0xff]
          %v718 = vld [vmem:[%s578 + $0xd8] sm:$0xff]
          %v719 = vld [vmem:[%s578 + $0xe0] sm:$0xff]
          %v720 = vld [vmem:[%s578 + $0xe8] sm:$0xff]
          %v721 = vld [vmem:[%s578 + $0xf0] sm:$0xff]
          %v722 = vld [vmem:[%s578 + $0xf8] sm:$0xff]
          %v723 = vld [vmem:[%s578 + $0x100] sm:$0xff]
          %v724 = vld [vmem:[%s578 + $0x108] sm:$0xff]
          %v725 = vld [vmem:[%s578 + $0x110] sm:$0xff]
          %v726 = vld [vmem:[%s578 + $0x118] sm:$0xff]
          %v727 = vld [vmem:[%s578 + $0x120] sm:$0xff]
          %v728 = vld [vmem:[%s578 + $0x128] sm:$0xff]
          %v729 = vld [vmem:[%s578 + $0x130] sm:$0xff]
          %v730 = vld [vmem:[%s578 + $0x138] sm:$0xff]
          %v731 = vld [vmem:[%s578 + $0x140] sm:$0xff]
          %v732 = vld [vmem:[%s578 + $0x148] sm:$0xff]
          %v733 = vld [vmem:[%s578 + $0x150] sm:$0xff]
          %v734 = vld [vmem:[%s578 + $0x158] sm:$0xff]
          %v735 = vld [vmem:[%s578 + $0x160] sm:$0xff]
          %v736 = vld [vmem:[%s578 + $0x168] sm:$0xff]
          %v737 = vld [vmem:[%s578 + $0x170] sm:$0xff]
          %v738 = vld [vmem:[%s578 + $0x178] sm:$0xff]
          %v739 = vld [vmem:[%s578 + $0x180] sm:$0xff]
          %v740 = vld [vmem:[%s578 + $0x188] sm:$0xff]
          %v741 = vld [vmem:[%s578 + $0x190] sm:$0xff]
          %v742 = vld [vmem:[%s578 + $0x198] sm:$0xff]
          %v743 = vld [vmem:[%s578 + $0x1a0] sm:$0xff]
          %v744 = vld [vmem:[%s578 + $0x1a8] sm:$0xff]
          %v745 = vld [vmem:[%s578 + $0x1b0] sm:$0xff]
          %v746 = vld [vmem:[%s578 + $0x1b8] sm:$0xff]
          %v747 = vld [vmem:[%s578 + $0x1c0] sm:$0xff]
          %v748 = vld [vmem:[%s578 + $0x1c8] sm:$0xff]
          %v749 = vld [vmem:[%s578 + $0x1d0] sm:$0xff]
          %v750 = vld [vmem:[%s578 + $0x1d8] sm:$0xff]
          %v751 = vld [vmem:[%s578 + $0x1e0] sm:$0xff]
          %v752 = vld [vmem:[%s578 + $0x1e8] sm:$0xff]
          %v753 = vld [vmem:[%s578 + $0x1f0] sm:$0xff]
          %v754 = vld [vmem:[%s578 + $0x1f8] sm:$0xff]
          %v755 = vpack.c.bf16 %v693, %v691
          %v756 = vpack.c.bf16 %v694, %v692
          %v757 = vpack.c.bf16 %v697, %v695
          %v758 = vpack.c.bf16 %v698, %v696
          %v759 = vpack.c.bf16 %v701, %v699
          %v760 = vpack.c.bf16 %v702, %v700
          %v761 = vpack.c.bf16 %v705, %v703
          %v762 = vpack.c.bf16 %v706, %v704
          %v763 = vpack.c.bf16 %v709, %v707
          %v764 = vpack.c.bf16 %v710, %v708
          %v765 = vpack.c.bf16 %v713, %v711
          %v766 = vpack.c.bf16 %v714, %v712
          %v767 = vpack.c.bf16 %v717, %v715
          %v768 = vpack.c.bf16 %v718, %v716
          %v769 = vpack.c.bf16 %v721, %v719
          %v770 = vpack.c.bf16 %v722, %v720
          %v771 = vpack.c.bf16 %v725, %v723
          %v772 = vpack.c.bf16 %v726, %v724
          %v773 = vpack.c.bf16 %v729, %v727
          %v774 = vpack.c.bf16 %v730, %v728
          %v775 = vpack.c.bf16 %v733, %v731
          %v776 = vpack.c.bf16 %v734, %v732
          %v777 = vpack.c.bf16 %v737, %v735
          %v778 = vpack.c.bf16 %v738, %v736
          %v779 = vpack.c.bf16 %v741, %v739
          %v780 = vpack.c.bf16 %v742, %v740
          %v781 = vpack.c.bf16 %v745, %v743
          %v782 = vpack.c.bf16 %v746, %v744
          %v783 = vpack.c.bf16 %v749, %v747
          %v784 = vpack.c.bf16 %v750, %v748
          %v785 = vpack.c.bf16 %v753, %v751
          %v786 = vpack.c.bf16 %v754, %v752
          %v787 = vld [vmem:[#allocation13] sm:$0xff]
          %v788 = vld [vmem:[#allocation13 + $0x8] sm:$0xff]
          %v789 = vld [vmem:[#allocation13 + $0x10] sm:$0xff]
          %v790 = vld [vmem:[#allocation13 + $0x18] sm:$0xff]
          %v791 = vld [vmem:[#allocation13 + $0x20] sm:$0xff]
          %v792 = vld [vmem:[#allocation13 + $0x28] sm:$0xff]
          %v793 = vld [vmem:[#allocation13 + $0x30] sm:$0xff]
          %v794 = vld [vmem:[#allocation13 + $0x38] sm:$0xff]
          %v795 = vld [vmem:[#allocation13 + $0x40] sm:$0xff]
          %v796 = vld [vmem:[#allocation13 + $0x48] sm:$0xff]
          %v797 = vld [vmem:[#allocation13 + $0x50] sm:$0xff]
          %v798 = vld [vmem:[#allocation13 + $0x58] sm:$0xff]
          %v799 = vld [vmem:[#allocation13 + $0x60] sm:$0xff]
          %v800 = vld [vmem:[#allocation13 + $0x68] sm:$0xff]
          %v801 = vld [vmem:[#allocation13 + $0x70] sm:$0xff]
          %v802 = vld [vmem:[#allocation13 + $0x78] sm:$0xff]
          %v803 = vld [vmem:[#allocation13 + $0x80] sm:$0xff]
          %v804 = vld [vmem:[#allocation13 + $0x88] sm:$0xff]
          %v805 = vld [vmem:[#allocation13 + $0x90] sm:$0xff]
          %v806 = vld [vmem:[#allocation13 + $0x98] sm:$0xff]
          %v807 = vld [vmem:[#allocation13 + $0xa0] sm:$0xff]
          %v808 = vld [vmem:[#allocation13 + $0xa8] sm:$0xff]
          %v809 = vld [vmem:[#allocation13 + $0xb0] sm:$0xff]
          %v810 = vld [vmem:[#allocation13 + $0xb8] sm:$0xff]
          %v811 = vld [vmem:[#allocation13 + $0xc0] sm:$0xff]
          %v812 = vld [vmem:[#allocation13 + $0xc8] sm:$0xff]
          %v813 = vld [vmem:[#allocation13 + $0xd0] sm:$0xff]
          %v814 = vld [vmem:[#allocation13 + $0xd8] sm:$0xff]
          %v815 = vld [vmem:[#allocation13 + $0xe0] sm:$0xff]
          %v816 = vld [vmem:[#allocation13 + $0xe8] sm:$0xff]
          %v817 = vld [vmem:[#allocation13 + $0xf0] sm:$0xff]
          %v818 = vld [vmem:[#allocation13 + $0xf8] sm:$0xff]
          %v819 = vld [vmem:[#allocation13 + $0x100] sm:$0xff]
          %v820 = vld [vmem:[#allocation13 + $0x108] sm:$0xff]
          %v821 = vld [vmem:[#allocation13 + $0x110] sm:$0xff]
          %v822 = vld [vmem:[#allocation13 + $0x118] sm:$0xff]
          %v823 = vld [vmem:[#allocation13 + $0x120] sm:$0xff]
          %v824 = vld [vmem:[#allocation13 + $0x128] sm:$0xff]
          %v825 = vld [vmem:[#allocation13 + $0x130] sm:$0xff]
          %v826 = vld [vmem:[#allocation13 + $0x138] sm:$0xff]
          %v827 = vld [vmem:[#allocation13 + $0x140] sm:$0xff]
          %v828 = vld [vmem:[#allocation13 + $0x148] sm:$0xff]
          %v829 = vld [vmem:[#allocation13 + $0x150] sm:$0xff]
          %v830 = vld [vmem:[#allocation13 + $0x158] sm:$0xff]
          %v831 = vld [vmem:[#allocation13 + $0x160] sm:$0xff]
          %v832 = vld [vmem:[#allocation13 + $0x168] sm:$0xff]
          %v833 = vld [vmem:[#allocation13 + $0x170] sm:$0xff]
          %v834 = vld [vmem:[#allocation13 + $0x178] sm:$0xff]
          %v835 = vld [vmem:[#allocation13 + $0x180] sm:$0xff]
          %v836 = vld [vmem:[#allocation13 + $0x188] sm:$0xff]
          %v837 = vld [vmem:[#allocation13 + $0x190] sm:$0xff]
          %v838 = vld [vmem:[#allocation13 + $0x198] sm:$0xff]
          %v839 = vld [vmem:[#allocation13 + $0x1a0] sm:$0xff]
          %v840 = vld [vmem:[#allocation13 + $0x1a8] sm:$0xff]
          %v841 = vld [vmem:[#allocation13 + $0x1b0] sm:$0xff]
          %v842 = vld [vmem:[#allocation13 + $0x1b8] sm:$0xff]
          %v843 = vld [vmem:[#allocation13 + $0x1c0] sm:$0xff]
          %v844 = vld [vmem:[#allocation13 + $0x1c8] sm:$0xff]
          %v845 = vld [vmem:[#allocation13 + $0x1d0] sm:$0xff]
          %v846 = vld [vmem:[#allocation13 + $0x1d8] sm:$0xff]
          %v847 = vld [vmem:[#allocation13 + $0x1e0] sm:$0xff]
          %v848 = vld [vmem:[#allocation13 + $0x1e8] sm:$0xff]
          %v849 = vld [vmem:[#allocation13 + $0x1f0] sm:$0xff]
          %v850 = vld [vmem:[#allocation13 + $0x1f8] sm:$0xff]
          %v851 = vld [vmem:[%s7] sm:$0xf]
          %v853 = vperm.slane %v851, 0
          %v854 = vperm.slane %v851, 1
          %v855 = vperm.slane %v851, 2
          %v856 = vperm.slane %v851, 3
          %v925 = vunpack.c.l.b16 %v787
          %v926 = vunpack.c.h.b16 %v787
          %v927 = vunpack.c.l.b16 %v788
          %v928 = vunpack.c.h.b16 %v788
          %v929 = vunpack.c.l.b16 %v789
          %v930 = vunpack.c.h.b16 %v789
          %v931 = vunpack.c.l.b16 %v790
          %v932 = vunpack.c.h.b16 %v790
          %v933 = vunpack.c.l.b16 %v791
          %v934 = vunpack.c.h.b16 %v791
          %v935 = vunpack.c.l.b16 %v792
          %v936 = vunpack.c.h.b16 %v792
          %v937 = vunpack.c.l.b16 %v793
          %v938 = vunpack.c.h.b16 %v793
          %v939 = vunpack.c.l.b16 %v794
          %v940 = vunpack.c.h.b16 %v794
          %v941 = vunpack.c.l.b16 %v795
          %v942 = vunpack.c.h.b16 %v795
          %v943 = vunpack.c.l.b16 %v796
          %v944 = vunpack.c.h.b16 %v796
          %v945 = vunpack.c.l.b16 %v797
          %v946 = vunpack.c.h.b16 %v797
          %v947 = vunpack.c.l.b16 %v798
          %v948 = vunpack.c.h.b16 %v798
          %v949 = vunpack.c.l.b16 %v799
          %v950 = vunpack.c.h.b16 %v799
          %v951 = vunpack.c.l.b16 %v800
          %v952 = vunpack.c.h.b16 %v800
          %v953 = vunpack.c.l.b16 %v801
          %v954 = vunpack.c.h.b16 %v801
          %v955 = vunpack.c.l.b16 %v802
          %v956 = vunpack.c.h.b16 %v802
          %v957 = vunpack.c.l.b16 %v803
          %v958 = vunpack.c.h.b16 %v803
          %v959 = vunpack.c.l.b16 %v804
          %v960 = vunpack.c.h.b16 %v804
          %v961 = vunpack.c.l.b16 %v805
          %v962 = vunpack.c.h.b16 %v805
          %v963 = vunpack.c.l.b16 %v806
          %v964 = vunpack.c.h.b16 %v806
          %v965 = vunpack.c.l.b16 %v807
          %v966 = vunpack.c.h.b16 %v807
          %v967 = vunpack.c.l.b16 %v808
          %v968 = vunpack.c.h.b16 %v808
          %v969 = vunpack.c.l.b16 %v809
          %v970 = vunpack.c.h.b16 %v809
          %v971 = vunpack.c.l.b16 %v810
          %v972 = vunpack.c.h.b16 %v810
          %v973 = vunpack.c.l.b16 %v811
          %v974 = vunpack.c.h.b16 %v811
          %v975 = vunpack.c.l.b16 %v812
          %v976 = vunpack.c.h.b16 %v812
          %v977 = vunpack.c.l.b16 %v813
          %v978 = vunpack.c.h.b16 %v813
          %v979 = vunpack.c.l.b16 %v814
          %v980 = vunpack.c.h.b16 %v814
          %v981 = vunpack.c.l.b16 %v815
          %v982 = vunpack.c.h.b16 %v815
          %v983 = vunpack.c.l.b16 %v816
          %v984 = vunpack.c.h.b16 %v816
          %v985 = vunpack.c.l.b16 %v817
          %v986 = vunpack.c.h.b16 %v817
          %v987 = vunpack.c.l.b16 %v818
          %v988 = vunpack.c.h.b16 %v818
          %v989 = vunpack.c.l.b16 %v819
          %v990 = vunpack.c.h.b16 %v819
          %v991 = vunpack.c.l.b16 %v820
          %v992 = vunpack.c.h.b16 %v820
          %v993 = vunpack.c.l.b16 %v821
          %v994 = vunpack.c.h.b16 %v821
          %v995 = vunpack.c.l.b16 %v822
          %v996 = vunpack.c.h.b16 %v822
          %v997 = vunpack.c.l.b16 %v823
          %v998 = vunpack.c.h.b16 %v823
          %v999 = vunpack.c.l.b16 %v824
          %v1000 = vunpack.c.h.b16 %v824
          %v1001 = vunpack.c.l.b16 %v825
          %v1002 = vunpack.c.h.b16 %v825
          %v1003 = vunpack.c.l.b16 %v826
          %v1004 = vunpack.c.h.b16 %v826
          %v1005 = vunpack.c.l.b16 %v827
          %v1006 = vunpack.c.h.b16 %v827
          %v1007 = vunpack.c.l.b16 %v828
          %v1008 = vunpack.c.h.b16 %v828
          %v1009 = vunpack.c.l.b16 %v829
          %v1010 = vunpack.c.h.b16 %v829
          %v1011 = vunpack.c.l.b16 %v830
          %v1012 = vunpack.c.h.b16 %v830
          %v1013 = vunpack.c.l.b16 %v831
          %v1014 = vunpack.c.h.b16 %v831
          %v1015 = vunpack.c.l.b16 %v832
          %v1016 = vunpack.c.h.b16 %v832
          %v1017 = vunpack.c.l.b16 %v833
          %v1018 = vunpack.c.h.b16 %v833
          %v1019 = vunpack.c.l.b16 %v834
          %v1020 = vunpack.c.h.b16 %v834
          %v1021 = vunpack.c.l.b16 %v835
          %v1022 = vunpack.c.h.b16 %v835
          %v1023 = vunpack.c.l.b16 %v836
          %v1024 = vunpack.c.h.b16 %v836
          %v1025 = vunpack.c.l.b16 %v837
          %v1026 = vunpack.c.h.b16 %v837
          %v1027 = vunpack.c.l.b16 %v838
          %v1028 = vunpack.c.h.b16 %v838
          %v1029 = vunpack.c.l.b16 %v839
          %v1030 = vunpack.c.h.b16 %v839
          %v1031 = vunpack.c.l.b16 %v840
          %v1032 = vunpack.c.h.b16 %v840
          %v1033 = vunpack.c.l.b16 %v841
          %v1034 = vunpack.c.h.b16 %v841
          %v1035 = vunpack.c.l.b16 %v842
          %v1036 = vunpack.c.h.b16 %v842
          %v1037 = vunpack.c.l.b16 %v843
          %v1038 = vunpack.c.h.b16 %v843
          %v1039 = vunpack.c.l.b16 %v844
          %v1040 = vunpack.c.h.b16 %v844
          %v1041 = vunpack.c.l.b16 %v845
          %v1042 = vunpack.c.h.b16 %v845
          %v1043 = vunpack.c.l.b16 %v846
          %v1044 = vunpack.c.h.b16 %v846
          %v1045 = vunpack.c.l.b16 %v847
          %v1046 = vunpack.c.h.b16 %v847
          %v1047 = vunpack.c.l.b16 %v848
          %v1048 = vunpack.c.h.b16 %v848
          %v1049 = vunpack.c.l.b16 %v849
          %v1050 = vunpack.c.h.b16 %v849
          %v1051 = vunpack.c.l.b16 %v850
          %v1052 = vunpack.c.h.b16 %v850
          %v1053 = vpack.c.b16 %v929, %v925
          %v1054 = vpack.c.b16 %v930, %v926
          %v1055 = vpack.c.b16 %v931, %v927
          %v1056 = vpack.c.b16 %v932, %v928
          %v1057 = vpack.c.b16 %v937, %v933
          %v1058 = vpack.c.b16 %v938, %v934
          %v1059 = vpack.c.b16 %v939, %v935
          %v1060 = vpack.c.b16 %v940, %v936
          %v1061 = vpack.c.b16 %v945, %v941
          %v1062 = vpack.c.b16 %v946, %v942
          %v1063 = vpack.c.b16 %v947, %v943
          %v1064 = vpack.c.b16 %v948, %v944
          %v1065 = vpack.c.b16 %v953, %v949
          %v1066 = vpack.c.b16 %v954, %v950
          %v1067 = vpack.c.b16 %v955, %v951
          %v1068 = vpack.c.b16 %v956, %v952
          %v1069 = vpack.c.b16 %v961, %v957
          %v1070 = vpack.c.b16 %v962, %v958
          %v1071 = vpack.c.b16 %v963, %v959
          %v1072 = vpack.c.b16 %v964, %v960
          %v1073 = vpack.c.b16 %v969, %v965
          %v1074 = vpack.c.b16 %v970, %v966
          %v1075 = vpack.c.b16 %v971, %v967
          %v1076 = vpack.c.b16 %v972, %v968
          %v1077 = vpack.c.b16 %v977, %v973
          %v1078 = vpack.c.b16 %v978, %v974
          %v1079 = vpack.c.b16 %v979, %v975
          %v1080 = vpack.c.b16 %v980, %v976
          %v1081 = vpack.c.b16 %v985, %v981
          %v1082 = vpack.c.b16 %v986, %v982
          %v1083 = vpack.c.b16 %v987, %v983
          %v1084 = vpack.c.b16 %v988, %v984
          %v1085 = vpack.c.b16 %v993, %v989
          %v1086 = vpack.c.b16 %v994, %v990
          %v1087 = vpack.c.b16 %v995, %v991
          %v1088 = vpack.c.b16 %v996, %v992
          %v1089 = vpack.c.b16 %v1001, %v997
          %v1090 = vpack.c.b16 %v1002, %v998
          %v1091 = vpack.c.b16 %v1003, %v999
          %v1092 = vpack.c.b16 %v1004, %v1000
          %v1093 = vpack.c.b16 %v1009, %v1005
          %v1094 = vpack.c.b16 %v1010, %v1006
          %v1095 = vpack.c.b16 %v1011, %v1007
          %v1096 = vpack.c.b16 %v1012, %v1008
          %v1097 = vpack.c.b16 %v1017, %v1013
          %v1098 = vpack.c.b16 %v1018, %v1014
          %v1099 = vpack.c.b16 %v1019, %v1015
          %v1100 = vpack.c.b16 %v1020, %v1016
          %v1101 = vpack.c.b16 %v1025, %v1021
          %v1102 = vpack.c.b16 %v1026, %v1022
          %v1103 = vpack.c.b16 %v1027, %v1023
          %v1104 = vpack.c.b16 %v1028, %v1024
          %v1105 = vpack.c.b16 %v1033, %v1029
          %v1106 = vpack.c.b16 %v1034, %v1030
          %v1107 = vpack.c.b16 %v1035, %v1031
          %v1108 = vpack.c.b16 %v1036, %v1032
          %v1109 = vpack.c.b16 %v1041, %v1037
          %v1110 = vpack.c.b16 %v1042, %v1038
          %v1111 = vpack.c.b16 %v1043, %v1039
          %v1112 = vpack.c.b16 %v1044, %v1040
          %v1113 = vpack.c.b16 %v1049, %v1045
          %v1114 = vpack.c.b16 %v1050, %v1046
          %v1115 = vpack.c.b16 %v1051, %v1047
          %v1116 = vpack.c.b16 %v1052, %v1048
          %1181 = vmatpush.bf16.msra.mxu0 %v1081
          %1182 = vmatpush.bf16.msra.mxu0 %v1077
          %1183 = vmatpush.bf16.msra.mxu0 %v1073
          %1184 = vmatpush.bf16.msra.mxu0 %v1069
          %1185 = vmatpush.bf16.msra.mxu0 %v1065
          %1186 = vmatpush.bf16.msra.mxu0 %v1061
          %1187 = vmatpush.bf16.msra.mxu0 %v1057
          %1188 = vmatpush.bf16.msra.mxu0 %v1053
          %1189 = vmatmul.bf16.gmra.mxu0 %v755
          %v1190 = vpop.f32.mrf.mxu0
          %v1191 = vadd.f32 %v853, %v1190
          %v1192 = vpop.f32.mrf.mxu0
          %v1193 = vadd.f32 %v853, %v1192
          %1194 = vmatmul.bf16.gmra.mxu0 %v757
          %v1195 = vpop.f32.mrf.mxu0
          %v1196 = vadd.f32 %v853, %v1195
          %v1197 = vpop.f32.mrf.mxu0
          %v1198 = vadd.f32 %v853, %v1197
          %1199 = vmatmul.bf16.gmra.mxu0 %v759
          %v1200 = vpop.f32.mrf.mxu0
          %v1201 = vadd.f32 %v853, %v1200
          %v1202 = vpop.f32.mrf.mxu0
          %v1203 = vadd.f32 %v853, %v1202
          %1204 = vmatmul.bf16.gmra.mxu0 %v761
          %v1205 = vpop.f32.mrf.mxu0
          %v1206 = vadd.f32 %v853, %v1205
          %v1207 = vpop.f32.mrf.mxu0
          %v1208 = vadd.f32 %v853, %v1207
          %1209 = vmatmul.bf16.gmra.mxu0 %v763
          %v1210 = vpop.f32.mrf.mxu0
          %v1211 = vadd.f32 %v853, %v1210
          %v1212 = vpop.f32.mrf.mxu0
          %v1213 = vadd.f32 %v853, %v1212
          %1214 = vmatmul.bf16.gmra.mxu0 %v765
          %v1215 = vpop.f32.mrf.mxu0
          %v1216 = vadd.f32 %v853, %v1215
          %v1217 = vpop.f32.mrf.mxu0
          %v1218 = vadd.f32 %v853, %v1217
          %1219 = vmatmul.bf16.gmra.mxu0 %v767
          %v1220 = vpop.f32.mrf.mxu0
          %v1221 = vadd.f32 %v853, %v1220
          %v1222 = vpop.f32.mrf.mxu0
          %v1223 = vadd.f32 %v853, %v1222
          %1224 = vmatmul.bf16.gmra.mxu0 %v769
          %v1225 = vpop.f32.mrf.mxu0
          %v1226 = vadd.f32 %v853, %v1225
          %v1227 = vpop.f32.mrf.mxu0
          %v1228 = vadd.f32 %v853, %v1227
          %1229 = vmatmul.bf16.gmra.mxu0 %v771
          %v1230 = vpop.f32.mrf.mxu0
          %v1231 = vadd.f32 %v853, %v1230
          %v1232 = vpop.f32.mrf.mxu0
          %v1233 = vadd.f32 %v853, %v1232
          %1234 = vmatmul.bf16.gmra.mxu0 %v773
          %v1235 = vpop.f32.mrf.mxu0
          %v1236 = vadd.f32 %v853, %v1235
          %v1237 = vpop.f32.mrf.mxu0
          %v1238 = vadd.f32 %v853, %v1237
          %1239 = vmatmul.bf16.gmra.mxu0 %v775
          %v1240 = vpop.f32.mrf.mxu0
          %v1241 = vadd.f32 %v853, %v1240
          %v1242 = vpop.f32.mrf.mxu0
          %v1243 = vadd.f32 %v853, %v1242
          %1244 = vmatmul.bf16.gmra.mxu0 %v777
          %v1245 = vpop.f32.mrf.mxu0
          %v1246 = vadd.f32 %v853, %v1245
          %v1247 = vpop.f32.mrf.mxu0
          %v1248 = vadd.f32 %v853, %v1247
          %1249 = vmatmul.bf16.gmra.mxu0 %v779
          %v1250 = vpop.f32.mrf.mxu0
          %v1251 = vadd.f32 %v853, %v1250
          %v1252 = vpop.f32.mrf.mxu0
          %v1253 = vadd.f32 %v853, %v1252
          %1254 = vmatmul.bf16.gmra.mxu0 %v781
          %v1255 = vpop.f32.mrf.mxu0
          %v1256 = vadd.f32 %v853, %v1255
          %v1257 = vpop.f32.mrf.mxu0
          %v1258 = vadd.f32 %v853, %v1257
          %1259 = vmatmul.bf16.gmra.mxu0 %v783
          %v1260 = vpop.f32.mrf.mxu0
          %v1261 = vadd.f32 %v853, %v1260
          %v1262 = vpop.f32.mrf.mxu0
          %v1263 = vadd.f32 %v853, %v1262
          %1264 = vmatmul.bf16.gmra.mxu0 %v785
          %v1265 = vpop.f32.mrf.mxu0
          %v1266 = vadd.f32 %v853, %v1265
          %v1267 = vpop.f32.mrf.mxu0
          %v1268 = vadd.f32 %v853, %v1267
          %1269 = vdwg.mxu0
          %1270 = vmatpush.bf16.msra.mxu0 %v1113
          %1271 = vmatpush.bf16.msra.mxu0 %v1109
          %1272 = vmatpush.bf16.msra.mxu0 %v1105
          %1273 = vmatpush.bf16.msra.mxu0 %v1101
          %1274 = vmatpush.bf16.msra.mxu0 %v1097
          %1275 = vmatpush.bf16.msra.mxu0 %v1093
          %1276 = vmatpush.bf16.msra.mxu0 %v1089
          %1277 = vmatpush.bf16.msra.mxu0 %v1085
          %1278 = vmatmul.bf16.gmra.mxu0 %v756
          %v1279 = vpop.f32.mrf.mxu0
          %v1280 = vadd.f32 %v1191, %v1279
          %v1281 = vpop.f32.mrf.mxu0
          %v1282 = vadd.f32 %v1193, %v1281
          %1283 = vmatmul.bf16.gmra.mxu0 %v758
          %v1284 = vpop.f32.mrf.mxu0
          %v1285 = vadd.f32 %v1196, %v1284
          %v1286 = vpop.f32.mrf.mxu0
          %v1287 = vadd.f32 %v1198, %v1286
          %1288 = vmatmul.bf16.gmra.mxu0 %v760
          %v1289 = vpop.f32.mrf.mxu0
          %v1290 = vadd.f32 %v1201, %v1289
          %v1291 = vpop.f32.mrf.mxu0
          %v1292 = vadd.f32 %v1203, %v1291
          %1293 = vmatmul.bf16.gmra.mxu0 %v762
          %v1294 = vpop.f32.mrf.mxu0
          %v1295 = vadd.f32 %v1206, %v1294
          %v1296 = vpop.f32.mrf.mxu0
          %v1297 = vadd.f32 %v1208, %v1296
          %1298 = vmatmul.bf16.gmra.mxu0 %v764
          %v1299 = vpop.f32.mrf.mxu0
          %v1300 = vadd.f32 %v1211, %v1299
          %v1301 = vpop.f32.mrf.mxu0
          %v1302 = vadd.f32 %v1213, %v1301
          %1303 = vmatmul.bf16.gmra.mxu0 %v766
          %v1304 = vpop.f32.mrf.mxu0
          %v1305 = vadd.f32 %v1216, %v1304
          %v1306 = vpop.f32.mrf.mxu0
          %v1307 = vadd.f32 %v1218, %v1306
          %1308 = vmatmul.bf16.gmra.mxu0 %v768
          %v1309 = vpop.f32.mrf.mxu0
          %v1310 = vadd.f32 %v1221, %v1309
          %v1311 = vpop.f32.mrf.mxu0
          %v1312 = vadd.f32 %v1223, %v1311
          %1313 = vmatmul.bf16.gmra.mxu0 %v770
          %v1314 = vpop.f32.mrf.mxu0
          %v1315 = vadd.f32 %v1226, %v1314
          %v1316 = vpop.f32.mrf.mxu0
          %v1317 = vadd.f32 %v1228, %v1316
          %1318 = vmatmul.bf16.gmra.mxu0 %v772
          %v1319 = vpop.f32.mrf.mxu0
          %v1320 = vadd.f32 %v1231, %v1319
          %v1321 = vpop.f32.mrf.mxu0
          %v1322 = vadd.f32 %v1233, %v1321
          %1323 = vmatmul.bf16.gmra.mxu0 %v774
          %v1324 = vpop.f32.mrf.mxu0
          %v1325 = vadd.f32 %v1236, %v1324
          %v1326 = vpop.f32.mrf.mxu0
          %v1327 = vadd.f32 %v1238, %v1326
          %1328 = vmatmul.bf16.gmra.mxu0 %v776
          %v1329 = vpop.f32.mrf.mxu0
          %v1330 = vadd.f32 %v1241, %v1329
          %v1331 = vpop.f32.mrf.mxu0
          %v1332 = vadd.f32 %v1243, %v1331
          %1333 = vmatmul.bf16.gmra.mxu0 %v778
          %v1334 = vpop.f32.mrf.mxu0
          %v1335 = vadd.f32 %v1246, %v1334
          %v1336 = vpop.f32.mrf.mxu0
          %v1337 = vadd.f32 %v1248, %v1336
          %1338 = vmatmul.bf16.gmra.mxu0 %v780
          %v1339 = vpop.f32.mrf.mxu0
          %v1340 = vadd.f32 %v1251, %v1339
          %v1341 = vpop.f32.mrf.mxu0
          %v1342 = vadd.f32 %v1253, %v1341
          %1343 = vmatmul.bf16.gmra.mxu0 %v782
          %v1344 = vpop.f32.mrf.mxu0
          %v1345 = vadd.f32 %v1256, %v1344
          %v1346 = vpop.f32.mrf.mxu0
          %v1347 = vadd.f32 %v1258, %v1346
          %1348 = vmatmul.bf16.gmra.mxu0 %v784
          %v1349 = vpop.f32.mrf.mxu0
          %v1350 = vadd.f32 %v1261, %v1349
          %v1351 = vpop.f32.mrf.mxu0
          %v1352 = vadd.f32 %v1263, %v1351
          %1353 = vmatmul.bf16.gmra.mxu0 %v786
          %v1354 = vpop.f32.mrf.mxu0
          %v1355 = vadd.f32 %v1266, %v1354
          %v1356 = vpop.f32.mrf.mxu0
          %v1357 = vadd.f32 %v1268, %v1356
          %1358 = vdwg.mxu0
          %1359 = vmatpush.bf16.msra.mxu0 %v1082
          %1360 = vmatpush.bf16.msra.mxu0 %v1078
          %1361 = vmatpush.bf16.msra.mxu0 %v1074
          %1362 = vmatpush.bf16.msra.mxu0 %v1070
          %1363 = vmatpush.bf16.msra.mxu0 %v1066
          %1364 = vmatpush.bf16.msra.mxu0 %v1062
          %1365 = vmatpush.bf16.msra.mxu0 %v1058
          %1366 = vmatpush.bf16.msra.mxu0 %v1054
          %1367 = vmatmul.bf16.gmra.mxu0 %v755
          %v1368 = vpop.f32.mrf.mxu0
          %v1369 = vadd.f32 %v854, %v1368
          %v1370 = vpop.f32.mrf.mxu0
          %v1371 = vadd.f32 %v854, %v1370
          %1372 = vmatmul.bf16.gmra.mxu0 %v757
          %v1373 = vpop.f32.mrf.mxu0
          %v1374 = vadd.f32 %v854, %v1373
          %v1375 = vpop.f32.mrf.mxu0
          %v1376 = vadd.f32 %v854, %v1375
          %1377 = vmatmul.bf16.gmra.mxu0 %v759
          %v1378 = vpop.f32.mrf.mxu0
          %v1379 = vadd.f32 %v854, %v1378
          %v1380 = vpop.f32.mrf.mxu0
          %v1381 = vadd.f32 %v854, %v1380
          %1382 = vmatmul.bf16.gmra.mxu0 %v761
          %v1383 = vpop.f32.mrf.mxu0
          %v1384 = vadd.f32 %v854, %v1383
          %v1385 = vpop.f32.mrf.mxu0
          %v1386 = vadd.f32 %v854, %v1385
          %1387 = vmatmul.bf16.gmra.mxu0 %v763
          %v1388 = vpop.f32.mrf.mxu0
          %v1389 = vadd.f32 %v854, %v1388
          %v1390 = vpop.f32.mrf.mxu0
          %v1391 = vadd.f32 %v854, %v1390
          %1392 = vmatmul.bf16.gmra.mxu0 %v765
          %v1393 = vpop.f32.mrf.mxu0
          %v1394 = vadd.f32 %v854, %v1393
          %v1395 = vpop.f32.mrf.mxu0
          %v1396 = vadd.f32 %v854, %v1395
          %1397 = vmatmul.bf16.gmra.mxu0 %v767
          %v1398 = vpop.f32.mrf.mxu0
          %v1399 = vadd.f32 %v854, %v1398
          %v1400 = vpop.f32.mrf.mxu0
          %v1401 = vadd.f32 %v854, %v1400
          %1402 = vmatmul.bf16.gmra.mxu0 %v769
          %v1403 = vpop.f32.mrf.mxu0
          %v1404 = vadd.f32 %v854, %v1403
          %v1405 = vpop.f32.mrf.mxu0
          %v1406 = vadd.f32 %v854, %v1405
          %1407 = vmatmul.bf16.gmra.mxu0 %v771
          %v1408 = vpop.f32.mrf.mxu0
          %v1409 = vadd.f32 %v854, %v1408
          %v1410 = vpop.f32.mrf.mxu0
          %v1411 = vadd.f32 %v854, %v1410
          %1412 = vmatmul.bf16.gmra.mxu0 %v773
          %v1413 = vpop.f32.mrf.mxu0
          %v1414 = vadd.f32 %v854, %v1413
          %v1415 = vpop.f32.mrf.mxu0
          %v1416 = vadd.f32 %v854, %v1415
          %1417 = vmatmul.bf16.gmra.mxu0 %v775
          %v1418 = vpop.f32.mrf.mxu0
          %v1419 = vadd.f32 %v854, %v1418
          %v1420 = vpop.f32.mrf.mxu0
          %v1421 = vadd.f32 %v854, %v1420
          %1422 = vmatmul.bf16.gmra.mxu0 %v777
          %v1423 = vpop.f32.mrf.mxu0
          %v1424 = vadd.f32 %v854, %v1423
          %v1425 = vpop.f32.mrf.mxu0
          %v1426 = vadd.f32 %v854, %v1425
          %1427 = vmatmul.bf16.gmra.mxu0 %v779
          %v1428 = vpop.f32.mrf.mxu0
          %v1429 = vadd.f32 %v854, %v1428
          %v1430 = vpop.f32.mrf.mxu0
          %v1431 = vadd.f32 %v854, %v1430
          %1432 = vmatmul.bf16.gmra.mxu0 %v781
          %v1433 = vpop.f32.mrf.mxu0
          %v1434 = vadd.f32 %v854, %v1433
          %v1435 = vpop.f32.mrf.mxu0
          %v1436 = vadd.f32 %v854, %v1435
          %1437 = vmatmul.bf16.gmra.mxu0 %v783
          %v1438 = vpop.f32.mrf.mxu0
          %v1439 = vadd.f32 %v854, %v1438
          %v1440 = vpop.f32.mrf.mxu0
          %v1441 = vadd.f32 %v854, %v1440
          %1442 = vmatmul.bf16.gmra.mxu0 %v785
          %v1443 = vpop.f32.mrf.mxu0
          %v1444 = vadd.f32 %v854, %v1443
          %v1445 = vpop.f32.mrf.mxu0
          %v1446 = vadd.f32 %v854, %v1445
          %1447 = vdwg.mxu0
          %1448 = vmatpush.bf16.msra.mxu0 %v1114
          %1449 = vmatpush.bf16.msra.mxu0 %v1110
          %1450 = vmatpush.bf16.msra.mxu0 %v1106
          %1451 = vmatpush.bf16.msra.mxu0 %v1102
          %1452 = vmatpush.bf16.msra.mxu0 %v1098
          %1453 = vmatpush.bf16.msra.mxu0 %v1094
          %1454 = vmatpush.bf16.msra.mxu0 %v1090
          %1455 = vmatpush.bf16.msra.mxu0 %v1086
          %1456 = vmatmul.bf16.gmra.mxu0 %v756
          %v1457 = vpop.f32.mrf.mxu0
          %v1458 = vadd.f32 %v1369, %v1457
          %v1459 = vpop.f32.mrf.mxu0
          %v1460 = vadd.f32 %v1371, %v1459
          %1461 = vmatmul.bf16.gmra.mxu0 %v758
          %v1462 = vpop.f32.mrf.mxu0
          %v1463 = vadd.f32 %v1374, %v1462
          %v1464 = vpop.f32.mrf.mxu0
          %v1465 = vadd.f32 %v1376, %v1464
          %1466 = vmatmul.bf16.gmra.mxu0 %v760
          %v1467 = vpop.f32.mrf.mxu0
          %v1468 = vadd.f32 %v1379, %v1467
          %v1469 = vpop.f32.mrf.mxu0
          %v1470 = vadd.f32 %v1381, %v1469
          %1471 = vmatmul.bf16.gmra.mxu0 %v762
          %v1472 = vpop.f32.mrf.mxu0
          %v1473 = vadd.f32 %v1384, %v1472
          %v1474 = vpop.f32.mrf.mxu0
          %v1475 = vadd.f32 %v1386, %v1474
          %1476 = vmatmul.bf16.gmra.mxu0 %v764
          %v1477 = vpop.f32.mrf.mxu0
          %v1478 = vadd.f32 %v1389, %v1477
          %v1479 = vpop.f32.mrf.mxu0
          %v1480 = vadd.f32 %v1391, %v1479
          %1481 = vmatmul.bf16.gmra.mxu0 %v766
          %v1482 = vpop.f32.mrf.mxu0
          %v1483 = vadd.f32 %v1394, %v1482
          %v1484 = vpop.f32.mrf.mxu0
          %v1485 = vadd.f32 %v1396, %v1484
          %1486 = vmatmul.bf16.gmra.mxu0 %v768
          %v1487 = vpop.f32.mrf.mxu0
          %v1488 = vadd.f32 %v1399, %v1487
          %v1489 = vpop.f32.mrf.mxu0
          %v1490 = vadd.f32 %v1401, %v1489
          %1491 = vmatmul.bf16.gmra.mxu0 %v770
          %v1492 = vpop.f32.mrf.mxu0
          %v1493 = vadd.f32 %v1404, %v1492
          %v1494 = vpop.f32.mrf.mxu0
          %v1495 = vadd.f32 %v1406, %v1494
          %1496 = vmatmul.bf16.gmra.mxu0 %v772
          %v1497 = vpop.f32.mrf.mxu0
          %v1498 = vadd.f32 %v1409, %v1497
          %v1499 = vpop.f32.mrf.mxu0
          %v1500 = vadd.f32 %v1411, %v1499
          %1501 = vmatmul.bf16.gmra.mxu0 %v774
          %v1502 = vpop.f32.mrf.mxu0
          %v1503 = vadd.f32 %v1414, %v1502
          %v1504 = vpop.f32.mrf.mxu0
          %v1505 = vadd.f32 %v1416, %v1504
          %1506 = vmatmul.bf16.gmra.mxu0 %v776
          %v1507 = vpop.f32.mrf.mxu0
          %v1508 = vadd.f32 %v1419, %v1507
          %v1509 = vpop.f32.mrf.mxu0
          %v1510 = vadd.f32 %v1421, %v1509
          %1511 = vmatmul.bf16.gmra.mxu0 %v778
          %v1512 = vpop.f32.mrf.mxu0
          %v1513 = vadd.f32 %v1424, %v1512
          %v1514 = vpop.f32.mrf.mxu0
          %v1515 = vadd.f32 %v1426, %v1514
          %1516 = vmatmul.bf16.gmra.mxu0 %v780
          %v1517 = vpop.f32.mrf.mxu0
          %v1518 = vadd.f32 %v1429, %v1517
          %v1519 = vpop.f32.mrf.mxu0
          %v1520 = vadd.f32 %v1431, %v1519
          %1521 = vmatmul.bf16.gmra.mxu0 %v782
          %v1522 = vpop.f32.mrf.mxu0
          %v1523 = vadd.f32 %v1434, %v1522
          %v1524 = vpop.f32.mrf.mxu0
          %v1525 = vadd.f32 %v1436, %v1524
          %1526 = vmatmul.bf16.gmra.mxu0 %v784
          %v1527 = vpop.f32.mrf.mxu0
          %v1528 = vadd.f32 %v1439, %v1527
          %v1529 = vpop.f32.mrf.mxu0
          %v1530 = vadd.f32 %v1441, %v1529
          %1531 = vmatmul.bf16.gmra.mxu0 %v786
          %v1532 = vpop.f32.mrf.mxu0
          %v1533 = vadd.f32 %v1444, %v1532
          %v1534 = vpop.f32.mrf.mxu0
          %v1535 = vadd.f32 %v1446, %v1534
          %1536 = vdwg.mxu0
          %1537 = vmatpush.bf16.msra.mxu0 %v1083
          %1538 = vmatpush.bf16.msra.mxu0 %v1079
          %1539 = vmatpush.bf16.msra.mxu0 %v1075
          %1540 = vmatpush.bf16.msra.mxu0 %v1071
          %1541 = vmatpush.bf16.msra.mxu0 %v1067
          %1542 = vmatpush.bf16.msra.mxu0 %v1063
          %1543 = vmatpush.bf16.msra.mxu0 %v1059
          %1544 = vmatpush.bf16.msra.mxu0 %v1055
          %1545 = vmatmul.bf16.gmra.mxu0 %v755
          %v1546 = vpop.f32.mrf.mxu0
          %v1547 = vadd.f32 %v855, %v1546
          %v1548 = vpop.f32.mrf.mxu0
          %v1549 = vadd.f32 %v855, %v1548
          %1550 = vmatmul.bf16.gmra.mxu0 %v757
          %v1551 = vpop.f32.mrf.mxu0
          %v1552 = vadd.f32 %v855, %v1551
          %v1553 = vpop.f32.mrf.mxu0
          %v1554 = vadd.f32 %v855, %v1553
          %1555 = vmatmul.bf16.gmra.mxu0 %v759
          %v1556 = vpop.f32.mrf.mxu0
          %v1557 = vadd.f32 %v855, %v1556
          %v1558 = vpop.f32.mrf.mxu0
          %v1559 = vadd.f32 %v855, %v1558
          %1560 = vmatmul.bf16.gmra.mxu0 %v761
          %v1561 = vpop.f32.mrf.mxu0
          %v1562 = vadd.f32 %v855, %v1561
          %v1563 = vpop.f32.mrf.mxu0
          %v1564 = vadd.f32 %v855, %v1563
          %1565 = vmatmul.bf16.gmra.mxu0 %v763
          %v1566 = vpop.f32.mrf.mxu0
          %v1567 = vadd.f32 %v855, %v1566
          %v1568 = vpop.f32.mrf.mxu0
          %v1569 = vadd.f32 %v855, %v1568
          %1570 = vmatmul.bf16.gmra.mxu0 %v765
          %v1571 = vpop.f32.mrf.mxu0
          %v1572 = vadd.f32 %v855, %v1571
          %v1573 = vpop.f32.mrf.mxu0
          %v1574 = vadd.f32 %v855, %v1573
          %1575 = vmatmul.bf16.gmra.mxu0 %v767
          %v1576 = vpop.f32.mrf.mxu0
          %v1577 = vadd.f32 %v855, %v1576
          %v1578 = vpop.f32.mrf.mxu0
          %v1579 = vadd.f32 %v855, %v1578
          %1580 = vmatmul.bf16.gmra.mxu0 %v769
          %v1581 = vpop.f32.mrf.mxu0
          %v1582 = vadd.f32 %v855, %v1581
          %v1583 = vpop.f32.mrf.mxu0
          %v1584 = vadd.f32 %v855, %v1583
          %1585 = vmatmul.bf16.gmra.mxu0 %v771
          %v1586 = vpop.f32.mrf.mxu0
          %v1587 = vadd.f32 %v855, %v1586
          %v1588 = vpop.f32.mrf.mxu0
          %v1589 = vadd.f32 %v855, %v1588
          %1590 = vmatmul.bf16.gmra.mxu0 %v773
          %v1591 = vpop.f32.mrf.mxu0
          %v1592 = vadd.f32 %v855, %v1591
          %v1593 = vpop.f32.mrf.mxu0
          %v1594 = vadd.f32 %v855, %v1593
          %1595 = vmatmul.bf16.gmra.mxu0 %v775
          %v1596 = vpop.f32.mrf.mxu0
          %v1597 = vadd.f32 %v855, %v1596
          %v1598 = vpop.f32.mrf.mxu0
          %v1599 = vadd.f32 %v855, %v1598
          %1600 = vmatmul.bf16.gmra.mxu0 %v777
          %v1601 = vpop.f32.mrf.mxu0
          %v1602 = vadd.f32 %v855, %v1601
          %v1603 = vpop.f32.mrf.mxu0
          %v1604 = vadd.f32 %v855, %v1603
          %1605 = vmatmul.bf16.gmra.mxu0 %v779
          %v1606 = vpop.f32.mrf.mxu0
          %v1607 = vadd.f32 %v855, %v1606
          %v1608 = vpop.f32.mrf.mxu0
          %v1609 = vadd.f32 %v855, %v1608
          %1610 = vmatmul.bf16.gmra.mxu0 %v781
          %v1611 = vpop.f32.mrf.mxu0
          %v1612 = vadd.f32 %v855, %v1611
          %v1613 = vpop.f32.mrf.mxu0
          %v1614 = vadd.f32 %v855, %v1613
          %1615 = vmatmul.bf16.gmra.mxu0 %v783
          %v1616 = vpop.f32.mrf.mxu0
          %v1617 = vadd.f32 %v855, %v1616
          %v1618 = vpop.f32.mrf.mxu0
          %v1619 = vadd.f32 %v855, %v1618
          %1620 = vmatmul.bf16.gmra.mxu0 %v785
          %v1621 = vpop.f32.mrf.mxu0
          %v1622 = vadd.f32 %v855, %v1621
          %v1623 = vpop.f32.mrf.mxu0
          %v1624 = vadd.f32 %v855, %v1623
          %1625 = vdwg.mxu0
          %1626 = vmatpush.bf16.msra.mxu0 %v1115
          %1627 = vmatpush.bf16.msra.mxu0 %v1111
          %1628 = vmatpush.bf16.msra.mxu0 %v1107
          %1629 = vmatpush.bf16.msra.mxu0 %v1103
          %1630 = vmatpush.bf16.msra.mxu0 %v1099
          %1631 = vmatpush.bf16.msra.mxu0 %v1095
          %1632 = vmatpush.bf16.msra.mxu0 %v1091
          %1633 = vmatpush.bf16.msra.mxu0 %v1087
          %1634 = vmatmul.bf16.gmra.mxu0 %v756
          %v1635 = vpop.f32.mrf.mxu0
          %v1636 = vadd.f32 %v1547, %v1635
          %v1637 = vpop.f32.mrf.mxu0
          %v1638 = vadd.f32 %v1549, %v1637
          %1639 = vmatmul.bf16.gmra.mxu0 %v758
          %v1640 = vpop.f32.mrf.mxu0
          %v1641 = vadd.f32 %v1552, %v1640
          %v1642 = vpop.f32.mrf.mxu0
          %v1643 = vadd.f32 %v1554, %v1642
          %1644 = vmatmul.bf16.gmra.mxu0 %v760
          %v1645 = vpop.f32.mrf.mxu0
          %v1646 = vadd.f32 %v1557, %v1645
          %v1647 = vpop.f32.mrf.mxu0
          %v1648 = vadd.f32 %v1559, %v1647
          %1649 = vmatmul.bf16.gmra.mxu0 %v762
          %v1650 = vpop.f32.mrf.mxu0
          %v1651 = vadd.f32 %v1562, %v1650
          %v1652 = vpop.f32.mrf.mxu0
          %v1653 = vadd.f32 %v1564, %v1652
          %1654 = vmatmul.bf16.gmra.mxu0 %v764
          %v1655 = vpop.f32.mrf.mxu0
          %v1656 = vadd.f32 %v1567, %v1655
          %v1657 = vpop.f32.mrf.mxu0
          %v1658 = vadd.f32 %v1569, %v1657
          %1659 = vmatmul.bf16.gmra.mxu0 %v766
          %v1660 = vpop.f32.mrf.mxu0
          %v1661 = vadd.f32 %v1572, %v1660
          %v1662 = vpop.f32.mrf.mxu0
          %v1663 = vadd.f32 %v1574, %v1662
          %1664 = vmatmul.bf16.gmra.mxu0 %v768
          %v1665 = vpop.f32.mrf.mxu0
          %v1666 = vadd.f32 %v1577, %v1665
          %v1667 = vpop.f32.mrf.mxu0
          %v1668 = vadd.f32 %v1579, %v1667
          %1669 = vmatmul.bf16.gmra.mxu0 %v770
          %v1670 = vpop.f32.mrf.mxu0
          %v1671 = vadd.f32 %v1582, %v1670
          %v1672 = vpop.f32.mrf.mxu0
          %v1673 = vadd.f32 %v1584, %v1672
          %1674 = vmatmul.bf16.gmra.mxu0 %v772
          %v1675 = vpop.f32.mrf.mxu0
          %v1676 = vadd.f32 %v1587, %v1675
          %v1677 = vpop.f32.mrf.mxu0
          %v1678 = vadd.f32 %v1589, %v1677
          %1679 = vmatmul.bf16.gmra.mxu0 %v774
          %v1680 = vpop.f32.mrf.mxu0
          %v1681 = vadd.f32 %v1592, %v1680
          %v1682 = vpop.f32.mrf.mxu0
          %v1683 = vadd.f32 %v1594, %v1682
          %1684 = vmatmul.bf16.gmra.mxu0 %v776
          %v1685 = vpop.f32.mrf.mxu0
          %v1686 = vadd.f32 %v1597, %v1685
          %v1687 = vpop.f32.mrf.mxu0
          %v1688 = vadd.f32 %v1599, %v1687
          %1689 = vmatmul.bf16.gmra.mxu0 %v778
          %v1690 = vpop.f32.mrf.mxu0
          %v1691 = vadd.f32 %v1602, %v1690
          %v1692 = vpop.f32.mrf.mxu0
          %v1693 = vadd.f32 %v1604, %v1692
          %1694 = vmatmul.bf16.gmra.mxu0 %v780
          %v1695 = vpop.f32.mrf.mxu0
          %v1696 = vadd.f32 %v1607, %v1695
          %v1697 = vpop.f32.mrf.mxu0
          %v1698 = vadd.f32 %v1609, %v1697
          %1699 = vmatmul.bf16.gmra.mxu0 %v782
          %v1700 = vpop.f32.mrf.mxu0
          %v1701 = vadd.f32 %v1612, %v1700
          %v1702 = vpop.f32.mrf.mxu0
          %v1703 = vadd.f32 %v1614, %v1702
          %1704 = vmatmul.bf16.gmra.mxu0 %v784
          %v1705 = vpop.f32.mrf.mxu0
          %v1706 = vadd.f32 %v1617, %v1705
          %v1707 = vpop.f32.mrf.mxu0
          %v1708 = vadd.f32 %v1619, %v1707
          %1709 = vmatmul.bf16.gmra.mxu0 %v786
          %v1710 = vpop.f32.mrf.mxu0
          %v1711 = vadd.f32 %v1622, %v1710
          %v1712 = vpop.f32.mrf.mxu0
          %v1713 = vadd.f32 %v1624, %v1712
          %1714 = vdwg.mxu0
          %1715 = vmatpush.bf16.msra.mxu0 %v1084
          %1716 = vmatpush.bf16.msra.mxu0 %v1080
          %1717 = vmatpush.bf16.msra.mxu0 %v1076
          %1718 = vmatpush.bf16.msra.mxu0 %v1072
          %1719 = vmatpush.bf16.msra.mxu0 %v1068
          %1720 = vmatpush.bf16.msra.mxu0 %v1064
          %1721 = vmatpush.bf16.msra.mxu0 %v1060
          %1722 = vmatpush.bf16.msra.mxu0 %v1056
          %1723 = vmatmul.bf16.gmra.mxu0 %v755
          %v1724 = vpop.f32.mrf.mxu0
          %v1725 = vadd.f32 %v856, %v1724
          %v1726 = vpop.f32.mrf.mxu0
          %v1727 = vadd.f32 %v856, %v1726
          %1728 = vmatmul.bf16.gmra.mxu0 %v757
          %v1729 = vpop.f32.mrf.mxu0
          %v1730 = vadd.f32 %v856, %v1729
          %v1731 = vpop.f32.mrf.mxu0
          %v1732 = vadd.f32 %v856, %v1731
          %1733 = vmatmul.bf16.gmra.mxu0 %v759
          %v1734 = vpop.f32.mrf.mxu0
          %v1735 = vadd.f32 %v856, %v1734
          %v1736 = vpop.f32.mrf.mxu0
          %v1737 = vadd.f32 %v856, %v1736
          %1738 = vmatmul.bf16.gmra.mxu0 %v761
          %v1739 = vpop.f32.mrf.mxu0
          %v1740 = vadd.f32 %v856, %v1739
          %v1741 = vpop.f32.mrf.mxu0
          %v1742 = vadd.f32 %v856, %v1741
          %1743 = vmatmul.bf16.gmra.mxu0 %v763
          %v1744 = vpop.f32.mrf.mxu0
          %v1745 = vadd.f32 %v856, %v1744
          %v1746 = vpop.f32.mrf.mxu0
          %v1747 = vadd.f32 %v856, %v1746
          %1748 = vmatmul.bf16.gmra.mxu0 %v765
          %v1749 = vpop.f32.mrf.mxu0
          %v1750 = vadd.f32 %v856, %v1749
          %v1751 = vpop.f32.mrf.mxu0
          %v1752 = vadd.f32 %v856, %v1751
          %1753 = vmatmul.bf16.gmra.mxu0 %v767
          %v1754 = vpop.f32.mrf.mxu0
          %v1755 = vadd.f32 %v856, %v1754
          %v1756 = vpop.f32.mrf.mxu0
          %v1757 = vadd.f32 %v856, %v1756
          %1758 = vmatmul.bf16.gmra.mxu0 %v769
          %v1759 = vpop.f32.mrf.mxu0
          %v1760 = vadd.f32 %v856, %v1759
          %v1761 = vpop.f32.mrf.mxu0
          %v1762 = vadd.f32 %v856, %v1761
          %1763 = vmatmul.bf16.gmra.mxu0 %v771
          %v1764 = vpop.f32.mrf.mxu0
          %v1765 = vadd.f32 %v856, %v1764
          %v1766 = vpop.f32.mrf.mxu0
          %v1767 = vadd.f32 %v856, %v1766
          %1768 = vmatmul.bf16.gmra.mxu0 %v773
          %v1769 = vpop.f32.mrf.mxu0
          %v1770 = vadd.f32 %v856, %v1769
          %v1771 = vpop.f32.mrf.mxu0
          %v1772 = vadd.f32 %v856, %v1771
          %1773 = vmatmul.bf16.gmra.mxu0 %v775
          %v1774 = vpop.f32.mrf.mxu0
          %v1775 = vadd.f32 %v856, %v1774
          %v1776 = vpop.f32.mrf.mxu0
          %v1777 = vadd.f32 %v856, %v1776
          %1778 = vmatmul.bf16.gmra.mxu0 %v777
          %v1779 = vpop.f32.mrf.mxu0
          %v1780 = vadd.f32 %v856, %v1779
          %v1781 = vpop.f32.mrf.mxu0
          %v1782 = vadd.f32 %v856, %v1781
          %1783 = vmatmul.bf16.gmra.mxu0 %v779
          %v1784 = vpop.f32.mrf.mxu0
          %v1785 = vadd.f32 %v856, %v1784
          %v1786 = vpop.f32.mrf.mxu0
          %v1787 = vadd.f32 %v856, %v1786
          %1788 = vmatmul.bf16.gmra.mxu0 %v781
          %v1789 = vpop.f32.mrf.mxu0
          %v1790 = vadd.f32 %v856, %v1789
          %v1791 = vpop.f32.mrf.mxu0
          %v1792 = vadd.f32 %v856, %v1791
          %1793 = vmatmul.bf16.gmra.mxu0 %v783
          %v1794 = vpop.f32.mrf.mxu0
          %v1795 = vadd.f32 %v856, %v1794
          %v1796 = vpop.f32.mrf.mxu0
          %v1797 = vadd.f32 %v856, %v1796
          %1798 = vmatmul.bf16.gmra.mxu0 %v785
          %v1799 = vpop.f32.mrf.mxu0
          %v1800 = vadd.f32 %v856, %v1799
          %v1801 = vpop.f32.mrf.mxu0
          %v1802 = vadd.f32 %v856, %v1801
          %1803 = vdwg.mxu0
          %1804 = vmatpush.bf16.msra.mxu0 %v1116
          %1805 = vmatpush.bf16.msra.mxu0 %v1112
          %1806 = vmatpush.bf16.msra.mxu0 %v1108
          %1807 = vmatpush.bf16.msra.mxu0 %v1104
          %1808 = vmatpush.bf16.msra.mxu0 %v1100
          %1809 = vmatpush.bf16.msra.mxu0 %v1096
          %1810 = vmatpush.bf16.msra.mxu0 %v1092
          %1811 = vmatpush.bf16.msra.mxu0 %v1088
          %1812 = vmatmul.bf16.gmra.mxu0 %v756
          %v1813 = vpop.f32.mrf.mxu0
          %v1814 = vadd.f32 %v1725, %v1813
          %v1815 = vpop.f32.mrf.mxu0
          %v1816 = vadd.f32 %v1727, %v1815
          %1817 = vmatmul.bf16.gmra.mxu0 %v758
          %v1818 = vpop.f32.mrf.mxu0
          %v1819 = vadd.f32 %v1730, %v1818
          %v1820 = vpop.f32.mrf.mxu0
          %v1821 = vadd.f32 %v1732, %v1820
          %1822 = vmatmul.bf16.gmra.mxu0 %v760
          %v1823 = vpop.f32.mrf.mxu0
          %v1824 = vadd.f32 %v1735, %v1823
          %v1825 = vpop.f32.mrf.mxu0
          %v1826 = vadd.f32 %v1737, %v1825
          %1827 = vmatmul.bf16.gmra.mxu0 %v762
          %v1828 = vpop.f32.mrf.mxu0
          %v1829 = vadd.f32 %v1740, %v1828
          %v1830 = vpop.f32.mrf.mxu0
          %v1831 = vadd.f32 %v1742, %v1830
          %1832 = vmatmul.bf16.gmra.mxu0 %v764
          %v1833 = vpop.f32.mrf.mxu0
          %v1834 = vadd.f32 %v1745, %v1833
          %v1835 = vpop.f32.mrf.mxu0
          %v1836 = vadd.f32 %v1747, %v1835
          %1837 = vmatmul.bf16.gmra.mxu0 %v766
          %v1838 = vpop.f32.mrf.mxu0
          %v1839 = vadd.f32 %v1750, %v1838
          %v1840 = vpop.f32.mrf.mxu0
          %v1841 = vadd.f32 %v1752, %v1840
          %1842 = vmatmul.bf16.gmra.mxu0 %v768
          %v1843 = vpop.f32.mrf.mxu0
          %v1844 = vadd.f32 %v1755, %v1843
          %v1845 = vpop.f32.mrf.mxu0
          %v1846 = vadd.f32 %v1757, %v1845
          %1847 = vmatmul.bf16.gmra.mxu0 %v770
          %v1848 = vpop.f32.mrf.mxu0
          %v1849 = vadd.f32 %v1760, %v1848
          %v1850 = vpop.f32.mrf.mxu0
          %v1851 = vadd.f32 %v1762, %v1850
          %1852 = vmatmul.bf16.gmra.mxu0 %v772
          %v1853 = vpop.f32.mrf.mxu0
          %v1854 = vadd.f32 %v1765, %v1853
          %v1855 = vpop.f32.mrf.mxu0
          %v1856 = vadd.f32 %v1767, %v1855
          %1857 = vmatmul.bf16.gmra.mxu0 %v774
          %v1858 = vpop.f32.mrf.mxu0
          %v1859 = vadd.f32 %v1770, %v1858
          %v1860 = vpop.f32.mrf.mxu0
          %v1861 = vadd.f32 %v1772, %v1860
          %1862 = vmatmul.bf16.gmra.mxu0 %v776
          %v1863 = vpop.f32.mrf.mxu0
          %v1864 = vadd.f32 %v1775, %v1863
          %v1865 = vpop.f32.mrf.mxu0
          %v1866 = vadd.f32 %v1777, %v1865
          %1867 = vmatmul.bf16.gmra.mxu0 %v778
          %v1868 = vpop.f32.mrf.mxu0
          %v1869 = vadd.f32 %v1780, %v1868
          %v1870 = vpop.f32.mrf.mxu0
          %v1871 = vadd.f32 %v1782, %v1870
          %1872 = vmatmul.bf16.gmra.mxu0 %v780
          %v1873 = vpop.f32.mrf.mxu0
          %v1874 = vadd.f32 %v1785, %v1873
          %v1875 = vpop.f32.mrf.mxu0
          %v1876 = vadd.f32 %v1787, %v1875
          %1877 = vmatmul.bf16.gmra.mxu0 %v782
          %v1878 = vpop.f32.mrf.mxu0
          %v1879 = vadd.f32 %v1790, %v1878
          %v1880 = vpop.f32.mrf.mxu0
          %v1881 = vadd.f32 %v1792, %v1880
          %1882 = vmatmul.bf16.gmra.mxu0 %v784
          %v1883 = vpop.f32.mrf.mxu0
          %v1884 = vadd.f32 %v1795, %v1883
          %v1885 = vpop.f32.mrf.mxu0
          %v1886 = vadd.f32 %v1797, %v1885
          %1887 = vmatmul.bf16.gmra.mxu0 %v786
          %v1888 = vpop.f32.mrf.mxu0
          %v1889 = vadd.f32 %v1800, %v1888
          %v1890 = vpop.f32.mrf.mxu0
          %v1891 = vadd.f32 %v1802, %v1890
          %1892 = vdwg.mxu0
          %v1893 = vpack.c.bf16 %v1458, %v1280
          %v1894 = vpack.c.bf16 %v1814, %v1636
          %v1895 = vpack.c.bf16 %v1460, %v1282
          %v1896 = vpack.c.bf16 %v1816, %v1638
          %v1897 = vpack.c.bf16 %v1463, %v1285
          %v1898 = vpack.c.bf16 %v1819, %v1641
          %v1899 = vpack.c.bf16 %v1465, %v1287
          %v1900 = vpack.c.bf16 %v1821, %v1643
          %v1901 = vpack.c.bf16 %v1468, %v1290
          %v1902 = vpack.c.bf16 %v1824, %v1646
          %v1903 = vpack.c.bf16 %v1470, %v1292
          %v1904 = vpack.c.bf16 %v1826, %v1648
          %v1905 = vpack.c.bf16 %v1473, %v1295
          %v1906 = vpack.c.bf16 %v1829, %v1651
          %v1907 = vpack.c.bf16 %v1475, %v1297
          %v1908 = vpack.c.bf16 %v1831, %v1653
          %v1909 = vpack.c.bf16 %v1478, %v1300
          %v1910 = vpack.c.bf16 %v1834, %v1656
          %v1911 = vpack.c.bf16 %v1480, %v1302
          %v1912 = vpack.c.bf16 %v1836, %v1658
          %v1913 = vpack.c.bf16 %v1483, %v1305
          %v1914 = vpack.c.bf16 %v1839, %v1661
          %v1915 = vpack.c.bf16 %v1485, %v1307
          %v1916 = vpack.c.bf16 %v1841, %v1663
          %v1917 = vpack.c.bf16 %v1488, %v1310
          %v1918 = vpack.c.bf16 %v1844, %v1666
          %v1919 = vpack.c.bf16 %v1490, %v1312
          %v1920 = vpack.c.bf16 %v1846, %v1668
          %v1921 = vpack.c.bf16 %v1493, %v1315
          %v1922 = vpack.c.bf16 %v1849, %v1671
          %v1923 = vpack.c.bf16 %v1495, %v1317
          %v1924 = vpack.c.bf16 %v1851, %v1673
          %v1925 = vpack.c.bf16 %v1498, %v1320
          %v1926 = vpack.c.bf16 %v1854, %v1676
          %v1927 = vpack.c.bf16 %v1500, %v1322
          %v1928 = vpack.c.bf16 %v1856, %v1678
          %v1929 = vpack.c.bf16 %v1503, %v1325
          %v1930 = vpack.c.bf16 %v1859, %v1681
          %v1931 = vpack.c.bf16 %v1505, %v1327
          %v1932 = vpack.c.bf16 %v1861, %v1683
          %v1933 = vpack.c.bf16 %v1508, %v1330
          %v1934 = vpack.c.bf16 %v1864, %v1686
          %v1935 = vpack.c.bf16 %v1510, %v1332
          %v1936 = vpack.c.bf16 %v1866, %v1688
          %v1937 = vpack.c.bf16 %v1513, %v1335
          %v1938 = vpack.c.bf16 %v1869, %v1691
          %v1939 = vpack.c.bf16 %v1515, %v1337
          %v1940 = vpack.c.bf16 %v1871, %v1693
          %v1941 = vpack.c.bf16 %v1518, %v1340
          %v1942 = vpack.c.bf16 %v1874, %v1696
          %v1943 = vpack.c.bf16 %v1520, %v1342
          %v1944 = vpack.c.bf16 %v1876, %v1698
          %v1945 = vpack.c.bf16 %v1523, %v1345
          %v1946 = vpack.c.bf16 %v1879, %v1701
          %v1947 = vpack.c.bf16 %v1525, %v1347
          %v1948 = vpack.c.bf16 %v1881, %v1703
          %v1949 = vpack.c.bf16 %v1528, %v1350
          %v1950 = vpack.c.bf16 %v1884, %v1706
          %v1951 = vpack.c.bf16 %v1530, %v1352
          %v1952 = vpack.c.bf16 %v1886, %v1708
          %v1953 = vpack.c.bf16 %v1533, %v1355
          %v1954 = vpack.c.bf16 %v1889, %v1711
          %v1955 = vpack.c.bf16 %v1535, %v1357
          %v1956 = vpack.c.bf16 %v1891, %v1713
          %v1989 = vrot.slane %v1893, 4
          %v1990 = vrot.slane %v1895, 4
          %v1991 = vrot.slane %v1897, 4
          %v1992 = vrot.slane %v1899, 4
          %v1993 = vrot.slane %v1901, 4
          %v1994 = vrot.slane %v1903, 4
          %v1995 = vrot.slane %v1905, 4
          %v1996 = vrot.slane %v1907, 4
          %v1997 = vrot.slane %v1909, 4
          %v1998 = vrot.slane %v1911, 4
          %v1999 = vrot.slane %v1913, 4
          %v2000 = vrot.slane %v1915, 4
          %v2001 = vrot.slane %v1917, 4
          %v2002 = vrot.slane %v1919, 4
          %v2003 = vrot.slane %v1921, 4
          %v2004 = vrot.slane %v1923, 4
          %v2005 = vrot.slane %v1925, 4
          %v2006 = vrot.slane %v1927, 4
          %v2007 = vrot.slane %v1929, 4
          %v2008 = vrot.slane %v1931, 4
          %v2009 = vrot.slane %v1933, 4
          %v2010 = vrot.slane %v1935, 4
          %v2011 = vrot.slane %v1937, 4
          %v2012 = vrot.slane %v1939, 4
          %v2013 = vrot.slane %v1941, 4
          %v2014 = vrot.slane %v1943, 4
          %v2015 = vrot.slane %v1945, 4
          %v2016 = vrot.slane %v1947, 4
          %v2017 = vrot.slane %v1949, 4
          %v2018 = vrot.slane %v1951, 4
          %v2019 = vrot.slane %v1953, 4
          %v2020 = vrot.slane %v1955, 4
          %v2023 = vpack.i.b16 %v1989, %v1893
          %v2024 = vshrl.u32 %v1893, 16
          %v2025 = vshrl.u32 %v1989, 16
          %v2026 = vpack.i.b16 %v2025, %v2024
          %v2029 = vpack.i.b16 %v1990, %v1895
          %v2030 = vshrl.u32 %v1895, 16
          %v2031 = vshrl.u32 %v1990, 16
          %v2032 = vpack.i.b16 %v2031, %v2030
          %v2035 = vpack.i.b16 %v1991, %v1897
          %v2036 = vshrl.u32 %v1897, 16
          %v2037 = vshrl.u32 %v1991, 16
          %v2038 = vpack.i.b16 %v2037, %v2036
          %v2041 = vpack.i.b16 %v1992, %v1899
          %v2042 = vshrl.u32 %v1899, 16
          %v2043 = vshrl.u32 %v1992, 16
          %v2044 = vpack.i.b16 %v2043, %v2042
          %v2047 = vpack.i.b16 %v1993, %v1901
          %v2048 = vshrl.u32 %v1901, 16
          %v2049 = vshrl.u32 %v1993, 16
          %v2050 = vpack.i.b16 %v2049, %v2048
          %v2053 = vpack.i.b16 %v1994, %v1903
          %v2054 = vshrl.u32 %v1903, 16
          %v2055 = vshrl.u32 %v1994, 16
          %v2056 = vpack.i.b16 %v2055, %v2054
          %v2059 = vpack.i.b16 %v1995, %v1905
          %v2060 = vshrl.u32 %v1905, 16
          %v2061 = vshrl.u32 %v1995, 16
          %v2062 = vpack.i.b16 %v2061, %v2060
          %v2065 = vpack.i.b16 %v1996, %v1907
          %v2066 = vshrl.u32 %v1907, 16
          %v2067 = vshrl.u32 %v1996, 16
          %v2068 = vpack.i.b16 %v2067, %v2066
          %v2071 = vpack.i.b16 %v1997, %v1909
          %v2072 = vshrl.u32 %v1909, 16
          %v2073 = vshrl.u32 %v1997, 16
          %v2074 = vpack.i.b16 %v2073, %v2072
          %v2077 = vpack.i.b16 %v1998, %v1911
          %v2078 = vshrl.u32 %v1911, 16
          %v2079 = vshrl.u32 %v1998, 16
          %v2080 = vpack.i.b16 %v2079, %v2078
          %v2083 = vpack.i.b16 %v1999, %v1913
          %v2084 = vshrl.u32 %v1913, 16
          %v2085 = vshrl.u32 %v1999, 16
          %v2086 = vpack.i.b16 %v2085, %v2084
          %v2089 = vpack.i.b16 %v2000, %v1915
          %v2090 = vshrl.u32 %v1915, 16
          %v2091 = vshrl.u32 %v2000, 16
          %v2092 = vpack.i.b16 %v2091, %v2090
          %v2095 = vpack.i.b16 %v2001, %v1917
          %v2096 = vshrl.u32 %v1917, 16
          %v2097 = vshrl.u32 %v2001, 16
          %v2098 = vpack.i.b16 %v2097, %v2096
          %v2101 = vpack.i.b16 %v2002, %v1919
          %v2102 = vshrl.u32 %v1919, 16
          %v2103 = vshrl.u32 %v2002, 16
          %v2104 = vpack.i.b16 %v2103, %v2102
          %v2107 = vpack.i.b16 %v2003, %v1921
          %v2108 = vshrl.u32 %v1921, 16
          %v2109 = vshrl.u32 %v2003, 16
          %v2110 = vpack.i.b16 %v2109, %v2108
          %v2113 = vpack.i.b16 %v2004, %v1923
          %v2114 = vshrl.u32 %v1923, 16
          %v2115 = vshrl.u32 %v2004, 16
          %v2116 = vpack.i.b16 %v2115, %v2114
          %v2119 = vpack.i.b16 %v2005, %v1925
          %v2120 = vshrl.u32 %v1925, 16
          %v2121 = vshrl.u32 %v2005, 16
          %v2122 = vpack.i.b16 %v2121, %v2120
          %v2125 = vpack.i.b16 %v2006, %v1927
          %v2126 = vshrl.u32 %v1927, 16
          %v2127 = vshrl.u32 %v2006, 16
          %v2128 = vpack.i.b16 %v2127, %v2126
          %v2131 = vpack.i.b16 %v2007, %v1929
          %v2132 = vshrl.u32 %v1929, 16
          %v2133 = vshrl.u32 %v2007, 16
          %v2134 = vpack.i.b16 %v2133, %v2132
          %v2137 = vpack.i.b16 %v2008, %v1931
          %v2138 = vshrl.u32 %v1931, 16
          %v2139 = vshrl.u32 %v2008, 16
          %v2140 = vpack.i.b16 %v2139, %v2138
          %v2143 = vpack.i.b16 %v2009, %v1933
          %v2144 = vshrl.u32 %v1933, 16
          %v2145 = vshrl.u32 %v2009, 16
          %v2146 = vpack.i.b16 %v2145, %v2144
          %v2149 = vpack.i.b16 %v2010, %v1935
          %v2150 = vshrl.u32 %v1935, 16
          %v2151 = vshrl.u32 %v2010, 16
          %v2152 = vpack.i.b16 %v2151, %v2150
          %v2155 = vpack.i.b16 %v2011, %v1937
          %v2156 = vshrl.u32 %v1937, 16
          %v2157 = vshrl.u32 %v2011, 16
          %v2158 = vpack.i.b16 %v2157, %v2156
          %v2161 = vpack.i.b16 %v2012, %v1939
          %v2162 = vshrl.u32 %v1939, 16
          %v2163 = vshrl.u32 %v2012, 16
          %v2164 = vpack.i.b16 %v2163, %v2162
          %v2167 = vpack.i.b16 %v2013, %v1941
          %v2168 = vshrl.u32 %v1941, 16
          %v2169 = vshrl.u32 %v2013, 16
          %v2170 = vpack.i.b16 %v2169, %v2168
          %v2173 = vpack.i.b16 %v2014, %v1943
          %v2174 = vshrl.u32 %v1943, 16
          %v2175 = vshrl.u32 %v2014, 16
          %v2176 = vpack.i.b16 %v2175, %v2174
          %v2179 = vpack.i.b16 %v2015, %v1945
          %v2180 = vshrl.u32 %v1945, 16
          %v2181 = vshrl.u32 %v2015, 16
          %v2182 = vpack.i.b16 %v2181, %v2180
          %v2185 = vpack.i.b16 %v2016, %v1947
          %v2186 = vshrl.u32 %v1947, 16
          %v2187 = vshrl.u32 %v2016, 16
          %v2188 = vpack.i.b16 %v2187, %v2186
          %v2191 = vpack.i.b16 %v2017, %v1949
          %v2192 = vshrl.u32 %v1949, 16
          %v2193 = vshrl.u32 %v2017, 16
          %v2194 = vpack.i.b16 %v2193, %v2192
          %v2197 = vpack.i.b16 %v2018, %v1951
          %v2198 = vshrl.u32 %v1951, 16
          %v2199 = vshrl.u32 %v2018, 16
          %v2200 = vpack.i.b16 %v2199, %v2198
          %v2203 = vpack.i.b16 %v2019, %v1953
          %v2204 = vshrl.u32 %v1953, 16
          %v2205 = vshrl.u32 %v2019, 16
          %v2206 = vpack.i.b16 %v2205, %v2204
          %v2209 = vpack.i.b16 %v2020, %v1955
          %v2210 = vshrl.u32 %v1955, 16
          %v2211 = vshrl.u32 %v2020, 16
          %v2212 = vpack.i.b16 %v2211, %v2210
          %v2215 = vunpack.c.l.s4 1983009808
          %v2216 = vunpack.c.0.s8 %v2215
          %v2217 = vperm.slane %v2023, %v2216
          %v2218 = vrot.slane %v2217, 4
          %vm2219 = vcmask 1047556
          %v2220 = vsel %vm2219, 0, %v2218
          %v2222 = vunpack.c.l.s4 1934713408
          %v2223 = vunpack.c.0.s8 %v2222
          %v2224 = vperm.slane %v2217, %v2223
          %v2226 = vunpack.c.l.s4 1934713408
          %v2227 = vunpack.c.0.s8 %v2226
          %v2228 = vperm.slane %v2220, %v2227
          %v2229 = vrot.slane %v2224, 4
          %v2230 = vsel %vm2219, 0, %v2229
          %v2231 = vrot.slane %v2228, 4
          %v2232 = vsel %vm2219, 0, %v2231
          %v2235 = vunpack.c.l.s4 1983009808
          %v2236 = vunpack.c.0.s8 %v2235
          %v2237 = vperm.slane %v2026, %v2236
          %v2238 = vrot.slane %v2237, 4
          %v2239 = vsel %vm2219, 0, %v2238
          %v2241 = vunpack.c.l.s4 1934713408
          %v2242 = vunpack.c.0.s8 %v2241
          %v2243 = vperm.slane %v2237, %v2242
          %v2245 = vunpack.c.l.s4 1934713408
          %v2246 = vunpack.c.0.s8 %v2245
          %v2247 = vperm.slane %v2239, %v2246
          %v2248 = vrot.slane %v2243, 4
          %v2249 = vsel %vm2219, 0, %v2248
          %v2250 = vrot.slane %v2247, 4
          %v2251 = vsel %vm2219, 0, %v2250
          %v2254 = vunpack.c.l.s4 1983009808
          %v2255 = vunpack.c.0.s8 %v2254
          %v2256 = vperm.slane %v2029, %v2255
          %v2257 = vrot.slane %v2256, 4
          %v2258 = vsel %vm2219, 0, %v2257
          %v2260 = vunpack.c.l.s4 1934713408
          %v2261 = vunpack.c.0.s8 %v2260
          %v2262 = vperm.slane %v2256, %v2261
          %v2264 = vunpack.c.l.s4 1934713408
          %v2265 = vunpack.c.0.s8 %v2264
          %v2266 = vperm.slane %v2258, %v2265
          %v2267 = vrot.slane %v2262, 4
          %v2268 = vsel %vm2219, 0, %v2267
          %v2269 = vrot.slane %v2266, 4
          %v2270 = vsel %vm2219, 0, %v2269
          %v2273 = vunpack.c.l.s4 1983009808
          %v2274 = vunpack.c.0.s8 %v2273
          %v2275 = vperm.slane %v2032, %v2274
          %v2276 = vrot.slane %v2275, 4
          %v2277 = vsel %vm2219, 0, %v2276
          %v2279 = vunpack.c.l.s4 1934713408
          %v2280 = vunpack.c.0.s8 %v2279
          %v2281 = vperm.slane %v2275, %v2280
          %v2283 = vunpack.c.l.s4 1934713408
          %v2284 = vunpack.c.0.s8 %v2283
          %v2285 = vperm.slane %v2277, %v2284
          %v2286 = vrot.slane %v2281, 4
          %v2287 = vsel %vm2219, 0, %v2286
          %v2288 = vrot.slane %v2285, 4
          %v2289 = vsel %vm2219, 0, %v2288
          %v2292 = vunpack.c.l.s4 1983009808
          %v2293 = vunpack.c.0.s8 %v2292
          %v2294 = vperm.slane %v2035, %v2293
          %v2295 = vrot.slane %v2294, 4
          %v2296 = vsel %vm2219, 0, %v2295
          %v2298 = vunpack.c.l.s4 1934713408
          %v2299 = vunpack.c.0.s8 %v2298
          %v2300 = vperm.slane %v2294, %v2299
          %v2302 = vunpack.c.l.s4 1934713408
          %v2303 = vunpack.c.0.s8 %v2302
          %v2304 = vperm.slane %v2296, %v2303
          %v2305 = vrot.slane %v2300, 4
          %v2306 = vsel %vm2219, 0, %v2305
          %v2307 = vrot.slane %v2304, 4
          %v2308 = vsel %vm2219, 0, %v2307
          %v2311 = vunpack.c.l.s4 1983009808
          %v2312 = vunpack.c.0.s8 %v2311
          %v2313 = vperm.slane %v2038, %v2312
          %v2314 = vrot.slane %v2313, 4
          %v2315 = vsel %vm2219, 0, %v2314
          %v2317 = vunpack.c.l.s4 1934713408
          %v2318 = vunpack.c.0.s8 %v2317
          %v2319 = vperm.slane %v2313, %v2318
          %v2321 = vunpack.c.l.s4 1934713408
          %v2322 = vunpack.c.0.s8 %v2321
          %v2323 = vperm.slane %v2315, %v2322
          %v2324 = vrot.slane %v2319, 4
          %v2325 = vsel %vm2219, 0, %v2324
          %v2326 = vrot.slane %v2323, 4
          %v2327 = vsel %vm2219, 0, %v2326
          %v2330 = vunpack.c.l.s4 1983009808
          %v2331 = vunpack.c.0.s8 %v2330
          %v2332 = vperm.slane %v2041, %v2331
          %v2333 = vrot.slane %v2332, 4
          %v2334 = vsel %vm2219, 0, %v2333
          %v2336 = vunpack.c.l.s4 1934713408
          %v2337 = vunpack.c.0.s8 %v2336
          %v2338 = vperm.slane %v2332, %v2337
          %v2340 = vunpack.c.l.s4 1934713408
          %v2341 = vunpack.c.0.s8 %v2340
          %v2342 = vperm.slane %v2334, %v2341
          %v2343 = vrot.slane %v2338, 4
          %v2344 = vsel %vm2219, 0, %v2343
          %v2345 = vrot.slane %v2342, 4
          %v2346 = vsel %vm2219, 0, %v2345
          %v2349 = vunpack.c.l.s4 1983009808
          %v2350 = vunpack.c.0.s8 %v2349
          %v2351 = vperm.slane %v2044, %v2350
          %v2352 = vrot.slane %v2351, 4
          %v2353 = vsel %vm2219, 0, %v2352
          %v2355 = vunpack.c.l.s4 1934713408
          %v2356 = vunpack.c.0.s8 %v2355
          %v2357 = vperm.slane %v2351, %v2356
          %v2359 = vunpack.c.l.s4 1934713408
          %v2360 = vunpack.c.0.s8 %v2359
          %v2361 = vperm.slane %v2353, %v2360
          %v2362 = vrot.slane %v2357, 4
          %v2363 = vsel %vm2219, 0, %v2362
          %v2364 = vrot.slane %v2361, 4
          %v2365 = vsel %vm2219, 0, %v2364
          %v2368 = vunpack.c.l.s4 1983009808
          %v2369 = vunpack.c.0.s8 %v2368
          %v2370 = vperm.slane %v2047, %v2369
          %v2371 = vrot.slane %v2370, 4
          %v2372 = vsel %vm2219, 0, %v2371
          %v2374 = vunpack.c.l.s4 1934713408
          %v2375 = vunpack.c.0.s8 %v2374
          %v2376 = vperm.slane %v2370, %v2375
          %v2378 = vunpack.c.l.s4 1934713408
          %v2379 = vunpack.c.0.s8 %v2378
          %v2380 = vperm.slane %v2372, %v2379
          %v2381 = vrot.slane %v2376, 4
          %v2382 = vsel %vm2219, 0, %v2381
          %v2383 = vrot.slane %v2380, 4
          %v2384 = vsel %vm2219, 0, %v2383
          %v2387 = vunpack.c.l.s4 1983009808
          %v2388 = vunpack.c.0.s8 %v2387
          %v2389 = vperm.slane %v2050, %v2388
          %v2390 = vrot.slane %v2389, 4
          %v2391 = vsel %vm2219, 0, %v2390
          %v2393 = vunpack.c.l.s4 1934713408
          %v2394 = vunpack.c.0.s8 %v2393
          %v2395 = vperm.slane %v2389, %v2394
          %v2397 = vunpack.c.l.s4 1934713408
          %v2398 = vunpack.c.0.s8 %v2397
          %v2399 = vperm.slane %v2391, %v2398
          %v2400 = vrot.slane %v2395, 4
          %v2401 = vsel %vm2219, 0, %v2400
          %v2402 = vrot.slane %v2399, 4
          %v2403 = vsel %vm2219, 0, %v2402
          %v2406 = vunpack.c.l.s4 1983009808
          %v2407 = vunpack.c.0.s8 %v2406
          %v2408 = vperm.slane %v2053, %v2407
          %v2409 = vrot.slane %v2408, 4
          %v2410 = vsel %vm2219, 0, %v2409
          %v2412 = vunpack.c.l.s4 1934713408
          %v2413 = vunpack.c.0.s8 %v2412
          %v2414 = vperm.slane %v2408, %v2413
          %v2416 = vunpack.c.l.s4 1934713408
          %v2417 = vunpack.c.0.s8 %v2416
          %v2418 = vperm.slane %v2410, %v2417
          %v2419 = vrot.slane %v2414, 4
          %v2420 = vsel %vm2219, 0, %v2419
          %v2421 = vrot.slane %v2418, 4
          %v2422 = vsel %vm2219, 0, %v2421
          %v2425 = vunpack.c.l.s4 1983009808
          %v2426 = vunpack.c.0.s8 %v2425
          %v2427 = vperm.slane %v2056, %v2426
          %v2428 = vrot.slane %v2427, 4
          %v2429 = vsel %vm2219, 0, %v2428
          %v2431 = vunpack.c.l.s4 1934713408
          %v2432 = vunpack.c.0.s8 %v2431
          %v2433 = vperm.slane %v2427, %v2432
          %v2435 = vunpack.c.l.s4 1934713408
          %v2436 = vunpack.c.0.s8 %v2435
          %v2437 = vperm.slane %v2429, %v2436
          %v2438 = vrot.slane %v2433, 4
          %v2439 = vsel %vm2219, 0, %v2438
          %v2440 = vrot.slane %v2437, 4
          %v2441 = vsel %vm2219, 0, %v2440
          %v2444 = vunpack.c.l.s4 1983009808
          %v2445 = vunpack.c.0.s8 %v2444
          %v2446 = vperm.slane %v2059, %v2445
          %v2447 = vrot.slane %v2446, 4
          %v2448 = vsel %vm2219, 0, %v2447
          %v2450 = vunpack.c.l.s4 1934713408
          %v2451 = vunpack.c.0.s8 %v2450
          %v2452 = vperm.slane %v2446, %v2451
          %v2454 = vunpack.c.l.s4 1934713408
          %v2455 = vunpack.c.0.s8 %v2454
          %v2456 = vperm.slane %v2448, %v2455
          %v2457 = vrot.slane %v2452, 4
          %v2458 = vsel %vm2219, 0, %v2457
          %v2459 = vrot.slane %v2456, 4
          %v2460 = vsel %vm2219, 0, %v2459
          %v2463 = vunpack.c.l.s4 1983009808
          %v2464 = vunpack.c.0.s8 %v2463
          %v2465 = vperm.slane %v2062, %v2464
          %v2466 = vrot.slane %v2465, 4
          %v2467 = vsel %vm2219, 0, %v2466
          %v2469 = vunpack.c.l.s4 1934713408
          %v2470 = vunpack.c.0.s8 %v2469
          %v2471 = vperm.slane %v2465, %v2470
          %v2473 = vunpack.c.l.s4 1934713408
          %v2474 = vunpack.c.0.s8 %v2473
          %v2475 = vperm.slane %v2467, %v2474
          %v2476 = vrot.slane %v2471, 4
          %v2477 = vsel %vm2219, 0, %v2476
          %v2478 = vrot.slane %v2475, 4
          %v2479 = vsel %vm2219, 0, %v2478
          %v2482 = vunpack.c.l.s4 1983009808
          %v2483 = vunpack.c.0.s8 %v2482
          %v2484 = vperm.slane %v2065, %v2483
          %v2485 = vrot.slane %v2484, 4
          %v2486 = vsel %vm2219, 0, %v2485
          %v2488 = vunpack.c.l.s4 1934713408
          %v2489 = vunpack.c.0.s8 %v2488
          %v2490 = vperm.slane %v2484, %v2489
          %v2492 = vunpack.c.l.s4 1934713408
          %v2493 = vunpack.c.0.s8 %v2492
          %v2494 = vperm.slane %v2486, %v2493
          %v2495 = vrot.slane %v2490, 4
          %v2496 = vsel %vm2219, 0, %v2495
          %v2497 = vrot.slane %v2494, 4
          %v2498 = vsel %vm2219, 0, %v2497
          %v2501 = vunpack.c.l.s4 1983009808
          %v2502 = vunpack.c.0.s8 %v2501
          %v2503 = vperm.slane %v2068, %v2502
          %v2504 = vrot.slane %v2503, 4
          %v2505 = vsel %vm2219, 0, %v2504
          %v2507 = vunpack.c.l.s4 1934713408
          %v2508 = vunpack.c.0.s8 %v2507
          %v2509 = vperm.slane %v2503, %v2508
          %v2511 = vunpack.c.l.s4 1934713408
          %v2512 = vunpack.c.0.s8 %v2511
          %v2513 = vperm.slane %v2505, %v2512
          %v2514 = vrot.slane %v2509, 4
          %v2515 = vsel %vm2219, 0, %v2514
          %v2516 = vrot.slane %v2513, 4
          %v2517 = vsel %vm2219, 0, %v2516
          %v2520 = vunpack.c.l.s4 1983009808
          %v2521 = vunpack.c.0.s8 %v2520
          %v2522 = vperm.slane %v2071, %v2521
          %v2523 = vrot.slane %v2522, 4
          %v2524 = vsel %vm2219, 0, %v2523
          %v2526 = vunpack.c.l.s4 1934713408
          %v2527 = vunpack.c.0.s8 %v2526
          %v2528 = vperm.slane %v2522, %v2527
          %v2530 = vunpack.c.l.s4 1934713408
          %v2531 = vunpack.c.0.s8 %v2530
          %v2532 = vperm.slane %v2524, %v2531
          %v2533 = vrot.slane %v2528, 4
          %v2534 = vsel %vm2219, 0, %v2533
          %v2535 = vrot.slane %v2532, 4
          %v2536 = vsel %vm2219, 0, %v2535
          %v2539 = vunpack.c.l.s4 1983009808
          %v2540 = vunpack.c.0.s8 %v2539
          %v2541 = vperm.slane %v2074, %v2540
          %v2542 = vrot.slane %v2541, 4
          %v2543 = vsel %vm2219, 0, %v2542
          %v2545 = vunpack.c.l.s4 1934713408
          %v2546 = vunpack.c.0.s8 %v2545
          %v2547 = vperm.slane %v2541, %v2546
          %v2549 = vunpack.c.l.s4 1934713408
          %v2550 = vunpack.c.0.s8 %v2549
          %v2551 = vperm.slane %v2543, %v2550
          %v2552 = vrot.slane %v2547, 4
          %v2553 = vsel %vm2219, 0, %v2552
          %v2554 = vrot.slane %v2551, 4
          %v2555 = vsel %vm2219, 0, %v2554
          %v2558 = vunpack.c.l.s4 1983009808
          %v2559 = vunpack.c.0.s8 %v2558
          %v2560 = vperm.slane %v2077, %v2559
          %v2561 = vrot.slane %v2560, 4
          %v2562 = vsel %vm2219, 0, %v2561
          %v2564 = vunpack.c.l.s4 1934713408
          %v2565 = vunpack.c.0.s8 %v2564
          %v2566 = vperm.slane %v2560, %v2565
          %v2568 = vunpack.c.l.s4 1934713408
          %v2569 = vunpack.c.0.s8 %v2568
          %v2570 = vperm.slane %v2562, %v2569
          %v2571 = vrot.slane %v2566, 4
          %v2572 = vsel %vm2219, 0, %v2571
          %v2573 = vrot.slane %v2570, 4
          %v2574 = vsel %vm2219, 0, %v2573
          %v2577 = vunpack.c.l.s4 1983009808
          %v2578 = vunpack.c.0.s8 %v2577
          %v2579 = vperm.slane %v2080, %v2578
          %v2580 = vrot.slane %v2579, 4
          %v2581 = vsel %vm2219, 0, %v2580
          %v2583 = vunpack.c.l.s4 1934713408
          %v2584 = vunpack.c.0.s8 %v2583
          %v2585 = vperm.slane %v2579, %v2584
          %v2587 = vunpack.c.l.s4 1934713408
          %v2588 = vunpack.c.0.s8 %v2587
          %v2589 = vperm.slane %v2581, %v2588
          %v2590 = vrot.slane %v2585, 4
          %v2591 = vsel %vm2219, 0, %v2590
          %v2592 = vrot.slane %v2589, 4
          %v2593 = vsel %vm2219, 0, %v2592
          %v2596 = vunpack.c.l.s4 1983009808
          %v2597 = vunpack.c.0.s8 %v2596
          %v2598 = vperm.slane %v2083, %v2597
          %v2599 = vrot.slane %v2598, 4
          %v2600 = vsel %vm2219, 0, %v2599
          %v2602 = vunpack.c.l.s4 1934713408
          %v2603 = vunpack.c.0.s8 %v2602
          %v2604 = vperm.slane %v2598, %v2603
          %v2606 = vunpack.c.l.s4 1934713408
          %v2607 = vunpack.c.0.s8 %v2606
          %v2608 = vperm.slane %v2600, %v2607
          %v2609 = vrot.slane %v2604, 4
          %v2610 = vsel %vm2219, 0, %v2609
          %v2611 = vrot.slane %v2608, 4
          %v2612 = vsel %vm2219, 0, %v2611
          %v2615 = vunpack.c.l.s4 1983009808
          %v2616 = vunpack.c.0.s8 %v2615
          %v2617 = vperm.slane %v2086, %v2616
          %v2618 = vrot.slane %v2617, 4
          %v2619 = vsel %vm2219, 0, %v2618
          %v2621 = vunpack.c.l.s4 1934713408
          %v2622 = vunpack.c.0.s8 %v2621
          %v2623 = vperm.slane %v2617, %v2622
          %v2625 = vunpack.c.l.s4 1934713408
          %v2626 = vunpack.c.0.s8 %v2625
          %v2627 = vperm.slane %v2619, %v2626
          %v2628 = vrot.slane %v2623, 4
          %v2629 = vsel %vm2219, 0, %v2628
          %v2630 = vrot.slane %v2627, 4
          %v2631 = vsel %vm2219, 0, %v2630
          %v2634 = vunpack.c.l.s4 1983009808
          %v2635 = vunpack.c.0.s8 %v2634
          %v2636 = vperm.slane %v2089, %v2635
          %v2637 = vrot.slane %v2636, 4
          %v2638 = vsel %vm2219, 0, %v2637
          %v2640 = vunpack.c.l.s4 1934713408
          %v2641 = vunpack.c.0.s8 %v2640
          %v2642 = vperm.slane %v2636, %v2641
          %v2644 = vunpack.c.l.s4 1934713408
          %v2645 = vunpack.c.0.s8 %v2644
          %v2646 = vperm.slane %v2638, %v2645
          %v2647 = vrot.slane %v2642, 4
          %v2648 = vsel %vm2219, 0, %v2647
          %v2649 = vrot.slane %v2646, 4
          %v2650 = vsel %vm2219, 0, %v2649
          %v2653 = vunpack.c.l.s4 1983009808
          %v2654 = vunpack.c.0.s8 %v2653
          %v2655 = vperm.slane %v2092, %v2654
          %v2656 = vrot.slane %v2655, 4
          %v2657 = vsel %vm2219, 0, %v2656
          %v2659 = vunpack.c.l.s4 1934713408
          %v2660 = vunpack.c.0.s8 %v2659
          %v2661 = vperm.slane %v2655, %v2660
          %v2663 = vunpack.c.l.s4 1934713408
          %v2664 = vunpack.c.0.s8 %v2663
          %v2665 = vperm.slane %v2657, %v2664
          %v2666 = vrot.slane %v2661, 4
          %v2667 = vsel %vm2219, 0, %v2666
          %v2668 = vrot.slane %v2665, 4
          %v2669 = vsel %vm2219, 0, %v2668
          %v2672 = vunpack.c.l.s4 1983009808
          %v2673 = vunpack.c.0.s8 %v2672
          %v2674 = vperm.slane %v2095, %v2673
          %v2675 = vrot.slane %v2674, 4
          %v2676 = vsel %vm2219, 0, %v2675
          %v2678 = vunpack.c.l.s4 1934713408
          %v2679 = vunpack.c.0.s8 %v2678
          %v2680 = vperm.slane %v2674, %v2679
          %v2682 = vunpack.c.l.s4 1934713408
          %v2683 = vunpack.c.0.s8 %v2682
          %v2684 = vperm.slane %v2676, %v2683
          %v2685 = vrot.slane %v2680, 4
          %v2686 = vsel %vm2219, 0, %v2685
          %v2687 = vrot.slane %v2684, 4
          %v2688 = vsel %vm2219, 0, %v2687
          %v2691 = vunpack.c.l.s4 1983009808
          %v2692 = vunpack.c.0.s8 %v2691
          %v2693 = vperm.slane %v2098, %v2692
          %v2694 = vrot.slane %v2693, 4
          %v2695 = vsel %vm2219, 0, %v2694
          %v2697 = vunpack.c.l.s4 1934713408
          %v2698 = vunpack.c.0.s8 %v2697
          %v2699 = vperm.slane %v2693, %v2698
          %v2701 = vunpack.c.l.s4 1934713408
          %v2702 = vunpack.c.0.s8 %v2701
          %v2703 = vperm.slane %v2695, %v2702
          %v2704 = vrot.slane %v2699, 4
          %v2705 = vsel %vm2219, 0, %v2704
          %v2706 = vrot.slane %v2703, 4
          %v2707 = vsel %vm2219, 0, %v2706
          %v2710 = vunpack.c.l.s4 1983009808
          %v2711 = vunpack.c.0.s8 %v2710
          %v2712 = vperm.slane %v2101, %v2711
          %v2713 = vrot.slane %v2712, 4
          %v2714 = vsel %vm2219, 0, %v2713
          %v2716 = vunpack.c.l.s4 1934713408
          %v2717 = vunpack.c.0.s8 %v2716
          %v2718 = vperm.slane %v2712, %v2717
          %v2720 = vunpack.c.l.s4 1934713408
          %v2721 = vunpack.c.0.s8 %v2720
          %v2722 = vperm.slane %v2714, %v2721
          %v2723 = vrot.slane %v2718, 4
          %v2724 = vsel %vm2219, 0, %v2723
          %v2725 = vrot.slane %v2722, 4
          %v2726 = vsel %vm2219, 0, %v2725
          %v2729 = vunpack.c.l.s4 1983009808
          %v2730 = vunpack.c.0.s8 %v2729
          %v2731 = vperm.slane %v2104, %v2730
          %v2732 = vrot.slane %v2731, 4
          %v2733 = vsel %vm2219, 0, %v2732
          %v2735 = vunpack.c.l.s4 1934713408
          %v2736 = vunpack.c.0.s8 %v2735
          %v2737 = vperm.slane %v2731, %v2736
          %v2739 = vunpack.c.l.s4 1934713408
          %v2740 = vunpack.c.0.s8 %v2739
          %v2741 = vperm.slane %v2733, %v2740
          %v2742 = vrot.slane %v2737, 4
          %v2743 = vsel %vm2219, 0, %v2742
          %v2744 = vrot.slane %v2741, 4
          %v2745 = vsel %vm2219, 0, %v2744
          %v2748 = vunpack.c.l.s4 1983009808
          %v2749 = vunpack.c.0.s8 %v2748
          %v2750 = vperm.slane %v2107, %v2749
          %v2751 = vrot.slane %v2750, 4
          %v2752 = vsel %vm2219, 0, %v2751
          %v2754 = vunpack.c.l.s4 1934713408
          %v2755 = vunpack.c.0.s8 %v2754
          %v2756 = vperm.slane %v2750, %v2755
          %v2758 = vunpack.c.l.s4 1934713408
          %v2759 = vunpack.c.0.s8 %v2758
          %v2760 = vperm.slane %v2752, %v2759
          %v2761 = vrot.slane %v2756, 4
          %v2762 = vsel %vm2219, 0, %v2761
          %v2763 = vrot.slane %v2760, 4
          %v2764 = vsel %vm2219, 0, %v2763
          %v2767 = vunpack.c.l.s4 1983009808
          %v2768 = vunpack.c.0.s8 %v2767
          %v2769 = vperm.slane %v2110, %v2768
          %v2770 = vrot.slane %v2769, 4
          %v2771 = vsel %vm2219, 0, %v2770
          %v2773 = vunpack.c.l.s4 1934713408
          %v2774 = vunpack.c.0.s8 %v2773
          %v2775 = vperm.slane %v2769, %v2774
          %v2777 = vunpack.c.l.s4 1934713408
          %v2778 = vunpack.c.0.s8 %v2777
          %v2779 = vperm.slane %v2771, %v2778
          %v2780 = vrot.slane %v2775, 4
          %v2781 = vsel %vm2219, 0, %v2780
          %v2782 = vrot.slane %v2779, 4
          %v2783 = vsel %vm2219, 0, %v2782
          %v2786 = vunpack.c.l.s4 1983009808
          %v2787 = vunpack.c.0.s8 %v2786
          %v2788 = vperm.slane %v2113, %v2787
          %v2789 = vrot.slane %v2788, 4
          %v2790 = vsel %vm2219, 0, %v2789
          %v2792 = vunpack.c.l.s4 1934713408
          %v2793 = vunpack.c.0.s8 %v2792
          %v2794 = vperm.slane %v2788, %v2793
          %v2796 = vunpack.c.l.s4 1934713408
          %v2797 = vunpack.c.0.s8 %v2796
          %v2798 = vperm.slane %v2790, %v2797
          %v2799 = vrot.slane %v2794, 4
          %v2800 = vsel %vm2219, 0, %v2799
          %v2801 = vrot.slane %v2798, 4
          %v2802 = vsel %vm2219, 0, %v2801
          %v2805 = vunpack.c.l.s4 1983009808
          %v2806 = vunpack.c.0.s8 %v2805
          %v2807 = vperm.slane %v2116, %v2806
          %v2808 = vrot.slane %v2807, 4
          %v2809 = vsel %vm2219, 0, %v2808
          %v2811 = vunpack.c.l.s4 1934713408
          %v2812 = vunpack.c.0.s8 %v2811
          %v2813 = vperm.slane %v2807, %v2812
          %v2815 = vunpack.c.l.s4 1934713408
          %v2816 = vunpack.c.0.s8 %v2815
          %v2817 = vperm.slane %v2809, %v2816
          %v2818 = vrot.slane %v2813, 4
          %v2819 = vsel %vm2219, 0, %v2818
          %v2820 = vrot.slane %v2817, 4
          %v2821 = vsel %vm2219, 0, %v2820
          %v2824 = vunpack.c.l.s4 1983009808
          %v2825 = vunpack.c.0.s8 %v2824
          %v2826 = vperm.slane %v2119, %v2825
          %v2827 = vrot.slane %v2826, 4
          %v2828 = vsel %vm2219, 0, %v2827
          %v2830 = vunpack.c.l.s4 1934713408
          %v2831 = vunpack.c.0.s8 %v2830
          %v2832 = vperm.slane %v2826, %v2831
          %v2834 = vunpack.c.l.s4 1934713408
          %v2835 = vunpack.c.0.s8 %v2834
          %v2836 = vperm.slane %v2828, %v2835
          %v2837 = vrot.slane %v2832, 4
          %v2838 = vsel %vm2219, 0, %v2837
          %v2839 = vrot.slane %v2836, 4
          %v2840 = vsel %vm2219, 0, %v2839
          %v2843 = vunpack.c.l.s4 1983009808
          %v2844 = vunpack.c.0.s8 %v2843
          %v2845 = vperm.slane %v2122, %v2844
          %v2846 = vrot.slane %v2845, 4
          %v2847 = vsel %vm2219, 0, %v2846
          %v2849 = vunpack.c.l.s4 1934713408
          %v2850 = vunpack.c.0.s8 %v2849
          %v2851 = vperm.slane %v2845, %v2850
          %v2853 = vunpack.c.l.s4 1934713408
          %v2854 = vunpack.c.0.s8 %v2853
          %v2855 = vperm.slane %v2847, %v2854
          %v2856 = vrot.slane %v2851, 4
          %v2857 = vsel %vm2219, 0, %v2856
          %v2858 = vrot.slane %v2855, 4
          %v2859 = vsel %vm2219, 0, %v2858
          %v2862 = vunpack.c.l.s4 1983009808
          %v2863 = vunpack.c.0.s8 %v2862
          %v2864 = vperm.slane %v2125, %v2863
          %v2865 = vrot.slane %v2864, 4
          %v2866 = vsel %vm2219, 0, %v2865
          %v2868 = vunpack.c.l.s4 1934713408
          %v2869 = vunpack.c.0.s8 %v2868
          %v2870 = vperm.slane %v2864, %v2869
          %v2872 = vunpack.c.l.s4 1934713408
          %v2873 = vunpack.c.0.s8 %v2872
          %v2874 = vperm.slane %v2866, %v2873
          %v2875 = vrot.slane %v2870, 4
          %v2876 = vsel %vm2219, 0, %v2875
          %v2877 = vrot.slane %v2874, 4
          %v2878 = vsel %vm2219, 0, %v2877
          %v2881 = vunpack.c.l.s4 1983009808
          %v2882 = vunpack.c.0.s8 %v2881
          %v2883 = vperm.slane %v2128, %v2882
          %v2884 = vrot.slane %v2883, 4
          %v2885 = vsel %vm2219, 0, %v2884
          %v2887 = vunpack.c.l.s4 1934713408
          %v2888 = vunpack.c.0.s8 %v2887
          %v2889 = vperm.slane %v2883, %v2888
          %v2891 = vunpack.c.l.s4 1934713408
          %v2892 = vunpack.c.0.s8 %v2891
          %v2893 = vperm.slane %v2885, %v2892
          %v2894 = vrot.slane %v2889, 4
          %v2895 = vsel %vm2219, 0, %v2894
          %v2896 = vrot.slane %v2893, 4
          %v2897 = vsel %vm2219, 0, %v2896
          %v2900 = vunpack.c.l.s4 1983009808
          %v2901 = vunpack.c.0.s8 %v2900
          %v2902 = vperm.slane %v2131, %v2901
          %v2903 = vrot.slane %v2902, 4
          %v2904 = vsel %vm2219, 0, %v2903
          %v2906 = vunpack.c.l.s4 1934713408
          %v2907 = vunpack.c.0.s8 %v2906
          %v2908 = vperm.slane %v2902, %v2907
          %v2910 = vunpack.c.l.s4 1934713408
          %v2911 = vunpack.c.0.s8 %v2910
          %v2912 = vperm.slane %v2904, %v2911
          %v2913 = vrot.slane %v2908, 4
          %v2914 = vsel %vm2219, 0, %v2913
          %v2915 = vrot.slane %v2912, 4
          %v2916 = vsel %vm2219, 0, %v2915
          %v2919 = vunpack.c.l.s4 1983009808
          %v2920 = vunpack.c.0.s8 %v2919
          %v2921 = vperm.slane %v2134, %v2920
          %v2922 = vrot.slane %v2921, 4
          %v2923 = vsel %vm2219, 0, %v2922
          %v2925 = vunpack.c.l.s4 1934713408
          %v2926 = vunpack.c.0.s8 %v2925
          %v2927 = vperm.slane %v2921, %v2926
          %v2929 = vunpack.c.l.s4 1934713408
          %v2930 = vunpack.c.0.s8 %v2929
          %v2931 = vperm.slane %v2923, %v2930
          %v2932 = vrot.slane %v2927, 4
          %v2933 = vsel %vm2219, 0, %v2932
          %v2934 = vrot.slane %v2931, 4
          %v2935 = vsel %vm2219, 0, %v2934
          %v2938 = vunpack.c.l.s4 1983009808
          %v2939 = vunpack.c.0.s8 %v2938
          %v2940 = vperm.slane %v2137, %v2939
          %v2941 = vrot.slane %v2940, 4
          %v2942 = vsel %vm2219, 0, %v2941
          %v2944 = vunpack.c.l.s4 1934713408
          %v2945 = vunpack.c.0.s8 %v2944
          %v2946 = vperm.slane %v2940, %v2945
          %v2948 = vunpack.c.l.s4 1934713408
          %v2949 = vunpack.c.0.s8 %v2948
          %v2950 = vperm.slane %v2942, %v2949
          %v2951 = vrot.slane %v2946, 4
          %v2952 = vsel %vm2219, 0, %v2951
          %v2953 = vrot.slane %v2950, 4
          %v2954 = vsel %vm2219, 0, %v2953
          %v2957 = vunpack.c.l.s4 1983009808
          %v2958 = vunpack.c.0.s8 %v2957
          %v2959 = vperm.slane %v2140, %v2958
          %v2960 = vrot.slane %v2959, 4
          %v2961 = vsel %vm2219, 0, %v2960
          %v2963 = vunpack.c.l.s4 1934713408
          %v2964 = vunpack.c.0.s8 %v2963
          %v2965 = vperm.slane %v2959, %v2964
          %v2967 = vunpack.c.l.s4 1934713408
          %v2968 = vunpack.c.0.s8 %v2967
          %v2969 = vperm.slane %v2961, %v2968
          %v2970 = vrot.slane %v2965, 4
          %v2971 = vsel %vm2219, 0, %v2970
          %v2972 = vrot.slane %v2969, 4
          %v2973 = vsel %vm2219, 0, %v2972
          %v2976 = vunpack.c.l.s4 1983009808
          %v2977 = vunpack.c.0.s8 %v2976
          %v2978 = vperm.slane %v2143, %v2977
          %v2979 = vrot.slane %v2978, 4
          %v2980 = vsel %vm2219, 0, %v2979
          %v2982 = vunpack.c.l.s4 1934713408
          %v2983 = vunpack.c.0.s8 %v2982
          %v2984 = vperm.slane %v2978, %v2983
          %v2986 = vunpack.c.l.s4 1934713408
          %v2987 = vunpack.c.0.s8 %v2986
          %v2988 = vperm.slane %v2980, %v2987
          %v2989 = vrot.slane %v2984, 4
          %v2990 = vsel %vm2219, 0, %v2989
          %v2991 = vrot.slane %v2988, 4
          %v2992 = vsel %vm2219, 0, %v2991
          %v2995 = vunpack.c.l.s4 1983009808
          %v2996 = vunpack.c.0.s8 %v2995
          %v2997 = vperm.slane %v2146, %v2996
          %v2998 = vrot.slane %v2997, 4
          %v2999 = vsel %vm2219, 0, %v2998
          %v3001 = vunpack.c.l.s4 1934713408
          %v3002 = vunpack.c.0.s8 %v3001
          %v3003 = vperm.slane %v2997, %v3002
          %v3005 = vunpack.c.l.s4 1934713408
          %v3006 = vunpack.c.0.s8 %v3005
          %v3007 = vperm.slane %v2999, %v3006
          %v3008 = vrot.slane %v3003, 4
          %v3009 = vsel %vm2219, 0, %v3008
          %v3010 = vrot.slane %v3007, 4
          %v3011 = vsel %vm2219, 0, %v3010
          %v3014 = vunpack.c.l.s4 1983009808
          %v3015 = vunpack.c.0.s8 %v3014
          %v3016 = vperm.slane %v2149, %v3015
          %v3017 = vrot.slane %v3016, 4
          %v3018 = vsel %vm2219, 0, %v3017
          %v3020 = vunpack.c.l.s4 1934713408
          %v3021 = vunpack.c.0.s8 %v3020
          %v3022 = vperm.slane %v3016, %v3021
          %v3024 = vunpack.c.l.s4 1934713408
          %v3025 = vunpack.c.0.s8 %v3024
          %v3026 = vperm.slane %v3018, %v3025
          %v3027 = vrot.slane %v3022, 4
          %v3028 = vsel %vm2219, 0, %v3027
          %v3029 = vrot.slane %v3026, 4
          %v3030 = vsel %vm2219, 0, %v3029
          %v3033 = vunpack.c.l.s4 1983009808
          %v3034 = vunpack.c.0.s8 %v3033
          %v3035 = vperm.slane %v2152, %v3034
          %v3036 = vrot.slane %v3035, 4
          %v3037 = vsel %vm2219, 0, %v3036
          %v3039 = vunpack.c.l.s4 1934713408
          %v3040 = vunpack.c.0.s8 %v3039
          %v3041 = vperm.slane %v3035, %v3040
          %v3043 = vunpack.c.l.s4 1934713408
          %v3044 = vunpack.c.0.s8 %v3043
          %v3045 = vperm.slane %v3037, %v3044
          %v3046 = vrot.slane %v3041, 4
          %v3047 = vsel %vm2219, 0, %v3046
          %v3048 = vrot.slane %v3045, 4
          %v3049 = vsel %vm2219, 0, %v3048
          %v3052 = vunpack.c.l.s4 1983009808
          %v3053 = vunpack.c.0.s8 %v3052
          %v3054 = vperm.slane %v2155, %v3053
          %v3055 = vrot.slane %v3054, 4
          %v3056 = vsel %vm2219, 0, %v3055
          %v3058 = vunpack.c.l.s4 1934713408
          %v3059 = vunpack.c.0.s8 %v3058
          %v3060 = vperm.slane %v3054, %v3059
          %v3062 = vunpack.c.l.s4 1934713408
          %v3063 = vunpack.c.0.s8 %v3062
          %v3064 = vperm.slane %v3056, %v3063
          %v3065 = vrot.slane %v3060, 4
          %v3066 = vsel %vm2219, 0, %v3065
          %v3067 = vrot.slane %v3064, 4
          %v3068 = vsel %vm2219, 0, %v3067
          %v3071 = vunpack.c.l.s4 1983009808
          %v3072 = vunpack.c.0.s8 %v3071
          %v3073 = vperm.slane %v2158, %v3072
          %v3074 = vrot.slane %v3073, 4
          %v3075 = vsel %vm2219, 0, %v3074
          %v3077 = vunpack.c.l.s4 1934713408
          %v3078 = vunpack.c.0.s8 %v3077
          %v3079 = vperm.slane %v3073, %v3078
          %v3081 = vunpack.c.l.s4 1934713408
          %v3082 = vunpack.c.0.s8 %v3081
          %v3083 = vperm.slane %v3075, %v3082
          %v3084 = vrot.slane %v3079, 4
          %v3085 = vsel %vm2219, 0, %v3084
          %v3086 = vrot.slane %v3083, 4
          %v3087 = vsel %vm2219, 0, %v3086
          %v3090 = vunpack.c.l.s4 1983009808
          %v3091 = vunpack.c.0.s8 %v3090
          %v3092 = vperm.slane %v2161, %v3091
          %v3093 = vrot.slane %v3092, 4
          %v3094 = vsel %vm2219, 0, %v3093
          %v3096 = vunpack.c.l.s4 1934713408
          %v3097 = vunpack.c.0.s8 %v3096
          %v3098 = vperm.slane %v3092, %v3097
          %v3100 = vunpack.c.l.s4 1934713408
          %v3101 = vunpack.c.0.s8 %v3100
          %v3102 = vperm.slane %v3094, %v3101
          %v3103 = vrot.slane %v3098, 4
          %v3104 = vsel %vm2219, 0, %v3103
          %v3105 = vrot.slane %v3102, 4
          %v3106 = vsel %vm2219, 0, %v3105
          %v3109 = vunpack.c.l.s4 1983009808
          %v3110 = vunpack.c.0.s8 %v3109
          %v3111 = vperm.slane %v2164, %v3110
          %v3112 = vrot.slane %v3111, 4
          %v3113 = vsel %vm2219, 0, %v3112
          %v3115 = vunpack.c.l.s4 1934713408
          %v3116 = vunpack.c.0.s8 %v3115
          %v3117 = vperm.slane %v3111, %v3116
          %v3119 = vunpack.c.l.s4 1934713408
          %v3120 = vunpack.c.0.s8 %v3119
          %v3121 = vperm.slane %v3113, %v3120
          %v3122 = vrot.slane %v3117, 4
          %v3123 = vsel %vm2219, 0, %v3122
          %v3124 = vrot.slane %v3121, 4
          %v3125 = vsel %vm2219, 0, %v3124
          %v3128 = vunpack.c.l.s4 1983009808
          %v3129 = vunpack.c.0.s8 %v3128
          %v3130 = vperm.slane %v2167, %v3129
          %v3131 = vrot.slane %v3130, 4
          %v3132 = vsel %vm2219, 0, %v3131
          %v3134 = vunpack.c.l.s4 1934713408
          %v3135 = vunpack.c.0.s8 %v3134
          %v3136 = vperm.slane %v3130, %v3135
          %v3138 = vunpack.c.l.s4 1934713408
          %v3139 = vunpack.c.0.s8 %v3138
          %v3140 = vperm.slane %v3132, %v3139
          %v3141 = vrot.slane %v3136, 4
          %v3142 = vsel %vm2219, 0, %v3141
          %v3143 = vrot.slane %v3140, 4
          %v3144 = vsel %vm2219, 0, %v3143
          %v3147 = vunpack.c.l.s4 1983009808
          %v3148 = vunpack.c.0.s8 %v3147
          %v3149 = vperm.slane %v2170, %v3148
          %v3150 = vrot.slane %v3149, 4
          %v3151 = vsel %vm2219, 0, %v3150
          %v3153 = vunpack.c.l.s4 1934713408
          %v3154 = vunpack.c.0.s8 %v3153
          %v3155 = vperm.slane %v3149, %v3154
          %v3157 = vunpack.c.l.s4 1934713408
          %v3158 = vunpack.c.0.s8 %v3157
          %v3159 = vperm.slane %v3151, %v3158
          %v3160 = vrot.slane %v3155, 4
          %v3161 = vsel %vm2219, 0, %v3160
          %v3162 = vrot.slane %v3159, 4
          %v3163 = vsel %vm2219, 0, %v3162
          %v3166 = vunpack.c.l.s4 1983009808
          %v3167 = vunpack.c.0.s8 %v3166
          %v3168 = vperm.slane %v2173, %v3167
          %v3169 = vrot.slane %v3168, 4
          %v3170 = vsel %vm2219, 0, %v3169
          %v3172 = vunpack.c.l.s4 1934713408
          %v3173 = vunpack.c.0.s8 %v3172
          %v3174 = vperm.slane %v3168, %v3173
          %v3176 = vunpack.c.l.s4 1934713408
          %v3177 = vunpack.c.0.s8 %v3176
          %v3178 = vperm.slane %v3170, %v3177
          %v3179 = vrot.slane %v3174, 4
          %v3180 = vsel %vm2219, 0, %v3179
          %v3181 = vrot.slane %v3178, 4
          %v3182 = vsel %vm2219, 0, %v3181
          %v3185 = vunpack.c.l.s4 1983009808
          %v3186 = vunpack.c.0.s8 %v3185
          %v3187 = vperm.slane %v2176, %v3186
          %v3188 = vrot.slane %v3187, 4
          %v3189 = vsel %vm2219, 0, %v3188
          %v3191 = vunpack.c.l.s4 1934713408
          %v3192 = vunpack.c.0.s8 %v3191
          %v3193 = vperm.slane %v3187, %v3192
          %v3195 = vunpack.c.l.s4 1934713408
          %v3196 = vunpack.c.0.s8 %v3195
          %v3197 = vperm.slane %v3189, %v3196
          %v3198 = vrot.slane %v3193, 4
          %v3199 = vsel %vm2219, 0, %v3198
          %v3200 = vrot.slane %v3197, 4
          %v3201 = vsel %vm2219, 0, %v3200
          %v3204 = vunpack.c.l.s4 1983009808
          %v3205 = vunpack.c.0.s8 %v3204
          %v3206 = vperm.slane %v2179, %v3205
          %v3207 = vrot.slane %v3206, 4
          %v3208 = vsel %vm2219, 0, %v3207
          %v3210 = vunpack.c.l.s4 1934713408
          %v3211 = vunpack.c.0.s8 %v3210
          %v3212 = vperm.slane %v3206, %v3211
          %v3214 = vunpack.c.l.s4 1934713408
          %v3215 = vunpack.c.0.s8 %v3214
          %v3216 = vperm.slane %v3208, %v3215
          %v3217 = vrot.slane %v3212, 4
          %v3218 = vsel %vm2219, 0, %v3217
          %v3219 = vrot.slane %v3216, 4
          %v3220 = vsel %vm2219, 0, %v3219
          %v3223 = vunpack.c.l.s4 1983009808
          %v3224 = vunpack.c.0.s8 %v3223
          %v3225 = vperm.slane %v2182, %v3224
          %v3226 = vrot.slane %v3225, 4
          %v3227 = vsel %vm2219, 0, %v3226
          %v3229 = vunpack.c.l.s4 1934713408
          %v3230 = vunpack.c.0.s8 %v3229
          %v3231 = vperm.slane %v3225, %v3230
          %v3233 = vunpack.c.l.s4 1934713408
          %v3234 = vunpack.c.0.s8 %v3233
          %v3235 = vperm.slane %v3227, %v3234
          %v3236 = vrot.slane %v3231, 4
          %v3237 = vsel %vm2219, 0, %v3236
          %v3238 = vrot.slane %v3235, 4
          %v3239 = vsel %vm2219, 0, %v3238
          %v3242 = vunpack.c.l.s4 1983009808
          %v3243 = vunpack.c.0.s8 %v3242
          %v3244 = vperm.slane %v2185, %v3243
          %v3245 = vrot.slane %v3244, 4
          %v3246 = vsel %vm2219, 0, %v3245
          %v3248 = vunpack.c.l.s4 1934713408
          %v3249 = vunpack.c.0.s8 %v3248
          %v3250 = vperm.slane %v3244, %v3249
          %v3252 = vunpack.c.l.s4 1934713408
          %v3253 = vunpack.c.0.s8 %v3252
          %v3254 = vperm.slane %v3246, %v3253
          %v3255 = vrot.slane %v3250, 4
          %v3256 = vsel %vm2219, 0, %v3255
          %v3257 = vrot.slane %v3254, 4
          %v3258 = vsel %vm2219, 0, %v3257
          %v3261 = vunpack.c.l.s4 1983009808
          %v3262 = vunpack.c.0.s8 %v3261
          %v3263 = vperm.slane %v2188, %v3262
          %v3264 = vrot.slane %v3263, 4
          %v3265 = vsel %vm2219, 0, %v3264
          %v3267 = vunpack.c.l.s4 1934713408
          %v3268 = vunpack.c.0.s8 %v3267
          %v3269 = vperm.slane %v3263, %v3268
          %v3271 = vunpack.c.l.s4 1934713408
          %v3272 = vunpack.c.0.s8 %v3271
          %v3273 = vperm.slane %v3265, %v3272
          %v3274 = vrot.slane %v3269, 4
          %v3275 = vsel %vm2219, 0, %v3274
          %v3276 = vrot.slane %v3273, 4
          %v3277 = vsel %vm2219, 0, %v3276
          %v3280 = vunpack.c.l.s4 1983009808
          %v3281 = vunpack.c.0.s8 %v3280
          %v3282 = vperm.slane %v2191, %v3281
          %v3283 = vrot.slane %v3282, 4
          %v3284 = vsel %vm2219, 0, %v3283
          %v3286 = vunpack.c.l.s4 1934713408
          %v3287 = vunpack.c.0.s8 %v3286
          %v3288 = vperm.slane %v3282, %v3287
          %v3290 = vunpack.c.l.s4 1934713408
          %v3291 = vunpack.c.0.s8 %v3290
          %v3292 = vperm.slane %v3284, %v3291
          %v3293 = vrot.slane %v3288, 4
          %v3294 = vsel %vm2219, 0, %v3293
          %v3295 = vrot.slane %v3292, 4
          %v3296 = vsel %vm2219, 0, %v3295
          %v3299 = vunpack.c.l.s4 1983009808
          %v3300 = vunpack.c.0.s8 %v3299
          %v3301 = vperm.slane %v2194, %v3300
          %v3302 = vrot.slane %v3301, 4
          %v3303 = vsel %vm2219, 0, %v3302
          %v3305 = vunpack.c.l.s4 1934713408
          %v3306 = vunpack.c.0.s8 %v3305
          %v3307 = vperm.slane %v3301, %v3306
          %v3309 = vunpack.c.l.s4 1934713408
          %v3310 = vunpack.c.0.s8 %v3309
          %v3311 = vperm.slane %v3303, %v3310
          %v3312 = vrot.slane %v3307, 4
          %v3313 = vsel %vm2219, 0, %v3312
          %v3314 = vrot.slane %v3311, 4
          %v3315 = vsel %vm2219, 0, %v3314
          %v3318 = vunpack.c.l.s4 1983009808
          %v3319 = vunpack.c.0.s8 %v3318
          %v3320 = vperm.slane %v2197, %v3319
          %v3321 = vrot.slane %v3320, 4
          %v3322 = vsel %vm2219, 0, %v3321
          %v3324 = vunpack.c.l.s4 1934713408
          %v3325 = vunpack.c.0.s8 %v3324
          %v3326 = vperm.slane %v3320, %v3325
          %v3328 = vunpack.c.l.s4 1934713408
          %v3329 = vunpack.c.0.s8 %v3328
          %v3330 = vperm.slane %v3322, %v3329
          %v3331 = vrot.slane %v3326, 4
          %v3332 = vsel %vm2219, 0, %v3331
          %v3333 = vrot.slane %v3330, 4
          %v3334 = vsel %vm2219, 0, %v3333
          %v3337 = vunpack.c.l.s4 1983009808
          %v3338 = vunpack.c.0.s8 %v3337
          %v3339 = vperm.slane %v2200, %v3338
          %v3340 = vrot.slane %v3339, 4
          %v3341 = vsel %vm2219, 0, %v3340
          %v3343 = vunpack.c.l.s4 1934713408
          %v3344 = vunpack.c.0.s8 %v3343
          %v3345 = vperm.slane %v3339, %v3344
          %v3347 = vunpack.c.l.s4 1934713408
          %v3348 = vunpack.c.0.s8 %v3347
          %v3349 = vperm.slane %v3341, %v3348
          %v3350 = vrot.slane %v3345, 4
          %v3351 = vsel %vm2219, 0, %v3350
          %v3352 = vrot.slane %v3349, 4
          %v3353 = vsel %vm2219, 0, %v3352
          %v3356 = vunpack.c.l.s4 1983009808
          %v3357 = vunpack.c.0.s8 %v3356
          %v3358 = vperm.slane %v2203, %v3357
          %v3359 = vrot.slane %v3358, 4
          %v3360 = vsel %vm2219, 0, %v3359
          %v3362 = vunpack.c.l.s4 1934713408
          %v3363 = vunpack.c.0.s8 %v3362
          %v3364 = vperm.slane %v3358, %v3363
          %v3366 = vunpack.c.l.s4 1934713408
          %v3367 = vunpack.c.0.s8 %v3366
          %v3368 = vperm.slane %v3360, %v3367
          %v3369 = vrot.slane %v3364, 4
          %v3370 = vsel %vm2219, 0, %v3369
          %v3371 = vrot.slane %v3368, 4
          %v3372 = vsel %vm2219, 0, %v3371
          %v3375 = vunpack.c.l.s4 1983009808
          %v3376 = vunpack.c.0.s8 %v3375
          %v3377 = vperm.slane %v2206, %v3376
          %v3378 = vrot.slane %v3377, 4
          %v3379 = vsel %vm2219, 0, %v3378
          %v3381 = vunpack.c.l.s4 1934713408
          %v3382 = vunpack.c.0.s8 %v3381
          %v3383 = vperm.slane %v3377, %v3382
          %v3385 = vunpack.c.l.s4 1934713408
          %v3386 = vunpack.c.0.s8 %v3385
          %v3387 = vperm.slane %v3379, %v3386
          %v3388 = vrot.slane %v3383, 4
          %v3389 = vsel %vm2219, 0, %v3388
          %v3390 = vrot.slane %v3387, 4
          %v3391 = vsel %vm2219, 0, %v3390
          %v3394 = vunpack.c.l.s4 1983009808
          %v3395 = vunpack.c.0.s8 %v3394
          %v3396 = vperm.slane %v2209, %v3395
          %v3397 = vrot.slane %v3396, 4
          %v3398 = vsel %vm2219, 0, %v3397
          %v3400 = vunpack.c.l.s4 1934713408
          %v3401 = vunpack.c.0.s8 %v3400
          %v3402 = vperm.slane %v3396, %v3401
          %v3404 = vunpack.c.l.s4 1934713408
          %v3405 = vunpack.c.0.s8 %v3404
          %v3406 = vperm.slane %v3398, %v3405
          %v3407 = vrot.slane %v3402, 4
          %v3408 = vsel %vm2219, 0, %v3407
          %v3409 = vrot.slane %v3406, 4
          %v3410 = vsel %vm2219, 0, %v3409
          %v3413 = vunpack.c.l.s4 1983009808
          %v3414 = vunpack.c.0.s8 %v3413
          %v3415 = vperm.slane %v2212, %v3414
          %v3416 = vrot.slane %v3415, 4
          %v3417 = vsel %vm2219, 0, %v3416
          %v3419 = vunpack.c.l.s4 1934713408
          %v3420 = vunpack.c.0.s8 %v3419
          %v3421 = vperm.slane %v3415, %v3420
          %v3423 = vunpack.c.l.s4 1934713408
          %v3424 = vunpack.c.0.s8 %v3423
          %v3425 = vperm.slane %v3417, %v3424
          %v3426 = vrot.slane %v3421, 4
          %v3427 = vsel %vm2219, 0, %v3426
          %v3428 = vrot.slane %v3425, 4
          %v3429 = vsel %vm2219, 0, %v3428
          %v3462 = vrot.slane %v1894, 4
          %v3463 = vrot.slane %v1896, 4
          %v3464 = vrot.slane %v1898, 4
          %v3465 = vrot.slane %v1900, 4
          %v3466 = vrot.slane %v1902, 4
          %v3467 = vrot.slane %v1904, 4
          %v3468 = vrot.slane %v1906, 4
          %v3469 = vrot.slane %v1908, 4
          %v3470 = vrot.slane %v1910, 4
          %v3471 = vrot.slane %v1912, 4
          %v3472 = vrot.slane %v1914, 4
          %v3473 = vrot.slane %v1916, 4
          %v3474 = vrot.slane %v1918, 4
          %v3475 = vrot.slane %v1920, 4
          %v3476 = vrot.slane %v1922, 4
          %v3477 = vrot.slane %v1924, 4
          %v3478 = vrot.slane %v1926, 4
          %v3479 = vrot.slane %v1928, 4
          %v3480 = vrot.slane %v1930, 4
          %v3481 = vrot.slane %v1932, 4
          %v3482 = vrot.slane %v1934, 4
          %v3483 = vrot.slane %v1936, 4
          %v3484 = vrot.slane %v1938, 4
          %v3485 = vrot.slane %v1940, 4
          %v3486 = vrot.slane %v1942, 4
          %v3487 = vrot.slane %v1944, 4
          %v3488 = vrot.slane %v1946, 4
          %v3489 = vrot.slane %v1948, 4
          %v3490 = vrot.slane %v1950, 4
          %v3491 = vrot.slane %v1952, 4
          %v3492 = vrot.slane %v1954, 4
          %v3493 = vrot.slane %v1956, 4
          %v3496 = vpack.i.b16 %v3462, %v1894
          %v3497 = vshrl.u32 %v1894, 16
          %v3498 = vshrl.u32 %v3462, 16
          %v3499 = vpack.i.b16 %v3498, %v3497
          %v3502 = vpack.i.b16 %v3463, %v1896
          %v3503 = vshrl.u32 %v1896, 16
          %v3504 = vshrl.u32 %v3463, 16
          %v3505 = vpack.i.b16 %v3504, %v3503
          %v3508 = vpack.i.b16 %v3464, %v1898
          %v3509 = vshrl.u32 %v1898, 16
          %v3510 = vshrl.u32 %v3464, 16
          %v3511 = vpack.i.b16 %v3510, %v3509
          %v3514 = vpack.i.b16 %v3465, %v1900
          %v3515 = vshrl.u32 %v1900, 16
          %v3516 = vshrl.u32 %v3465, 16
          %v3517 = vpack.i.b16 %v3516, %v3515
          %v3520 = vpack.i.b16 %v3466, %v1902
          %v3521 = vshrl.u32 %v1902, 16
          %v3522 = vshrl.u32 %v3466, 16
          %v3523 = vpack.i.b16 %v3522, %v3521
          %v3526 = vpack.i.b16 %v3467, %v1904
          %v3527 = vshrl.u32 %v1904, 16
          %v3528 = vshrl.u32 %v3467, 16
          %v3529 = vpack.i.b16 %v3528, %v3527
          %v3532 = vpack.i.b16 %v3468, %v1906
          %v3533 = vshrl.u32 %v1906, 16
          %v3534 = vshrl.u32 %v3468, 16
          %v3535 = vpack.i.b16 %v3534, %v3533
          %v3538 = vpack.i.b16 %v3469, %v1908
          %v3539 = vshrl.u32 %v1908, 16
          %v3540 = vshrl.u32 %v3469, 16
          %v3541 = vpack.i.b16 %v3540, %v3539
          %v3544 = vpack.i.b16 %v3470, %v1910
          %v3545 = vshrl.u32 %v1910, 16
          %v3546 = vshrl.u32 %v3470, 16
          %v3547 = vpack.i.b16 %v3546, %v3545
          %v3550 = vpack.i.b16 %v3471, %v1912
          %v3551 = vshrl.u32 %v1912, 16
          %v3552 = vshrl.u32 %v3471, 16
          %v3553 = vpack.i.b16 %v3552, %v3551
          %v3556 = vpack.i.b16 %v3472, %v1914
          %v3557 = vshrl.u32 %v1914, 16
          %v3558 = vshrl.u32 %v3472, 16
          %v3559 = vpack.i.b16 %v3558, %v3557
          %v3562 = vpack.i.b16 %v3473, %v1916
          %v3563 = vshrl.u32 %v1916, 16
          %v3564 = vshrl.u32 %v3473, 16
          %v3565 = vpack.i.b16 %v3564, %v3563
          %v3568 = vpack.i.b16 %v3474, %v1918
          %v3569 = vshrl.u32 %v1918, 16
          %v3570 = vshrl.u32 %v3474, 16
          %v3571 = vpack.i.b16 %v3570, %v3569
          %v3574 = vpack.i.b16 %v3475, %v1920
          %v3575 = vshrl.u32 %v1920, 16
          %v3576 = vshrl.u32 %v3475, 16
          %v3577 = vpack.i.b16 %v3576, %v3575
          %v3580 = vpack.i.b16 %v3476, %v1922
          %v3581 = vshrl.u32 %v1922, 16
          %v3582 = vshrl.u32 %v3476, 16
          %v3583 = vpack.i.b16 %v3582, %v3581
          %v3586 = vpack.i.b16 %v3477, %v1924
          %v3587 = vshrl.u32 %v1924, 16
          %v3588 = vshrl.u32 %v3477, 16
          %v3589 = vpack.i.b16 %v3588, %v3587
          %v3592 = vpack.i.b16 %v3478, %v1926
          %v3593 = vshrl.u32 %v1926, 16
          %v3594 = vshrl.u32 %v3478, 16
          %v3595 = vpack.i.b16 %v3594, %v3593
          %v3598 = vpack.i.b16 %v3479, %v1928
          %v3599 = vshrl.u32 %v1928, 16
          %v3600 = vshrl.u32 %v3479, 16
          %v3601 = vpack.i.b16 %v3600, %v3599
          %v3604 = vpack.i.b16 %v3480, %v1930
          %v3605 = vshrl.u32 %v1930, 16
          %v3606 = vshrl.u32 %v3480, 16
          %v3607 = vpack.i.b16 %v3606, %v3605
          %v3610 = vpack.i.b16 %v3481, %v1932
          %v3611 = vshrl.u32 %v1932, 16
          %v3612 = vshrl.u32 %v3481, 16
          %v3613 = vpack.i.b16 %v3612, %v3611
          %v3616 = vpack.i.b16 %v3482, %v1934
          %v3617 = vshrl.u32 %v1934, 16
          %v3618 = vshrl.u32 %v3482, 16
          %v3619 = vpack.i.b16 %v3618, %v3617
          %v3622 = vpack.i.b16 %v3483, %v1936
          %v3623 = vshrl.u32 %v1936, 16
          %v3624 = vshrl.u32 %v3483, 16
          %v3625 = vpack.i.b16 %v3624, %v3623
          %v3628 = vpack.i.b16 %v3484, %v1938
          %v3629 = vshrl.u32 %v1938, 16
          %v3630 = vshrl.u32 %v3484, 16
          %v3631 = vpack.i.b16 %v3630, %v3629
          %v3634 = vpack.i.b16 %v3485, %v1940
          %v3635 = vshrl.u32 %v1940, 16
          %v3636 = vshrl.u32 %v3485, 16
          %v3637 = vpack.i.b16 %v3636, %v3635
          %v3640 = vpack.i.b16 %v3486, %v1942
          %v3641 = vshrl.u32 %v1942, 16
          %v3642 = vshrl.u32 %v3486, 16
          %v3643 = vpack.i.b16 %v3642, %v3641
          %v3646 = vpack.i.b16 %v3487, %v1944
          %v3647 = vshrl.u32 %v1944, 16
          %v3648 = vshrl.u32 %v3487, 16
          %v3649 = vpack.i.b16 %v3648, %v3647
          %v3652 = vpack.i.b16 %v3488, %v1946
          %v3653 = vshrl.u32 %v1946, 16
          %v3654 = vshrl.u32 %v3488, 16
          %v3655 = vpack.i.b16 %v3654, %v3653
          %v3658 = vpack.i.b16 %v3489, %v1948
          %v3659 = vshrl.u32 %v1948, 16
          %v3660 = vshrl.u32 %v3489, 16
          %v3661 = vpack.i.b16 %v3660, %v3659
          %v3664 = vpack.i.b16 %v3490, %v1950
          %v3665 = vshrl.u32 %v1950, 16
          %v3666 = vshrl.u32 %v3490, 16
          %v3667 = vpack.i.b16 %v3666, %v3665
          %v3670 = vpack.i.b16 %v3491, %v1952
          %v3671 = vshrl.u32 %v1952, 16
          %v3672 = vshrl.u32 %v3491, 16
          %v3673 = vpack.i.b16 %v3672, %v3671
          %v3676 = vpack.i.b16 %v3492, %v1954
          %v3677 = vshrl.u32 %v1954, 16
          %v3678 = vshrl.u32 %v3492, 16
          %v3679 = vpack.i.b16 %v3678, %v3677
          %v3682 = vpack.i.b16 %v3493, %v1956
          %v3683 = vshrl.u32 %v1956, 16
          %v3684 = vshrl.u32 %v3493, 16
          %v3685 = vpack.i.b16 %v3684, %v3683
          %v3688 = vunpack.c.l.s4 1983009808
          %v3689 = vunpack.c.0.s8 %v3688
          %v3690 = vperm.slane %v3496, %v3689
          %v3691 = vrot.slane %v3690, 4
          %v3692 = vsel %vm2219, 0, %v3691
          %v3694 = vunpack.c.l.s4 1934713408
          %v3695 = vunpack.c.0.s8 %v3694
          %v3696 = vperm.slane %v3690, %v3695
          %v3698 = vunpack.c.l.s4 1934713408
          %v3699 = vunpack.c.0.s8 %v3698
          %v3700 = vperm.slane %v3692, %v3699
          %v3701 = vrot.slane %v3696, 4
          %v3702 = vsel %vm2219, 0, %v3701
          %v3703 = vrot.slane %v3700, 4
          %v3704 = vsel %vm2219, 0, %v3703
          %v3707 = vunpack.c.l.s4 1983009808
          %v3708 = vunpack.c.0.s8 %v3707
          %v3709 = vperm.slane %v3499, %v3708
          %v3710 = vrot.slane %v3709, 4
          %v3711 = vsel %vm2219, 0, %v3710
          %v3713 = vunpack.c.l.s4 1934713408
          %v3714 = vunpack.c.0.s8 %v3713
          %v3715 = vperm.slane %v3709, %v3714
          %v3717 = vunpack.c.l.s4 1934713408
          %v3718 = vunpack.c.0.s8 %v3717
          %v3719 = vperm.slane %v3711, %v3718
          %v3720 = vrot.slane %v3715, 4
          %v3721 = vsel %vm2219, 0, %v3720
          %v3722 = vrot.slane %v3719, 4
          %v3723 = vsel %vm2219, 0, %v3722
          %v3726 = vunpack.c.l.s4 1983009808
          %v3727 = vunpack.c.0.s8 %v3726
          %v3728 = vperm.slane %v3502, %v3727
          %v3729 = vrot.slane %v3728, 4
          %v3730 = vsel %vm2219, 0, %v3729
          %v3732 = vunpack.c.l.s4 1934713408
          %v3733 = vunpack.c.0.s8 %v3732
          %v3734 = vperm.slane %v3728, %v3733
          %v3736 = vunpack.c.l.s4 1934713408
          %v3737 = vunpack.c.0.s8 %v3736
          %v3738 = vperm.slane %v3730, %v3737
          %v3739 = vrot.slane %v3734, 4
          %v3740 = vsel %vm2219, 0, %v3739
          %v3741 = vrot.slane %v3738, 4
          %v3742 = vsel %vm2219, 0, %v3741
          %v3745 = vunpack.c.l.s4 1983009808
          %v3746 = vunpack.c.0.s8 %v3745
          %v3747 = vperm.slane %v3505, %v3746
          %v3748 = vrot.slane %v3747, 4
          %v3749 = vsel %vm2219, 0, %v3748
          %v3751 = vunpack.c.l.s4 1934713408
          %v3752 = vunpack.c.0.s8 %v3751
          %v3753 = vperm.slane %v3747, %v3752
          %v3755 = vunpack.c.l.s4 1934713408
          %v3756 = vunpack.c.0.s8 %v3755
          %v3757 = vperm.slane %v3749, %v3756
          %v3758 = vrot.slane %v3753, 4
          %v3759 = vsel %vm2219, 0, %v3758
          %v3760 = vrot.slane %v3757, 4
          %v3761 = vsel %vm2219, 0, %v3760
          %v3764 = vunpack.c.l.s4 1983009808
          %v3765 = vunpack.c.0.s8 %v3764
          %v3766 = vperm.slane %v3508, %v3765
          %v3767 = vrot.slane %v3766, 4
          %v3768 = vsel %vm2219, 0, %v3767
          %v3770 = vunpack.c.l.s4 1934713408
          %v3771 = vunpack.c.0.s8 %v3770
          %v3772 = vperm.slane %v3766, %v3771
          %v3774 = vunpack.c.l.s4 1934713408
          %v3775 = vunpack.c.0.s8 %v3774
          %v3776 = vperm.slane %v3768, %v3775
          %v3777 = vrot.slane %v3772, 4
          %v3778 = vsel %vm2219, 0, %v3777
          %v3779 = vrot.slane %v3776, 4
          %v3780 = vsel %vm2219, 0, %v3779
          %v3783 = vunpack.c.l.s4 1983009808
          %v3784 = vunpack.c.0.s8 %v3783
          %v3785 = vperm.slane %v3511, %v3784
          %v3786 = vrot.slane %v3785, 4
          %v3787 = vsel %vm2219, 0, %v3786
          %v3789 = vunpack.c.l.s4 1934713408
          %v3790 = vunpack.c.0.s8 %v3789
          %v3791 = vperm.slane %v3785, %v3790
          %v3793 = vunpack.c.l.s4 1934713408
          %v3794 = vunpack.c.0.s8 %v3793
          %v3795 = vperm.slane %v3787, %v3794
          %v3796 = vrot.slane %v3791, 4
          %v3797 = vsel %vm2219, 0, %v3796
          %v3798 = vrot.slane %v3795, 4
          %v3799 = vsel %vm2219, 0, %v3798
          %v3802 = vunpack.c.l.s4 1983009808
          %v3803 = vunpack.c.0.s8 %v3802
          %v3804 = vperm.slane %v3514, %v3803
          %v3805 = vrot.slane %v3804, 4
          %v3806 = vsel %vm2219, 0, %v3805
          %v3808 = vunpack.c.l.s4 1934713408
          %v3809 = vunpack.c.0.s8 %v3808
          %v3810 = vperm.slane %v3804, %v3809
          %v3812 = vunpack.c.l.s4 1934713408
          %v3813 = vunpack.c.0.s8 %v3812
          %v3814 = vperm.slane %v3806, %v3813
          %v3815 = vrot.slane %v3810, 4
          %v3816 = vsel %vm2219, 0, %v3815
          %v3817 = vrot.slane %v3814, 4
          %v3818 = vsel %vm2219, 0, %v3817
          %v3821 = vunpack.c.l.s4 1983009808
          %v3822 = vunpack.c.0.s8 %v3821
          %v3823 = vperm.slane %v3517, %v3822
          %v3824 = vrot.slane %v3823, 4
          %v3825 = vsel %vm2219, 0, %v3824
          %v3827 = vunpack.c.l.s4 1934713408
          %v3828 = vunpack.c.0.s8 %v3827
          %v3829 = vperm.slane %v3823, %v3828
          %v3831 = vunpack.c.l.s4 1934713408
          %v3832 = vunpack.c.0.s8 %v3831
          %v3833 = vperm.slane %v3825, %v3832
          %v3834 = vrot.slane %v3829, 4
          %v3835 = vsel %vm2219, 0, %v3834
          %v3836 = vrot.slane %v3833, 4
          %v3837 = vsel %vm2219, 0, %v3836
          %v3840 = vunpack.c.l.s4 1983009808
          %v3841 = vunpack.c.0.s8 %v3840
          %v3842 = vperm.slane %v3520, %v3841
          %v3843 = vrot.slane %v3842, 4
          %v3844 = vsel %vm2219, 0, %v3843
          %v3846 = vunpack.c.l.s4 1934713408
          %v3847 = vunpack.c.0.s8 %v3846
          %v3848 = vperm.slane %v3842, %v3847
          %v3850 = vunpack.c.l.s4 1934713408
          %v3851 = vunpack.c.0.s8 %v3850
          %v3852 = vperm.slane %v3844, %v3851
          %v3853 = vrot.slane %v3848, 4
          %v3854 = vsel %vm2219, 0, %v3853
          %v3855 = vrot.slane %v3852, 4
          %v3856 = vsel %vm2219, 0, %v3855
          %v3859 = vunpack.c.l.s4 1983009808
          %v3860 = vunpack.c.0.s8 %v3859
          %v3861 = vperm.slane %v3523, %v3860
          %v3862 = vrot.slane %v3861, 4
          %v3863 = vsel %vm2219, 0, %v3862
          %v3865 = vunpack.c.l.s4 1934713408
          %v3866 = vunpack.c.0.s8 %v3865
          %v3867 = vperm.slane %v3861, %v3866
          %v3869 = vunpack.c.l.s4 1934713408
          %v3870 = vunpack.c.0.s8 %v3869
          %v3871 = vperm.slane %v3863, %v3870
          %v3872 = vrot.slane %v3867, 4
          %v3873 = vsel %vm2219, 0, %v3872
          %v3874 = vrot.slane %v3871, 4
          %v3875 = vsel %vm2219, 0, %v3874
          %v3878 = vunpack.c.l.s4 1983009808
          %v3879 = vunpack.c.0.s8 %v3878
          %v3880 = vperm.slane %v3526, %v3879
          %v3881 = vrot.slane %v3880, 4
          %v3882 = vsel %vm2219, 0, %v3881
          %v3884 = vunpack.c.l.s4 1934713408
          %v3885 = vunpack.c.0.s8 %v3884
          %v3886 = vperm.slane %v3880, %v3885
          %v3888 = vunpack.c.l.s4 1934713408
          %v3889 = vunpack.c.0.s8 %v3888
          %v3890 = vperm.slane %v3882, %v3889
          %v3891 = vrot.slane %v3886, 4
          %v3892 = vsel %vm2219, 0, %v3891
          %v3893 = vrot.slane %v3890, 4
          %v3894 = vsel %vm2219, 0, %v3893
          %v3897 = vunpack.c.l.s4 1983009808
          %v3898 = vunpack.c.0.s8 %v3897
          %v3899 = vperm.slane %v3529, %v3898
          %v3900 = vrot.slane %v3899, 4
          %v3901 = vsel %vm2219, 0, %v3900
          %v3903 = vunpack.c.l.s4 1934713408
          %v3904 = vunpack.c.0.s8 %v3903
          %v3905 = vperm.slane %v3899, %v3904
          %v3907 = vunpack.c.l.s4 1934713408
          %v3908 = vunpack.c.0.s8 %v3907
          %v3909 = vperm.slane %v3901, %v3908
          %v3910 = vrot.slane %v3905, 4
          %v3911 = vsel %vm2219, 0, %v3910
          %v3912 = vrot.slane %v3909, 4
          %v3913 = vsel %vm2219, 0, %v3912
          %v3916 = vunpack.c.l.s4 1983009808
          %v3917 = vunpack.c.0.s8 %v3916
          %v3918 = vperm.slane %v3532, %v3917
          %v3919 = vrot.slane %v3918, 4
          %v3920 = vsel %vm2219, 0, %v3919
          %v3922 = vunpack.c.l.s4 1934713408
          %v3923 = vunpack.c.0.s8 %v3922
          %v3924 = vperm.slane %v3918, %v3923
          %v3926 = vunpack.c.l.s4 1934713408
          %v3927 = vunpack.c.0.s8 %v3926
          %v3928 = vperm.slane %v3920, %v3927
          %v3929 = vrot.slane %v3924, 4
          %v3930 = vsel %vm2219, 0, %v3929
          %v3931 = vrot.slane %v3928, 4
          %v3932 = vsel %vm2219, 0, %v3931
          %v3935 = vunpack.c.l.s4 1983009808
          %v3936 = vunpack.c.0.s8 %v3935
          %v3937 = vperm.slane %v3535, %v3936
          %v3938 = vrot.slane %v3937, 4
          %v3939 = vsel %vm2219, 0, %v3938
          %v3941 = vunpack.c.l.s4 1934713408
          %v3942 = vunpack.c.0.s8 %v3941
          %v3943 = vperm.slane %v3937, %v3942
          %v3945 = vunpack.c.l.s4 1934713408
          %v3946 = vunpack.c.0.s8 %v3945
          %v3947 = vperm.slane %v3939, %v3946
          %v3948 = vrot.slane %v3943, 4
          %v3949 = vsel %vm2219, 0, %v3948
          %v3950 = vrot.slane %v3947, 4
          %v3951 = vsel %vm2219, 0, %v3950
          %v3954 = vunpack.c.l.s4 1983009808
          %v3955 = vunpack.c.0.s8 %v3954
          %v3956 = vperm.slane %v3538, %v3955
          %v3957 = vrot.slane %v3956, 4
          %v3958 = vsel %vm2219, 0, %v3957
          %v3960 = vunpack.c.l.s4 1934713408
          %v3961 = vunpack.c.0.s8 %v3960
          %v3962 = vperm.slane %v3956, %v3961
          %v3964 = vunpack.c.l.s4 1934713408
          %v3965 = vunpack.c.0.s8 %v3964
          %v3966 = vperm.slane %v3958, %v3965
          %v3967 = vrot.slane %v3962, 4
          %v3968 = vsel %vm2219, 0, %v3967
          %v3969 = vrot.slane %v3966, 4
          %v3970 = vsel %vm2219, 0, %v3969
          %v3973 = vunpack.c.l.s4 1983009808
          %v3974 = vunpack.c.0.s8 %v3973
          %v3975 = vperm.slane %v3541, %v3974
          %v3976 = vrot.slane %v3975, 4
          %v3977 = vsel %vm2219, 0, %v3976
          %v3979 = vunpack.c.l.s4 1934713408
          %v3980 = vunpack.c.0.s8 %v3979
          %v3981 = vperm.slane %v3975, %v3980
          %v3983 = vunpack.c.l.s4 1934713408
          %v3984 = vunpack.c.0.s8 %v3983
          %v3985 = vperm.slane %v3977, %v3984
          %v3986 = vrot.slane %v3981, 4
          %v3987 = vsel %vm2219, 0, %v3986
          %v3988 = vrot.slane %v3985, 4
          %v3989 = vsel %vm2219, 0, %v3988
          %v3992 = vunpack.c.l.s4 1983009808
          %v3993 = vunpack.c.0.s8 %v3992
          %v3994 = vperm.slane %v3544, %v3993
          %v3995 = vrot.slane %v3994, 4
          %v3996 = vsel %vm2219, 0, %v3995
          %v3998 = vunpack.c.l.s4 1934713408
          %v3999 = vunpack.c.0.s8 %v3998
          %v4000 = vperm.slane %v3994, %v3999
          %v4002 = vunpack.c.l.s4 1934713408
          %v4003 = vunpack.c.0.s8 %v4002
          %v4004 = vperm.slane %v3996, %v4003
          %v4005 = vrot.slane %v4000, 4
          %v4006 = vsel %vm2219, 0, %v4005
          %v4007 = vrot.slane %v4004, 4
          %v4008 = vsel %vm2219, 0, %v4007
          %v4011 = vunpack.c.l.s4 1983009808
          %v4012 = vunpack.c.0.s8 %v4011
          %v4013 = vperm.slane %v3547, %v4012
          %v4014 = vrot.slane %v4013, 4
          %v4015 = vsel %vm2219, 0, %v4014
          %v4017 = vunpack.c.l.s4 1934713408
          %v4018 = vunpack.c.0.s8 %v4017
          %v4019 = vperm.slane %v4013, %v4018
          %v4021 = vunpack.c.l.s4 1934713408
          %v4022 = vunpack.c.0.s8 %v4021
          %v4023 = vperm.slane %v4015, %v4022
          %v4024 = vrot.slane %v4019, 4
          %v4025 = vsel %vm2219, 0, %v4024
          %v4026 = vrot.slane %v4023, 4
          %v4027 = vsel %vm2219, 0, %v4026
          %v4030 = vunpack.c.l.s4 1983009808
          %v4031 = vunpack.c.0.s8 %v4030
          %v4032 = vperm.slane %v3550, %v4031
          %v4033 = vrot.slane %v4032, 4
          %v4034 = vsel %vm2219, 0, %v4033
          %v4036 = vunpack.c.l.s4 1934713408
          %v4037 = vunpack.c.0.s8 %v4036
          %v4038 = vperm.slane %v4032, %v4037
          %v4040 = vunpack.c.l.s4 1934713408
          %v4041 = vunpack.c.0.s8 %v4040
          %v4042 = vperm.slane %v4034, %v4041
          %v4043 = vrot.slane %v4038, 4
          %v4044 = vsel %vm2219, 0, %v4043
          %v4045 = vrot.slane %v4042, 4
          %v4046 = vsel %vm2219, 0, %v4045
          %v4049 = vunpack.c.l.s4 1983009808
          %v4050 = vunpack.c.0.s8 %v4049
          %v4051 = vperm.slane %v3553, %v4050
          %v4052 = vrot.slane %v4051, 4
          %v4053 = vsel %vm2219, 0, %v4052
          %v4055 = vunpack.c.l.s4 1934713408
          %v4056 = vunpack.c.0.s8 %v4055
          %v4057 = vperm.slane %v4051, %v4056
          %v4059 = vunpack.c.l.s4 1934713408
          %v4060 = vunpack.c.0.s8 %v4059
          %v4061 = vperm.slane %v4053, %v4060
          %v4062 = vrot.slane %v4057, 4
          %v4063 = vsel %vm2219, 0, %v4062
          %v4064 = vrot.slane %v4061, 4
          %v4065 = vsel %vm2219, 0, %v4064
          %v4068 = vunpack.c.l.s4 1983009808
          %v4069 = vunpack.c.0.s8 %v4068
          %v4070 = vperm.slane %v3556, %v4069
          %v4071 = vrot.slane %v4070, 4
          %v4072 = vsel %vm2219, 0, %v4071
          %v4074 = vunpack.c.l.s4 1934713408
          %v4075 = vunpack.c.0.s8 %v4074
          %v4076 = vperm.slane %v4070, %v4075
          %v4078 = vunpack.c.l.s4 1934713408
          %v4079 = vunpack.c.0.s8 %v4078
          %v4080 = vperm.slane %v4072, %v4079
          %v4081 = vrot.slane %v4076, 4
          %v4082 = vsel %vm2219, 0, %v4081
          %v4083 = vrot.slane %v4080, 4
          %v4084 = vsel %vm2219, 0, %v4083
          %v4087 = vunpack.c.l.s4 1983009808
          %v4088 = vunpack.c.0.s8 %v4087
          %v4089 = vperm.slane %v3559, %v4088
          %v4090 = vrot.slane %v4089, 4
          %v4091 = vsel %vm2219, 0, %v4090
          %v4093 = vunpack.c.l.s4 1934713408
          %v4094 = vunpack.c.0.s8 %v4093
          %v4095 = vperm.slane %v4089, %v4094
          %v4097 = vunpack.c.l.s4 1934713408
          %v4098 = vunpack.c.0.s8 %v4097
          %v4099 = vperm.slane %v4091, %v4098
          %v4100 = vrot.slane %v4095, 4
          %v4101 = vsel %vm2219, 0, %v4100
          %v4102 = vrot.slane %v4099, 4
          %v4103 = vsel %vm2219, 0, %v4102
          %v4106 = vunpack.c.l.s4 1983009808
          %v4107 = vunpack.c.0.s8 %v4106
          %v4108 = vperm.slane %v3562, %v4107
          %v4109 = vrot.slane %v4108, 4
          %v4110 = vsel %vm2219, 0, %v4109
          %v4112 = vunpack.c.l.s4 1934713408
          %v4113 = vunpack.c.0.s8 %v4112
          %v4114 = vperm.slane %v4108, %v4113
          %v4116 = vunpack.c.l.s4 1934713408
          %v4117 = vunpack.c.0.s8 %v4116
          %v4118 = vperm.slane %v4110, %v4117
          %v4119 = vrot.slane %v4114, 4
          %v4120 = vsel %vm2219, 0, %v4119
          %v4121 = vrot.slane %v4118, 4
          %v4122 = vsel %vm2219, 0, %v4121
          %v4125 = vunpack.c.l.s4 1983009808
          %v4126 = vunpack.c.0.s8 %v4125
          %v4127 = vperm.slane %v3565, %v4126
          %v4128 = vrot.slane %v4127, 4
          %v4129 = vsel %vm2219, 0, %v4128
          %v4131 = vunpack.c.l.s4 1934713408
          %v4132 = vunpack.c.0.s8 %v4131
          %v4133 = vperm.slane %v4127, %v4132
          %v4135 = vunpack.c.l.s4 1934713408
          %v4136 = vunpack.c.0.s8 %v4135
          %v4137 = vperm.slane %v4129, %v4136
          %v4138 = vrot.slane %v4133, 4
          %v4139 = vsel %vm2219, 0, %v4138
          %v4140 = vrot.slane %v4137, 4
          %v4141 = vsel %vm2219, 0, %v4140
          %v4144 = vunpack.c.l.s4 1983009808
          %v4145 = vunpack.c.0.s8 %v4144
          %v4146 = vperm.slane %v3568, %v4145
          %v4147 = vrot.slane %v4146, 4
          %v4148 = vsel %vm2219, 0, %v4147
          %v4150 = vunpack.c.l.s4 1934713408
          %v4151 = vunpack.c.0.s8 %v4150
          %v4152 = vperm.slane %v4146, %v4151
          %v4154 = vunpack.c.l.s4 1934713408
          %v4155 = vunpack.c.0.s8 %v4154
          %v4156 = vperm.slane %v4148, %v4155
          %v4157 = vrot.slane %v4152, 4
          %v4158 = vsel %vm2219, 0, %v4157
          %v4159 = vrot.slane %v4156, 4
          %v4160 = vsel %vm2219, 0, %v4159
          %v4163 = vunpack.c.l.s4 1983009808
          %v4164 = vunpack.c.0.s8 %v4163
          %v4165 = vperm.slane %v3571, %v4164
          %v4166 = vrot.slane %v4165, 4
          %v4167 = vsel %vm2219, 0, %v4166
          %v4169 = vunpack.c.l.s4 1934713408
          %v4170 = vunpack.c.0.s8 %v4169
          %v4171 = vperm.slane %v4165, %v4170
          %v4173 = vunpack.c.l.s4 1934713408
          %v4174 = vunpack.c.0.s8 %v4173
          %v4175 = vperm.slane %v4167, %v4174
          %v4176 = vrot.slane %v4171, 4
          %v4177 = vsel %vm2219, 0, %v4176
          %v4178 = vrot.slane %v4175, 4
          %v4179 = vsel %vm2219, 0, %v4178
          %v4182 = vunpack.c.l.s4 1983009808
          %v4183 = vunpack.c.0.s8 %v4182
          %v4184 = vperm.slane %v3574, %v4183
          %v4185 = vrot.slane %v4184, 4
          %v4186 = vsel %vm2219, 0, %v4185
          %v4188 = vunpack.c.l.s4 1934713408
          %v4189 = vunpack.c.0.s8 %v4188
          %v4190 = vperm.slane %v4184, %v4189
          %v4192 = vunpack.c.l.s4 1934713408
          %v4193 = vunpack.c.0.s8 %v4192
          %v4194 = vperm.slane %v4186, %v4193
          %v4195 = vrot.slane %v4190, 4
          %v4196 = vsel %vm2219, 0, %v4195
          %v4197 = vrot.slane %v4194, 4
          %v4198 = vsel %vm2219, 0, %v4197
          %v4201 = vunpack.c.l.s4 1983009808
          %v4202 = vunpack.c.0.s8 %v4201
          %v4203 = vperm.slane %v3577, %v4202
          %v4204 = vrot.slane %v4203, 4
          %v4205 = vsel %vm2219, 0, %v4204
          %v4207 = vunpack.c.l.s4 1934713408
          %v4208 = vunpack.c.0.s8 %v4207
          %v4209 = vperm.slane %v4203, %v4208
          %v4211 = vunpack.c.l.s4 1934713408
          %v4212 = vunpack.c.0.s8 %v4211
          %v4213 = vperm.slane %v4205, %v4212
          %v4214 = vrot.slane %v4209, 4
          %v4215 = vsel %vm2219, 0, %v4214
          %v4216 = vrot.slane %v4213, 4
          %v4217 = vsel %vm2219, 0, %v4216
          %v4220 = vunpack.c.l.s4 1983009808
          %v4221 = vunpack.c.0.s8 %v4220
          %v4222 = vperm.slane %v3580, %v4221
          %v4223 = vrot.slane %v4222, 4
          %v4224 = vsel %vm2219, 0, %v4223
          %v4226 = vunpack.c.l.s4 1934713408
          %v4227 = vunpack.c.0.s8 %v4226
          %v4228 = vperm.slane %v4222, %v4227
          %v4230 = vunpack.c.l.s4 1934713408
          %v4231 = vunpack.c.0.s8 %v4230
          %v4232 = vperm.slane %v4224, %v4231
          %v4233 = vrot.slane %v4228, 4
          %v4234 = vsel %vm2219, 0, %v4233
          %v4235 = vrot.slane %v4232, 4
          %v4236 = vsel %vm2219, 0, %v4235
          %v4239 = vunpack.c.l.s4 1983009808
          %v4240 = vunpack.c.0.s8 %v4239
          %v4241 = vperm.slane %v3583, %v4240
          %v4242 = vrot.slane %v4241, 4
          %v4243 = vsel %vm2219, 0, %v4242
          %v4245 = vunpack.c.l.s4 1934713408
          %v4246 = vunpack.c.0.s8 %v4245
          %v4247 = vperm.slane %v4241, %v4246
          %v4249 = vunpack.c.l.s4 1934713408
          %v4250 = vunpack.c.0.s8 %v4249
          %v4251 = vperm.slane %v4243, %v4250
          %v4252 = vrot.slane %v4247, 4
          %v4253 = vsel %vm2219, 0, %v4252
          %v4254 = vrot.slane %v4251, 4
          %v4255 = vsel %vm2219, 0, %v4254
          %v4258 = vunpack.c.l.s4 1983009808
          %v4259 = vunpack.c.0.s8 %v4258
          %v4260 = vperm.slane %v3586, %v4259
          %v4261 = vrot.slane %v4260, 4
          %v4262 = vsel %vm2219, 0, %v4261
          %v4264 = vunpack.c.l.s4 1934713408
          %v4265 = vunpack.c.0.s8 %v4264
          %v4266 = vperm.slane %v4260, %v4265
          %v4268 = vunpack.c.l.s4 1934713408
          %v4269 = vunpack.c.0.s8 %v4268
          %v4270 = vperm.slane %v4262, %v4269
          %v4271 = vrot.slane %v4266, 4
          %v4272 = vsel %vm2219, 0, %v4271
          %v4273 = vrot.slane %v4270, 4
          %v4274 = vsel %vm2219, 0, %v4273
          %v4277 = vunpack.c.l.s4 1983009808
          %v4278 = vunpack.c.0.s8 %v4277
          %v4279 = vperm.slane %v3589, %v4278
          %v4280 = vrot.slane %v4279, 4
          %v4281 = vsel %vm2219, 0, %v4280
          %v4283 = vunpack.c.l.s4 1934713408
          %v4284 = vunpack.c.0.s8 %v4283
          %v4285 = vperm.slane %v4279, %v4284
          %v4287 = vunpack.c.l.s4 1934713408
          %v4288 = vunpack.c.0.s8 %v4287
          %v4289 = vperm.slane %v4281, %v4288
          %v4290 = vrot.slane %v4285, 4
          %v4291 = vsel %vm2219, 0, %v4290
          %v4292 = vrot.slane %v4289, 4
          %v4293 = vsel %vm2219, 0, %v4292
          %v4296 = vunpack.c.l.s4 1983009808
          %v4297 = vunpack.c.0.s8 %v4296
          %v4298 = vperm.slane %v3592, %v4297
          %v4299 = vrot.slane %v4298, 4
          %v4300 = vsel %vm2219, 0, %v4299
          %v4302 = vunpack.c.l.s4 1934713408
          %v4303 = vunpack.c.0.s8 %v4302
          %v4304 = vperm.slane %v4298, %v4303
          %v4306 = vunpack.c.l.s4 1934713408
          %v4307 = vunpack.c.0.s8 %v4306
          %v4308 = vperm.slane %v4300, %v4307
          %v4309 = vrot.slane %v4304, 4
          %v4310 = vsel %vm2219, 0, %v4309
          %v4311 = vrot.slane %v4308, 4
          %v4312 = vsel %vm2219, 0, %v4311
          %v4315 = vunpack.c.l.s4 1983009808
          %v4316 = vunpack.c.0.s8 %v4315
          %v4317 = vperm.slane %v3595, %v4316
          %v4318 = vrot.slane %v4317, 4
          %v4319 = vsel %vm2219, 0, %v4318
          %v4321 = vunpack.c.l.s4 1934713408
          %v4322 = vunpack.c.0.s8 %v4321
          %v4323 = vperm.slane %v4317, %v4322
          %v4325 = vunpack.c.l.s4 1934713408
          %v4326 = vunpack.c.0.s8 %v4325
          %v4327 = vperm.slane %v4319, %v4326
          %v4328 = vrot.slane %v4323, 4
          %v4329 = vsel %vm2219, 0, %v4328
          %v4330 = vrot.slane %v4327, 4
          %v4331 = vsel %vm2219, 0, %v4330
          %v4334 = vunpack.c.l.s4 1983009808
          %v4335 = vunpack.c.0.s8 %v4334
          %v4336 = vperm.slane %v3598, %v4335
          %v4337 = vrot.slane %v4336, 4
          %v4338 = vsel %vm2219, 0, %v4337
          %v4340 = vunpack.c.l.s4 1934713408
          %v4341 = vunpack.c.0.s8 %v4340
          %v4342 = vperm.slane %v4336, %v4341
          %v4344 = vunpack.c.l.s4 1934713408
          %v4345 = vunpack.c.0.s8 %v4344
          %v4346 = vperm.slane %v4338, %v4345
          %v4347 = vrot.slane %v4342, 4
          %v4348 = vsel %vm2219, 0, %v4347
          %v4349 = vrot.slane %v4346, 4
          %v4350 = vsel %vm2219, 0, %v4349
          %v4353 = vunpack.c.l.s4 1983009808
          %v4354 = vunpack.c.0.s8 %v4353
          %v4355 = vperm.slane %v3601, %v4354
          %v4356 = vrot.slane %v4355, 4
          %v4357 = vsel %vm2219, 0, %v4356
          %v4359 = vunpack.c.l.s4 1934713408
          %v4360 = vunpack.c.0.s8 %v4359
          %v4361 = vperm.slane %v4355, %v4360
          %v4363 = vunpack.c.l.s4 1934713408
          %v4364 = vunpack.c.0.s8 %v4363
          %v4365 = vperm.slane %v4357, %v4364
          %v4366 = vrot.slane %v4361, 4
          %v4367 = vsel %vm2219, 0, %v4366
          %v4368 = vrot.slane %v4365, 4
          %v4369 = vsel %vm2219, 0, %v4368
          %v4372 = vunpack.c.l.s4 1983009808
          %v4373 = vunpack.c.0.s8 %v4372
          %v4374 = vperm.slane %v3604, %v4373
          %v4375 = vrot.slane %v4374, 4
          %v4376 = vsel %vm2219, 0, %v4375
          %v4378 = vunpack.c.l.s4 1934713408
          %v4379 = vunpack.c.0.s8 %v4378
          %v4380 = vperm.slane %v4374, %v4379
          %v4382 = vunpack.c.l.s4 1934713408
          %v4383 = vunpack.c.0.s8 %v4382
          %v4384 = vperm.slane %v4376, %v4383
          %v4385 = vrot.slane %v4380, 4
          %v4386 = vsel %vm2219, 0, %v4385
          %v4387 = vrot.slane %v4384, 4
          %v4388 = vsel %vm2219, 0, %v4387
          %v4391 = vunpack.c.l.s4 1983009808
          %v4392 = vunpack.c.0.s8 %v4391
          %v4393 = vperm.slane %v3607, %v4392
          %v4394 = vrot.slane %v4393, 4
          %v4395 = vsel %vm2219, 0, %v4394
          %v4397 = vunpack.c.l.s4 1934713408
          %v4398 = vunpack.c.0.s8 %v4397
          %v4399 = vperm.slane %v4393, %v4398
          %v4401 = vunpack.c.l.s4 1934713408
          %v4402 = vunpack.c.0.s8 %v4401
          %v4403 = vperm.slane %v4395, %v4402
          %v4404 = vrot.slane %v4399, 4
          %v4405 = vsel %vm2219, 0, %v4404
          %v4406 = vrot.slane %v4403, 4
          %v4407 = vsel %vm2219, 0, %v4406
          %v4410 = vunpack.c.l.s4 1983009808
          %v4411 = vunpack.c.0.s8 %v4410
          %v4412 = vperm.slane %v3610, %v4411
          %v4413 = vrot.slane %v4412, 4
          %v4414 = vsel %vm2219, 0, %v4413
          %v4416 = vunpack.c.l.s4 1934713408
          %v4417 = vunpack.c.0.s8 %v4416
          %v4418 = vperm.slane %v4412, %v4417
          %v4420 = vunpack.c.l.s4 1934713408
          %v4421 = vunpack.c.0.s8 %v4420
          %v4422 = vperm.slane %v4414, %v4421
          %v4423 = vrot.slane %v4418, 4
          %v4424 = vsel %vm2219, 0, %v4423
          %v4425 = vrot.slane %v4422, 4
          %v4426 = vsel %vm2219, 0, %v4425
          %v4429 = vunpack.c.l.s4 1983009808
          %v4430 = vunpack.c.0.s8 %v4429
          %v4431 = vperm.slane %v3613, %v4430
          %v4432 = vrot.slane %v4431, 4
          %v4433 = vsel %vm2219, 0, %v4432
          %v4435 = vunpack.c.l.s4 1934713408
          %v4436 = vunpack.c.0.s8 %v4435
          %v4437 = vperm.slane %v4431, %v4436
          %v4439 = vunpack.c.l.s4 1934713408
          %v4440 = vunpack.c.0.s8 %v4439
          %v4441 = vperm.slane %v4433, %v4440
          %v4442 = vrot.slane %v4437, 4
          %v4443 = vsel %vm2219, 0, %v4442
          %v4444 = vrot.slane %v4441, 4
          %v4445 = vsel %vm2219, 0, %v4444
          %v4448 = vunpack.c.l.s4 1983009808
          %v4449 = vunpack.c.0.s8 %v4448
          %v4450 = vperm.slane %v3616, %v4449
          %v4451 = vrot.slane %v4450, 4
          %v4452 = vsel %vm2219, 0, %v4451
          %v4454 = vunpack.c.l.s4 1934713408
          %v4455 = vunpack.c.0.s8 %v4454
          %v4456 = vperm.slane %v4450, %v4455
          %v4458 = vunpack.c.l.s4 1934713408
          %v4459 = vunpack.c.0.s8 %v4458
          %v4460 = vperm.slane %v4452, %v4459
          %v4461 = vrot.slane %v4456, 4
          %v4462 = vsel %vm2219, 0, %v4461
          %v4463 = vrot.slane %v4460, 4
          %v4464 = vsel %vm2219, 0, %v4463
          %v4467 = vunpack.c.l.s4 1983009808
          %v4468 = vunpack.c.0.s8 %v4467
          %v4469 = vperm.slane %v3619, %v4468
          %v4470 = vrot.slane %v4469, 4
          %v4471 = vsel %vm2219, 0, %v4470
          %v4473 = vunpack.c.l.s4 1934713408
          %v4474 = vunpack.c.0.s8 %v4473
          %v4475 = vperm.slane %v4469, %v4474
          %v4477 = vunpack.c.l.s4 1934713408
          %v4478 = vunpack.c.0.s8 %v4477
          %v4479 = vperm.slane %v4471, %v4478
          %v4480 = vrot.slane %v4475, 4
          %v4481 = vsel %vm2219, 0, %v4480
          %v4482 = vrot.slane %v4479, 4
          %v4483 = vsel %vm2219, 0, %v4482
          %v4486 = vunpack.c.l.s4 1983009808
          %v4487 = vunpack.c.0.s8 %v4486
          %v4488 = vperm.slane %v3622, %v4487
          %v4489 = vrot.slane %v4488, 4
          %v4490 = vsel %vm2219, 0, %v4489
          %v4492 = vunpack.c.l.s4 1934713408
          %v4493 = vunpack.c.0.s8 %v4492
          %v4494 = vperm.slane %v4488, %v4493
          %v4496 = vunpack.c.l.s4 1934713408
          %v4497 = vunpack.c.0.s8 %v4496
          %v4498 = vperm.slane %v4490, %v4497
          %v4499 = vrot.slane %v4494, 4
          %v4500 = vsel %vm2219, 0, %v4499
          %v4501 = vrot.slane %v4498, 4
          %v4502 = vsel %vm2219, 0, %v4501
          %v4505 = vunpack.c.l.s4 1983009808
          %v4506 = vunpack.c.0.s8 %v4505
          %v4507 = vperm.slane %v3625, %v4506
          %v4508 = vrot.slane %v4507, 4
          %v4509 = vsel %vm2219, 0, %v4508
          %v4511 = vunpack.c.l.s4 1934713408
          %v4512 = vunpack.c.0.s8 %v4511
          %v4513 = vperm.slane %v4507, %v4512
          %v4515 = vunpack.c.l.s4 1934713408
          %v4516 = vunpack.c.0.s8 %v4515
          %v4517 = vperm.slane %v4509, %v4516
          %v4518 = vrot.slane %v4513, 4
          %v4519 = vsel %vm2219, 0, %v4518
          %v4520 = vrot.slane %v4517, 4
          %v4521 = vsel %vm2219, 0, %v4520
          %v4524 = vunpack.c.l.s4 1983009808
          %v4525 = vunpack.c.0.s8 %v4524
          %v4526 = vperm.slane %v3628, %v4525
          %v4527 = vrot.slane %v4526, 4
          %v4528 = vsel %vm2219, 0, %v4527
          %v4530 = vunpack.c.l.s4 1934713408
          %v4531 = vunpack.c.0.s8 %v4530
          %v4532 = vperm.slane %v4526, %v4531
          %v4534 = vunpack.c.l.s4 1934713408
          %v4535 = vunpack.c.0.s8 %v4534
          %v4536 = vperm.slane %v4528, %v4535
          %v4537 = vrot.slane %v4532, 4
          %v4538 = vsel %vm2219, 0, %v4537
          %v4539 = vrot.slane %v4536, 4
          %v4540 = vsel %vm2219, 0, %v4539
          %v4543 = vunpack.c.l.s4 1983009808
          %v4544 = vunpack.c.0.s8 %v4543
          %v4545 = vperm.slane %v3631, %v4544
          %v4546 = vrot.slane %v4545, 4
          %v4547 = vsel %vm2219, 0, %v4546
          %v4549 = vunpack.c.l.s4 1934713408
          %v4550 = vunpack.c.0.s8 %v4549
          %v4551 = vperm.slane %v4545, %v4550
          %v4553 = vunpack.c.l.s4 1934713408
          %v4554 = vunpack.c.0.s8 %v4553
          %v4555 = vperm.slane %v4547, %v4554
          %v4556 = vrot.slane %v4551, 4
          %v4557 = vsel %vm2219, 0, %v4556
          %v4558 = vrot.slane %v4555, 4
          %v4559 = vsel %vm2219, 0, %v4558
          %v4562 = vunpack.c.l.s4 1983009808
          %v4563 = vunpack.c.0.s8 %v4562
          %v4564 = vperm.slane %v3634, %v4563
          %v4565 = vrot.slane %v4564, 4
          %v4566 = vsel %vm2219, 0, %v4565
          %v4568 = vunpack.c.l.s4 1934713408
          %v4569 = vunpack.c.0.s8 %v4568
          %v4570 = vperm.slane %v4564, %v4569
          %v4572 = vunpack.c.l.s4 1934713408
          %v4573 = vunpack.c.0.s8 %v4572
          %v4574 = vperm.slane %v4566, %v4573
          %v4575 = vrot.slane %v4570, 4
          %v4576 = vsel %vm2219, 0, %v4575
          %v4577 = vrot.slane %v4574, 4
          %v4578 = vsel %vm2219, 0, %v4577
          %v4581 = vunpack.c.l.s4 1983009808
          %v4582 = vunpack.c.0.s8 %v4581
          %v4583 = vperm.slane %v3637, %v4582
          %v4584 = vrot.slane %v4583, 4
          %v4585 = vsel %vm2219, 0, %v4584
          %v4587 = vunpack.c.l.s4 1934713408
          %v4588 = vunpack.c.0.s8 %v4587
          %v4589 = vperm.slane %v4583, %v4588
          %v4591 = vunpack.c.l.s4 1934713408
          %v4592 = vunpack.c.0.s8 %v4591
          %v4593 = vperm.slane %v4585, %v4592
          %v4594 = vrot.slane %v4589, 4
          %v4595 = vsel %vm2219, 0, %v4594
          %v4596 = vrot.slane %v4593, 4
          %v4597 = vsel %vm2219, 0, %v4596
          %v4600 = vunpack.c.l.s4 1983009808
          %v4601 = vunpack.c.0.s8 %v4600
          %v4602 = vperm.slane %v3640, %v4601
          %v4603 = vrot.slane %v4602, 4
          %v4604 = vsel %vm2219, 0, %v4603
          %v4606 = vunpack.c.l.s4 1934713408
          %v4607 = vunpack.c.0.s8 %v4606
          %v4608 = vperm.slane %v4602, %v4607
          %v4610 = vunpack.c.l.s4 1934713408
          %v4611 = vunpack.c.0.s8 %v4610
          %v4612 = vperm.slane %v4604, %v4611
          %v4613 = vrot.slane %v4608, 4
          %v4614 = vsel %vm2219, 0, %v4613
          %v4615 = vrot.slane %v4612, 4
          %v4616 = vsel %vm2219, 0, %v4615
          %v4619 = vunpack.c.l.s4 1983009808
          %v4620 = vunpack.c.0.s8 %v4619
          %v4621 = vperm.slane %v3643, %v4620
          %v4622 = vrot.slane %v4621, 4
          %v4623 = vsel %vm2219, 0, %v4622
          %v4625 = vunpack.c.l.s4 1934713408
          %v4626 = vunpack.c.0.s8 %v4625
          %v4627 = vperm.slane %v4621, %v4626
          %v4629 = vunpack.c.l.s4 1934713408
          %v4630 = vunpack.c.0.s8 %v4629
          %v4631 = vperm.slane %v4623, %v4630
          %v4632 = vrot.slane %v4627, 4
          %v4633 = vsel %vm2219, 0, %v4632
          %v4634 = vrot.slane %v4631, 4
          %v4635 = vsel %vm2219, 0, %v4634
          %v4638 = vunpack.c.l.s4 1983009808
          %v4639 = vunpack.c.0.s8 %v4638
          %v4640 = vperm.slane %v3646, %v4639
          %v4641 = vrot.slane %v4640, 4
          %v4642 = vsel %vm2219, 0, %v4641
          %v4644 = vunpack.c.l.s4 1934713408
          %v4645 = vunpack.c.0.s8 %v4644
          %v4646 = vperm.slane %v4640, %v4645
          %v4648 = vunpack.c.l.s4 1934713408
          %v4649 = vunpack.c.0.s8 %v4648
          %v4650 = vperm.slane %v4642, %v4649
          %v4651 = vrot.slane %v4646, 4
          %v4652 = vsel %vm2219, 0, %v4651
          %v4653 = vrot.slane %v4650, 4
          %v4654 = vsel %vm2219, 0, %v4653
          %v4657 = vunpack.c.l.s4 1983009808
          %v4658 = vunpack.c.0.s8 %v4657
          %v4659 = vperm.slane %v3649, %v4658
          %v4660 = vrot.slane %v4659, 4
          %v4661 = vsel %vm2219, 0, %v4660
          %v4663 = vunpack.c.l.s4 1934713408
          %v4664 = vunpack.c.0.s8 %v4663
          %v4665 = vperm.slane %v4659, %v4664
          %v4667 = vunpack.c.l.s4 1934713408
          %v4668 = vunpack.c.0.s8 %v4667
          %v4669 = vperm.slane %v4661, %v4668
          %v4670 = vrot.slane %v4665, 4
          %v4671 = vsel %vm2219, 0, %v4670
          %v4672 = vrot.slane %v4669, 4
          %v4673 = vsel %vm2219, 0, %v4672
          %v4676 = vunpack.c.l.s4 1983009808
          %v4677 = vunpack.c.0.s8 %v4676
          %v4678 = vperm.slane %v3652, %v4677
          %v4679 = vrot.slane %v4678, 4
          %v4680 = vsel %vm2219, 0, %v4679
          %v4682 = vunpack.c.l.s4 1934713408
          %v4683 = vunpack.c.0.s8 %v4682
          %v4684 = vperm.slane %v4678, %v4683
          %v4686 = vunpack.c.l.s4 1934713408
          %v4687 = vunpack.c.0.s8 %v4686
          %v4688 = vperm.slane %v4680, %v4687
          %v4689 = vrot.slane %v4684, 4
          %v4690 = vsel %vm2219, 0, %v4689
          %v4691 = vrot.slane %v4688, 4
          %v4692 = vsel %vm2219, 0, %v4691
          %v4695 = vunpack.c.l.s4 1983009808
          %v4696 = vunpack.c.0.s8 %v4695
          %v4697 = vperm.slane %v3655, %v4696
          %v4698 = vrot.slane %v4697, 4
          %v4699 = vsel %vm2219, 0, %v4698
          %v4701 = vunpack.c.l.s4 1934713408
          %v4702 = vunpack.c.0.s8 %v4701
          %v4703 = vperm.slane %v4697, %v4702
          %v4705 = vunpack.c.l.s4 1934713408
          %v4706 = vunpack.c.0.s8 %v4705
          %v4707 = vperm.slane %v4699, %v4706
          %v4708 = vrot.slane %v4703, 4
          %v4709 = vsel %vm2219, 0, %v4708
          %v4710 = vrot.slane %v4707, 4
          %v4711 = vsel %vm2219, 0, %v4710
          %v4714 = vunpack.c.l.s4 1983009808
          %v4715 = vunpack.c.0.s8 %v4714
          %v4716 = vperm.slane %v3658, %v4715
          %v4717 = vrot.slane %v4716, 4
          %v4718 = vsel %vm2219, 0, %v4717
          %v4720 = vunpack.c.l.s4 1934713408
          %v4721 = vunpack.c.0.s8 %v4720
          %v4722 = vperm.slane %v4716, %v4721
          %v4724 = vunpack.c.l.s4 1934713408
          %v4725 = vunpack.c.0.s8 %v4724
          %v4726 = vperm.slane %v4718, %v4725
          %v4727 = vrot.slane %v4722, 4
          %v4728 = vsel %vm2219, 0, %v4727
          %v4729 = vrot.slane %v4726, 4
          %v4730 = vsel %vm2219, 0, %v4729
          %v4733 = vunpack.c.l.s4 1983009808
          %v4734 = vunpack.c.0.s8 %v4733
          %v4735 = vperm.slane %v3661, %v4734
          %v4736 = vrot.slane %v4735, 4
          %v4737 = vsel %vm2219, 0, %v4736
          %v4739 = vunpack.c.l.s4 1934713408
          %v4740 = vunpack.c.0.s8 %v4739
          %v4741 = vperm.slane %v4735, %v4740
          %v4743 = vunpack.c.l.s4 1934713408
          %v4744 = vunpack.c.0.s8 %v4743
          %v4745 = vperm.slane %v4737, %v4744
          %v4746 = vrot.slane %v4741, 4
          %v4747 = vsel %vm2219, 0, %v4746
          %v4748 = vrot.slane %v4745, 4
          %v4749 = vsel %vm2219, 0, %v4748
          %v4752 = vunpack.c.l.s4 1983009808
          %v4753 = vunpack.c.0.s8 %v4752
          %v4754 = vperm.slane %v3664, %v4753
          %v4755 = vrot.slane %v4754, 4
          %v4756 = vsel %vm2219, 0, %v4755
          %v4758 = vunpack.c.l.s4 1934713408
          %v4759 = vunpack.c.0.s8 %v4758
          %v4760 = vperm.slane %v4754, %v4759
          %v4762 = vunpack.c.l.s4 1934713408
          %v4763 = vunpack.c.0.s8 %v4762
          %v4764 = vperm.slane %v4756, %v4763
          %v4765 = vrot.slane %v4760, 4
          %v4766 = vsel %vm2219, 0, %v4765
          %v4767 = vrot.slane %v4764, 4
          %v4768 = vsel %vm2219, 0, %v4767
          %v4771 = vunpack.c.l.s4 1983009808
          %v4772 = vunpack.c.0.s8 %v4771
          %v4773 = vperm.slane %v3667, %v4772
          %v4774 = vrot.slane %v4773, 4
          %v4775 = vsel %vm2219, 0, %v4774
          %v4777 = vunpack.c.l.s4 1934713408
          %v4778 = vunpack.c.0.s8 %v4777
          %v4779 = vperm.slane %v4773, %v4778
          %v4781 = vunpack.c.l.s4 1934713408
          %v4782 = vunpack.c.0.s8 %v4781
          %v4783 = vperm.slane %v4775, %v4782
          %v4784 = vrot.slane %v4779, 4
          %v4785 = vsel %vm2219, 0, %v4784
          %v4786 = vrot.slane %v4783, 4
          %v4787 = vsel %vm2219, 0, %v4786
          %v4790 = vunpack.c.l.s4 1983009808
          %v4791 = vunpack.c.0.s8 %v4790
          %v4792 = vperm.slane %v3670, %v4791
          %v4793 = vrot.slane %v4792, 4
          %v4794 = vsel %vm2219, 0, %v4793
          %v4796 = vunpack.c.l.s4 1934713408
          %v4797 = vunpack.c.0.s8 %v4796
          %v4798 = vperm.slane %v4792, %v4797
          %v4800 = vunpack.c.l.s4 1934713408
          %v4801 = vunpack.c.0.s8 %v4800
          %v4802 = vperm.slane %v4794, %v4801
          %v4803 = vrot.slane %v4798, 4
          %v4804 = vsel %vm2219, 0, %v4803
          %v4805 = vrot.slane %v4802, 4
          %v4806 = vsel %vm2219, 0, %v4805
          %v4809 = vunpack.c.l.s4 1983009808
          %v4810 = vunpack.c.0.s8 %v4809
          %v4811 = vperm.slane %v3673, %v4810
          %v4812 = vrot.slane %v4811, 4
          %v4813 = vsel %vm2219, 0, %v4812
          %v4815 = vunpack.c.l.s4 1934713408
          %v4816 = vunpack.c.0.s8 %v4815
          %v4817 = vperm.slane %v4811, %v4816
          %v4819 = vunpack.c.l.s4 1934713408
          %v4820 = vunpack.c.0.s8 %v4819
          %v4821 = vperm.slane %v4813, %v4820
          %v4822 = vrot.slane %v4817, 4
          %v4823 = vsel %vm2219, 0, %v4822
          %v4824 = vrot.slane %v4821, 4
          %v4825 = vsel %vm2219, 0, %v4824
          %v4828 = vunpack.c.l.s4 1983009808
          %v4829 = vunpack.c.0.s8 %v4828
          %v4830 = vperm.slane %v3676, %v4829
          %v4831 = vrot.slane %v4830, 4
          %v4832 = vsel %vm2219, 0, %v4831
          %v4834 = vunpack.c.l.s4 1934713408
          %v4835 = vunpack.c.0.s8 %v4834
          %v4836 = vperm.slane %v4830, %v4835
          %v4838 = vunpack.c.l.s4 1934713408
          %v4839 = vunpack.c.0.s8 %v4838
          %v4840 = vperm.slane %v4832, %v4839
          %v4841 = vrot.slane %v4836, 4
          %v4842 = vsel %vm2219, 0, %v4841
          %v4843 = vrot.slane %v4840, 4
          %v4844 = vsel %vm2219, 0, %v4843
          %v4847 = vunpack.c.l.s4 1983009808
          %v4848 = vunpack.c.0.s8 %v4847
          %v4849 = vperm.slane %v3679, %v4848
          %v4850 = vrot.slane %v4849, 4
          %v4851 = vsel %vm2219, 0, %v4850
          %v4853 = vunpack.c.l.s4 1934713408
          %v4854 = vunpack.c.0.s8 %v4853
          %v4855 = vperm.slane %v4849, %v4854
          %v4857 = vunpack.c.l.s4 1934713408
          %v4858 = vunpack.c.0.s8 %v4857
          %v4859 = vperm.slane %v4851, %v4858
          %v4860 = vrot.slane %v4855, 4
          %v4861 = vsel %vm2219, 0, %v4860
          %v4862 = vrot.slane %v4859, 4
          %v4863 = vsel %vm2219, 0, %v4862
          %v4866 = vunpack.c.l.s4 1983009808
          %v4867 = vunpack.c.0.s8 %v4866
          %v4868 = vperm.slane %v3682, %v4867
          %v4869 = vrot.slane %v4868, 4
          %v4870 = vsel %vm2219, 0, %v4869
          %v4872 = vunpack.c.l.s4 1934713408
          %v4873 = vunpack.c.0.s8 %v4872
          %v4874 = vperm.slane %v4868, %v4873
          %v4876 = vunpack.c.l.s4 1934713408
          %v4877 = vunpack.c.0.s8 %v4876
          %v4878 = vperm.slane %v4870, %v4877
          %v4879 = vrot.slane %v4874, 4
          %v4880 = vsel %vm2219, 0, %v4879
          %v4881 = vrot.slane %v4878, 4
          %v4882 = vsel %vm2219, 0, %v4881
          %v4885 = vunpack.c.l.s4 1983009808
          %v4886 = vunpack.c.0.s8 %v4885
          %v4887 = vperm.slane %v3685, %v4886
          %v4888 = vrot.slane %v4887, 4
          %v4889 = vsel %vm2219, 0, %v4888
          %v4891 = vunpack.c.l.s4 1934713408
          %v4892 = vunpack.c.0.s8 %v4891
          %v4893 = vperm.slane %v4887, %v4892
          %v4895 = vunpack.c.l.s4 1934713408
          %v4896 = vunpack.c.0.s8 %v4895
          %v4897 = vperm.slane %v4889, %v4896
          %v4898 = vrot.slane %v4893, 4
          %v4899 = vsel %vm2219, 0, %v4898
          %v4900 = vrot.slane %v4897, 4
          %v4901 = vsel %vm2219, 0, %v4900
          %v4902 = vsel %vm2219, %v2231, %v2224
          %v4904 = vunpack.c.l.s4 1983009808
          %v4905 = vunpack.c.0.s8 %v4904
          %v4906 = vperm.slane %v4902, %v4905
          %v4907 = vrot.slane %v2232, 4
          %v4908 = vsel %vm2219, %v4907, %v2230
          %v4910 = vunpack.c.l.s4 1983009808
          %v4911 = vunpack.c.0.s8 %v4910
          %v4912 = vperm.slane %v4908, %v4911
          %v4913 = vrot.slane %v4912, 4
          %v4914 = vsel %vm2219, %v4913, %v4906
          %v4916 = vunpack.c.l.s4 1934713408
          %v4917 = vunpack.c.0.s8 %v4916
          %v4918 = vperm.slane %v4914, %v4917
          %v4919 = vsel %vm2219, %v2250, %v2243
          %v4921 = vunpack.c.l.s4 1983009808
          %v4922 = vunpack.c.0.s8 %v4921
          %v4923 = vperm.slane %v4919, %v4922
          %v4924 = vrot.slane %v2251, 4
          %v4925 = vsel %vm2219, %v4924, %v2249
          %v4927 = vunpack.c.l.s4 1983009808
          %v4928 = vunpack.c.0.s8 %v4927
          %v4929 = vperm.slane %v4925, %v4928
          %v4930 = vrot.slane %v4929, 4
          %v4931 = vsel %vm2219, %v4930, %v4923
          %v4933 = vunpack.c.l.s4 1934713408
          %v4934 = vunpack.c.0.s8 %v4933
          %v4935 = vperm.slane %v4931, %v4934
          %v4936 = vsel %vm2219, %v2269, %v2262
          %v4938 = vunpack.c.l.s4 1983009808
          %v4939 = vunpack.c.0.s8 %v4938
          %v4940 = vperm.slane %v4936, %v4939
          %v4941 = vrot.slane %v2270, 4
          %v4942 = vsel %vm2219, %v4941, %v2268
          %v4944 = vunpack.c.l.s4 1983009808
          %v4945 = vunpack.c.0.s8 %v4944
          %v4946 = vperm.slane %v4942, %v4945
          %v4947 = vrot.slane %v4946, 4
          %v4948 = vsel %vm2219, %v4947, %v4940
          %v4950 = vunpack.c.l.s4 1934713408
          %v4951 = vunpack.c.0.s8 %v4950
          %v4952 = vperm.slane %v4948, %v4951
          %v4953 = vsel %vm2219, %v2288, %v2281
          %v4955 = vunpack.c.l.s4 1983009808
          %v4956 = vunpack.c.0.s8 %v4955
          %v4957 = vperm.slane %v4953, %v4956
          %v4958 = vrot.slane %v2289, 4
          %v4959 = vsel %vm2219, %v4958, %v2287
          %v4961 = vunpack.c.l.s4 1983009808
          %v4962 = vunpack.c.0.s8 %v4961
          %v4963 = vperm.slane %v4959, %v4962
          %v4964 = vrot.slane %v4963, 4
          %v4965 = vsel %vm2219, %v4964, %v4957
          %v4967 = vunpack.c.l.s4 1934713408
          %v4968 = vunpack.c.0.s8 %v4967
          %v4969 = vperm.slane %v4965, %v4968
          %v4970 = vsel %vm2219, %v2307, %v2300
          %v4972 = vunpack.c.l.s4 1983009808
          %v4973 = vunpack.c.0.s8 %v4972
          %v4974 = vperm.slane %v4970, %v4973
          %v4975 = vrot.slane %v2308, 4
          %v4976 = vsel %vm2219, %v4975, %v2306
          %v4978 = vunpack.c.l.s4 1983009808
          %v4979 = vunpack.c.0.s8 %v4978
          %v4980 = vperm.slane %v4976, %v4979
          %v4981 = vrot.slane %v4980, 4
          %v4982 = vsel %vm2219, %v4981, %v4974
          %v4984 = vunpack.c.l.s4 1934713408
          %v4985 = vunpack.c.0.s8 %v4984
          %v4986 = vperm.slane %v4982, %v4985
          %v4987 = vsel %vm2219, %v2326, %v2319
          %v4989 = vunpack.c.l.s4 1983009808
          %v4990 = vunpack.c.0.s8 %v4989
          %v4991 = vperm.slane %v4987, %v4990
          %v4992 = vrot.slane %v2327, 4
          %v4993 = vsel %vm2219, %v4992, %v2325
          %v4995 = vunpack.c.l.s4 1983009808
          %v4996 = vunpack.c.0.s8 %v4995
          %v4997 = vperm.slane %v4993, %v4996
          %v4998 = vrot.slane %v4997, 4
          %v4999 = vsel %vm2219, %v4998, %v4991
          %v5001 = vunpack.c.l.s4 1934713408
          %v5002 = vunpack.c.0.s8 %v5001
          %v5003 = vperm.slane %v4999, %v5002
          %v5004 = vsel %vm2219, %v2345, %v2338
          %v5006 = vunpack.c.l.s4 1983009808
          %v5007 = vunpack.c.0.s8 %v5006
          %v5008 = vperm.slane %v5004, %v5007
          %v5009 = vrot.slane %v2346, 4
          %v5010 = vsel %vm2219, %v5009, %v2344
          %v5012 = vunpack.c.l.s4 1983009808
          %v5013 = vunpack.c.0.s8 %v5012
          %v5014 = vperm.slane %v5010, %v5013
          %v5015 = vrot.slane %v5014, 4
          %v5016 = vsel %vm2219, %v5015, %v5008
          %v5018 = vunpack.c.l.s4 1934713408
          %v5019 = vunpack.c.0.s8 %v5018
          %v5020 = vperm.slane %v5016, %v5019
          %v5021 = vsel %vm2219, %v2364, %v2357
          %v5023 = vunpack.c.l.s4 1983009808
          %v5024 = vunpack.c.0.s8 %v5023
          %v5025 = vperm.slane %v5021, %v5024
          %v5026 = vrot.slane %v2365, 4
          %v5027 = vsel %vm2219, %v5026, %v2363
          %v5029 = vunpack.c.l.s4 1983009808
          %v5030 = vunpack.c.0.s8 %v5029
          %v5031 = vperm.slane %v5027, %v5030
          %v5032 = vrot.slane %v5031, 4
          %v5033 = vsel %vm2219, %v5032, %v5025
          %v5035 = vunpack.c.l.s4 1934713408
          %v5036 = vunpack.c.0.s8 %v5035
          %v5037 = vperm.slane %v5033, %v5036
          %v5038 = vsel %vm2219, %v2383, %v2376
          %v5040 = vunpack.c.l.s4 1983009808
          %v5041 = vunpack.c.0.s8 %v5040
          %v5042 = vperm.slane %v5038, %v5041
          %v5043 = vrot.slane %v2384, 4
          %v5044 = vsel %vm2219, %v5043, %v2382
          %v5046 = vunpack.c.l.s4 1983009808
          %v5047 = vunpack.c.0.s8 %v5046
          %v5048 = vperm.slane %v5044, %v5047
          %v5049 = vrot.slane %v5048, 4
          %v5050 = vsel %vm2219, %v5049, %v5042
          %v5052 = vunpack.c.l.s4 1934713408
          %v5053 = vunpack.c.0.s8 %v5052
          %v5054 = vperm.slane %v5050, %v5053
          %v5055 = vsel %vm2219, %v2402, %v2395
          %v5057 = vunpack.c.l.s4 1983009808
          %v5058 = vunpack.c.0.s8 %v5057
          %v5059 = vperm.slane %v5055, %v5058
          %v5060 = vrot.slane %v2403, 4
          %v5061 = vsel %vm2219, %v5060, %v2401
          %v5063 = vunpack.c.l.s4 1983009808
          %v5064 = vunpack.c.0.s8 %v5063
          %v5065 = vperm.slane %v5061, %v5064
          %v5066 = vrot.slane %v5065, 4
          %v5067 = vsel %vm2219, %v5066, %v5059
          %v5069 = vunpack.c.l.s4 1934713408
          %v5070 = vunpack.c.0.s8 %v5069
          %v5071 = vperm.slane %v5067, %v5070
          %v5072 = vsel %vm2219, %v2421, %v2414
          %v5074 = vunpack.c.l.s4 1983009808
          %v5075 = vunpack.c.0.s8 %v5074
          %v5076 = vperm.slane %v5072, %v5075
          %v5077 = vrot.slane %v2422, 4
          %v5078 = vsel %vm2219, %v5077, %v2420
          %v5080 = vunpack.c.l.s4 1983009808
          %v5081 = vunpack.c.0.s8 %v5080
          %v5082 = vperm.slane %v5078, %v5081
          %v5083 = vrot.slane %v5082, 4
          %v5084 = vsel %vm2219, %v5083, %v5076
          %v5086 = vunpack.c.l.s4 1934713408
          %v5087 = vunpack.c.0.s8 %v5086
          %v5088 = vperm.slane %v5084, %v5087
          %v5089 = vsel %vm2219, %v2440, %v2433
          %v5091 = vunpack.c.l.s4 1983009808
          %v5092 = vunpack.c.0.s8 %v5091
          %v5093 = vperm.slane %v5089, %v5092
          %v5094 = vrot.slane %v2441, 4
          %v5095 = vsel %vm2219, %v5094, %v2439
          %v5097 = vunpack.c.l.s4 1983009808
          %v5098 = vunpack.c.0.s8 %v5097
          %v5099 = vperm.slane %v5095, %v5098
          %v5100 = vrot.slane %v5099, 4
          %v5101 = vsel %vm2219, %v5100, %v5093
          %v5103 = vunpack.c.l.s4 1934713408
          %v5104 = vunpack.c.0.s8 %v5103
          %v5105 = vperm.slane %v5101, %v5104
          %v5106 = vsel %vm2219, %v2459, %v2452
          %v5108 = vunpack.c.l.s4 1983009808
          %v5109 = vunpack.c.0.s8 %v5108
          %v5110 = vperm.slane %v5106, %v5109
          %v5111 = vrot.slane %v2460, 4
          %v5112 = vsel %vm2219, %v5111, %v2458
          %v5114 = vunpack.c.l.s4 1983009808
          %v5115 = vunpack.c.0.s8 %v5114
          %v5116 = vperm.slane %v5112, %v5115
          %v5117 = vrot.slane %v5116, 4
          %v5118 = vsel %vm2219, %v5117, %v5110
          %v5120 = vunpack.c.l.s4 1934713408
          %v5121 = vunpack.c.0.s8 %v5120
          %v5122 = vperm.slane %v5118, %v5121
          %v5123 = vsel %vm2219, %v2478, %v2471
          %v5125 = vunpack.c.l.s4 1983009808
          %v5126 = vunpack.c.0.s8 %v5125
          %v5127 = vperm.slane %v5123, %v5126
          %v5128 = vrot.slane %v2479, 4
          %v5129 = vsel %vm2219, %v5128, %v2477
          %v5131 = vunpack.c.l.s4 1983009808
          %v5132 = vunpack.c.0.s8 %v5131
          %v5133 = vperm.slane %v5129, %v5132
          %v5134 = vrot.slane %v5133, 4
          %v5135 = vsel %vm2219, %v5134, %v5127
          %v5137 = vunpack.c.l.s4 1934713408
          %v5138 = vunpack.c.0.s8 %v5137
          %v5139 = vperm.slane %v5135, %v5138
          %v5140 = vsel %vm2219, %v2497, %v2490
          %v5142 = vunpack.c.l.s4 1983009808
          %v5143 = vunpack.c.0.s8 %v5142
          %v5144 = vperm.slane %v5140, %v5143
          %v5145 = vrot.slane %v2498, 4
          %v5146 = vsel %vm2219, %v5145, %v2496
          %v5148 = vunpack.c.l.s4 1983009808
          %v5149 = vunpack.c.0.s8 %v5148
          %v5150 = vperm.slane %v5146, %v5149
          %v5151 = vrot.slane %v5150, 4
          %v5152 = vsel %vm2219, %v5151, %v5144
          %v5154 = vunpack.c.l.s4 1934713408
          %v5155 = vunpack.c.0.s8 %v5154
          %v5156 = vperm.slane %v5152, %v5155
          %v5157 = vsel %vm2219, %v2516, %v2509
          %v5159 = vunpack.c.l.s4 1983009808
          %v5160 = vunpack.c.0.s8 %v5159
          %v5161 = vperm.slane %v5157, %v5160
          %v5162 = vrot.slane %v2517, 4
          %v5163 = vsel %vm2219, %v5162, %v2515
          %v5165 = vunpack.c.l.s4 1983009808
          %v5166 = vunpack.c.0.s8 %v5165
          %v5167 = vperm.slane %v5163, %v5166
          %v5168 = vrot.slane %v5167, 4
          %v5169 = vsel %vm2219, %v5168, %v5161
          %v5171 = vunpack.c.l.s4 1934713408
          %v5172 = vunpack.c.0.s8 %v5171
          %v5173 = vperm.slane %v5169, %v5172
          %v5174 = vsel %vm2219, %v2535, %v2528
          %v5176 = vunpack.c.l.s4 1983009808
          %v5177 = vunpack.c.0.s8 %v5176
          %v5178 = vperm.slane %v5174, %v5177
          %v5179 = vrot.slane %v2536, 4
          %v5180 = vsel %vm2219, %v5179, %v2534
          %v5182 = vunpack.c.l.s4 1983009808
          %v5183 = vunpack.c.0.s8 %v5182
          %v5184 = vperm.slane %v5180, %v5183
          %v5185 = vrot.slane %v5184, 4
          %v5186 = vsel %vm2219, %v5185, %v5178
          %v5188 = vunpack.c.l.s4 1934713408
          %v5189 = vunpack.c.0.s8 %v5188
          %v5190 = vperm.slane %v5186, %v5189
          %v5191 = vsel %vm2219, %v2554, %v2547
          %v5193 = vunpack.c.l.s4 1983009808
          %v5194 = vunpack.c.0.s8 %v5193
          %v5195 = vperm.slane %v5191, %v5194
          %v5196 = vrot.slane %v2555, 4
          %v5197 = vsel %vm2219, %v5196, %v2553
          %v5199 = vunpack.c.l.s4 1983009808
          %v5200 = vunpack.c.0.s8 %v5199
          %v5201 = vperm.slane %v5197, %v5200
          %v5202 = vrot.slane %v5201, 4
          %v5203 = vsel %vm2219, %v5202, %v5195
          %v5205 = vunpack.c.l.s4 1934713408
          %v5206 = vunpack.c.0.s8 %v5205
          %v5207 = vperm.slane %v5203, %v5206
          %v5208 = vsel %vm2219, %v2573, %v2566
          %v5210 = vunpack.c.l.s4 1983009808
          %v5211 = vunpack.c.0.s8 %v5210
          %v5212 = vperm.slane %v5208, %v5211
          %v5213 = vrot.slane %v2574, 4
          %v5214 = vsel %vm2219, %v5213, %v2572
          %v5216 = vunpack.c.l.s4 1983009808
          %v5217 = vunpack.c.0.s8 %v5216
          %v5218 = vperm.slane %v5214, %v5217
          %v5219 = vrot.slane %v5218, 4
          %v5220 = vsel %vm2219, %v5219, %v5212
          %v5222 = vunpack.c.l.s4 1934713408
          %v5223 = vunpack.c.0.s8 %v5222
          %v5224 = vperm.slane %v5220, %v5223
          %v5225 = vsel %vm2219, %v2592, %v2585
          %v5227 = vunpack.c.l.s4 1983009808
          %v5228 = vunpack.c.0.s8 %v5227
          %v5229 = vperm.slane %v5225, %v5228
          %v5230 = vrot.slane %v2593, 4
          %v5231 = vsel %vm2219, %v5230, %v2591
          %v5233 = vunpack.c.l.s4 1983009808
          %v5234 = vunpack.c.0.s8 %v5233
          %v5235 = vperm.slane %v5231, %v5234
          %v5236 = vrot.slane %v5235, 4
          %v5237 = vsel %vm2219, %v5236, %v5229
          %v5239 = vunpack.c.l.s4 1934713408
          %v5240 = vunpack.c.0.s8 %v5239
          %v5241 = vperm.slane %v5237, %v5240
          %v5242 = vsel %vm2219, %v2611, %v2604
          %v5244 = vunpack.c.l.s4 1983009808
          %v5245 = vunpack.c.0.s8 %v5244
          %v5246 = vperm.slane %v5242, %v5245
          %v5247 = vrot.slane %v2612, 4
          %v5248 = vsel %vm2219, %v5247, %v2610
          %v5250 = vunpack.c.l.s4 1983009808
          %v5251 = vunpack.c.0.s8 %v5250
          %v5252 = vperm.slane %v5248, %v5251
          %v5253 = vrot.slane %v5252, 4
          %v5254 = vsel %vm2219, %v5253, %v5246
          %v5256 = vunpack.c.l.s4 1934713408
          %v5257 = vunpack.c.0.s8 %v5256
          %v5258 = vperm.slane %v5254, %v5257
          %v5259 = vsel %vm2219, %v2630, %v2623
          %v5261 = vunpack.c.l.s4 1983009808
          %v5262 = vunpack.c.0.s8 %v5261
          %v5263 = vperm.slane %v5259, %v5262
          %v5264 = vrot.slane %v2631, 4
          %v5265 = vsel %vm2219, %v5264, %v2629
          %v5267 = vunpack.c.l.s4 1983009808
          %v5268 = vunpack.c.0.s8 %v5267
          %v5269 = vperm.slane %v5265, %v5268
          %v5270 = vrot.slane %v5269, 4
          %v5271 = vsel %vm2219, %v5270, %v5263
          %v5273 = vunpack.c.l.s4 1934713408
          %v5274 = vunpack.c.0.s8 %v5273
          %v5275 = vperm.slane %v5271, %v5274
          %v5276 = vsel %vm2219, %v2649, %v2642
          %v5278 = vunpack.c.l.s4 1983009808
          %v5279 = vunpack.c.0.s8 %v5278
          %v5280 = vperm.slane %v5276, %v5279
          %v5281 = vrot.slane %v2650, 4
          %v5282 = vsel %vm2219, %v5281, %v2648
          %v5284 = vunpack.c.l.s4 1983009808
          %v5285 = vunpack.c.0.s8 %v5284
          %v5286 = vperm.slane %v5282, %v5285
          %v5287 = vrot.slane %v5286, 4
          %v5288 = vsel %vm2219, %v5287, %v5280
          %v5290 = vunpack.c.l.s4 1934713408
          %v5291 = vunpack.c.0.s8 %v5290
          %v5292 = vperm.slane %v5288, %v5291
          %v5293 = vsel %vm2219, %v2668, %v2661
          %v5295 = vunpack.c.l.s4 1983009808
          %v5296 = vunpack.c.0.s8 %v5295
          %v5297 = vperm.slane %v5293, %v5296
          %v5298 = vrot.slane %v2669, 4
          %v5299 = vsel %vm2219, %v5298, %v2667
          %v5301 = vunpack.c.l.s4 1983009808
          %v5302 = vunpack.c.0.s8 %v5301
          %v5303 = vperm.slane %v5299, %v5302
          %v5304 = vrot.slane %v5303, 4
          %v5305 = vsel %vm2219, %v5304, %v5297
          %v5307 = vunpack.c.l.s4 1934713408
          %v5308 = vunpack.c.0.s8 %v5307
          %v5309 = vperm.slane %v5305, %v5308
          %v5310 = vsel %vm2219, %v2687, %v2680
          %v5312 = vunpack.c.l.s4 1983009808
          %v5313 = vunpack.c.0.s8 %v5312
          %v5314 = vperm.slane %v5310, %v5313
          %v5315 = vrot.slane %v2688, 4
          %v5316 = vsel %vm2219, %v5315, %v2686
          %v5318 = vunpack.c.l.s4 1983009808
          %v5319 = vunpack.c.0.s8 %v5318
          %v5320 = vperm.slane %v5316, %v5319
          %v5321 = vrot.slane %v5320, 4
          %v5322 = vsel %vm2219, %v5321, %v5314
          %v5324 = vunpack.c.l.s4 1934713408
          %v5325 = vunpack.c.0.s8 %v5324
          %v5326 = vperm.slane %v5322, %v5325
          %v5327 = vsel %vm2219, %v2706, %v2699
          %v5329 = vunpack.c.l.s4 1983009808
          %v5330 = vunpack.c.0.s8 %v5329
          %v5331 = vperm.slane %v5327, %v5330
          %v5332 = vrot.slane %v2707, 4
          %v5333 = vsel %vm2219, %v5332, %v2705
          %v5335 = vunpack.c.l.s4 1983009808
          %v5336 = vunpack.c.0.s8 %v5335
          %v5337 = vperm.slane %v5333, %v5336
          %v5338 = vrot.slane %v5337, 4
          %v5339 = vsel %vm2219, %v5338, %v5331
          %v5341 = vunpack.c.l.s4 1934713408
          %v5342 = vunpack.c.0.s8 %v5341
          %v5343 = vperm.slane %v5339, %v5342
          %v5344 = vsel %vm2219, %v2725, %v2718
          %v5346 = vunpack.c.l.s4 1983009808
          %v5347 = vunpack.c.0.s8 %v5346
          %v5348 = vperm.slane %v5344, %v5347
          %v5349 = vrot.slane %v2726, 4
          %v5350 = vsel %vm2219, %v5349, %v2724
          %v5352 = vunpack.c.l.s4 1983009808
          %v5353 = vunpack.c.0.s8 %v5352
          %v5354 = vperm.slane %v5350, %v5353
          %v5355 = vrot.slane %v5354, 4
          %v5356 = vsel %vm2219, %v5355, %v5348
          %v5358 = vunpack.c.l.s4 1934713408
          %v5359 = vunpack.c.0.s8 %v5358
          %v5360 = vperm.slane %v5356, %v5359
          %v5361 = vsel %vm2219, %v2744, %v2737
          %v5363 = vunpack.c.l.s4 1983009808
          %v5364 = vunpack.c.0.s8 %v5363
          %v5365 = vperm.slane %v5361, %v5364
          %v5366 = vrot.slane %v2745, 4
          %v5367 = vsel %vm2219, %v5366, %v2743
          %v5369 = vunpack.c.l.s4 1983009808
          %v5370 = vunpack.c.0.s8 %v5369
          %v5371 = vperm.slane %v5367, %v5370
          %v5372 = vrot.slane %v5371, 4
          %v5373 = vsel %vm2219, %v5372, %v5365
          %v5375 = vunpack.c.l.s4 1934713408
          %v5376 = vunpack.c.0.s8 %v5375
          %v5377 = vperm.slane %v5373, %v5376
          %v5378 = vsel %vm2219, %v2763, %v2756
          %v5380 = vunpack.c.l.s4 1983009808
          %v5381 = vunpack.c.0.s8 %v5380
          %v5382 = vperm.slane %v5378, %v5381
          %v5383 = vrot.slane %v2764, 4
          %v5384 = vsel %vm2219, %v5383, %v2762
          %v5386 = vunpack.c.l.s4 1983009808
          %v5387 = vunpack.c.0.s8 %v5386
          %v5388 = vperm.slane %v5384, %v5387
          %v5389 = vrot.slane %v5388, 4
          %v5390 = vsel %vm2219, %v5389, %v5382
          %v5392 = vunpack.c.l.s4 1934713408
          %v5393 = vunpack.c.0.s8 %v5392
          %v5394 = vperm.slane %v5390, %v5393
          %v5395 = vsel %vm2219, %v2782, %v2775
          %v5397 = vunpack.c.l.s4 1983009808
          %v5398 = vunpack.c.0.s8 %v5397
          %v5399 = vperm.slane %v5395, %v5398
          %v5400 = vrot.slane %v2783, 4
          %v5401 = vsel %vm2219, %v5400, %v2781
          %v5403 = vunpack.c.l.s4 1983009808
          %v5404 = vunpack.c.0.s8 %v5403
          %v5405 = vperm.slane %v5401, %v5404
          %v5406 = vrot.slane %v5405, 4
          %v5407 = vsel %vm2219, %v5406, %v5399
          %v5409 = vunpack.c.l.s4 1934713408
          %v5410 = vunpack.c.0.s8 %v5409
          %v5411 = vperm.slane %v5407, %v5410
          %v5412 = vsel %vm2219, %v2801, %v2794
          %v5414 = vunpack.c.l.s4 1983009808
          %v5415 = vunpack.c.0.s8 %v5414
          %v5416 = vperm.slane %v5412, %v5415
          %v5417 = vrot.slane %v2802, 4
          %v5418 = vsel %vm2219, %v5417, %v2800
          %v5420 = vunpack.c.l.s4 1983009808
          %v5421 = vunpack.c.0.s8 %v5420
          %v5422 = vperm.slane %v5418, %v5421
          %v5423 = vrot.slane %v5422, 4
          %v5424 = vsel %vm2219, %v5423, %v5416
          %v5426 = vunpack.c.l.s4 1934713408
          %v5427 = vunpack.c.0.s8 %v5426
          %v5428 = vperm.slane %v5424, %v5427
          %v5429 = vsel %vm2219, %v2820, %v2813
          %v5431 = vunpack.c.l.s4 1983009808
          %v5432 = vunpack.c.0.s8 %v5431
          %v5433 = vperm.slane %v5429, %v5432
          %v5434 = vrot.slane %v2821, 4
          %v5435 = vsel %vm2219, %v5434, %v2819
          %v5437 = vunpack.c.l.s4 1983009808
          %v5438 = vunpack.c.0.s8 %v5437
          %v5439 = vperm.slane %v5435, %v5438
          %v5440 = vrot.slane %v5439, 4
          %v5441 = vsel %vm2219, %v5440, %v5433
          %v5443 = vunpack.c.l.s4 1934713408
          %v5444 = vunpack.c.0.s8 %v5443
          %v5445 = vperm.slane %v5441, %v5444
          %v5446 = vsel %vm2219, %v2839, %v2832
          %v5448 = vunpack.c.l.s4 1983009808
          %v5449 = vunpack.c.0.s8 %v5448
          %v5450 = vperm.slane %v5446, %v5449
          %v5451 = vrot.slane %v2840, 4
          %v5452 = vsel %vm2219, %v5451, %v2838
          %v5454 = vunpack.c.l.s4 1983009808
          %v5455 = vunpack.c.0.s8 %v5454
          %v5456 = vperm.slane %v5452, %v5455
          %v5457 = vrot.slane %v5456, 4
          %v5458 = vsel %vm2219, %v5457, %v5450
          %v5460 = vunpack.c.l.s4 1934713408
          %v5461 = vunpack.c.0.s8 %v5460
          %v5462 = vperm.slane %v5458, %v5461
          %v5463 = vsel %vm2219, %v2858, %v2851
          %v5465 = vunpack.c.l.s4 1983009808
          %v5466 = vunpack.c.0.s8 %v5465
          %v5467 = vperm.slane %v5463, %v5466
          %v5468 = vrot.slane %v2859, 4
          %v5469 = vsel %vm2219, %v5468, %v2857
          %v5471 = vunpack.c.l.s4 1983009808
          %v5472 = vunpack.c.0.s8 %v5471
          %v5473 = vperm.slane %v5469, %v5472
          %v5474 = vrot.slane %v5473, 4
          %v5475 = vsel %vm2219, %v5474, %v5467
          %v5477 = vunpack.c.l.s4 1934713408
          %v5478 = vunpack.c.0.s8 %v5477
          %v5479 = vperm.slane %v5475, %v5478
          %v5480 = vsel %vm2219, %v2877, %v2870
          %v5482 = vunpack.c.l.s4 1983009808
          %v5483 = vunpack.c.0.s8 %v5482
          %v5484 = vperm.slane %v5480, %v5483
          %v5485 = vrot.slane %v2878, 4
          %v5486 = vsel %vm2219, %v5485, %v2876
          %v5488 = vunpack.c.l.s4 1983009808
          %v5489 = vunpack.c.0.s8 %v5488
          %v5490 = vperm.slane %v5486, %v5489
          %v5491 = vrot.slane %v5490, 4
          %v5492 = vsel %vm2219, %v5491, %v5484
          %v5494 = vunpack.c.l.s4 1934713408
          %v5495 = vunpack.c.0.s8 %v5494
          %v5496 = vperm.slane %v5492, %v5495
          %v5497 = vsel %vm2219, %v2896, %v2889
          %v5499 = vunpack.c.l.s4 1983009808
          %v5500 = vunpack.c.0.s8 %v5499
          %v5501 = vperm.slane %v5497, %v5500
          %v5502 = vrot.slane %v2897, 4
          %v5503 = vsel %vm2219, %v5502, %v2895
          %v5505 = vunpack.c.l.s4 1983009808
          %v5506 = vunpack.c.0.s8 %v5505
          %v5507 = vperm.slane %v5503, %v5506
          %v5508 = vrot.slane %v5507, 4
          %v5509 = vsel %vm2219, %v5508, %v5501
          %v5511 = vunpack.c.l.s4 1934713408
          %v5512 = vunpack.c.0.s8 %v5511
          %v5513 = vperm.slane %v5509, %v5512
          %v5514 = vsel %vm2219, %v2915, %v2908
          %v5516 = vunpack.c.l.s4 1983009808
          %v5517 = vunpack.c.0.s8 %v5516
          %v5518 = vperm.slane %v5514, %v5517
          %v5519 = vrot.slane %v2916, 4
          %v5520 = vsel %vm2219, %v5519, %v2914
          %v5522 = vunpack.c.l.s4 1983009808
          %v5523 = vunpack.c.0.s8 %v5522
          %v5524 = vperm.slane %v5520, %v5523
          %v5525 = vrot.slane %v5524, 4
          %v5526 = vsel %vm2219, %v5525, %v5518
          %v5528 = vunpack.c.l.s4 1934713408
          %v5529 = vunpack.c.0.s8 %v5528
          %v5530 = vperm.slane %v5526, %v5529
          %v5531 = vsel %vm2219, %v2934, %v2927
          %v5533 = vunpack.c.l.s4 1983009808
          %v5534 = vunpack.c.0.s8 %v5533
          %v5535 = vperm.slane %v5531, %v5534
          %v5536 = vrot.slane %v2935, 4
          %v5537 = vsel %vm2219, %v5536, %v2933
          %v5539 = vunpack.c.l.s4 1983009808
          %v5540 = vunpack.c.0.s8 %v5539
          %v5541 = vperm.slane %v5537, %v5540
          %v5542 = vrot.slane %v5541, 4
          %v5543 = vsel %vm2219, %v5542, %v5535
          %v5545 = vunpack.c.l.s4 1934713408
          %v5546 = vunpack.c.0.s8 %v5545
          %v5547 = vperm.slane %v5543, %v5546
          %v5548 = vsel %vm2219, %v2953, %v2946
          %v5550 = vunpack.c.l.s4 1983009808
          %v5551 = vunpack.c.0.s8 %v5550
          %v5552 = vperm.slane %v5548, %v5551
          %v5553 = vrot.slane %v2954, 4
          %v5554 = vsel %vm2219, %v5553, %v2952
          %v5556 = vunpack.c.l.s4 1983009808
          %v5557 = vunpack.c.0.s8 %v5556
          %v5558 = vperm.slane %v5554, %v5557
          %v5559 = vrot.slane %v5558, 4
          %v5560 = vsel %vm2219, %v5559, %v5552
          %v5562 = vunpack.c.l.s4 1934713408
          %v5563 = vunpack.c.0.s8 %v5562
          %v5564 = vperm.slane %v5560, %v5563
          %v5565 = vsel %vm2219, %v2972, %v2965
          %v5567 = vunpack.c.l.s4 1983009808
          %v5568 = vunpack.c.0.s8 %v5567
          %v5569 = vperm.slane %v5565, %v5568
          %v5570 = vrot.slane %v2973, 4
          %v5571 = vsel %vm2219, %v5570, %v2971
          %v5573 = vunpack.c.l.s4 1983009808
          %v5574 = vunpack.c.0.s8 %v5573
          %v5575 = vperm.slane %v5571, %v5574
          %v5576 = vrot.slane %v5575, 4
          %v5577 = vsel %vm2219, %v5576, %v5569
          %v5579 = vunpack.c.l.s4 1934713408
          %v5580 = vunpack.c.0.s8 %v5579
          %v5581 = vperm.slane %v5577, %v5580
          %v5582 = vsel %vm2219, %v2991, %v2984
          %v5584 = vunpack.c.l.s4 1983009808
          %v5585 = vunpack.c.0.s8 %v5584
          %v5586 = vperm.slane %v5582, %v5585
          %v5587 = vrot.slane %v2992, 4
          %v5588 = vsel %vm2219, %v5587, %v2990
          %v5590 = vunpack.c.l.s4 1983009808
          %v5591 = vunpack.c.0.s8 %v5590
          %v5592 = vperm.slane %v5588, %v5591
          %v5593 = vrot.slane %v5592, 4
          %v5594 = vsel %vm2219, %v5593, %v5586
          %v5596 = vunpack.c.l.s4 1934713408
          %v5597 = vunpack.c.0.s8 %v5596
          %v5598 = vperm.slane %v5594, %v5597
          %v5599 = vsel %vm2219, %v3010, %v3003
          %v5601 = vunpack.c.l.s4 1983009808
          %v5602 = vunpack.c.0.s8 %v5601
          %v5603 = vperm.slane %v5599, %v5602
          %v5604 = vrot.slane %v3011, 4
          %v5605 = vsel %vm2219, %v5604, %v3009
          %v5607 = vunpack.c.l.s4 1983009808
          %v5608 = vunpack.c.0.s8 %v5607
          %v5609 = vperm.slane %v5605, %v5608
          %v5610 = vrot.slane %v5609, 4
          %v5611 = vsel %vm2219, %v5610, %v5603
          %v5613 = vunpack.c.l.s4 1934713408
          %v5614 = vunpack.c.0.s8 %v5613
          %v5615 = vperm.slane %v5611, %v5614
          %v5616 = vsel %vm2219, %v3029, %v3022
          %v5618 = vunpack.c.l.s4 1983009808
          %v5619 = vunpack.c.0.s8 %v5618
          %v5620 = vperm.slane %v5616, %v5619
          %v5621 = vrot.slane %v3030, 4
          %v5622 = vsel %vm2219, %v5621, %v3028
          %v5624 = vunpack.c.l.s4 1983009808
          %v5625 = vunpack.c.0.s8 %v5624
          %v5626 = vperm.slane %v5622, %v5625
          %v5627 = vrot.slane %v5626, 4
          %v5628 = vsel %vm2219, %v5627, %v5620
          %v5630 = vunpack.c.l.s4 1934713408
          %v5631 = vunpack.c.0.s8 %v5630
          %v5632 = vperm.slane %v5628, %v5631
          %v5633 = vsel %vm2219, %v3048, %v3041
          %v5635 = vunpack.c.l.s4 1983009808
          %v5636 = vunpack.c.0.s8 %v5635
          %v5637 = vperm.slane %v5633, %v5636
          %v5638 = vrot.slane %v3049, 4
          %v5639 = vsel %vm2219, %v5638, %v3047
          %v5641 = vunpack.c.l.s4 1983009808
          %v5642 = vunpack.c.0.s8 %v5641
          %v5643 = vperm.slane %v5639, %v5642
          %v5644 = vrot.slane %v5643, 4
          %v5645 = vsel %vm2219, %v5644, %v5637
          %v5647 = vunpack.c.l.s4 1934713408
          %v5648 = vunpack.c.0.s8 %v5647
          %v5649 = vperm.slane %v5645, %v5648
          %v5650 = vsel %vm2219, %v3067, %v3060
          %v5652 = vunpack.c.l.s4 1983009808
          %v5653 = vunpack.c.0.s8 %v5652
          %v5654 = vperm.slane %v5650, %v5653
          %v5655 = vrot.slane %v3068, 4
          %v5656 = vsel %vm2219, %v5655, %v3066
          %v5658 = vunpack.c.l.s4 1983009808
          %v5659 = vunpack.c.0.s8 %v5658
          %v5660 = vperm.slane %v5656, %v5659
          %v5661 = vrot.slane %v5660, 4
          %v5662 = vsel %vm2219, %v5661, %v5654
          %v5664 = vunpack.c.l.s4 1934713408
          %v5665 = vunpack.c.0.s8 %v5664
          %v5666 = vperm.slane %v5662, %v5665
          %v5667 = vsel %vm2219, %v3086, %v3079
          %v5669 = vunpack.c.l.s4 1983009808
          %v5670 = vunpack.c.0.s8 %v5669
          %v5671 = vperm.slane %v5667, %v5670
          %v5672 = vrot.slane %v3087, 4
          %v5673 = vsel %vm2219, %v5672, %v3085
          %v5675 = vunpack.c.l.s4 1983009808
          %v5676 = vunpack.c.0.s8 %v5675
          %v5677 = vperm.slane %v5673, %v5676
          %v5678 = vrot.slane %v5677, 4
          %v5679 = vsel %vm2219, %v5678, %v5671
          %v5681 = vunpack.c.l.s4 1934713408
          %v5682 = vunpack.c.0.s8 %v5681
          %v5683 = vperm.slane %v5679, %v5682
          %v5684 = vsel %vm2219, %v3105, %v3098
          %v5686 = vunpack.c.l.s4 1983009808
          %v5687 = vunpack.c.0.s8 %v5686
          %v5688 = vperm.slane %v5684, %v5687
          %v5689 = vrot.slane %v3106, 4
          %v5690 = vsel %vm2219, %v5689, %v3104
          %v5692 = vunpack.c.l.s4 1983009808
          %v5693 = vunpack.c.0.s8 %v5692
          %v5694 = vperm.slane %v5690, %v5693
          %v5695 = vrot.slane %v5694, 4
          %v5696 = vsel %vm2219, %v5695, %v5688
          %v5698 = vunpack.c.l.s4 1934713408
          %v5699 = vunpack.c.0.s8 %v5698
          %v5700 = vperm.slane %v5696, %v5699
          %v5701 = vsel %vm2219, %v3124, %v3117
          %v5703 = vunpack.c.l.s4 1983009808
          %v5704 = vunpack.c.0.s8 %v5703
          %v5705 = vperm.slane %v5701, %v5704
          %v5706 = vrot.slane %v3125, 4
          %v5707 = vsel %vm2219, %v5706, %v3123
          %v5709 = vunpack.c.l.s4 1983009808
          %v5710 = vunpack.c.0.s8 %v5709
          %v5711 = vperm.slane %v5707, %v5710
          %v5712 = vrot.slane %v5711, 4
          %v5713 = vsel %vm2219, %v5712, %v5705
          %v5715 = vunpack.c.l.s4 1934713408
          %v5716 = vunpack.c.0.s8 %v5715
          %v5717 = vperm.slane %v5713, %v5716
          %v5718 = vsel %vm2219, %v3143, %v3136
          %v5720 = vunpack.c.l.s4 1983009808
          %v5721 = vunpack.c.0.s8 %v5720
          %v5722 = vperm.slane %v5718, %v5721
          %v5723 = vrot.slane %v3144, 4
          %v5724 = vsel %vm2219, %v5723, %v3142
          %v5726 = vunpack.c.l.s4 1983009808
          %v5727 = vunpack.c.0.s8 %v5726
          %v5728 = vperm.slane %v5724, %v5727
          %v5729 = vrot.slane %v5728, 4
          %v5730 = vsel %vm2219, %v5729, %v5722
          %v5732 = vunpack.c.l.s4 1934713408
          %v5733 = vunpack.c.0.s8 %v5732
          %v5734 = vperm.slane %v5730, %v5733
          %v5735 = vsel %vm2219, %v3162, %v3155
          %v5737 = vunpack.c.l.s4 1983009808
          %v5738 = vunpack.c.0.s8 %v5737
          %v5739 = vperm.slane %v5735, %v5738
          %v5740 = vrot.slane %v3163, 4
          %v5741 = vsel %vm2219, %v5740, %v3161
          %v5743 = vunpack.c.l.s4 1983009808
          %v5744 = vunpack.c.0.s8 %v5743
          %v5745 = vperm.slane %v5741, %v5744
          %v5746 = vrot.slane %v5745, 4
          %v5747 = vsel %vm2219, %v5746, %v5739
          %v5749 = vunpack.c.l.s4 1934713408
          %v5750 = vunpack.c.0.s8 %v5749
          %v5751 = vperm.slane %v5747, %v5750
          %v5752 = vsel %vm2219, %v3181, %v3174
          %v5754 = vunpack.c.l.s4 1983009808
          %v5755 = vunpack.c.0.s8 %v5754
          %v5756 = vperm.slane %v5752, %v5755
          %v5757 = vrot.slane %v3182, 4
          %v5758 = vsel %vm2219, %v5757, %v3180
          %v5760 = vunpack.c.l.s4 1983009808
          %v5761 = vunpack.c.0.s8 %v5760
          %v5762 = vperm.slane %v5758, %v5761
          %v5763 = vrot.slane %v5762, 4
          %v5764 = vsel %vm2219, %v5763, %v5756
          %v5766 = vunpack.c.l.s4 1934713408
          %v5767 = vunpack.c.0.s8 %v5766
          %v5768 = vperm.slane %v5764, %v5767
          %v5769 = vsel %vm2219, %v3200, %v3193
          %v5771 = vunpack.c.l.s4 1983009808
          %v5772 = vunpack.c.0.s8 %v5771
          %v5773 = vperm.slane %v5769, %v5772
          %v5774 = vrot.slane %v3201, 4
          %v5775 = vsel %vm2219, %v5774, %v3199
          %v5777 = vunpack.c.l.s4 1983009808
          %v5778 = vunpack.c.0.s8 %v5777
          %v5779 = vperm.slane %v5775, %v5778
          %v5780 = vrot.slane %v5779, 4
          %v5781 = vsel %vm2219, %v5780, %v5773
          %v5783 = vunpack.c.l.s4 1934713408
          %v5784 = vunpack.c.0.s8 %v5783
          %v5785 = vperm.slane %v5781, %v5784
          %v5786 = vsel %vm2219, %v3219, %v3212
          %v5788 = vunpack.c.l.s4 1983009808
          %v5789 = vunpack.c.0.s8 %v5788
          %v5790 = vperm.slane %v5786, %v5789
          %v5791 = vrot.slane %v3220, 4
          %v5792 = vsel %vm2219, %v5791, %v3218
          %v5794 = vunpack.c.l.s4 1983009808
          %v5795 = vunpack.c.0.s8 %v5794
          %v5796 = vperm.slane %v5792, %v5795
          %v5797 = vrot.slane %v5796, 4
          %v5798 = vsel %vm2219, %v5797, %v5790
          %v5800 = vunpack.c.l.s4 1934713408
          %v5801 = vunpack.c.0.s8 %v5800
          %v5802 = vperm.slane %v5798, %v5801
          %v5803 = vsel %vm2219, %v3238, %v3231
          %v5805 = vunpack.c.l.s4 1983009808
          %v5806 = vunpack.c.0.s8 %v5805
          %v5807 = vperm.slane %v5803, %v5806
          %v5808 = vrot.slane %v3239, 4
          %v5809 = vsel %vm2219, %v5808, %v3237
          %v5811 = vunpack.c.l.s4 1983009808
          %v5812 = vunpack.c.0.s8 %v5811
          %v5813 = vperm.slane %v5809, %v5812
          %v5814 = vrot.slane %v5813, 4
          %v5815 = vsel %vm2219, %v5814, %v5807
          %v5817 = vunpack.c.l.s4 1934713408
          %v5818 = vunpack.c.0.s8 %v5817
          %v5819 = vperm.slane %v5815, %v5818
          %v5820 = vsel %vm2219, %v3257, %v3250
          %v5822 = vunpack.c.l.s4 1983009808
          %v5823 = vunpack.c.0.s8 %v5822
          %v5824 = vperm.slane %v5820, %v5823
          %v5825 = vrot.slane %v3258, 4
          %v5826 = vsel %vm2219, %v5825, %v3256
          %v5828 = vunpack.c.l.s4 1983009808
          %v5829 = vunpack.c.0.s8 %v5828
          %v5830 = vperm.slane %v5826, %v5829
          %v5831 = vrot.slane %v5830, 4
          %v5832 = vsel %vm2219, %v5831, %v5824
          %v5834 = vunpack.c.l.s4 1934713408
          %v5835 = vunpack.c.0.s8 %v5834
          %v5836 = vperm.slane %v5832, %v5835
          %v5837 = vsel %vm2219, %v3276, %v3269
          %v5839 = vunpack.c.l.s4 1983009808
          %v5840 = vunpack.c.0.s8 %v5839
          %v5841 = vperm.slane %v5837, %v5840
          %v5842 = vrot.slane %v3277, 4
          %v5843 = vsel %vm2219, %v5842, %v3275
          %v5845 = vunpack.c.l.s4 1983009808
          %v5846 = vunpack.c.0.s8 %v5845
          %v5847 = vperm.slane %v5843, %v5846
          %v5848 = vrot.slane %v5847, 4
          %v5849 = vsel %vm2219, %v5848, %v5841
          %v5851 = vunpack.c.l.s4 1934713408
          %v5852 = vunpack.c.0.s8 %v5851
          %v5853 = vperm.slane %v5849, %v5852
          %v5854 = vsel %vm2219, %v3295, %v3288
          %v5856 = vunpack.c.l.s4 1983009808
          %v5857 = vunpack.c.0.s8 %v5856
          %v5858 = vperm.slane %v5854, %v5857
          %v5859 = vrot.slane %v3296, 4
          %v5860 = vsel %vm2219, %v5859, %v3294
          %v5862 = vunpack.c.l.s4 1983009808
          %v5863 = vunpack.c.0.s8 %v5862
          %v5864 = vperm.slane %v5860, %v5863
          %v5865 = vrot.slane %v5864, 4
          %v5866 = vsel %vm2219, %v5865, %v5858
          %v5868 = vunpack.c.l.s4 1934713408
          %v5869 = vunpack.c.0.s8 %v5868
          %v5870 = vperm.slane %v5866, %v5869
          %v5871 = vsel %vm2219, %v3314, %v3307
          %v5873 = vunpack.c.l.s4 1983009808
          %v5874 = vunpack.c.0.s8 %v5873
          %v5875 = vperm.slane %v5871, %v5874
          %v5876 = vrot.slane %v3315, 4
          %v5877 = vsel %vm2219, %v5876, %v3313
          %v5879 = vunpack.c.l.s4 1983009808
          %v5880 = vunpack.c.0.s8 %v5879
          %v5881 = vperm.slane %v5877, %v5880
          %v5882 = vrot.slane %v5881, 4
          %v5883 = vsel %vm2219, %v5882, %v5875
          %v5885 = vunpack.c.l.s4 1934713408
          %v5886 = vunpack.c.0.s8 %v5885
          %v5887 = vperm.slane %v5883, %v5886
          %v5888 = vsel %vm2219, %v3333, %v3326
          %v5890 = vunpack.c.l.s4 1983009808
          %v5891 = vunpack.c.0.s8 %v5890
          %v5892 = vperm.slane %v5888, %v5891
          %v5893 = vrot.slane %v3334, 4
          %v5894 = vsel %vm2219, %v5893, %v3332
          %v5896 = vunpack.c.l.s4 1983009808
          %v5897 = vunpack.c.0.s8 %v5896
          %v5898 = vperm.slane %v5894, %v5897
          %v5899 = vrot.slane %v5898, 4
          %v5900 = vsel %vm2219, %v5899, %v5892
          %v5902 = vunpack.c.l.s4 1934713408
          %v5903 = vunpack.c.0.s8 %v5902
          %v5904 = vperm.slane %v5900, %v5903
          %v5905 = vsel %vm2219, %v3352, %v3345
          %v5907 = vunpack.c.l.s4 1983009808
          %v5908 = vunpack.c.0.s8 %v5907
          %v5909 = vperm.slane %v5905, %v5908
          %v5910 = vrot.slane %v3353, 4
          %v5911 = vsel %vm2219, %v5910, %v3351
          %v5913 = vunpack.c.l.s4 1983009808
          %v5914 = vunpack.c.0.s8 %v5913
          %v5915 = vperm.slane %v5911, %v5914
          %v5916 = vrot.slane %v5915, 4
          %v5917 = vsel %vm2219, %v5916, %v5909
          %v5919 = vunpack.c.l.s4 1934713408
          %v5920 = vunpack.c.0.s8 %v5919
          %v5921 = vperm.slane %v5917, %v5920
          %v5922 = vsel %vm2219, %v3371, %v3364
          %v5924 = vunpack.c.l.s4 1983009808
          %v5925 = vunpack.c.0.s8 %v5924
          %v5926 = vperm.slane %v5922, %v5925
          %v5927 = vrot.slane %v3372, 4
          %v5928 = vsel %vm2219, %v5927, %v3370
          %v5930 = vunpack.c.l.s4 1983009808
          %v5931 = vunpack.c.0.s8 %v5930
          %v5932 = vperm.slane %v5928, %v5931
          %v5933 = vrot.slane %v5932, 4
          %v5934 = vsel %vm2219, %v5933, %v5926
          %v5936 = vunpack.c.l.s4 1934713408
          %v5937 = vunpack.c.0.s8 %v5936
          %v5938 = vperm.slane %v5934, %v5937
          %v5939 = vsel %vm2219, %v3390, %v3383
          %v5941 = vunpack.c.l.s4 1983009808
          %v5942 = vunpack.c.0.s8 %v5941
          %v5943 = vperm.slane %v5939, %v5942
          %v5944 = vrot.slane %v3391, 4
          %v5945 = vsel %vm2219, %v5944, %v3389
          %v5947 = vunpack.c.l.s4 1983009808
          %v5948 = vunpack.c.0.s8 %v5947
          %v5949 = vperm.slane %v5945, %v5948
          %v5950 = vrot.slane %v5949, 4
          %v5951 = vsel %vm2219, %v5950, %v5943
          %v5953 = vunpack.c.l.s4 1934713408
          %v5954 = vunpack.c.0.s8 %v5953
          %v5955 = vperm.slane %v5951, %v5954
          %v5956 = vsel %vm2219, %v3409, %v3402
          %v5958 = vunpack.c.l.s4 1983009808
          %v5959 = vunpack.c.0.s8 %v5958
          %v5960 = vperm.slane %v5956, %v5959
          %v5961 = vrot.slane %v3410, 4
          %v5962 = vsel %vm2219, %v5961, %v3408
          %v5964 = vunpack.c.l.s4 1983009808
          %v5965 = vunpack.c.0.s8 %v5964
          %v5966 = vperm.slane %v5962, %v5965
          %v5967 = vrot.slane %v5966, 4
          %v5968 = vsel %vm2219, %v5967, %v5960
          %v5970 = vunpack.c.l.s4 1934713408
          %v5971 = vunpack.c.0.s8 %v5970
          %v5972 = vperm.slane %v5968, %v5971
          %v5973 = vsel %vm2219, %v3428, %v3421
          %v5975 = vunpack.c.l.s4 1983009808
          %v5976 = vunpack.c.0.s8 %v5975
          %v5977 = vperm.slane %v5973, %v5976
          %v5978 = vrot.slane %v3429, 4
          %v5979 = vsel %vm2219, %v5978, %v3427
          %v5981 = vunpack.c.l.s4 1983009808
          %v5982 = vunpack.c.0.s8 %v5981
          %v5983 = vperm.slane %v5979, %v5982
          %v5984 = vrot.slane %v5983, 4
          %v5985 = vsel %vm2219, %v5984, %v5977
          %v5987 = vunpack.c.l.s4 1934713408
          %v5988 = vunpack.c.0.s8 %v5987
          %v5989 = vperm.slane %v5985, %v5988
          %v5992 = vpack.i.b16 %v4935, %v4918
          %v5994 = vshrl.u32 %v4918, 16
          %v5995 = vshrl.u32 %v4935, 16
          %v5996 = vpack.i.b16 %v5995, %v5994
          %v6000 = vpack.i.b16 %v4969, %v4952
          %v6002 = vshrl.u32 %v4952, 16
          %v6003 = vshrl.u32 %v4969, 16
          %v6004 = vpack.i.b16 %v6003, %v6002
          %v6008 = vpack.i.b16 %v5003, %v4986
          %v6010 = vshrl.u32 %v4986, 16
          %v6011 = vshrl.u32 %v5003, 16
          %v6012 = vpack.i.b16 %v6011, %v6010
          %v6016 = vpack.i.b16 %v5037, %v5020
          %v6018 = vshrl.u32 %v5020, 16
          %v6019 = vshrl.u32 %v5037, 16
          %v6020 = vpack.i.b16 %v6019, %v6018
          %v6024 = vpack.i.b16 %v5071, %v5054
          %v6026 = vshrl.u32 %v5054, 16
          %v6027 = vshrl.u32 %v5071, 16
          %v6028 = vpack.i.b16 %v6027, %v6026
          %v6032 = vpack.i.b16 %v5105, %v5088
          %v6034 = vshrl.u32 %v5088, 16
          %v6035 = vshrl.u32 %v5105, 16
          %v6036 = vpack.i.b16 %v6035, %v6034
          %v6040 = vpack.i.b16 %v5139, %v5122
          %v6042 = vshrl.u32 %v5122, 16
          %v6043 = vshrl.u32 %v5139, 16
          %v6044 = vpack.i.b16 %v6043, %v6042
          %v6048 = vpack.i.b16 %v5173, %v5156
          %v6050 = vshrl.u32 %v5156, 16
          %v6051 = vshrl.u32 %v5173, 16
          %v6052 = vpack.i.b16 %v6051, %v6050
          %v6056 = vpack.i.b16 %v5207, %v5190
          %v6058 = vshrl.u32 %v5190, 16
          %v6059 = vshrl.u32 %v5207, 16
          %v6060 = vpack.i.b16 %v6059, %v6058
          %v6064 = vpack.i.b16 %v5241, %v5224
          %v6066 = vshrl.u32 %v5224, 16
          %v6067 = vshrl.u32 %v5241, 16
          %v6068 = vpack.i.b16 %v6067, %v6066
          %v6072 = vpack.i.b16 %v5275, %v5258
          %v6074 = vshrl.u32 %v5258, 16
          %v6075 = vshrl.u32 %v5275, 16
          %v6076 = vpack.i.b16 %v6075, %v6074
          %v6080 = vpack.i.b16 %v5309, %v5292
          %v6082 = vshrl.u32 %v5292, 16
          %v6083 = vshrl.u32 %v5309, 16
          %v6084 = vpack.i.b16 %v6083, %v6082
          %v6088 = vpack.i.b16 %v5343, %v5326
          %v6090 = vshrl.u32 %v5326, 16
          %v6091 = vshrl.u32 %v5343, 16
          %v6092 = vpack.i.b16 %v6091, %v6090
          %v6096 = vpack.i.b16 %v5377, %v5360
          %v6098 = vshrl.u32 %v5360, 16
          %v6099 = vshrl.u32 %v5377, 16
          %v6100 = vpack.i.b16 %v6099, %v6098
          %v6104 = vpack.i.b16 %v5411, %v5394
          %v6106 = vshrl.u32 %v5394, 16
          %v6107 = vshrl.u32 %v5411, 16
          %v6108 = vpack.i.b16 %v6107, %v6106
          %v6112 = vpack.i.b16 %v5445, %v5428
          %v6114 = vshrl.u32 %v5428, 16
          %v6115 = vshrl.u32 %v5445, 16
          %v6116 = vpack.i.b16 %v6115, %v6114
          %v6120 = vpack.i.b16 %v5479, %v5462
          %v6122 = vshrl.u32 %v5462, 16
          %v6123 = vshrl.u32 %v5479, 16
          %v6124 = vpack.i.b16 %v6123, %v6122
          %v6128 = vpack.i.b16 %v5513, %v5496
          %v6130 = vshrl.u32 %v5496, 16
          %v6131 = vshrl.u32 %v5513, 16
          %v6132 = vpack.i.b16 %v6131, %v6130
          %v6136 = vpack.i.b16 %v5547, %v5530
          %v6138 = vshrl.u32 %v5530, 16
          %v6139 = vshrl.u32 %v5547, 16
          %v6140 = vpack.i.b16 %v6139, %v6138
          %v6144 = vpack.i.b16 %v5581, %v5564
          %v6146 = vshrl.u32 %v5564, 16
          %v6147 = vshrl.u32 %v5581, 16
          %v6148 = vpack.i.b16 %v6147, %v6146
          %v6152 = vpack.i.b16 %v5615, %v5598
          %v6154 = vshrl.u32 %v5598, 16
          %v6155 = vshrl.u32 %v5615, 16
          %v6156 = vpack.i.b16 %v6155, %v6154
          %v6160 = vpack.i.b16 %v5649, %v5632
          %v6162 = vshrl.u32 %v5632, 16
          %v6163 = vshrl.u32 %v5649, 16
          %v6164 = vpack.i.b16 %v6163, %v6162
          %v6168 = vpack.i.b16 %v5683, %v5666
          %v6170 = vshrl.u32 %v5666, 16
          %v6171 = vshrl.u32 %v5683, 16
          %v6172 = vpack.i.b16 %v6171, %v6170
          %v6176 = vpack.i.b16 %v5717, %v5700
          %v6178 = vshrl.u32 %v5700, 16
          %v6179 = vshrl.u32 %v5717, 16
          %v6180 = vpack.i.b16 %v6179, %v6178
          %v6184 = vpack.i.b16 %v5751, %v5734
          %v6186 = vshrl.u32 %v5734, 16
          %v6187 = vshrl.u32 %v5751, 16
          %v6188 = vpack.i.b16 %v6187, %v6186
          %v6192 = vpack.i.b16 %v5785, %v5768
          %v6194 = vshrl.u32 %v5768, 16
          %v6195 = vshrl.u32 %v5785, 16
          %v6196 = vpack.i.b16 %v6195, %v6194
          %v6200 = vpack.i.b16 %v5819, %v5802
          %v6202 = vshrl.u32 %v5802, 16
          %v6203 = vshrl.u32 %v5819, 16
          %v6204 = vpack.i.b16 %v6203, %v6202
          %v6208 = vpack.i.b16 %v5853, %v5836
          %v6210 = vshrl.u32 %v5836, 16
          %v6211 = vshrl.u32 %v5853, 16
          %v6212 = vpack.i.b16 %v6211, %v6210
          %v6216 = vpack.i.b16 %v5887, %v5870
          %v6218 = vshrl.u32 %v5870, 16
          %v6219 = vshrl.u32 %v5887, 16
          %v6220 = vpack.i.b16 %v6219, %v6218
          %v6224 = vpack.i.b16 %v5921, %v5904
          %v6226 = vshrl.u32 %v5904, 16
          %v6227 = vshrl.u32 %v5921, 16
          %v6228 = vpack.i.b16 %v6227, %v6226
          %v6232 = vpack.i.b16 %v5955, %v5938
          %v6234 = vshrl.u32 %v5938, 16
          %v6235 = vshrl.u32 %v5955, 16
          %v6236 = vpack.i.b16 %v6235, %v6234
          %v6240 = vpack.i.b16 %v5989, %v5972
          %v6242 = vshrl.u32 %v5972, 16
          %v6243 = vshrl.u32 %v5989, 16
          %v6244 = vpack.i.b16 %v6243, %v6242
          %6246 = vst [vmem:[#allocation2] sm:$0xf] %v5992
          %6247 = vst [vmem:[#allocation2 + $0x4] sm:$0xf] %v6000
          %6248 = vst [vmem:[#allocation2 + $0x8] sm:$0xf] %v6008
          %6249 = vst [vmem:[#allocation2 + $0xc] sm:$0xf] %v6016
          %6250 = vst [vmem:[#allocation2 + $0x10] sm:$0xf] %v6024
          %6251 = vst [vmem:[#allocation2 + $0x14] sm:$0xf] %v6032
          %6252 = vst [vmem:[#allocation2 + $0x18] sm:$0xf] %v6040
          %6253 = vst [vmem:[#allocation2 + $0x1c] sm:$0xf] %v6048
          %6254 = vst [vmem:[#allocation2 + $0x20] sm:$0xf] %v6056
          %6255 = vst [vmem:[#allocation2 + $0x24] sm:$0xf] %v6064
          %6256 = vst [vmem:[#allocation2 + $0x28] sm:$0xf] %v6072
          %6257 = vst [vmem:[#allocation2 + $0x2c] sm:$0xf] %v6080
          %6258 = vst [vmem:[#allocation2 + $0x30] sm:$0xf] %v6088
          %6259 = vst [vmem:[#allocation2 + $0x34] sm:$0xf] %v6096
          %6260 = vst [vmem:[#allocation2 + $0x38] sm:$0xf] %v6104
          %6261 = vst [vmem:[#allocation2 + $0x3c] sm:$0xf] %v6112
          %6262 = vst [vmem:[#allocation2 + $0x40] sm:$0xf] %v6120
          %6263 = vst [vmem:[#allocation2 + $0x44] sm:$0xf] %v6128
          %6264 = vst [vmem:[#allocation2 + $0x48] sm:$0xf] %v6136
          %6265 = vst [vmem:[#allocation2 + $0x4c] sm:$0xf] %v6144
          %6266 = vst [vmem:[#allocation2 + $0x50] sm:$0xf] %v6152
          %6267 = vst [vmem:[#allocation2 + $0x54] sm:$0xf] %v6160
          %6268 = vst [vmem:[#allocation2 + $0x58] sm:$0xf] %v6168
          %6269 = vst [vmem:[#allocation2 + $0x5c] sm:$0xf] %v6176
          %6270 = vst [vmem:[#allocation2 + $0x60] sm:$0xf] %v6184
          %6271 = vst [vmem:[#allocation2 + $0x64] sm:$0xf] %v6192
          %6272 = vst [vmem:[#allocation2 + $0x68] sm:$0xf] %v6200
          %6273 = vst [vmem:[#allocation2 + $0x6c] sm:$0xf] %v6208
          %6274 = vst [vmem:[#allocation2 + $0x70] sm:$0xf] %v6216
          %6275 = vst [vmem:[#allocation2 + $0x74] sm:$0xf] %v6224
          %6276 = vst [vmem:[#allocation2 + $0x78] sm:$0xf] %v6232
          %6277 = vst [vmem:[#allocation2 + $0x7c] sm:$0xf] %v6240
          %6278 = vst [vmem:[#allocation2 + $0x80] sm:$0xf] %v5996
          %6279 = vst [vmem:[#allocation2 + $0x84] sm:$0xf] %v6004
          %6280 = vst [vmem:[#allocation2 + $0x88] sm:$0xf] %v6012
          %6281 = vst [vmem:[#allocation2 + $0x8c] sm:$0xf] %v6020
          %6282 = vst [vmem:[#allocation2 + $0x90] sm:$0xf] %v6028
          %6283 = vst [vmem:[#allocation2 + $0x94] sm:$0xf] %v6036
          %6284 = vst [vmem:[#allocation2 + $0x98] sm:$0xf] %v6044
          %6285 = vst [vmem:[#allocation2 + $0x9c] sm:$0xf] %v6052
          %6286 = vst [vmem:[#allocation2 + $0xa0] sm:$0xf] %v6060
          %6287 = vst [vmem:[#allocation2 + $0xa4] sm:$0xf] %v6068
          %6288 = vst [vmem:[#allocation2 + $0xa8] sm:$0xf] %v6076
          %6289 = vst [vmem:[#allocation2 + $0xac] sm:$0xf] %v6084
          %6290 = vst [vmem:[#allocation2 + $0xb0] sm:$0xf] %v6092
          %6291 = vst [vmem:[#allocation2 + $0xb4] sm:$0xf] %v6100
          %6292 = vst [vmem:[#allocation2 + $0xb8] sm:$0xf] %v6108
          %6293 = vst [vmem:[#allocation2 + $0xbc] sm:$0xf] %v6116
          %6294 = vst [vmem:[#allocation2 + $0xc0] sm:$0xf] %v6124
          %6295 = vst [vmem:[#allocation2 + $0xc4] sm:$0xf] %v6132
          %6296 = vst [vmem:[#allocation2 + $0xc8] sm:$0xf] %v6140
          %6297 = vst [vmem:[#allocation2 + $0xcc] sm:$0xf] %v6148
          %6298 = vst [vmem:[#allocation2 + $0xd0] sm:$0xf] %v6156
          %6299 = vst [vmem:[#allocation2 + $0xd4] sm:$0xf] %v6164
          %6300 = vst [vmem:[#allocation2 + $0xd8] sm:$0xf] %v6172
          %6301 = vst [vmem:[#allocation2 + $0xdc] sm:$0xf] %v6180
          %6302 = vst [vmem:[#allocation2 + $0xe0] sm:$0xf] %v6188
          %6303 = vst [vmem:[#allocation2 + $0xe4] sm:$0xf] %v6196
          %6304 = vst [vmem:[#allocation2 + $0xe8] sm:$0xf] %v6204
          %6305 = vst [vmem:[#allocation2 + $0xec] sm:$0xf] %v6212
          %6306 = vst [vmem:[#allocation2 + $0xf0] sm:$0xf] %v6220
          %6307 = vst [vmem:[#allocation2 + $0xf4] sm:$0xf] %v6228
          %6308 = vst [vmem:[#allocation2 + $0xf8] sm:$0xf] %v6236
          %6309 = vst [vmem:[#allocation2 + $0xfc] sm:$0xf] %v6244
          %v6310 = vsel %vm2219, %v3703, %v3696
          %v6312 = vunpack.c.l.s4 1983009808
          %v6313 = vunpack.c.0.s8 %v6312
          %v6314 = vperm.slane %v6310, %v6313
          %v6315 = vrot.slane %v3704, 4
          %v6316 = vsel %vm2219, %v6315, %v3702
          %v6318 = vunpack.c.l.s4 1983009808
          %v6319 = vunpack.c.0.s8 %v6318
          %v6320 = vperm.slane %v6316, %v6319
          %v6321 = vrot.slane %v6320, 4
          %v6322 = vsel %vm2219, %v6321, %v6314
          %v6324 = vunpack.c.l.s4 1934713408
          %v6325 = vunpack.c.0.s8 %v6324
          %v6326 = vperm.slane %v6322, %v6325
          %v6327 = vsel %vm2219, %v3722, %v3715
          %v6329 = vunpack.c.l.s4 1983009808
          %v6330 = vunpack.c.0.s8 %v6329
          %v6331 = vperm.slane %v6327, %v6330
          %v6332 = vrot.slane %v3723, 4
          %v6333 = vsel %vm2219, %v6332, %v3721
          %v6335 = vunpack.c.l.s4 1983009808
          %v6336 = vunpack.c.0.s8 %v6335
          %v6337 = vperm.slane %v6333, %v6336
          %v6338 = vrot.slane %v6337, 4
          %v6339 = vsel %vm2219, %v6338, %v6331
          %v6341 = vunpack.c.l.s4 1934713408
          %v6342 = vunpack.c.0.s8 %v6341
          %v6343 = vperm.slane %v6339, %v6342
          %v6344 = vsel %vm2219, %v3741, %v3734
          %v6346 = vunpack.c.l.s4 1983009808
          %v6347 = vunpack.c.0.s8 %v6346
          %v6348 = vperm.slane %v6344, %v6347
          %v6349 = vrot.slane %v3742, 4
          %v6350 = vsel %vm2219, %v6349, %v3740
          %v6352 = vunpack.c.l.s4 1983009808
          %v6353 = vunpack.c.0.s8 %v6352
          %v6354 = vperm.slane %v6350, %v6353
          %v6355 = vrot.slane %v6354, 4
          %v6356 = vsel %vm2219, %v6355, %v6348
          %v6358 = vunpack.c.l.s4 1934713408
          %v6359 = vunpack.c.0.s8 %v6358
          %v6360 = vperm.slane %v6356, %v6359
          %v6361 = vsel %vm2219, %v3760, %v3753
          %v6363 = vunpack.c.l.s4 1983009808
          %v6364 = vunpack.c.0.s8 %v6363
          %v6365 = vperm.slane %v6361, %v6364
          %v6366 = vrot.slane %v3761, 4
          %v6367 = vsel %vm2219, %v6366, %v3759
          %v6369 = vunpack.c.l.s4 1983009808
          %v6370 = vunpack.c.0.s8 %v6369
          %v6371 = vperm.slane %v6367, %v6370
          %v6372 = vrot.slane %v6371, 4
          %v6373 = vsel %vm2219, %v6372, %v6365
          %v6375 = vunpack.c.l.s4 1934713408
          %v6376 = vunpack.c.0.s8 %v6375
          %v6377 = vperm.slane %v6373, %v6376
          %v6378 = vsel %vm2219, %v3779, %v3772
          %v6380 = vunpack.c.l.s4 1983009808
          %v6381 = vunpack.c.0.s8 %v6380
          %v6382 = vperm.slane %v6378, %v6381
          %v6383 = vrot.slane %v3780, 4
          %v6384 = vsel %vm2219, %v6383, %v3778
          %v6386 = vunpack.c.l.s4 1983009808
          %v6387 = vunpack.c.0.s8 %v6386
          %v6388 = vperm.slane %v6384, %v6387
          %v6389 = vrot.slane %v6388, 4
          %v6390 = vsel %vm2219, %v6389, %v6382
          %v6392 = vunpack.c.l.s4 1934713408
          %v6393 = vunpack.c.0.s8 %v6392
          %v6394 = vperm.slane %v6390, %v6393
          %v6395 = vsel %vm2219, %v3798, %v3791
          %v6397 = vunpack.c.l.s4 1983009808
          %v6398 = vunpack.c.0.s8 %v6397
          %v6399 = vperm.slane %v6395, %v6398
          %v6400 = vrot.slane %v3799, 4
          %v6401 = vsel %vm2219, %v6400, %v3797
          %v6403 = vunpack.c.l.s4 1983009808
          %v6404 = vunpack.c.0.s8 %v6403
          %v6405 = vperm.slane %v6401, %v6404
          %v6406 = vrot.slane %v6405, 4
          %v6407 = vsel %vm2219, %v6406, %v6399
          %v6409 = vunpack.c.l.s4 1934713408
          %v6410 = vunpack.c.0.s8 %v6409
          %v6411 = vperm.slane %v6407, %v6410
          %v6412 = vsel %vm2219, %v3817, %v3810
          %v6414 = vunpack.c.l.s4 1983009808
          %v6415 = vunpack.c.0.s8 %v6414
          %v6416 = vperm.slane %v6412, %v6415
          %v6417 = vrot.slane %v3818, 4
          %v6418 = vsel %vm2219, %v6417, %v3816
          %v6420 = vunpack.c.l.s4 1983009808
          %v6421 = vunpack.c.0.s8 %v6420
          %v6422 = vperm.slane %v6418, %v6421
          %v6423 = vrot.slane %v6422, 4
          %v6424 = vsel %vm2219, %v6423, %v6416
          %v6426 = vunpack.c.l.s4 1934713408
          %v6427 = vunpack.c.0.s8 %v6426
          %v6428 = vperm.slane %v6424, %v6427
          %v6429 = vsel %vm2219, %v3836, %v3829
          %v6431 = vunpack.c.l.s4 1983009808
          %v6432 = vunpack.c.0.s8 %v6431
          %v6433 = vperm.slane %v6429, %v6432
          %v6434 = vrot.slane %v3837, 4
          %v6435 = vsel %vm2219, %v6434, %v3835
          %v6437 = vunpack.c.l.s4 1983009808
          %v6438 = vunpack.c.0.s8 %v6437
          %v6439 = vperm.slane %v6435, %v6438
          %v6440 = vrot.slane %v6439, 4
          %v6441 = vsel %vm2219, %v6440, %v6433
          %v6443 = vunpack.c.l.s4 1934713408
          %v6444 = vunpack.c.0.s8 %v6443
          %v6445 = vperm.slane %v6441, %v6444
          %v6446 = vsel %vm2219, %v3855, %v3848
          %v6448 = vunpack.c.l.s4 1983009808
          %v6449 = vunpack.c.0.s8 %v6448
          %v6450 = vperm.slane %v6446, %v6449
          %v6451 = vrot.slane %v3856, 4
          %v6452 = vsel %vm2219, %v6451, %v3854
          %v6454 = vunpack.c.l.s4 1983009808
          %v6455 = vunpack.c.0.s8 %v6454
          %v6456 = vperm.slane %v6452, %v6455
          %v6457 = vrot.slane %v6456, 4
          %v6458 = vsel %vm2219, %v6457, %v6450
          %v6460 = vunpack.c.l.s4 1934713408
          %v6461 = vunpack.c.0.s8 %v6460
          %v6462 = vperm.slane %v6458, %v6461
          %v6463 = vsel %vm2219, %v3874, %v3867
          %v6465 = vunpack.c.l.s4 1983009808
          %v6466 = vunpack.c.0.s8 %v6465
          %v6467 = vperm.slane %v6463, %v6466
          %v6468 = vrot.slane %v3875, 4
          %v6469 = vsel %vm2219, %v6468, %v3873
          %v6471 = vunpack.c.l.s4 1983009808
          %v6472 = vunpack.c.0.s8 %v6471
          %v6473 = vperm.slane %v6469, %v6472
          %v6474 = vrot.slane %v6473, 4
          %v6475 = vsel %vm2219, %v6474, %v6467
          %v6477 = vunpack.c.l.s4 1934713408
          %v6478 = vunpack.c.0.s8 %v6477
          %v6479 = vperm.slane %v6475, %v6478
          %v6480 = vsel %vm2219, %v3893, %v3886
          %v6482 = vunpack.c.l.s4 1983009808
          %v6483 = vunpack.c.0.s8 %v6482
          %v6484 = vperm.slane %v6480, %v6483
          %v6485 = vrot.slane %v3894, 4
          %v6486 = vsel %vm2219, %v6485, %v3892
          %v6488 = vunpack.c.l.s4 1983009808
          %v6489 = vunpack.c.0.s8 %v6488
          %v6490 = vperm.slane %v6486, %v6489
          %v6491 = vrot.slane %v6490, 4
          %v6492 = vsel %vm2219, %v6491, %v6484
          %v6494 = vunpack.c.l.s4 1934713408
          %v6495 = vunpack.c.0.s8 %v6494
          %v6496 = vperm.slane %v6492, %v6495
          %v6497 = vsel %vm2219, %v3912, %v3905
          %v6499 = vunpack.c.l.s4 1983009808
          %v6500 = vunpack.c.0.s8 %v6499
          %v6501 = vperm.slane %v6497, %v6500
          %v6502 = vrot.slane %v3913, 4
          %v6503 = vsel %vm2219, %v6502, %v3911
          %v6505 = vunpack.c.l.s4 1983009808
          %v6506 = vunpack.c.0.s8 %v6505
          %v6507 = vperm.slane %v6503, %v6506
          %v6508 = vrot.slane %v6507, 4
          %v6509 = vsel %vm2219, %v6508, %v6501
          %v6511 = vunpack.c.l.s4 1934713408
          %v6512 = vunpack.c.0.s8 %v6511
          %v6513 = vperm.slane %v6509, %v6512
          %v6514 = vsel %vm2219, %v3931, %v3924
          %v6516 = vunpack.c.l.s4 1983009808
          %v6517 = vunpack.c.0.s8 %v6516
          %v6518 = vperm.slane %v6514, %v6517
          %v6519 = vrot.slane %v3932, 4
          %v6520 = vsel %vm2219, %v6519, %v3930
          %v6522 = vunpack.c.l.s4 1983009808
          %v6523 = vunpack.c.0.s8 %v6522
          %v6524 = vperm.slane %v6520, %v6523
          %v6525 = vrot.slane %v6524, 4
          %v6526 = vsel %vm2219, %v6525, %v6518
          %v6528 = vunpack.c.l.s4 1934713408
          %v6529 = vunpack.c.0.s8 %v6528
          %v6530 = vperm.slane %v6526, %v6529
          %v6531 = vsel %vm2219, %v3950, %v3943
          %v6533 = vunpack.c.l.s4 1983009808
          %v6534 = vunpack.c.0.s8 %v6533
          %v6535 = vperm.slane %v6531, %v6534
          %v6536 = vrot.slane %v3951, 4
          %v6537 = vsel %vm2219, %v6536, %v3949
          %v6539 = vunpack.c.l.s4 1983009808
          %v6540 = vunpack.c.0.s8 %v6539
          %v6541 = vperm.slane %v6537, %v6540
          %v6542 = vrot.slane %v6541, 4
          %v6543 = vsel %vm2219, %v6542, %v6535
          %v6545 = vunpack.c.l.s4 1934713408
          %v6546 = vunpack.c.0.s8 %v6545
          %v6547 = vperm.slane %v6543, %v6546
          %v6548 = vsel %vm2219, %v3969, %v3962
          %v6550 = vunpack.c.l.s4 1983009808
          %v6551 = vunpack.c.0.s8 %v6550
          %v6552 = vperm.slane %v6548, %v6551
          %v6553 = vrot.slane %v3970, 4
          %v6554 = vsel %vm2219, %v6553, %v3968
          %v6556 = vunpack.c.l.s4 1983009808
          %v6557 = vunpack.c.0.s8 %v6556
          %v6558 = vperm.slane %v6554, %v6557
          %v6559 = vrot.slane %v6558, 4
          %v6560 = vsel %vm2219, %v6559, %v6552
          %v6562 = vunpack.c.l.s4 1934713408
          %v6563 = vunpack.c.0.s8 %v6562
          %v6564 = vperm.slane %v6560, %v6563
          %v6565 = vsel %vm2219, %v3988, %v3981
          %v6567 = vunpack.c.l.s4 1983009808
          %v6568 = vunpack.c.0.s8 %v6567
          %v6569 = vperm.slane %v6565, %v6568
          %v6570 = vrot.slane %v3989, 4
          %v6571 = vsel %vm2219, %v6570, %v3987
          %v6573 = vunpack.c.l.s4 1983009808
          %v6574 = vunpack.c.0.s8 %v6573
          %v6575 = vperm.slane %v6571, %v6574
          %v6576 = vrot.slane %v6575, 4
          %v6577 = vsel %vm2219, %v6576, %v6569
          %v6579 = vunpack.c.l.s4 1934713408
          %v6580 = vunpack.c.0.s8 %v6579
          %v6581 = vperm.slane %v6577, %v6580
          %v6582 = vsel %vm2219, %v4007, %v4000
          %v6584 = vunpack.c.l.s4 1983009808
          %v6585 = vunpack.c.0.s8 %v6584
          %v6586 = vperm.slane %v6582, %v6585
          %v6587 = vrot.slane %v4008, 4
          %v6588 = vsel %vm2219, %v6587, %v4006
          %v6590 = vunpack.c.l.s4 1983009808
          %v6591 = vunpack.c.0.s8 %v6590
          %v6592 = vperm.slane %v6588, %v6591
          %v6593 = vrot.slane %v6592, 4
          %v6594 = vsel %vm2219, %v6593, %v6586
          %v6596 = vunpack.c.l.s4 1934713408
          %v6597 = vunpack.c.0.s8 %v6596
          %v6598 = vperm.slane %v6594, %v6597
          %v6599 = vsel %vm2219, %v4026, %v4019
          %v6601 = vunpack.c.l.s4 1983009808
          %v6602 = vunpack.c.0.s8 %v6601
          %v6603 = vperm.slane %v6599, %v6602
          %v6604 = vrot.slane %v4027, 4
          %v6605 = vsel %vm2219, %v6604, %v4025
          %v6607 = vunpack.c.l.s4 1983009808
          %v6608 = vunpack.c.0.s8 %v6607
          %v6609 = vperm.slane %v6605, %v6608
          %v6610 = vrot.slane %v6609, 4
          %v6611 = vsel %vm2219, %v6610, %v6603
          %v6613 = vunpack.c.l.s4 1934713408
          %v6614 = vunpack.c.0.s8 %v6613
          %v6615 = vperm.slane %v6611, %v6614
          %v6616 = vsel %vm2219, %v4045, %v4038
          %v6618 = vunpack.c.l.s4 1983009808
          %v6619 = vunpack.c.0.s8 %v6618
          %v6620 = vperm.slane %v6616, %v6619
          %v6621 = vrot.slane %v4046, 4
          %v6622 = vsel %vm2219, %v6621, %v4044
          %v6624 = vunpack.c.l.s4 1983009808
          %v6625 = vunpack.c.0.s8 %v6624
          %v6626 = vperm.slane %v6622, %v6625
          %v6627 = vrot.slane %v6626, 4
          %v6628 = vsel %vm2219, %v6627, %v6620
          %v6630 = vunpack.c.l.s4 1934713408
          %v6631 = vunpack.c.0.s8 %v6630
          %v6632 = vperm.slane %v6628, %v6631
          %v6633 = vsel %vm2219, %v4064, %v4057
          %v6635 = vunpack.c.l.s4 1983009808
          %v6636 = vunpack.c.0.s8 %v6635
          %v6637 = vperm.slane %v6633, %v6636
          %v6638 = vrot.slane %v4065, 4
          %v6639 = vsel %vm2219, %v6638, %v4063
          %v6641 = vunpack.c.l.s4 1983009808
          %v6642 = vunpack.c.0.s8 %v6641
          %v6643 = vperm.slane %v6639, %v6642
          %v6644 = vrot.slane %v6643, 4
          %v6645 = vsel %vm2219, %v6644, %v6637
          %v6647 = vunpack.c.l.s4 1934713408
          %v6648 = vunpack.c.0.s8 %v6647
          %v6649 = vperm.slane %v6645, %v6648
          %v6650 = vsel %vm2219, %v4083, %v4076
          %v6652 = vunpack.c.l.s4 1983009808
          %v6653 = vunpack.c.0.s8 %v6652
          %v6654 = vperm.slane %v6650, %v6653
          %v6655 = vrot.slane %v4084, 4
          %v6656 = vsel %vm2219, %v6655, %v4082
          %v6658 = vunpack.c.l.s4 1983009808
          %v6659 = vunpack.c.0.s8 %v6658
          %v6660 = vperm.slane %v6656, %v6659
          %v6661 = vrot.slane %v6660, 4
          %v6662 = vsel %vm2219, %v6661, %v6654
          %v6664 = vunpack.c.l.s4 1934713408
          %v6665 = vunpack.c.0.s8 %v6664
          %v6666 = vperm.slane %v6662, %v6665
          %v6667 = vsel %vm2219, %v4102, %v4095
          %v6669 = vunpack.c.l.s4 1983009808
          %v6670 = vunpack.c.0.s8 %v6669
          %v6671 = vperm.slane %v6667, %v6670
          %v6672 = vrot.slane %v4103, 4
          %v6673 = vsel %vm2219, %v6672, %v4101
          %v6675 = vunpack.c.l.s4 1983009808
          %v6676 = vunpack.c.0.s8 %v6675
          %v6677 = vperm.slane %v6673, %v6676
          %v6678 = vrot.slane %v6677, 4
          %v6679 = vsel %vm2219, %v6678, %v6671
          %v6681 = vunpack.c.l.s4 1934713408
          %v6682 = vunpack.c.0.s8 %v6681
          %v6683 = vperm.slane %v6679, %v6682
          %v6684 = vsel %vm2219, %v4121, %v4114
          %v6686 = vunpack.c.l.s4 1983009808
          %v6687 = vunpack.c.0.s8 %v6686
          %v6688 = vperm.slane %v6684, %v6687
          %v6689 = vrot.slane %v4122, 4
          %v6690 = vsel %vm2219, %v6689, %v4120
          %v6692 = vunpack.c.l.s4 1983009808
          %v6693 = vunpack.c.0.s8 %v6692
          %v6694 = vperm.slane %v6690, %v6693
          %v6695 = vrot.slane %v6694, 4
          %v6696 = vsel %vm2219, %v6695, %v6688
          %v6698 = vunpack.c.l.s4 1934713408
          %v6699 = vunpack.c.0.s8 %v6698
          %v6700 = vperm.slane %v6696, %v6699
          %v6701 = vsel %vm2219, %v4140, %v4133
          %v6703 = vunpack.c.l.s4 1983009808
          %v6704 = vunpack.c.0.s8 %v6703
          %v6705 = vperm.slane %v6701, %v6704
          %v6706 = vrot.slane %v4141, 4
          %v6707 = vsel %vm2219, %v6706, %v4139
          %v6709 = vunpack.c.l.s4 1983009808
          %v6710 = vunpack.c.0.s8 %v6709
          %v6711 = vperm.slane %v6707, %v6710
          %v6712 = vrot.slane %v6711, 4
          %v6713 = vsel %vm2219, %v6712, %v6705
          %v6715 = vunpack.c.l.s4 1934713408
          %v6716 = vunpack.c.0.s8 %v6715
          %v6717 = vperm.slane %v6713, %v6716
          %v6718 = vsel %vm2219, %v4159, %v4152
          %v6720 = vunpack.c.l.s4 1983009808
          %v6721 = vunpack.c.0.s8 %v6720
          %v6722 = vperm.slane %v6718, %v6721
          %v6723 = vrot.slane %v4160, 4
          %v6724 = vsel %vm2219, %v6723, %v4158
          %v6726 = vunpack.c.l.s4 1983009808
          %v6727 = vunpack.c.0.s8 %v6726
          %v6728 = vperm.slane %v6724, %v6727
          %v6729 = vrot.slane %v6728, 4
          %v6730 = vsel %vm2219, %v6729, %v6722
          %v6732 = vunpack.c.l.s4 1934713408
          %v6733 = vunpack.c.0.s8 %v6732
          %v6734 = vperm.slane %v6730, %v6733
          %v6735 = vsel %vm2219, %v4178, %v4171
          %v6737 = vunpack.c.l.s4 1983009808
          %v6738 = vunpack.c.0.s8 %v6737
          %v6739 = vperm.slane %v6735, %v6738
          %v6740 = vrot.slane %v4179, 4
          %v6741 = vsel %vm2219, %v6740, %v4177
          %v6743 = vunpack.c.l.s4 1983009808
          %v6744 = vunpack.c.0.s8 %v6743
          %v6745 = vperm.slane %v6741, %v6744
          %v6746 = vrot.slane %v6745, 4
          %v6747 = vsel %vm2219, %v6746, %v6739
          %v6749 = vunpack.c.l.s4 1934713408
          %v6750 = vunpack.c.0.s8 %v6749
          %v6751 = vperm.slane %v6747, %v6750
          %v6752 = vsel %vm2219, %v4197, %v4190
          %v6754 = vunpack.c.l.s4 1983009808
          %v6755 = vunpack.c.0.s8 %v6754
          %v6756 = vperm.slane %v6752, %v6755
          %v6757 = vrot.slane %v4198, 4
          %v6758 = vsel %vm2219, %v6757, %v4196
          %v6760 = vunpack.c.l.s4 1983009808
          %v6761 = vunpack.c.0.s8 %v6760
          %v6762 = vperm.slane %v6758, %v6761
          %v6763 = vrot.slane %v6762, 4
          %v6764 = vsel %vm2219, %v6763, %v6756
          %v6766 = vunpack.c.l.s4 1934713408
          %v6767 = vunpack.c.0.s8 %v6766
          %v6768 = vperm.slane %v6764, %v6767
          %v6769 = vsel %vm2219, %v4216, %v4209
          %v6771 = vunpack.c.l.s4 1983009808
          %v6772 = vunpack.c.0.s8 %v6771
          %v6773 = vperm.slane %v6769, %v6772
          %v6774 = vrot.slane %v4217, 4
          %v6775 = vsel %vm2219, %v6774, %v4215
          %v6777 = vunpack.c.l.s4 1983009808
          %v6778 = vunpack.c.0.s8 %v6777
          %v6779 = vperm.slane %v6775, %v6778
          %v6780 = vrot.slane %v6779, 4
          %v6781 = vsel %vm2219, %v6780, %v6773
          %v6783 = vunpack.c.l.s4 1934713408
          %v6784 = vunpack.c.0.s8 %v6783
          %v6785 = vperm.slane %v6781, %v6784
          %v6786 = vsel %vm2219, %v4235, %v4228
          %v6788 = vunpack.c.l.s4 1983009808
          %v6789 = vunpack.c.0.s8 %v6788
          %v6790 = vperm.slane %v6786, %v6789
          %v6791 = vrot.slane %v4236, 4
          %v6792 = vsel %vm2219, %v6791, %v4234
          %v6794 = vunpack.c.l.s4 1983009808
          %v6795 = vunpack.c.0.s8 %v6794
          %v6796 = vperm.slane %v6792, %v6795
          %v6797 = vrot.slane %v6796, 4
          %v6798 = vsel %vm2219, %v6797, %v6790
          %v6800 = vunpack.c.l.s4 1934713408
          %v6801 = vunpack.c.0.s8 %v6800
          %v6802 = vperm.slane %v6798, %v6801
          %v6803 = vsel %vm2219, %v4254, %v4247
          %v6805 = vunpack.c.l.s4 1983009808
          %v6806 = vunpack.c.0.s8 %v6805
          %v6807 = vperm.slane %v6803, %v6806
          %v6808 = vrot.slane %v4255, 4
          %v6809 = vsel %vm2219, %v6808, %v4253
          %v6811 = vunpack.c.l.s4 1983009808
          %v6812 = vunpack.c.0.s8 %v6811
          %v6813 = vperm.slane %v6809, %v6812
          %v6814 = vrot.slane %v6813, 4
          %v6815 = vsel %vm2219, %v6814, %v6807
          %v6817 = vunpack.c.l.s4 1934713408
          %v6818 = vunpack.c.0.s8 %v6817
          %v6819 = vperm.slane %v6815, %v6818
          %v6820 = vsel %vm2219, %v4273, %v4266
          %v6822 = vunpack.c.l.s4 1983009808
          %v6823 = vunpack.c.0.s8 %v6822
          %v6824 = vperm.slane %v6820, %v6823
          %v6825 = vrot.slane %v4274, 4
          %v6826 = vsel %vm2219, %v6825, %v4272
          %v6828 = vunpack.c.l.s4 1983009808
          %v6829 = vunpack.c.0.s8 %v6828
          %v6830 = vperm.slane %v6826, %v6829
          %v6831 = vrot.slane %v6830, 4
          %v6832 = vsel %vm2219, %v6831, %v6824
          %v6834 = vunpack.c.l.s4 1934713408
          %v6835 = vunpack.c.0.s8 %v6834
          %v6836 = vperm.slane %v6832, %v6835
          %v6837 = vsel %vm2219, %v4292, %v4285
          %v6839 = vunpack.c.l.s4 1983009808
          %v6840 = vunpack.c.0.s8 %v6839
          %v6841 = vperm.slane %v6837, %v6840
          %v6842 = vrot.slane %v4293, 4
          %v6843 = vsel %vm2219, %v6842, %v4291
          %v6845 = vunpack.c.l.s4 1983009808
          %v6846 = vunpack.c.0.s8 %v6845
          %v6847 = vperm.slane %v6843, %v6846
          %v6848 = vrot.slane %v6847, 4
          %v6849 = vsel %vm2219, %v6848, %v6841
          %v6851 = vunpack.c.l.s4 1934713408
          %v6852 = vunpack.c.0.s8 %v6851
          %v6853 = vperm.slane %v6849, %v6852
          %v6854 = vsel %vm2219, %v4311, %v4304
          %v6856 = vunpack.c.l.s4 1983009808
          %v6857 = vunpack.c.0.s8 %v6856
          %v6858 = vperm.slane %v6854, %v6857
          %v6859 = vrot.slane %v4312, 4
          %v6860 = vsel %vm2219, %v6859, %v4310
          %v6862 = vunpack.c.l.s4 1983009808
          %v6863 = vunpack.c.0.s8 %v6862
          %v6864 = vperm.slane %v6860, %v6863
          %v6865 = vrot.slane %v6864, 4
          %v6866 = vsel %vm2219, %v6865, %v6858
          %v6868 = vunpack.c.l.s4 1934713408
          %v6869 = vunpack.c.0.s8 %v6868
          %v6870 = vperm.slane %v6866, %v6869
          %v6871 = vsel %vm2219, %v4330, %v4323
          %v6873 = vunpack.c.l.s4 1983009808
          %v6874 = vunpack.c.0.s8 %v6873
          %v6875 = vperm.slane %v6871, %v6874
          %v6876 = vrot.slane %v4331, 4
          %v6877 = vsel %vm2219, %v6876, %v4329
          %v6879 = vunpack.c.l.s4 1983009808
          %v6880 = vunpack.c.0.s8 %v6879
          %v6881 = vperm.slane %v6877, %v6880
          %v6882 = vrot.slane %v6881, 4
          %v6883 = vsel %vm2219, %v6882, %v6875
          %v6885 = vunpack.c.l.s4 1934713408
          %v6886 = vunpack.c.0.s8 %v6885
          %v6887 = vperm.slane %v6883, %v6886
          %v6888 = vsel %vm2219, %v4349, %v4342
          %v6890 = vunpack.c.l.s4 1983009808
          %v6891 = vunpack.c.0.s8 %v6890
          %v6892 = vperm.slane %v6888, %v6891
          %v6893 = vrot.slane %v4350, 4
          %v6894 = vsel %vm2219, %v6893, %v4348
          %v6896 = vunpack.c.l.s4 1983009808
          %v6897 = vunpack.c.0.s8 %v6896
          %v6898 = vperm.slane %v6894, %v6897
          %v6899 = vrot.slane %v6898, 4
          %v6900 = vsel %vm2219, %v6899, %v6892
          %v6902 = vunpack.c.l.s4 1934713408
          %v6903 = vunpack.c.0.s8 %v6902
          %v6904 = vperm.slane %v6900, %v6903
          %v6905 = vsel %vm2219, %v4368, %v4361
          %v6907 = vunpack.c.l.s4 1983009808
          %v6908 = vunpack.c.0.s8 %v6907
          %v6909 = vperm.slane %v6905, %v6908
          %v6910 = vrot.slane %v4369, 4
          %v6911 = vsel %vm2219, %v6910, %v4367
          %v6913 = vunpack.c.l.s4 1983009808
          %v6914 = vunpack.c.0.s8 %v6913
          %v6915 = vperm.slane %v6911, %v6914
          %v6916 = vrot.slane %v6915, 4
          %v6917 = vsel %vm2219, %v6916, %v6909
          %v6919 = vunpack.c.l.s4 1934713408
          %v6920 = vunpack.c.0.s8 %v6919
          %v6921 = vperm.slane %v6917, %v6920
          %v6922 = vsel %vm2219, %v4387, %v4380
          %v6924 = vunpack.c.l.s4 1983009808
          %v6925 = vunpack.c.0.s8 %v6924
          %v6926 = vperm.slane %v6922, %v6925
          %v6927 = vrot.slane %v4388, 4
          %v6928 = vsel %vm2219, %v6927, %v4386
          %v6930 = vunpack.c.l.s4 1983009808
          %v6931 = vunpack.c.0.s8 %v6930
          %v6932 = vperm.slane %v6928, %v6931
          %v6933 = vrot.slane %v6932, 4
          %v6934 = vsel %vm2219, %v6933, %v6926
          %v6936 = vunpack.c.l.s4 1934713408
          %v6937 = vunpack.c.0.s8 %v6936
          %v6938 = vperm.slane %v6934, %v6937
          %v6939 = vsel %vm2219, %v4406, %v4399
          %v6941 = vunpack.c.l.s4 1983009808
          %v6942 = vunpack.c.0.s8 %v6941
          %v6943 = vperm.slane %v6939, %v6942
          %v6944 = vrot.slane %v4407, 4
          %v6945 = vsel %vm2219, %v6944, %v4405
          %v6947 = vunpack.c.l.s4 1983009808
          %v6948 = vunpack.c.0.s8 %v6947
          %v6949 = vperm.slane %v6945, %v6948
          %v6950 = vrot.slane %v6949, 4
          %v6951 = vsel %vm2219, %v6950, %v6943
          %v6953 = vunpack.c.l.s4 1934713408
          %v6954 = vunpack.c.0.s8 %v6953
          %v6955 = vperm.slane %v6951, %v6954
          %v6956 = vsel %vm2219, %v4425, %v4418
          %v6958 = vunpack.c.l.s4 1983009808
          %v6959 = vunpack.c.0.s8 %v6958
          %v6960 = vperm.slane %v6956, %v6959
          %v6961 = vrot.slane %v4426, 4
          %v6962 = vsel %vm2219, %v6961, %v4424
          %v6964 = vunpack.c.l.s4 1983009808
          %v6965 = vunpack.c.0.s8 %v6964
          %v6966 = vperm.slane %v6962, %v6965
          %v6967 = vrot.slane %v6966, 4
          %v6968 = vsel %vm2219, %v6967, %v6960
          %v6970 = vunpack.c.l.s4 1934713408
          %v6971 = vunpack.c.0.s8 %v6970
          %v6972 = vperm.slane %v6968, %v6971
          %v6973 = vsel %vm2219, %v4444, %v4437
          %v6975 = vunpack.c.l.s4 1983009808
          %v6976 = vunpack.c.0.s8 %v6975
          %v6977 = vperm.slane %v6973, %v6976
          %v6978 = vrot.slane %v4445, 4
          %v6979 = vsel %vm2219, %v6978, %v4443
          %v6981 = vunpack.c.l.s4 1983009808
          %v6982 = vunpack.c.0.s8 %v6981
          %v6983 = vperm.slane %v6979, %v6982
          %v6984 = vrot.slane %v6983, 4
          %v6985 = vsel %vm2219, %v6984, %v6977
          %v6987 = vunpack.c.l.s4 1934713408
          %v6988 = vunpack.c.0.s8 %v6987
          %v6989 = vperm.slane %v6985, %v6988
          %v6990 = vsel %vm2219, %v4463, %v4456
          %v6992 = vunpack.c.l.s4 1983009808
          %v6993 = vunpack.c.0.s8 %v6992
          %v6994 = vperm.slane %v6990, %v6993
          %v6995 = vrot.slane %v4464, 4
          %v6996 = vsel %vm2219, %v6995, %v4462
          %v6998 = vunpack.c.l.s4 1983009808
          %v6999 = vunpack.c.0.s8 %v6998
          %v7000 = vperm.slane %v6996, %v6999
          %v7001 = vrot.slane %v7000, 4
          %v7002 = vsel %vm2219, %v7001, %v6994
          %v7004 = vunpack.c.l.s4 1934713408
          %v7005 = vunpack.c.0.s8 %v7004
          %v7006 = vperm.slane %v7002, %v7005
          %v7007 = vsel %vm2219, %v4482, %v4475
          %v7009 = vunpack.c.l.s4 1983009808
          %v7010 = vunpack.c.0.s8 %v7009
          %v7011 = vperm.slane %v7007, %v7010
          %v7012 = vrot.slane %v4483, 4
          %v7013 = vsel %vm2219, %v7012, %v4481
          %v7015 = vunpack.c.l.s4 1983009808
          %v7016 = vunpack.c.0.s8 %v7015
          %v7017 = vperm.slane %v7013, %v7016
          %v7018 = vrot.slane %v7017, 4
          %v7019 = vsel %vm2219, %v7018, %v7011
          %v7021 = vunpack.c.l.s4 1934713408
          %v7022 = vunpack.c.0.s8 %v7021
          %v7023 = vperm.slane %v7019, %v7022
          %v7024 = vsel %vm2219, %v4501, %v4494
          %v7026 = vunpack.c.l.s4 1983009808
          %v7027 = vunpack.c.0.s8 %v7026
          %v7028 = vperm.slane %v7024, %v7027
          %v7029 = vrot.slane %v4502, 4
          %v7030 = vsel %vm2219, %v7029, %v4500
          %v7032 = vunpack.c.l.s4 1983009808
          %v7033 = vunpack.c.0.s8 %v7032
          %v7034 = vperm.slane %v7030, %v7033
          %v7035 = vrot.slane %v7034, 4
          %v7036 = vsel %vm2219, %v7035, %v7028
          %v7038 = vunpack.c.l.s4 1934713408
          %v7039 = vunpack.c.0.s8 %v7038
          %v7040 = vperm.slane %v7036, %v7039
          %v7041 = vsel %vm2219, %v4520, %v4513
          %v7043 = vunpack.c.l.s4 1983009808
          %v7044 = vunpack.c.0.s8 %v7043
          %v7045 = vperm.slane %v7041, %v7044
          %v7046 = vrot.slane %v4521, 4
          %v7047 = vsel %vm2219, %v7046, %v4519
          %v7049 = vunpack.c.l.s4 1983009808
          %v7050 = vunpack.c.0.s8 %v7049
          %v7051 = vperm.slane %v7047, %v7050
          %v7052 = vrot.slane %v7051, 4
          %v7053 = vsel %vm2219, %v7052, %v7045
          %v7055 = vunpack.c.l.s4 1934713408
          %v7056 = vunpack.c.0.s8 %v7055
          %v7057 = vperm.slane %v7053, %v7056
          %v7058 = vsel %vm2219, %v4539, %v4532
          %v7060 = vunpack.c.l.s4 1983009808
          %v7061 = vunpack.c.0.s8 %v7060
          %v7062 = vperm.slane %v7058, %v7061
          %v7063 = vrot.slane %v4540, 4
          %v7064 = vsel %vm2219, %v7063, %v4538
          %v7066 = vunpack.c.l.s4 1983009808
          %v7067 = vunpack.c.0.s8 %v7066
          %v7068 = vperm.slane %v7064, %v7067
          %v7069 = vrot.slane %v7068, 4
          %v7070 = vsel %vm2219, %v7069, %v7062
          %v7072 = vunpack.c.l.s4 1934713408
          %v7073 = vunpack.c.0.s8 %v7072
          %v7074 = vperm.slane %v7070, %v7073
          %v7075 = vsel %vm2219, %v4558, %v4551
          %v7077 = vunpack.c.l.s4 1983009808
          %v7078 = vunpack.c.0.s8 %v7077
          %v7079 = vperm.slane %v7075, %v7078
          %v7080 = vrot.slane %v4559, 4
          %v7081 = vsel %vm2219, %v7080, %v4557
          %v7083 = vunpack.c.l.s4 1983009808
          %v7084 = vunpack.c.0.s8 %v7083
          %v7085 = vperm.slane %v7081, %v7084
          %v7086 = vrot.slane %v7085, 4
          %v7087 = vsel %vm2219, %v7086, %v7079
          %v7089 = vunpack.c.l.s4 1934713408
          %v7090 = vunpack.c.0.s8 %v7089
          %v7091 = vperm.slane %v7087, %v7090
          %v7092 = vsel %vm2219, %v4577, %v4570
          %v7094 = vunpack.c.l.s4 1983009808
          %v7095 = vunpack.c.0.s8 %v7094
          %v7096 = vperm.slane %v7092, %v7095
          %v7097 = vrot.slane %v4578, 4
          %v7098 = vsel %vm2219, %v7097, %v4576
          %v7100 = vunpack.c.l.s4 1983009808
          %v7101 = vunpack.c.0.s8 %v7100
          %v7102 = vperm.slane %v7098, %v7101
          %v7103 = vrot.slane %v7102, 4
          %v7104 = vsel %vm2219, %v7103, %v7096
          %v7106 = vunpack.c.l.s4 1934713408
          %v7107 = vunpack.c.0.s8 %v7106
          %v7108 = vperm.slane %v7104, %v7107
          %v7109 = vsel %vm2219, %v4596, %v4589
          %v7111 = vunpack.c.l.s4 1983009808
          %v7112 = vunpack.c.0.s8 %v7111
          %v7113 = vperm.slane %v7109, %v7112
          %v7114 = vrot.slane %v4597, 4
          %v7115 = vsel %vm2219, %v7114, %v4595
          %v7117 = vunpack.c.l.s4 1983009808
          %v7118 = vunpack.c.0.s8 %v7117
          %v7119 = vperm.slane %v7115, %v7118
          %v7120 = vrot.slane %v7119, 4
          %v7121 = vsel %vm2219, %v7120, %v7113
          %v7123 = vunpack.c.l.s4 1934713408
          %v7124 = vunpack.c.0.s8 %v7123
          %v7125 = vperm.slane %v7121, %v7124
          %v7126 = vsel %vm2219, %v4615, %v4608
          %v7128 = vunpack.c.l.s4 1983009808
          %v7129 = vunpack.c.0.s8 %v7128
          %v7130 = vperm.slane %v7126, %v7129
          %v7131 = vrot.slane %v4616, 4
          %v7132 = vsel %vm2219, %v7131, %v4614
          %v7134 = vunpack.c.l.s4 1983009808
          %v7135 = vunpack.c.0.s8 %v7134
          %v7136 = vperm.slane %v7132, %v7135
          %v7137 = vrot.slane %v7136, 4
          %v7138 = vsel %vm2219, %v7137, %v7130
          %v7140 = vunpack.c.l.s4 1934713408
          %v7141 = vunpack.c.0.s8 %v7140
          %v7142 = vperm.slane %v7138, %v7141
          %v7143 = vsel %vm2219, %v4634, %v4627
          %v7145 = vunpack.c.l.s4 1983009808
          %v7146 = vunpack.c.0.s8 %v7145
          %v7147 = vperm.slane %v7143, %v7146
          %v7148 = vrot.slane %v4635, 4
          %v7149 = vsel %vm2219, %v7148, %v4633
          %v7151 = vunpack.c.l.s4 1983009808
          %v7152 = vunpack.c.0.s8 %v7151
          %v7153 = vperm.slane %v7149, %v7152
          %v7154 = vrot.slane %v7153, 4
          %v7155 = vsel %vm2219, %v7154, %v7147
          %v7157 = vunpack.c.l.s4 1934713408
          %v7158 = vunpack.c.0.s8 %v7157
          %v7159 = vperm.slane %v7155, %v7158
          %v7160 = vsel %vm2219, %v4653, %v4646
          %v7162 = vunpack.c.l.s4 1983009808
          %v7163 = vunpack.c.0.s8 %v7162
          %v7164 = vperm.slane %v7160, %v7163
          %v7165 = vrot.slane %v4654, 4
          %v7166 = vsel %vm2219, %v7165, %v4652
          %v7168 = vunpack.c.l.s4 1983009808
          %v7169 = vunpack.c.0.s8 %v7168
          %v7170 = vperm.slane %v7166, %v7169
          %v7171 = vrot.slane %v7170, 4
          %v7172 = vsel %vm2219, %v7171, %v7164
          %v7174 = vunpack.c.l.s4 1934713408
          %v7175 = vunpack.c.0.s8 %v7174
          %v7176 = vperm.slane %v7172, %v7175
          %v7177 = vsel %vm2219, %v4672, %v4665
          %v7179 = vunpack.c.l.s4 1983009808
          %v7180 = vunpack.c.0.s8 %v7179
          %v7181 = vperm.slane %v7177, %v7180
          %v7182 = vrot.slane %v4673, 4
          %v7183 = vsel %vm2219, %v7182, %v4671
          %v7185 = vunpack.c.l.s4 1983009808
          %v7186 = vunpack.c.0.s8 %v7185
          %v7187 = vperm.slane %v7183, %v7186
          %v7188 = vrot.slane %v7187, 4
          %v7189 = vsel %vm2219, %v7188, %v7181
          %v7191 = vunpack.c.l.s4 1934713408
          %v7192 = vunpack.c.0.s8 %v7191
          %v7193 = vperm.slane %v7189, %v7192
          %v7194 = vsel %vm2219, %v4691, %v4684
          %v7196 = vunpack.c.l.s4 1983009808
          %v7197 = vunpack.c.0.s8 %v7196
          %v7198 = vperm.slane %v7194, %v7197
          %v7199 = vrot.slane %v4692, 4
          %v7200 = vsel %vm2219, %v7199, %v4690
          %v7202 = vunpack.c.l.s4 1983009808
          %v7203 = vunpack.c.0.s8 %v7202
          %v7204 = vperm.slane %v7200, %v7203
          %v7205 = vrot.slane %v7204, 4
          %v7206 = vsel %vm2219, %v7205, %v7198
          %v7208 = vunpack.c.l.s4 1934713408
          %v7209 = vunpack.c.0.s8 %v7208
          %v7210 = vperm.slane %v7206, %v7209
          %v7211 = vsel %vm2219, %v4710, %v4703
          %v7213 = vunpack.c.l.s4 1983009808
          %v7214 = vunpack.c.0.s8 %v7213
          %v7215 = vperm.slane %v7211, %v7214
          %v7216 = vrot.slane %v4711, 4
          %v7217 = vsel %vm2219, %v7216, %v4709
          %v7219 = vunpack.c.l.s4 1983009808
          %v7220 = vunpack.c.0.s8 %v7219
          %v7221 = vperm.slane %v7217, %v7220
          %v7222 = vrot.slane %v7221, 4
          %v7223 = vsel %vm2219, %v7222, %v7215
          %v7225 = vunpack.c.l.s4 1934713408
          %v7226 = vunpack.c.0.s8 %v7225
          %v7227 = vperm.slane %v7223, %v7226
          %v7228 = vsel %vm2219, %v4729, %v4722
          %v7230 = vunpack.c.l.s4 1983009808
          %v7231 = vunpack.c.0.s8 %v7230
          %v7232 = vperm.slane %v7228, %v7231
          %v7233 = vrot.slane %v4730, 4
          %v7234 = vsel %vm2219, %v7233, %v4728
          %v7236 = vunpack.c.l.s4 1983009808
          %v7237 = vunpack.c.0.s8 %v7236
          %v7238 = vperm.slane %v7234, %v7237
          %v7239 = vrot.slane %v7238, 4
          %v7240 = vsel %vm2219, %v7239, %v7232
          %v7242 = vunpack.c.l.s4 1934713408
          %v7243 = vunpack.c.0.s8 %v7242
          %v7244 = vperm.slane %v7240, %v7243
          %v7245 = vsel %vm2219, %v4748, %v4741
          %v7247 = vunpack.c.l.s4 1983009808
          %v7248 = vunpack.c.0.s8 %v7247
          %v7249 = vperm.slane %v7245, %v7248
          %v7250 = vrot.slane %v4749, 4
          %v7251 = vsel %vm2219, %v7250, %v4747
          %v7253 = vunpack.c.l.s4 1983009808
          %v7254 = vunpack.c.0.s8 %v7253
          %v7255 = vperm.slane %v7251, %v7254
          %v7256 = vrot.slane %v7255, 4
          %v7257 = vsel %vm2219, %v7256, %v7249
          %v7259 = vunpack.c.l.s4 1934713408
          %v7260 = vunpack.c.0.s8 %v7259
          %v7261 = vperm.slane %v7257, %v7260
          %v7262 = vsel %vm2219, %v4767, %v4760
          %v7264 = vunpack.c.l.s4 1983009808
          %v7265 = vunpack.c.0.s8 %v7264
          %v7266 = vperm.slane %v7262, %v7265
          %v7267 = vrot.slane %v4768, 4
          %v7268 = vsel %vm2219, %v7267, %v4766
          %v7270 = vunpack.c.l.s4 1983009808
          %v7271 = vunpack.c.0.s8 %v7270
          %v7272 = vperm.slane %v7268, %v7271
          %v7273 = vrot.slane %v7272, 4
          %v7274 = vsel %vm2219, %v7273, %v7266
          %v7276 = vunpack.c.l.s4 1934713408
          %v7277 = vunpack.c.0.s8 %v7276
          %v7278 = vperm.slane %v7274, %v7277
          %v7279 = vsel %vm2219, %v4786, %v4779
          %v7281 = vunpack.c.l.s4 1983009808
          %v7282 = vunpack.c.0.s8 %v7281
          %v7283 = vperm.slane %v7279, %v7282
          %v7284 = vrot.slane %v4787, 4
          %v7285 = vsel %vm2219, %v7284, %v4785
          %v7287 = vunpack.c.l.s4 1983009808
          %v7288 = vunpack.c.0.s8 %v7287
          %v7289 = vperm.slane %v7285, %v7288
          %v7290 = vrot.slane %v7289, 4
          %v7291 = vsel %vm2219, %v7290, %v7283
          %v7293 = vunpack.c.l.s4 1934713408
          %v7294 = vunpack.c.0.s8 %v7293
          %v7295 = vperm.slane %v7291, %v7294
          %v7296 = vsel %vm2219, %v4805, %v4798
          %v7298 = vunpack.c.l.s4 1983009808
          %v7299 = vunpack.c.0.s8 %v7298
          %v7300 = vperm.slane %v7296, %v7299
          %v7301 = vrot.slane %v4806, 4
          %v7302 = vsel %vm2219, %v7301, %v4804
          %v7304 = vunpack.c.l.s4 1983009808
          %v7305 = vunpack.c.0.s8 %v7304
          %v7306 = vperm.slane %v7302, %v7305
          %v7307 = vrot.slane %v7306, 4
          %v7308 = vsel %vm2219, %v7307, %v7300
          %v7310 = vunpack.c.l.s4 1934713408
          %v7311 = vunpack.c.0.s8 %v7310
          %v7312 = vperm.slane %v7308, %v7311
          %v7313 = vsel %vm2219, %v4824, %v4817
          %v7315 = vunpack.c.l.s4 1983009808
          %v7316 = vunpack.c.0.s8 %v7315
          %v7317 = vperm.slane %v7313, %v7316
          %v7318 = vrot.slane %v4825, 4
          %v7319 = vsel %vm2219, %v7318, %v4823
          %v7321 = vunpack.c.l.s4 1983009808
          %v7322 = vunpack.c.0.s8 %v7321
          %v7323 = vperm.slane %v7319, %v7322
          %v7324 = vrot.slane %v7323, 4
          %v7325 = vsel %vm2219, %v7324, %v7317
          %v7327 = vunpack.c.l.s4 1934713408
          %v7328 = vunpack.c.0.s8 %v7327
          %v7329 = vperm.slane %v7325, %v7328
          %v7330 = vsel %vm2219, %v4843, %v4836
          %v7332 = vunpack.c.l.s4 1983009808
          %v7333 = vunpack.c.0.s8 %v7332
          %v7334 = vperm.slane %v7330, %v7333
          %v7335 = vrot.slane %v4844, 4
          %v7336 = vsel %vm2219, %v7335, %v4842
          %v7338 = vunpack.c.l.s4 1983009808
          %v7339 = vunpack.c.0.s8 %v7338
          %v7340 = vperm.slane %v7336, %v7339
          %v7341 = vrot.slane %v7340, 4
          %v7342 = vsel %vm2219, %v7341, %v7334
          %v7344 = vunpack.c.l.s4 1934713408
          %v7345 = vunpack.c.0.s8 %v7344
          %v7346 = vperm.slane %v7342, %v7345
          %v7347 = vsel %vm2219, %v4862, %v4855
          %v7349 = vunpack.c.l.s4 1983009808
          %v7350 = vunpack.c.0.s8 %v7349
          %v7351 = vperm.slane %v7347, %v7350
          %v7352 = vrot.slane %v4863, 4
          %v7353 = vsel %vm2219, %v7352, %v4861
          %v7355 = vunpack.c.l.s4 1983009808
          %v7356 = vunpack.c.0.s8 %v7355
          %v7357 = vperm.slane %v7353, %v7356
          %v7358 = vrot.slane %v7357, 4
          %v7359 = vsel %vm2219, %v7358, %v7351
          %v7361 = vunpack.c.l.s4 1934713408
          %v7362 = vunpack.c.0.s8 %v7361
          %v7363 = vperm.slane %v7359, %v7362
          %v7364 = vsel %vm2219, %v4881, %v4874
          %v7366 = vunpack.c.l.s4 1983009808
          %v7367 = vunpack.c.0.s8 %v7366
          %v7368 = vperm.slane %v7364, %v7367
          %v7369 = vrot.slane %v4882, 4
          %v7370 = vsel %vm2219, %v7369, %v4880
          %v7372 = vunpack.c.l.s4 1983009808
          %v7373 = vunpack.c.0.s8 %v7372
          %v7374 = vperm.slane %v7370, %v7373
          %v7375 = vrot.slane %v7374, 4
          %v7376 = vsel %vm2219, %v7375, %v7368
          %v7378 = vunpack.c.l.s4 1934713408
          %v7379 = vunpack.c.0.s8 %v7378
          %v7380 = vperm.slane %v7376, %v7379
          %v7381 = vsel %vm2219, %v4900, %v4893
          %v7383 = vunpack.c.l.s4 1983009808
          %v7384 = vunpack.c.0.s8 %v7383
          %v7385 = vperm.slane %v7381, %v7384
          %v7386 = vrot.slane %v4901, 4
          %v7387 = vsel %vm2219, %v7386, %v4899
          %v7389 = vunpack.c.l.s4 1983009808
          %v7390 = vunpack.c.0.s8 %v7389
          %v7391 = vperm.slane %v7387, %v7390
          %v7392 = vrot.slane %v7391, 4
          %v7393 = vsel %vm2219, %v7392, %v7385
          %v7395 = vunpack.c.l.s4 1934713408
          %v7396 = vunpack.c.0.s8 %v7395
          %v7397 = vperm.slane %v7393, %v7396
          %v7400 = vpack.i.b16 %v6343, %v6326
          %v7402 = vshrl.u32 %v6326, 16
          %v7403 = vshrl.u32 %v6343, 16
          %v7404 = vpack.i.b16 %v7403, %v7402
          %v7408 = vpack.i.b16 %v6377, %v6360
          %v7410 = vshrl.u32 %v6360, 16
          %v7411 = vshrl.u32 %v6377, 16
          %v7412 = vpack.i.b16 %v7411, %v7410
          %v7416 = vpack.i.b16 %v6411, %v6394
          %v7418 = vshrl.u32 %v6394, 16
          %v7419 = vshrl.u32 %v6411, 16
          %v7420 = vpack.i.b16 %v7419, %v7418
          %v7424 = vpack.i.b16 %v6445, %v6428
          %v7426 = vshrl.u32 %v6428, 16
          %v7427 = vshrl.u32 %v6445, 16
          %v7428 = vpack.i.b16 %v7427, %v7426
          %v7432 = vpack.i.b16 %v6479, %v6462
          %v7434 = vshrl.u32 %v6462, 16
          %v7435 = vshrl.u32 %v6479, 16
          %v7436 = vpack.i.b16 %v7435, %v7434
          %v7440 = vpack.i.b16 %v6513, %v6496
          %v7442 = vshrl.u32 %v6496, 16
          %v7443 = vshrl.u32 %v6513, 16
          %v7444 = vpack.i.b16 %v7443, %v7442
          %v7448 = vpack.i.b16 %v6547, %v6530
          %v7450 = vshrl.u32 %v6530, 16
          %v7451 = vshrl.u32 %v6547, 16
          %v7452 = vpack.i.b16 %v7451, %v7450
          %v7456 = vpack.i.b16 %v6581, %v6564
          %v7458 = vshrl.u32 %v6564, 16
          %v7459 = vshrl.u32 %v6581, 16
          %v7460 = vpack.i.b16 %v7459, %v7458
          %v7464 = vpack.i.b16 %v6615, %v6598
          %v7466 = vshrl.u32 %v6598, 16
          %v7467 = vshrl.u32 %v6615, 16
          %v7468 = vpack.i.b16 %v7467, %v7466
          %v7472 = vpack.i.b16 %v6649, %v6632
          %v7474 = vshrl.u32 %v6632, 16
          %v7475 = vshrl.u32 %v6649, 16
          %v7476 = vpack.i.b16 %v7475, %v7474
          %v7480 = vpack.i.b16 %v6683, %v6666
          %v7482 = vshrl.u32 %v6666, 16
          %v7483 = vshrl.u32 %v6683, 16
          %v7484 = vpack.i.b16 %v7483, %v7482
          %v7488 = vpack.i.b16 %v6717, %v6700
          %v7490 = vshrl.u32 %v6700, 16
          %v7491 = vshrl.u32 %v6717, 16
          %v7492 = vpack.i.b16 %v7491, %v7490
          %v7496 = vpack.i.b16 %v6751, %v6734
          %v7498 = vshrl.u32 %v6734, 16
          %v7499 = vshrl.u32 %v6751, 16
          %v7500 = vpack.i.b16 %v7499, %v7498
          %v7504 = vpack.i.b16 %v6785, %v6768
          %v7506 = vshrl.u32 %v6768, 16
          %v7507 = vshrl.u32 %v6785, 16
          %v7508 = vpack.i.b16 %v7507, %v7506
          %v7512 = vpack.i.b16 %v6819, %v6802
          %v7514 = vshrl.u32 %v6802, 16
          %v7515 = vshrl.u32 %v6819, 16
          %v7516 = vpack.i.b16 %v7515, %v7514
          %v7520 = vpack.i.b16 %v6853, %v6836
          %v7522 = vshrl.u32 %v6836, 16
          %v7523 = vshrl.u32 %v6853, 16
          %v7524 = vpack.i.b16 %v7523, %v7522
          %v7528 = vpack.i.b16 %v6887, %v6870
          %v7530 = vshrl.u32 %v6870, 16
          %v7531 = vshrl.u32 %v6887, 16
          %v7532 = vpack.i.b16 %v7531, %v7530
          %v7536 = vpack.i.b16 %v6921, %v6904
          %v7538 = vshrl.u32 %v6904, 16
          %v7539 = vshrl.u32 %v6921, 16
          %v7540 = vpack.i.b16 %v7539, %v7538
          %v7544 = vpack.i.b16 %v6955, %v6938
          %v7546 = vshrl.u32 %v6938, 16
          %v7547 = vshrl.u32 %v6955, 16
          %v7548 = vpack.i.b16 %v7547, %v7546
          %v7552 = vpack.i.b16 %v6989, %v6972
          %v7554 = vshrl.u32 %v6972, 16
          %v7555 = vshrl.u32 %v6989, 16
          %v7556 = vpack.i.b16 %v7555, %v7554
          %v7560 = vpack.i.b16 %v7023, %v7006
          %v7562 = vshrl.u32 %v7006, 16
          %v7563 = vshrl.u32 %v7023, 16
          %v7564 = vpack.i.b16 %v7563, %v7562
          %v7568 = vpack.i.b16 %v7057, %v7040
          %v7570 = vshrl.u32 %v7040, 16
          %v7571 = vshrl.u32 %v7057, 16
          %v7572 = vpack.i.b16 %v7571, %v7570
          %v7576 = vpack.i.b16 %v7091, %v7074
          %v7578 = vshrl.u32 %v7074, 16
          %v7579 = vshrl.u32 %v7091, 16
          %v7580 = vpack.i.b16 %v7579, %v7578
          %v7584 = vpack.i.b16 %v7125, %v7108
          %v7586 = vshrl.u32 %v7108, 16
          %v7587 = vshrl.u32 %v7125, 16
          %v7588 = vpack.i.b16 %v7587, %v7586
          %v7592 = vpack.i.b16 %v7159, %v7142
          %v7594 = vshrl.u32 %v7142, 16
          %v7595 = vshrl.u32 %v7159, 16
          %v7596 = vpack.i.b16 %v7595, %v7594
          %v7600 = vpack.i.b16 %v7193, %v7176
          %v7602 = vshrl.u32 %v7176, 16
          %v7603 = vshrl.u32 %v7193, 16
          %v7604 = vpack.i.b16 %v7603, %v7602
          %v7608 = vpack.i.b16 %v7227, %v7210
          %v7610 = vshrl.u32 %v7210, 16
          %v7611 = vshrl.u32 %v7227, 16
          %v7612 = vpack.i.b16 %v7611, %v7610
          %v7616 = vpack.i.b16 %v7261, %v7244
          %v7618 = vshrl.u32 %v7244, 16
          %v7619 = vshrl.u32 %v7261, 16
          %v7620 = vpack.i.b16 %v7619, %v7618
          %v7624 = vpack.i.b16 %v7295, %v7278
          %v7626 = vshrl.u32 %v7278, 16
          %v7627 = vshrl.u32 %v7295, 16
          %v7628 = vpack.i.b16 %v7627, %v7626
          %v7632 = vpack.i.b16 %v7329, %v7312
          %v7634 = vshrl.u32 %v7312, 16
          %v7635 = vshrl.u32 %v7329, 16
          %v7636 = vpack.i.b16 %v7635, %v7634
          %v7640 = vpack.i.b16 %v7363, %v7346
          %v7642 = vshrl.u32 %v7346, 16
          %v7643 = vshrl.u32 %v7363, 16
          %v7644 = vpack.i.b16 %v7643, %v7642
          %v7648 = vpack.i.b16 %v7397, %v7380
          %v7650 = vshrl.u32 %v7380, 16
          %v7651 = vshrl.u32 %v7397, 16
          %v7652 = vpack.i.b16 %v7651, %v7650
          %7654 = vst [vmem:[#allocation3] sm:$0xf] %v7400
          %7655 = vst [vmem:[#allocation3 + $0x4] sm:$0xf] %v7408
          %7656 = vst [vmem:[#allocation3 + $0x8] sm:$0xf] %v7416
          %7657 = vst [vmem:[#allocation3 + $0xc] sm:$0xf] %v7424
          %7658 = vst [vmem:[#allocation3 + $0x10] sm:$0xf] %v7432
          %7659 = vst [vmem:[#allocation3 + $0x14] sm:$0xf] %v7440
          %7660 = vst [vmem:[#allocation3 + $0x18] sm:$0xf] %v7448
          %7661 = vst [vmem:[#allocation3 + $0x1c] sm:$0xf] %v7456
          %7662 = vst [vmem:[#allocation3 + $0x20] sm:$0xf] %v7464
          %7663 = vst [vmem:[#allocation3 + $0x24] sm:$0xf] %v7472
          %7664 = vst [vmem:[#allocation3 + $0x28] sm:$0xf] %v7480
          %7665 = vst [vmem:[#allocation3 + $0x2c] sm:$0xf] %v7488
          %7666 = vst [vmem:[#allocation3 + $0x30] sm:$0xf] %v7496
          %7667 = vst [vmem:[#allocation3 + $0x34] sm:$0xf] %v7504
          %7668 = vst [vmem:[#allocation3 + $0x38] sm:$0xf] %v7512
          %7669 = vst [vmem:[#allocation3 + $0x3c] sm:$0xf] %v7520
          %7670 = vst [vmem:[#allocation3 + $0x40] sm:$0xf] %v7528
          %7671 = vst [vmem:[#allocation3 + $0x44] sm:$0xf] %v7536
          %7672 = vst [vmem:[#allocation3 + $0x48] sm:$0xf] %v7544
          %7673 = vst [vmem:[#allocation3 + $0x4c] sm:$0xf] %v7552
          %7674 = vst [vmem:[#allocation3 + $0x50] sm:$0xf] %v7560
          %7675 = vst [vmem:[#allocation3 + $0x54] sm:$0xf] %v7568
          %7676 = vst [vmem:[#allocation3 + $0x58] sm:$0xf] %v7576
          %7677 = vst [vmem:[#allocation3 + $0x5c] sm:$0xf] %v7584
          %7678 = vst [vmem:[#allocation3 + $0x60] sm:$0xf] %v7592
          %7679 = vst [vmem:[#allocation3 + $0x64] sm:$0xf] %v7600
          %7680 = vst [vmem:[#allocation3 + $0x68] sm:$0xf] %v7608
          %7681 = vst [vmem:[#allocation3 + $0x6c] sm:$0xf] %v7616
          %7682 = vst [vmem:[#allocation3 + $0x70] sm:$0xf] %v7624
          %7683 = vst [vmem:[#allocation3 + $0x74] sm:$0xf] %v7632
          %7684 = vst [vmem:[#allocation3 + $0x78] sm:$0xf] %v7640
          %7685 = vst [vmem:[#allocation3 + $0x7c] sm:$0xf] %v7648
          %7686 = vst [vmem:[#allocation3 + $0x80] sm:$0xf] %v7404
          %7687 = vst [vmem:[#allocation3 + $0x84] sm:$0xf] %v7412
          %7688 = vst [vmem:[#allocation3 + $0x88] sm:$0xf] %v7420
          %7689 = vst [vmem:[#allocation3 + $0x8c] sm:$0xf] %v7428
          %7690 = vst [vmem:[#allocation3 + $0x90] sm:$0xf] %v7436
          %7691 = vst [vmem:[#allocation3 + $0x94] sm:$0xf] %v7444
          %7692 = vst [vmem:[#allocation3 + $0x98] sm:$0xf] %v7452
          %7693 = vst [vmem:[#allocation3 + $0x9c] sm:$0xf] %v7460
          %7694 = vst [vmem:[#allocation3 + $0xa0] sm:$0xf] %v7468
          %7695 = vst [vmem:[#allocation3 + $0xa4] sm:$0xf] %v7476
          %7696 = vst [vmem:[#allocation3 + $0xa8] sm:$0xf] %v7484
          %7697 = vst [vmem:[#allocation3 + $0xac] sm:$0xf] %v7492
          %7698 = vst [vmem:[#allocation3 + $0xb0] sm:$0xf] %v7500
          %7699 = vst [vmem:[#allocation3 + $0xb4] sm:$0xf] %v7508
          %7700 = vst [vmem:[#allocation3 + $0xb8] sm:$0xf] %v7516
          %7701 = vst [vmem:[#allocation3 + $0xbc] sm:$0xf] %v7524
          %7702 = vst [vmem:[#allocation3 + $0xc0] sm:$0xf] %v7532
          %7703 = vst [vmem:[#allocation3 + $0xc4] sm:$0xf] %v7540
          %7704 = vst [vmem:[#allocation3 + $0xc8] sm:$0xf] %v7548
          %7705 = vst [vmem:[#allocation3 + $0xcc] sm:$0xf] %v7556
          %7706 = vst [vmem:[#allocation3 + $0xd0] sm:$0xf] %v7564
          %7707 = vst [vmem:[#allocation3 + $0xd4] sm:$0xf] %v7572
          %7708 = vst [vmem:[#allocation3 + $0xd8] sm:$0xf] %v7580
          %7709 = vst [vmem:[#allocation3 + $0xdc] sm:$0xf] %v7588
          %7710 = vst [vmem:[#allocation3 + $0xe0] sm:$0xf] %v7596
          %7711 = vst [vmem:[#allocation3 + $0xe4] sm:$0xf] %v7604
          %7712 = vst [vmem:[#allocation3 + $0xe8] sm:$0xf] %v7612
          %7713 = vst [vmem:[#allocation3 + $0xec] sm:$0xf] %v7620
          %7714 = vst [vmem:[#allocation3 + $0xf0] sm:$0xf] %v7628
          %7715 = vst [vmem:[#allocation3 + $0xf4] sm:$0xf] %v7636
          %7716 = vst [vmem:[#allocation3 + $0xf8] sm:$0xf] %v7644
          %7717 = vst [vmem:[#allocation3 + $0xfc] sm:$0xf] %v7652
        $region104: #{tpu_custom_call.1} parent=67 // pred_fallthru
          _
        %v7718 = vld [vmem:[%s568] sm:$0xff]
        %v7719 = vld [vmem:[%s568 + $0x8] sm:$0xff]
        %v7720 = vld [vmem:[%s568 + $0x10] sm:$0xff]
        %v7721 = vld [vmem:[%s568 + $0x18] sm:$0xff]
        %v7722 = vld [vmem:[%s568 + $0x20] sm:$0xff]
        %v7723 = vld [vmem:[%s568 + $0x28] sm:$0xff]
        %v7724 = vld [vmem:[%s568 + $0x30] sm:$0xff]
        %v7725 = vld [vmem:[%s568 + $0x38] sm:$0xff]
        %v7726 = vld [vmem:[%s568 + $0x40] sm:$0xff]
        %v7727 = vld [vmem:[%s568 + $0x48] sm:$0xff]
        %v7728 = vld [vmem:[%s568 + $0x50] sm:$0xff]
        %v7729 = vld [vmem:[%s568 + $0x58] sm:$0xff]
        %v7730 = vld [vmem:[%s568 + $0x60] sm:$0xff]
        %v7731 = vld [vmem:[%s568 + $0x68] sm:$0xff]
        %v7732 = vld [vmem:[%s568 + $0x70] sm:$0xff]
        %v7733 = vld [vmem:[%s568 + $0x78] sm:$0xff]
        %v7734 = vld [vmem:[%s568 + $0x80] sm:$0xff]
        %v7735 = vld [vmem:[%s568 + $0x88] sm:$0xff]
        %v7736 = vld [vmem:[%s568 + $0x90] sm:$0xff]
        %v7737 = vld [vmem:[%s568 + $0x98] sm:$0xff]
        %v7738 = vld [vmem:[%s568 + $0xa0] sm:$0xff]
        %v7739 = vld [vmem:[%s568 + $0xa8] sm:$0xff]
        %v7740 = vld [vmem:[%s568 + $0xb0] sm:$0xff]
        %v7741 = vld [vmem:[%s568 + $0xb8] sm:$0xff]
        %v7742 = vld [vmem:[%s568 + $0xc0] sm:$0xff]
        %v7743 = vld [vmem:[%s568 + $0xc8] sm:$0xff]
        %v7744 = vld [vmem:[%s568 + $0xd0] sm:$0xff]
        %v7745 = vld [vmem:[%s568 + $0xd8] sm:$0xff]
        %v7746 = vld [vmem:[%s568 + $0xe0] sm:$0xff]
        %v7747 = vld [vmem:[%s568 + $0xe8] sm:$0xff]
        %v7748 = vld [vmem:[%s568 + $0xf0] sm:$0xff]
        %v7749 = vld [vmem:[%s568 + $0xf8] sm:$0xff]
        %v7750 = vpack.c.bf16 %v7720, %v7718
        %v7751 = vpack.c.bf16 %v7721, %v7719
        %v7752 = vpack.c.bf16 %v7724, %v7722
        %v7753 = vpack.c.bf16 %v7725, %v7723
        %v7754 = vpack.c.bf16 %v7728, %v7726
        %v7755 = vpack.c.bf16 %v7729, %v7727
        %v7756 = vpack.c.bf16 %v7732, %v7730
        %v7757 = vpack.c.bf16 %v7733, %v7731
        %v7758 = vpack.c.bf16 %v7736, %v7734
        %v7759 = vpack.c.bf16 %v7737, %v7735
        %v7760 = vpack.c.bf16 %v7740, %v7738
        %v7761 = vpack.c.bf16 %v7741, %v7739
        %v7762 = vpack.c.bf16 %v7744, %v7742
        %v7763 = vpack.c.bf16 %v7745, %v7743
        %v7764 = vpack.c.bf16 %v7748, %v7746
        %v7765 = vpack.c.bf16 %v7749, %v7747
        %v7766 = vld [vmem:[#allocation12] sm:$0xff]
        %v7767 = vld [vmem:[#allocation12 + $0x8] sm:$0xff]
        %v7768 = vld [vmem:[#allocation12 + $0x10] sm:$0xff]
        %v7769 = vld [vmem:[#allocation12 + $0x18] sm:$0xff]
        %v7770 = vld [vmem:[#allocation12 + $0x20] sm:$0xff]
        %v7771 = vld [vmem:[#allocation12 + $0x28] sm:$0xff]
        %v7772 = vld [vmem:[#allocation12 + $0x30] sm:$0xff]
        %v7773 = vld [vmem:[#allocation12 + $0x38] sm:$0xff]
        %v7774 = vld [vmem:[#allocation12 + $0x40] sm:$0xff]
        %v7775 = vld [vmem:[#allocation12 + $0x48] sm:$0xff]
        %v7776 = vld [vmem:[#allocation12 + $0x50] sm:$0xff]
        %v7777 = vld [vmem:[#allocation12 + $0x58] sm:$0xff]
        %v7778 = vld [vmem:[#allocation12 + $0x60] sm:$0xff]
        %v7779 = vld [vmem:[#allocation12 + $0x68] sm:$0xff]
        %v7780 = vld [vmem:[#allocation12 + $0x70] sm:$0xff]
        %v7781 = vld [vmem:[#allocation12 + $0x78] sm:$0xff]
        %v7782 = vld [vmem:[#allocation12 + $0x80] sm:$0xff]
        %v7783 = vld [vmem:[#allocation12 + $0x88] sm:$0xff]
        %v7784 = vld [vmem:[#allocation12 + $0x90] sm:$0xff]
        %v7785 = vld [vmem:[#allocation12 + $0x98] sm:$0xff]
        %v7786 = vld [vmem:[#allocation12 + $0xa0] sm:$0xff]
        %v7787 = vld [vmem:[#allocation12 + $0xa8] sm:$0xff]
        %v7788 = vld [vmem:[#allocation12 + $0xb0] sm:$0xff]
        %v7789 = vld [vmem:[#allocation12 + $0xb8] sm:$0xff]
        %v7790 = vld [vmem:[#allocation12 + $0xc0] sm:$0xff]
        %v7791 = vld [vmem:[#allocation12 + $0xc8] sm:$0xff]
        %v7792 = vld [vmem:[#allocation12 + $0xd0] sm:$0xff]
        %v7793 = vld [vmem:[#allocation12 + $0xd8] sm:$0xff]
        %v7794 = vld [vmem:[#allocation12 + $0xe0] sm:$0xff]
        %v7795 = vld [vmem:[#allocation12 + $0xe8] sm:$0xff]
        %v7796 = vld [vmem:[#allocation12 + $0xf0] sm:$0xff]
        %v7797 = vld [vmem:[#allocation12 + $0xf8] sm:$0xff]
        %v7798 = vld [vmem:[%s5] sm:$0x3]
        %v7800 = vperm.slane %v7798, 0
        %v7801 = vperm.slane %v7798, 1
        %v7836 = vunpack.c.l.b16 %v7766
        %v7837 = vunpack.c.h.b16 %v7766
        %v7838 = vunpack.c.l.b16 %v7767
        %v7839 = vunpack.c.h.b16 %v7767
        %v7840 = vunpack.c.l.b16 %v7768
        %v7841 = vunpack.c.h.b16 %v7768
        %v7842 = vunpack.c.l.b16 %v7769
        %v7843 = vunpack.c.h.b16 %v7769
        %v7844 = vunpack.c.l.b16 %v7770
        %v7845 = vunpack.c.h.b16 %v7770
        %v7846 = vunpack.c.l.b16 %v7771
        %v7847 = vunpack.c.h.b16 %v7771
        %v7848 = vunpack.c.l.b16 %v7772
        %v7849 = vunpack.c.h.b16 %v7772
        %v7850 = vunpack.c.l.b16 %v7773
        %v7851 = vunpack.c.h.b16 %v7773
        %v7852 = vunpack.c.l.b16 %v7774
        %v7853 = vunpack.c.h.b16 %v7774
        %v7854 = vunpack.c.l.b16 %v7775
        %v7855 = vunpack.c.h.b16 %v7775
        %v7856 = vunpack.c.l.b16 %v7776
        %v7857 = vunpack.c.h.b16 %v7776
        %v7858 = vunpack.c.l.b16 %v7777
        %v7859 = vunpack.c.h.b16 %v7777
        %v7860 = vunpack.c.l.b16 %v7778
        %v7861 = vunpack.c.h.b16 %v7778
        %v7862 = vunpack.c.l.b16 %v7779
        %v7863 = vunpack.c.h.b16 %v7779
        %v7864 = vunpack.c.l.b16 %v7780
        %v7865 = vunpack.c.h.b16 %v7780
        %v7866 = vunpack.c.l.b16 %v7781
        %v7867 = vunpack.c.h.b16 %v7781
        %v7868 = vunpack.c.l.b16 %v7782
        %v7869 = vunpack.c.h.b16 %v7782
        %v7870 = vunpack.c.l.b16 %v7783
        %v7871 = vunpack.c.h.b16 %v7783
        %v7872 = vunpack.c.l.b16 %v7784
        %v7873 = vunpack.c.h.b16 %v7784
        %v7874 = vunpack.c.l.b16 %v7785
        %v7875 = vunpack.c.h.b16 %v7785
        %v7876 = vunpack.c.l.b16 %v7786
        %v7877 = vunpack.c.h.b16 %v7786
        %v7878 = vunpack.c.l.b16 %v7787
        %v7879 = vunpack.c.h.b16 %v7787
        %v7880 = vunpack.c.l.b16 %v7788
        %v7881 = vunpack.c.h.b16 %v7788
        %v7882 = vunpack.c.l.b16 %v7789
        %v7883 = vunpack.c.h.b16 %v7789
        %v7884 = vunpack.c.l.b16 %v7790
        %v7885 = vunpack.c.h.b16 %v7790
        %v7886 = vunpack.c.l.b16 %v7791
        %v7887 = vunpack.c.h.b16 %v7791
        %v7888 = vunpack.c.l.b16 %v7792
        %v7889 = vunpack.c.h.b16 %v7792
        %v7890 = vunpack.c.l.b16 %v7793
        %v7891 = vunpack.c.h.b16 %v7793
        %v7892 = vunpack.c.l.b16 %v7794
        %v7893 = vunpack.c.h.b16 %v7794
        %v7894 = vunpack.c.l.b16 %v7795
        %v7895 = vunpack.c.h.b16 %v7795
        %v7896 = vunpack.c.l.b16 %v7796
        %v7897 = vunpack.c.h.b16 %v7796
        %v7898 = vunpack.c.l.b16 %v7797
        %v7899 = vunpack.c.h.b16 %v7797
        %v7900 = vpack.c.b16 %v7838, %v7836
        %v7901 = vpack.c.b16 %v7839, %v7837
        %v7902 = vpack.c.b16 %v7842, %v7840
        %v7903 = vpack.c.b16 %v7843, %v7841
        %v7904 = vpack.c.b16 %v7846, %v7844
        %v7905 = vpack.c.b16 %v7847, %v7845
        %v7906 = vpack.c.b16 %v7850, %v7848
        %v7907 = vpack.c.b16 %v7851, %v7849
        %v7908 = vpack.c.b16 %v7854, %v7852
        %v7909 = vpack.c.b16 %v7855, %v7853
        %v7910 = vpack.c.b16 %v7858, %v7856
        %v7911 = vpack.c.b16 %v7859, %v7857
        %v7912 = vpack.c.b16 %v7862, %v7860
        %v7913 = vpack.c.b16 %v7863, %v7861
        %v7914 = vpack.c.b16 %v7866, %v7864
        %v7915 = vpack.c.b16 %v7867, %v7865
        %v7916 = vpack.c.b16 %v7870, %v7868
        %v7917 = vpack.c.b16 %v7871, %v7869
        %v7918 = vpack.c.b16 %v7874, %v7872
        %v7919 = vpack.c.b16 %v7875, %v7873
        %v7920 = vpack.c.b16 %v7878, %v7876
        %v7921 = vpack.c.b16 %v7879, %v7877
        %v7922 = vpack.c.b16 %v7882, %v7880
        %v7923 = vpack.c.b16 %v7883, %v7881
        %v7924 = vpack.c.b16 %v7886, %v7884
        %v7925 = vpack.c.b16 %v7887, %v7885
        %v7926 = vpack.c.b16 %v7890, %v7888
        %v7927 = vpack.c.b16 %v7891, %v7889
        %v7928 = vpack.c.b16 %v7894, %v7892
        %v7929 = vpack.c.b16 %v7895, %v7893
        %v7930 = vpack.c.b16 %v7898, %v7896
        %v7931 = vpack.c.b16 %v7899, %v7897
        %7964 = vmatpush.bf16.msra.mxu0 %v7914
        %7965 = vmatpush.bf16.msra.mxu0 %v7912
        %7966 = vmatpush.bf16.msra.mxu0 %v7910
        %7967 = vmatpush.bf16.msra.mxu0 %v7908
        %7968 = vmatpush.bf16.msra.mxu0 %v7906
        %7969 = vmatpush.bf16.msra.mxu0 %v7904
        %7970 = vmatpush.bf16.msra.mxu0 %v7902
        %7971 = vmatpush.bf16.msra.mxu0 %v7900
        %7972 = vmatmul.bf16.gmra.mxu0 %v7750
        %v7973 = vpop.f32.mrf.mxu0
        %v7974 = vadd.f32 %v7800, %v7973
        %v7975 = vpop.f32.mrf.mxu0
        %v7976 = vadd.f32 %v7800, %v7975
        %7977 = vmatmul.bf16.gmra.mxu0 %v7752
        %v7978 = vpop.f32.mrf.mxu0
        %v7979 = vadd.f32 %v7800, %v7978
        %v7980 = vpop.f32.mrf.mxu0
        %v7981 = vadd.f32 %v7800, %v7980
        %7982 = vmatmul.bf16.gmra.mxu0 %v7754
        %v7983 = vpop.f32.mrf.mxu0
        %v7984 = vadd.f32 %v7800, %v7983
        %v7985 = vpop.f32.mrf.mxu0
        %v7986 = vadd.f32 %v7800, %v7985
        %7987 = vmatmul.bf16.gmra.mxu0 %v7756
        %v7988 = vpop.f32.mrf.mxu0
        %v7989 = vadd.f32 %v7800, %v7988
        %v7990 = vpop.f32.mrf.mxu0
        %v7991 = vadd.f32 %v7800, %v7990
        %7992 = vmatmul.bf16.gmra.mxu0 %v7758
        %v7993 = vpop.f32.mrf.mxu0
        %v7994 = vadd.f32 %v7800, %v7993
        %v7995 = vpop.f32.mrf.mxu0
        %v7996 = vadd.f32 %v7800, %v7995
        %7997 = vmatmul.bf16.gmra.mxu0 %v7760
        %v7998 = vpop.f32.mrf.mxu0
        %v7999 = vadd.f32 %v7800, %v7998
        %v8000 = vpop.f32.mrf.mxu0
        %v8001 = vadd.f32 %v7800, %v8000
        %8002 = vmatmul.bf16.gmra.mxu0 %v7762
        %v8003 = vpop.f32.mrf.mxu0
        %v8004 = vadd.f32 %v7800, %v8003
        %v8005 = vpop.f32.mrf.mxu0
        %v8006 = vadd.f32 %v7800, %v8005
        %8007 = vmatmul.bf16.gmra.mxu0 %v7764
        %v8008 = vpop.f32.mrf.mxu0
        %v8009 = vadd.f32 %v7800, %v8008
        %v8010 = vpop.f32.mrf.mxu0
        %v8011 = vadd.f32 %v7800, %v8010
        %8012 = vdwg.mxu0
        %8013 = vmatpush.bf16.msra.mxu0 %v7930
        %8014 = vmatpush.bf16.msra.mxu0 %v7928
        %8015 = vmatpush.bf16.msra.mxu0 %v7926
        %8016 = vmatpush.bf16.msra.mxu0 %v7924
        %8017 = vmatpush.bf16.msra.mxu0 %v7922
        %8018 = vmatpush.bf16.msra.mxu0 %v7920
        %8019 = vmatpush.bf16.msra.mxu0 %v7918
        %8020 = vmatpush.bf16.msra.mxu0 %v7916
        %8021 = vmatmul.bf16.gmra.mxu0 %v7751
        %v8022 = vpop.f32.mrf.mxu0
        %v8023 = vadd.f32 %v7974, %v8022
        %v8024 = vpop.f32.mrf.mxu0
        %v8025 = vadd.f32 %v7976, %v8024
        %8026 = vmatmul.bf16.gmra.mxu0 %v7753
        %v8027 = vpop.f32.mrf.mxu0
        %v8028 = vadd.f32 %v7979, %v8027
        %v8029 = vpop.f32.mrf.mxu0
        %v8030 = vadd.f32 %v7981, %v8029
        %8031 = vmatmul.bf16.gmra.mxu0 %v7755
        %v8032 = vpop.f32.mrf.mxu0
        %v8033 = vadd.f32 %v7984, %v8032
        %v8034 = vpop.f32.mrf.mxu0
        %v8035 = vadd.f32 %v7986, %v8034
        %8036 = vmatmul.bf16.gmra.mxu0 %v7757
        %v8037 = vpop.f32.mrf.mxu0
        %v8038 = vadd.f32 %v7989, %v8037
        %v8039 = vpop.f32.mrf.mxu0
        %v8040 = vadd.f32 %v7991, %v8039
        %8041 = vmatmul.bf16.gmra.mxu0 %v7759
        %v8042 = vpop.f32.mrf.mxu0
        %v8043 = vadd.f32 %v7994, %v8042
        %v8044 = vpop.f32.mrf.mxu0
        %v8045 = vadd.f32 %v7996, %v8044
        %8046 = vmatmul.bf16.gmra.mxu0 %v7761
        %v8047 = vpop.f32.mrf.mxu0
        %v8048 = vadd.f32 %v7999, %v8047
        %v8049 = vpop.f32.mrf.mxu0
        %v8050 = vadd.f32 %v8001, %v8049
        %8051 = vmatmul.bf16.gmra.mxu0 %v7763
        %v8052 = vpop.f32.mrf.mxu0
        %v8053 = vadd.f32 %v8004, %v8052
        %v8054 = vpop.f32.mrf.mxu0
        %v8055 = vadd.f32 %v8006, %v8054
        %8056 = vmatmul.bf16.gmra.mxu0 %v7765
        %v8057 = vpop.f32.mrf.mxu0
        %v8058 = vadd.f32 %v8009, %v8057
        %v8059 = vpop.f32.mrf.mxu0
        %v8060 = vadd.f32 %v8011, %v8059
        %8061 = vdwg.mxu0
        %8062 = vmatpush.bf16.msra.mxu0 %v7915
        %8063 = vmatpush.bf16.msra.mxu0 %v7913
        %8064 = vmatpush.bf16.msra.mxu0 %v7911
        %8065 = vmatpush.bf16.msra.mxu0 %v7909
        %8066 = vmatpush.bf16.msra.mxu0 %v7907
        %8067 = vmatpush.bf16.msra.mxu0 %v7905
        %8068 = vmatpush.bf16.msra.mxu0 %v7903
        %8069 = vmatpush.bf16.msra.mxu0 %v7901
        %8070 = vmatmul.bf16.gmra.mxu0 %v7750
        %v8071 = vpop.f32.mrf.mxu0
        %v8072 = vadd.f32 %v7801, %v8071
        %v8073 = vpop.f32.mrf.mxu0
        %v8074 = vadd.f32 %v7801, %v8073
        %8075 = vmatmul.bf16.gmra.mxu0 %v7752
        %v8076 = vpop.f32.mrf.mxu0
        %v8077 = vadd.f32 %v7801, %v8076
        %v8078 = vpop.f32.mrf.mxu0
        %v8079 = vadd.f32 %v7801, %v8078
        %8080 = vmatmul.bf16.gmra.mxu0 %v7754
        %v8081 = vpop.f32.mrf.mxu0
        %v8082 = vadd.f32 %v7801, %v8081
        %v8083 = vpop.f32.mrf.mxu0
        %v8084 = vadd.f32 %v7801, %v8083
        %8085 = vmatmul.bf16.gmra.mxu0 %v7756
        %v8086 = vpop.f32.mrf.mxu0
        %v8087 = vadd.f32 %v7801, %v8086
        %v8088 = vpop.f32.mrf.mxu0
        %v8089 = vadd.f32 %v7801, %v8088
        %8090 = vmatmul.bf16.gmra.mxu0 %v7758
        %v8091 = vpop.f32.mrf.mxu0
        %v8092 = vadd.f32 %v7801, %v8091
        %v8093 = vpop.f32.mrf.mxu0
        %v8094 = vadd.f32 %v7801, %v8093
        %8095 = vmatmul.bf16.gmra.mxu0 %v7760
        %v8096 = vpop.f32.mrf.mxu0
        %v8097 = vadd.f32 %v7801, %v8096
        %v8098 = vpop.f32.mrf.mxu0
        %v8099 = vadd.f32 %v7801, %v8098
        %8100 = vmatmul.bf16.gmra.mxu0 %v7762
        %v8101 = vpop.f32.mrf.mxu0
        %v8102 = vadd.f32 %v7801, %v8101
        %v8103 = vpop.f32.mrf.mxu0
        %v8104 = vadd.f32 %v7801, %v8103
        %8105 = vmatmul.bf16.gmra.mxu0 %v7764
        %v8106 = vpop.f32.mrf.mxu0
        %v8107 = vadd.f32 %v7801, %v8106
        %v8108 = vpop.f32.mrf.mxu0
        %v8109 = vadd.f32 %v7801, %v8108
        %8110 = vdwg.mxu0
        %8111 = vmatpush.bf16.msra.mxu0 %v7931
        %8112 = vmatpush.bf16.msra.mxu0 %v7929
        %8113 = vmatpush.bf16.msra.mxu0 %v7927
        %8114 = vmatpush.bf16.msra.mxu0 %v7925
        %8115 = vmatpush.bf16.msra.mxu0 %v7923
        %8116 = vmatpush.bf16.msra.mxu0 %v7921
        %8117 = vmatpush.bf16.msra.mxu0 %v7919
        %8118 = vmatpush.bf16.msra.mxu0 %v7917
        %8119 = vmatmul.bf16.gmra.mxu0 %v7751
        %v8120 = vpop.f32.mrf.mxu0
        %v8121 = vadd.f32 %v8072, %v8120
        %v8122 = vpop.f32.mrf.mxu0
        %v8123 = vadd.f32 %v8074, %v8122
        %8124 = vmatmul.bf16.gmra.mxu0 %v7753
        %v8125 = vpop.f32.mrf.mxu0
        %v8126 = vadd.f32 %v8077, %v8125
        %v8127 = vpop.f32.mrf.mxu0
        %v8128 = vadd.f32 %v8079, %v8127
        %8129 = vmatmul.bf16.gmra.mxu0 %v7755
        %v8130 = vpop.f32.mrf.mxu0
        %v8131 = vadd.f32 %v8082, %v8130
        %v8132 = vpop.f32.mrf.mxu0
        %v8133 = vadd.f32 %v8084, %v8132
        %8134 = vmatmul.bf16.gmra.mxu0 %v7757
        %v8135 = vpop.f32.mrf.mxu0
        %v8136 = vadd.f32 %v8087, %v8135
        %v8137 = vpop.f32.mrf.mxu0
        %v8138 = vadd.f32 %v8089, %v8137
        %8139 = vmatmul.bf16.gmra.mxu0 %v7759
        %v8140 = vpop.f32.mrf.mxu0
        %v8141 = vadd.f32 %v8092, %v8140
        %v8142 = vpop.f32.mrf.mxu0
        %v8143 = vadd.f32 %v8094, %v8142
        %8144 = vmatmul.bf16.gmra.mxu0 %v7761
        %v8145 = vpop.f32.mrf.mxu0
        %v8146 = vadd.f32 %v8097, %v8145
        %v8147 = vpop.f32.mrf.mxu0
        %v8148 = vadd.f32 %v8099, %v8147
        %8149 = vmatmul.bf16.gmra.mxu0 %v7763
        %v8150 = vpop.f32.mrf.mxu0
        %v8151 = vadd.f32 %v8102, %v8150
        %v8152 = vpop.f32.mrf.mxu0
        %v8153 = vadd.f32 %v8104, %v8152
        %8154 = vmatmul.bf16.gmra.mxu0 %v7765
        %v8155 = vpop.f32.mrf.mxu0
        %v8156 = vadd.f32 %v8107, %v8155
        %v8157 = vpop.f32.mrf.mxu0
        %v8158 = vadd.f32 %v8109, %v8157
        %8159 = vdwg.mxu0
        %v8160 = vpack.c.bf16 %v8121, %v8023
        %v8161 = vpack.c.bf16 %v8123, %v8025
        %v8162 = vpack.c.bf16 %v8126, %v8028
        %v8163 = vpack.c.bf16 %v8128, %v8030
        %v8164 = vpack.c.bf16 %v8131, %v8033
        %v8165 = vpack.c.bf16 %v8133, %v8035
        %v8166 = vpack.c.bf16 %v8136, %v8038
        %v8167 = vpack.c.bf16 %v8138, %v8040
        %v8168 = vpack.c.bf16 %v8141, %v8043
        %v8169 = vpack.c.bf16 %v8143, %v8045
        %v8170 = vpack.c.bf16 %v8146, %v8048
        %v8171 = vpack.c.bf16 %v8148, %v8050
        %v8172 = vpack.c.bf16 %v8151, %v8053
        %v8173 = vpack.c.bf16 %v8153, %v8055
        %v8174 = vpack.c.bf16 %v8156, %v8058
        %v8175 = vpack.c.bf16 %v8158, %v8060
        %v8192 = vrot.slane %v8160, 4
        %v8193 = vrot.slane %v8161, 4
        %v8194 = vrot.slane %v8162, 4
        %v8195 = vrot.slane %v8163, 4
        %v8196 = vrot.slane %v8164, 4
        %v8197 = vrot.slane %v8165, 4
        %v8198 = vrot.slane %v8166, 4
        %v8199 = vrot.slane %v8167, 4
        %v8200 = vrot.slane %v8168, 4
        %v8201 = vrot.slane %v8169, 4
        %v8202 = vrot.slane %v8170, 4
        %v8203 = vrot.slane %v8171, 4
        %v8204 = vrot.slane %v8172, 4
        %v8205 = vrot.slane %v8173, 4
        %v8206 = vrot.slane %v8174, 4
        %v8207 = vrot.slane %v8175, 4
        %v8210 = vpack.i.b16 %v8192, %v8160
        %v8211 = vshrl.u32 %v8160, 16
        %v8212 = vshrl.u32 %v8192, 16
        %v8213 = vpack.i.b16 %v8212, %v8211
        %v8216 = vpack.i.b16 %v8193, %v8161
        %v8217 = vshrl.u32 %v8161, 16
        %v8218 = vshrl.u32 %v8193, 16
        %v8219 = vpack.i.b16 %v8218, %v8217
        %v8222 = vpack.i.b16 %v8194, %v8162
        %v8223 = vshrl.u32 %v8162, 16
        %v8224 = vshrl.u32 %v8194, 16
        %v8225 = vpack.i.b16 %v8224, %v8223
        %v8228 = vpack.i.b16 %v8195, %v8163
        %v8229 = vshrl.u32 %v8163, 16
        %v8230 = vshrl.u32 %v8195, 16
        %v8231 = vpack.i.b16 %v8230, %v8229
        %v8234 = vpack.i.b16 %v8196, %v8164
        %v8235 = vshrl.u32 %v8164, 16
        %v8236 = vshrl.u32 %v8196, 16
        %v8237 = vpack.i.b16 %v8236, %v8235
        %v8240 = vpack.i.b16 %v8197, %v8165
        %v8241 = vshrl.u32 %v8165, 16
        %v8242 = vshrl.u32 %v8197, 16
        %v8243 = vpack.i.b16 %v8242, %v8241
        %v8246 = vpack.i.b16 %v8198, %v8166
        %v8247 = vshrl.u32 %v8166, 16
        %v8248 = vshrl.u32 %v8198, 16
        %v8249 = vpack.i.b16 %v8248, %v8247
        %v8252 = vpack.i.b16 %v8199, %v8167
        %v8253 = vshrl.u32 %v8167, 16
        %v8254 = vshrl.u32 %v8199, 16
        %v8255 = vpack.i.b16 %v8254, %v8253
        %v8258 = vpack.i.b16 %v8200, %v8168
        %v8259 = vshrl.u32 %v8168, 16
        %v8260 = vshrl.u32 %v8200, 16
        %v8261 = vpack.i.b16 %v8260, %v8259
        %v8264 = vpack.i.b16 %v8201, %v8169
        %v8265 = vshrl.u32 %v8169, 16
        %v8266 = vshrl.u32 %v8201, 16
        %v8267 = vpack.i.b16 %v8266, %v8265
        %v8270 = vpack.i.b16 %v8202, %v8170
        %v8271 = vshrl.u32 %v8170, 16
        %v8272 = vshrl.u32 %v8202, 16
        %v8273 = vpack.i.b16 %v8272, %v8271
        %v8276 = vpack.i.b16 %v8203, %v8171
        %v8277 = vshrl.u32 %v8171, 16
        %v8278 = vshrl.u32 %v8203, 16
        %v8279 = vpack.i.b16 %v8278, %v8277
        %v8282 = vpack.i.b16 %v8204, %v8172
        %v8283 = vshrl.u32 %v8172, 16
        %v8284 = vshrl.u32 %v8204, 16
        %v8285 = vpack.i.b16 %v8284, %v8283
        %v8288 = vpack.i.b16 %v8205, %v8173
        %v8289 = vshrl.u32 %v8173, 16
        %v8290 = vshrl.u32 %v8205, 16
        %v8291 = vpack.i.b16 %v8290, %v8289
        %v8294 = vpack.i.b16 %v8206, %v8174
        %v8295 = vshrl.u32 %v8174, 16
        %v8296 = vshrl.u32 %v8206, 16
        %v8297 = vpack.i.b16 %v8296, %v8295
        %v8300 = vpack.i.b16 %v8207, %v8175
        %v8301 = vshrl.u32 %v8175, 16
        %v8302 = vshrl.u32 %v8207, 16
        %v8303 = vpack.i.b16 %v8302, %v8301
        %v8306 = vunpack.c.l.s4 1983009808
        %v8307 = vunpack.c.0.s8 %v8306
        %v8308 = vperm.slane %v8210, %v8307
        %v8309 = vrot.slane %v8308, 4
        %vm8310 = vcmask 1047556
        %v8311 = vsel %vm8310, 0, %v8309
        %v8313 = vunpack.c.l.s4 1934713408
        %v8314 = vunpack.c.0.s8 %v8313
        %v8315 = vperm.slane %v8308, %v8314
        %v8317 = vunpack.c.l.s4 1934713408
        %v8318 = vunpack.c.0.s8 %v8317
        %v8319 = vperm.slane %v8311, %v8318
        %v8320 = vrot.slane %v8315, 4
        %v8321 = vsel %vm8310, 0, %v8320
        %v8322 = vrot.slane %v8319, 4
        %v8323 = vsel %vm8310, 0, %v8322
        %v8326 = vunpack.c.l.s4 1983009808
        %v8327 = vunpack.c.0.s8 %v8326
        %v8328 = vperm.slane %v8213, %v8327
        %v8329 = vrot.slane %v8328, 4
        %v8330 = vsel %vm8310, 0, %v8329
        %v8332 = vunpack.c.l.s4 1934713408
        %v8333 = vunpack.c.0.s8 %v8332
        %v8334 = vperm.slane %v8328, %v8333
        %v8336 = vunpack.c.l.s4 1934713408
        %v8337 = vunpack.c.0.s8 %v8336
        %v8338 = vperm.slane %v8330, %v8337
        %v8339 = vrot.slane %v8334, 4
        %v8340 = vsel %vm8310, 0, %v8339
        %v8341 = vrot.slane %v8338, 4
        %v8342 = vsel %vm8310, 0, %v8341
        %v8345 = vunpack.c.l.s4 1983009808
        %v8346 = vunpack.c.0.s8 %v8345
        %v8347 = vperm.slane %v8216, %v8346
        %v8348 = vrot.slane %v8347, 4
        %v8349 = vsel %vm8310, 0, %v8348
        %v8351 = vunpack.c.l.s4 1934713408
        %v8352 = vunpack.c.0.s8 %v8351
        %v8353 = vperm.slane %v8347, %v8352
        %v8355 = vunpack.c.l.s4 1934713408
        %v8356 = vunpack.c.0.s8 %v8355
        %v8357 = vperm.slane %v8349, %v8356
        %v8358 = vrot.slane %v8353, 4
        %v8359 = vsel %vm8310, 0, %v8358
        %v8360 = vrot.slane %v8357, 4
        %v8361 = vsel %vm8310, 0, %v8360
        %v8364 = vunpack.c.l.s4 1983009808
        %v8365 = vunpack.c.0.s8 %v8364
        %v8366 = vperm.slane %v8219, %v8365
        %v8367 = vrot.slane %v8366, 4
        %v8368 = vsel %vm8310, 0, %v8367
        %v8370 = vunpack.c.l.s4 1934713408
        %v8371 = vunpack.c.0.s8 %v8370
        %v8372 = vperm.slane %v8366, %v8371
        %v8374 = vunpack.c.l.s4 1934713408
        %v8375 = vunpack.c.0.s8 %v8374
        %v8376 = vperm.slane %v8368, %v8375
        %v8377 = vrot.slane %v8372, 4
        %v8378 = vsel %vm8310, 0, %v8377
        %v8379 = vrot.slane %v8376, 4
        %v8380 = vsel %vm8310, 0, %v8379
        %v8383 = vunpack.c.l.s4 1983009808
        %v8384 = vunpack.c.0.s8 %v8383
        %v8385 = vperm.slane %v8222, %v8384
        %v8386 = vrot.slane %v8385, 4
        %v8387 = vsel %vm8310, 0, %v8386
        %v8389 = vunpack.c.l.s4 1934713408
        %v8390 = vunpack.c.0.s8 %v8389
        %v8391 = vperm.slane %v8385, %v8390
        %v8393 = vunpack.c.l.s4 1934713408
        %v8394 = vunpack.c.0.s8 %v8393
        %v8395 = vperm.slane %v8387, %v8394
        %v8396 = vrot.slane %v8391, 4
        %v8397 = vsel %vm8310, 0, %v8396
        %v8398 = vrot.slane %v8395, 4
        %v8399 = vsel %vm8310, 0, %v8398
        %v8402 = vunpack.c.l.s4 1983009808
        %v8403 = vunpack.c.0.s8 %v8402
        %v8404 = vperm.slane %v8225, %v8403
        %v8405 = vrot.slane %v8404, 4
        %v8406 = vsel %vm8310, 0, %v8405
        %v8408 = vunpack.c.l.s4 1934713408
        %v8409 = vunpack.c.0.s8 %v8408
        %v8410 = vperm.slane %v8404, %v8409
        %v8412 = vunpack.c.l.s4 1934713408
        %v8413 = vunpack.c.0.s8 %v8412
        %v8414 = vperm.slane %v8406, %v8413
        %v8415 = vrot.slane %v8410, 4
        %v8416 = vsel %vm8310, 0, %v8415
        %v8417 = vrot.slane %v8414, 4
        %v8418 = vsel %vm8310, 0, %v8417
        %v8421 = vunpack.c.l.s4 1983009808
        %v8422 = vunpack.c.0.s8 %v8421
        %v8423 = vperm.slane %v8228, %v8422
        %v8424 = vrot.slane %v8423, 4
        %v8425 = vsel %vm8310, 0, %v8424
        %v8427 = vunpack.c.l.s4 1934713408
        %v8428 = vunpack.c.0.s8 %v8427
        %v8429 = vperm.slane %v8423, %v8428
        %v8431 = vunpack.c.l.s4 1934713408
        %v8432 = vunpack.c.0.s8 %v8431
        %v8433 = vperm.slane %v8425, %v8432
        %v8434 = vrot.slane %v8429, 4
        %v8435 = vsel %vm8310, 0, %v8434
        %v8436 = vrot.slane %v8433, 4
        %v8437 = vsel %vm8310, 0, %v8436
        %v8440 = vunpack.c.l.s4 1983009808
        %v8441 = vunpack.c.0.s8 %v8440
        %v8442 = vperm.slane %v8231, %v8441
        %v8443 = vrot.slane %v8442, 4
        %v8444 = vsel %vm8310, 0, %v8443
        %v8446 = vunpack.c.l.s4 1934713408
        %v8447 = vunpack.c.0.s8 %v8446
        %v8448 = vperm.slane %v8442, %v8447
        %v8450 = vunpack.c.l.s4 1934713408
        %v8451 = vunpack.c.0.s8 %v8450
        %v8452 = vperm.slane %v8444, %v8451
        %v8453 = vrot.slane %v8448, 4
        %v8454 = vsel %vm8310, 0, %v8453
        %v8455 = vrot.slane %v8452, 4
        %v8456 = vsel %vm8310, 0, %v8455
        %v8459 = vunpack.c.l.s4 1983009808
        %v8460 = vunpack.c.0.s8 %v8459
        %v8461 = vperm.slane %v8234, %v8460
        %v8462 = vrot.slane %v8461, 4
        %v8463 = vsel %vm8310, 0, %v8462
        %v8465 = vunpack.c.l.s4 1934713408
        %v8466 = vunpack.c.0.s8 %v8465
        %v8467 = vperm.slane %v8461, %v8466
        %v8469 = vunpack.c.l.s4 1934713408
        %v8470 = vunpack.c.0.s8 %v8469
        %v8471 = vperm.slane %v8463, %v8470
        %v8472 = vrot.slane %v8467, 4
        %v8473 = vsel %vm8310, 0, %v8472
        %v8474 = vrot.slane %v8471, 4
        %v8475 = vsel %vm8310, 0, %v8474
        %v8478 = vunpack.c.l.s4 1983009808
        %v8479 = vunpack.c.0.s8 %v8478
        %v8480 = vperm.slane %v8237, %v8479
        %v8481 = vrot.slane %v8480, 4
        %v8482 = vsel %vm8310, 0, %v8481
        %v8484 = vunpack.c.l.s4 1934713408
        %v8485 = vunpack.c.0.s8 %v8484
        %v8486 = vperm.slane %v8480, %v8485
        %v8488 = vunpack.c.l.s4 1934713408
        %v8489 = vunpack.c.0.s8 %v8488
        %v8490 = vperm.slane %v8482, %v8489
        %v8491 = vrot.slane %v8486, 4
        %v8492 = vsel %vm8310, 0, %v8491
        %v8493 = vrot.slane %v8490, 4
        %v8494 = vsel %vm8310, 0, %v8493
        %v8497 = vunpack.c.l.s4 1983009808
        %v8498 = vunpack.c.0.s8 %v8497
        %v8499 = vperm.slane %v8240, %v8498
        %v8500 = vrot.slane %v8499, 4
        %v8501 = vsel %vm8310, 0, %v8500
        %v8503 = vunpack.c.l.s4 1934713408
        %v8504 = vunpack.c.0.s8 %v8503
        %v8505 = vperm.slane %v8499, %v8504
        %v8507 = vunpack.c.l.s4 1934713408
        %v8508 = vunpack.c.0.s8 %v8507
        %v8509 = vperm.slane %v8501, %v8508
        %v8510 = vrot.slane %v8505, 4
        %v8511 = vsel %vm8310, 0, %v8510
        %v8512 = vrot.slane %v8509, 4
        %v8513 = vsel %vm8310, 0, %v8512
        %v8516 = vunpack.c.l.s4 1983009808
        %v8517 = vunpack.c.0.s8 %v8516
        %v8518 = vperm.slane %v8243, %v8517
        %v8519 = vrot.slane %v8518, 4
        %v8520 = vsel %vm8310, 0, %v8519
        %v8522 = vunpack.c.l.s4 1934713408
        %v8523 = vunpack.c.0.s8 %v8522
        %v8524 = vperm.slane %v8518, %v8523
        %v8526 = vunpack.c.l.s4 1934713408
        %v8527 = vunpack.c.0.s8 %v8526
        %v8528 = vperm.slane %v8520, %v8527
        %v8529 = vrot.slane %v8524, 4
        %v8530 = vsel %vm8310, 0, %v8529
        %v8531 = vrot.slane %v8528, 4
        %v8532 = vsel %vm8310, 0, %v8531
        %v8535 = vunpack.c.l.s4 1983009808
        %v8536 = vunpack.c.0.s8 %v8535
        %v8537 = vperm.slane %v8246, %v8536
        %v8538 = vrot.slane %v8537, 4
        %v8539 = vsel %vm8310, 0, %v8538
        %v8541 = vunpack.c.l.s4 1934713408
        %v8542 = vunpack.c.0.s8 %v8541
        %v8543 = vperm.slane %v8537, %v8542
        %v8545 = vunpack.c.l.s4 1934713408
        %v8546 = vunpack.c.0.s8 %v8545
        %v8547 = vperm.slane %v8539, %v8546
        %v8548 = vrot.slane %v8543, 4
        %v8549 = vsel %vm8310, 0, %v8548
        %v8550 = vrot.slane %v8547, 4
        %v8551 = vsel %vm8310, 0, %v8550
        %v8554 = vunpack.c.l.s4 1983009808
        %v8555 = vunpack.c.0.s8 %v8554
        %v8556 = vperm.slane %v8249, %v8555
        %v8557 = vrot.slane %v8556, 4
        %v8558 = vsel %vm8310, 0, %v8557
        %v8560 = vunpack.c.l.s4 1934713408
        %v8561 = vunpack.c.0.s8 %v8560
        %v8562 = vperm.slane %v8556, %v8561
        %v8564 = vunpack.c.l.s4 1934713408
        %v8565 = vunpack.c.0.s8 %v8564
        %v8566 = vperm.slane %v8558, %v8565
        %v8567 = vrot.slane %v8562, 4
        %v8568 = vsel %vm8310, 0, %v8567
        %v8569 = vrot.slane %v8566, 4
        %v8570 = vsel %vm8310, 0, %v8569
        %v8573 = vunpack.c.l.s4 1983009808
        %v8574 = vunpack.c.0.s8 %v8573
        %v8575 = vperm.slane %v8252, %v8574
        %v8576 = vrot.slane %v8575, 4
        %v8577 = vsel %vm8310, 0, %v8576
        %v8579 = vunpack.c.l.s4 1934713408
        %v8580 = vunpack.c.0.s8 %v8579
        %v8581 = vperm.slane %v8575, %v8580
        %v8583 = vunpack.c.l.s4 1934713408
        %v8584 = vunpack.c.0.s8 %v8583
        %v8585 = vperm.slane %v8577, %v8584
        %v8586 = vrot.slane %v8581, 4
        %v8587 = vsel %vm8310, 0, %v8586
        %v8588 = vrot.slane %v8585, 4
        %v8589 = vsel %vm8310, 0, %v8588
        %v8592 = vunpack.c.l.s4 1983009808
        %v8593 = vunpack.c.0.s8 %v8592
        %v8594 = vperm.slane %v8255, %v8593
        %v8595 = vrot.slane %v8594, 4
        %v8596 = vsel %vm8310, 0, %v8595
        %v8598 = vunpack.c.l.s4 1934713408
        %v8599 = vunpack.c.0.s8 %v8598
        %v8600 = vperm.slane %v8594, %v8599
        %v8602 = vunpack.c.l.s4 1934713408
        %v8603 = vunpack.c.0.s8 %v8602
        %v8604 = vperm.slane %v8596, %v8603
        %v8605 = vrot.slane %v8600, 4
        %v8606 = vsel %vm8310, 0, %v8605
        %v8607 = vrot.slane %v8604, 4
        %v8608 = vsel %vm8310, 0, %v8607
        %v8611 = vunpack.c.l.s4 1983009808
        %v8612 = vunpack.c.0.s8 %v8611
        %v8613 = vperm.slane %v8258, %v8612
        %v8614 = vrot.slane %v8613, 4
        %v8615 = vsel %vm8310, 0, %v8614
        %v8617 = vunpack.c.l.s4 1934713408
        %v8618 = vunpack.c.0.s8 %v8617
        %v8619 = vperm.slane %v8613, %v8618
        %v8621 = vunpack.c.l.s4 1934713408
        %v8622 = vunpack.c.0.s8 %v8621
        %v8623 = vperm.slane %v8615, %v8622
        %v8624 = vrot.slane %v8619, 4
        %v8625 = vsel %vm8310, 0, %v8624
        %v8626 = vrot.slane %v8623, 4
        %v8627 = vsel %vm8310, 0, %v8626
        %v8630 = vunpack.c.l.s4 1983009808
        %v8631 = vunpack.c.0.s8 %v8630
        %v8632 = vperm.slane %v8261, %v8631
        %v8633 = vrot.slane %v8632, 4
        %v8634 = vsel %vm8310, 0, %v8633
        %v8636 = vunpack.c.l.s4 1934713408
        %v8637 = vunpack.c.0.s8 %v8636
        %v8638 = vperm.slane %v8632, %v8637
        %v8640 = vunpack.c.l.s4 1934713408
        %v8641 = vunpack.c.0.s8 %v8640
        %v8642 = vperm.slane %v8634, %v8641
        %v8643 = vrot.slane %v8638, 4
        %v8644 = vsel %vm8310, 0, %v8643
        %v8645 = vrot.slane %v8642, 4
        %v8646 = vsel %vm8310, 0, %v8645
        %v8649 = vunpack.c.l.s4 1983009808
        %v8650 = vunpack.c.0.s8 %v8649
        %v8651 = vperm.slane %v8264, %v8650
        %v8652 = vrot.slane %v8651, 4
        %v8653 = vsel %vm8310, 0, %v8652
        %v8655 = vunpack.c.l.s4 1934713408
        %v8656 = vunpack.c.0.s8 %v8655
        %v8657 = vperm.slane %v8651, %v8656
        %v8659 = vunpack.c.l.s4 1934713408
        %v8660 = vunpack.c.0.s8 %v8659
        %v8661 = vperm.slane %v8653, %v8660
        %v8662 = vrot.slane %v8657, 4
        %v8663 = vsel %vm8310, 0, %v8662
        %v8664 = vrot.slane %v8661, 4
        %v8665 = vsel %vm8310, 0, %v8664
        %v8668 = vunpack.c.l.s4 1983009808
        %v8669 = vunpack.c.0.s8 %v8668
        %v8670 = vperm.slane %v8267, %v8669
        %v8671 = vrot.slane %v8670, 4
        %v8672 = vsel %vm8310, 0, %v8671
        %v8674 = vunpack.c.l.s4 1934713408
        %v8675 = vunpack.c.0.s8 %v8674
        %v8676 = vperm.slane %v8670, %v8675
        %v8678 = vunpack.c.l.s4 1934713408
        %v8679 = vunpack.c.0.s8 %v8678
        %v8680 = vperm.slane %v8672, %v8679
        %v8681 = vrot.slane %v8676, 4
        %v8682 = vsel %vm8310, 0, %v8681
        %v8683 = vrot.slane %v8680, 4
        %v8684 = vsel %vm8310, 0, %v8683
        %v8687 = vunpack.c.l.s4 1983009808
        %v8688 = vunpack.c.0.s8 %v8687
        %v8689 = vperm.slane %v8270, %v8688
        %v8690 = vrot.slane %v8689, 4
        %v8691 = vsel %vm8310, 0, %v8690
        %v8693 = vunpack.c.l.s4 1934713408
        %v8694 = vunpack.c.0.s8 %v8693
        %v8695 = vperm.slane %v8689, %v8694
        %v8697 = vunpack.c.l.s4 1934713408
        %v8698 = vunpack.c.0.s8 %v8697
        %v8699 = vperm.slane %v8691, %v8698
        %v8700 = vrot.slane %v8695, 4
        %v8701 = vsel %vm8310, 0, %v8700
        %v8702 = vrot.slane %v8699, 4
        %v8703 = vsel %vm8310, 0, %v8702
        %v8706 = vunpack.c.l.s4 1983009808
        %v8707 = vunpack.c.0.s8 %v8706
        %v8708 = vperm.slane %v8273, %v8707
        %v8709 = vrot.slane %v8708, 4
        %v8710 = vsel %vm8310, 0, %v8709
        %v8712 = vunpack.c.l.s4 1934713408
        %v8713 = vunpack.c.0.s8 %v8712
        %v8714 = vperm.slane %v8708, %v8713
        %v8716 = vunpack.c.l.s4 1934713408
        %v8717 = vunpack.c.0.s8 %v8716
        %v8718 = vperm.slane %v8710, %v8717
        %v8719 = vrot.slane %v8714, 4
        %v8720 = vsel %vm8310, 0, %v8719
        %v8721 = vrot.slane %v8718, 4
        %v8722 = vsel %vm8310, 0, %v8721
        %v8725 = vunpack.c.l.s4 1983009808
        %v8726 = vunpack.c.0.s8 %v8725
        %v8727 = vperm.slane %v8276, %v8726
        %v8728 = vrot.slane %v8727, 4
        %v8729 = vsel %vm8310, 0, %v8728
        %v8731 = vunpack.c.l.s4 1934713408
        %v8732 = vunpack.c.0.s8 %v8731
        %v8733 = vperm.slane %v8727, %v8732
        %v8735 = vunpack.c.l.s4 1934713408
        %v8736 = vunpack.c.0.s8 %v8735
        %v8737 = vperm.slane %v8729, %v8736
        %v8738 = vrot.slane %v8733, 4
        %v8739 = vsel %vm8310, 0, %v8738
        %v8740 = vrot.slane %v8737, 4
        %v8741 = vsel %vm8310, 0, %v8740
        %v8744 = vunpack.c.l.s4 1983009808
        %v8745 = vunpack.c.0.s8 %v8744
        %v8746 = vperm.slane %v8279, %v8745
        %v8747 = vrot.slane %v8746, 4
        %v8748 = vsel %vm8310, 0, %v8747
        %v8750 = vunpack.c.l.s4 1934713408
        %v8751 = vunpack.c.0.s8 %v8750
        %v8752 = vperm.slane %v8746, %v8751
        %v8754 = vunpack.c.l.s4 1934713408
        %v8755 = vunpack.c.0.s8 %v8754
        %v8756 = vperm.slane %v8748, %v8755
        %v8757 = vrot.slane %v8752, 4
        %v8758 = vsel %vm8310, 0, %v8757
        %v8759 = vrot.slane %v8756, 4
        %v8760 = vsel %vm8310, 0, %v8759
        %v8763 = vunpack.c.l.s4 1983009808
        %v8764 = vunpack.c.0.s8 %v8763
        %v8765 = vperm.slane %v8282, %v8764
        %v8766 = vrot.slane %v8765, 4
        %v8767 = vsel %vm8310, 0, %v8766
        %v8769 = vunpack.c.l.s4 1934713408
        %v8770 = vunpack.c.0.s8 %v8769
        %v8771 = vperm.slane %v8765, %v8770
        %v8773 = vunpack.c.l.s4 1934713408
        %v8774 = vunpack.c.0.s8 %v8773
        %v8775 = vperm.slane %v8767, %v8774
        %v8776 = vrot.slane %v8771, 4
        %v8777 = vsel %vm8310, 0, %v8776
        %v8778 = vrot.slane %v8775, 4
        %v8779 = vsel %vm8310, 0, %v8778
        %v8782 = vunpack.c.l.s4 1983009808
        %v8783 = vunpack.c.0.s8 %v8782
        %v8784 = vperm.slane %v8285, %v8783
        %v8785 = vrot.slane %v8784, 4
        %v8786 = vsel %vm8310, 0, %v8785
        %v8788 = vunpack.c.l.s4 1934713408
        %v8789 = vunpack.c.0.s8 %v8788
        %v8790 = vperm.slane %v8784, %v8789
        %v8792 = vunpack.c.l.s4 1934713408
        %v8793 = vunpack.c.0.s8 %v8792
        %v8794 = vperm.slane %v8786, %v8793
        %v8795 = vrot.slane %v8790, 4
        %v8796 = vsel %vm8310, 0, %v8795
        %v8797 = vrot.slane %v8794, 4
        %v8798 = vsel %vm8310, 0, %v8797
        %v8801 = vunpack.c.l.s4 1983009808
        %v8802 = vunpack.c.0.s8 %v8801
        %v8803 = vperm.slane %v8288, %v8802
        %v8804 = vrot.slane %v8803, 4
        %v8805 = vsel %vm8310, 0, %v8804
        %v8807 = vunpack.c.l.s4 1934713408
        %v8808 = vunpack.c.0.s8 %v8807
        %v8809 = vperm.slane %v8803, %v8808
        %v8811 = vunpack.c.l.s4 1934713408
        %v8812 = vunpack.c.0.s8 %v8811
        %v8813 = vperm.slane %v8805, %v8812
        %v8814 = vrot.slane %v8809, 4
        %v8815 = vsel %vm8310, 0, %v8814
        %v8816 = vrot.slane %v8813, 4
        %v8817 = vsel %vm8310, 0, %v8816
        %v8820 = vunpack.c.l.s4 1983009808
        %v8821 = vunpack.c.0.s8 %v8820
        %v8822 = vperm.slane %v8291, %v8821
        %v8823 = vrot.slane %v8822, 4
        %v8824 = vsel %vm8310, 0, %v8823
        %v8826 = vunpack.c.l.s4 1934713408
        %v8827 = vunpack.c.0.s8 %v8826
        %v8828 = vperm.slane %v8822, %v8827
        %v8830 = vunpack.c.l.s4 1934713408
        %v8831 = vunpack.c.0.s8 %v8830
        %v8832 = vperm.slane %v8824, %v8831
        %v8833 = vrot.slane %v8828, 4
        %v8834 = vsel %vm8310, 0, %v8833
        %v8835 = vrot.slane %v8832, 4
        %v8836 = vsel %vm8310, 0, %v8835
        %v8839 = vunpack.c.l.s4 1983009808
        %v8840 = vunpack.c.0.s8 %v8839
        %v8841 = vperm.slane %v8294, %v8840
        %v8842 = vrot.slane %v8841, 4
        %v8843 = vsel %vm8310, 0, %v8842
        %v8845 = vunpack.c.l.s4 1934713408
        %v8846 = vunpack.c.0.s8 %v8845
        %v8847 = vperm.slane %v8841, %v8846
        %v8849 = vunpack.c.l.s4 1934713408
        %v8850 = vunpack.c.0.s8 %v8849
        %v8851 = vperm.slane %v8843, %v8850
        %v8852 = vrot.slane %v8847, 4
        %v8853 = vsel %vm8310, 0, %v8852
        %v8854 = vrot.slane %v8851, 4
        %v8855 = vsel %vm8310, 0, %v8854
        %v8858 = vunpack.c.l.s4 1983009808
        %v8859 = vunpack.c.0.s8 %v8858
        %v8860 = vperm.slane %v8297, %v8859
        %v8861 = vrot.slane %v8860, 4
        %v8862 = vsel %vm8310, 0, %v8861
        %v8864 = vunpack.c.l.s4 1934713408
        %v8865 = vunpack.c.0.s8 %v8864
        %v8866 = vperm.slane %v8860, %v8865
        %v8868 = vunpack.c.l.s4 1934713408
        %v8869 = vunpack.c.0.s8 %v8868
        %v8870 = vperm.slane %v8862, %v8869
        %v8871 = vrot.slane %v8866, 4
        %v8872 = vsel %vm8310, 0, %v8871
        %v8873 = vrot.slane %v8870, 4
        %v8874 = vsel %vm8310, 0, %v8873
        %v8877 = vunpack.c.l.s4 1983009808
        %v8878 = vunpack.c.0.s8 %v8877
        %v8879 = vperm.slane %v8300, %v8878
        %v8880 = vrot.slane %v8879, 4
        %v8881 = vsel %vm8310, 0, %v8880
        %v8883 = vunpack.c.l.s4 1934713408
        %v8884 = vunpack.c.0.s8 %v8883
        %v8885 = vperm.slane %v8879, %v8884
        %v8887 = vunpack.c.l.s4 1934713408
        %v8888 = vunpack.c.0.s8 %v8887
        %v8889 = vperm.slane %v8881, %v8888
        %v8890 = vrot.slane %v8885, 4
        %v8891 = vsel %vm8310, 0, %v8890
        %v8892 = vrot.slane %v8889, 4
        %v8893 = vsel %vm8310, 0, %v8892
        %v8896 = vunpack.c.l.s4 1983009808
        %v8897 = vunpack.c.0.s8 %v8896
        %v8898 = vperm.slane %v8303, %v8897
        %v8899 = vrot.slane %v8898, 4
        %v8900 = vsel %vm8310, 0, %v8899
        %v8902 = vunpack.c.l.s4 1934713408
        %v8903 = vunpack.c.0.s8 %v8902
        %v8904 = vperm.slane %v8898, %v8903
        %v8906 = vunpack.c.l.s4 1934713408
        %v8907 = vunpack.c.0.s8 %v8906
        %v8908 = vperm.slane %v8900, %v8907
        %v8909 = vrot.slane %v8904, 4
        %v8910 = vsel %vm8310, 0, %v8909
        %v8911 = vrot.slane %v8908, 4
        %v8912 = vsel %vm8310, 0, %v8911
        %v8913 = vsel %vm8310, %v8322, %v8315
        %v8915 = vunpack.c.l.s4 1983009808
        %v8916 = vunpack.c.0.s8 %v8915
        %v8917 = vperm.slane %v8913, %v8916
        %v8918 = vrot.slane %v8323, 4
        %v8919 = vsel %vm8310, %v8918, %v8321
        %v8921 = vunpack.c.l.s4 1983009808
        %v8922 = vunpack.c.0.s8 %v8921
        %v8923 = vperm.slane %v8919, %v8922
        %v8924 = vrot.slane %v8923, 4
        %v8925 = vsel %vm8310, %v8924, %v8917
        %v8927 = vunpack.c.l.s4 1934713408
        %v8928 = vunpack.c.0.s8 %v8927
        %v8929 = vperm.slane %v8925, %v8928
        %v8930 = vsel %vm8310, %v8341, %v8334
        %v8932 = vunpack.c.l.s4 1983009808
        %v8933 = vunpack.c.0.s8 %v8932
        %v8934 = vperm.slane %v8930, %v8933
        %v8935 = vrot.slane %v8342, 4
        %v8936 = vsel %vm8310, %v8935, %v8340
        %v8938 = vunpack.c.l.s4 1983009808
        %v8939 = vunpack.c.0.s8 %v8938
        %v8940 = vperm.slane %v8936, %v8939
        %v8941 = vrot.slane %v8940, 4
        %v8942 = vsel %vm8310, %v8941, %v8934
        %v8944 = vunpack.c.l.s4 1934713408
        %v8945 = vunpack.c.0.s8 %v8944
        %v8946 = vperm.slane %v8942, %v8945
        %v8947 = vsel %vm8310, %v8360, %v8353
        %v8949 = vunpack.c.l.s4 1983009808
        %v8950 = vunpack.c.0.s8 %v8949
        %v8951 = vperm.slane %v8947, %v8950
        %v8952 = vrot.slane %v8361, 4
        %v8953 = vsel %vm8310, %v8952, %v8359
        %v8955 = vunpack.c.l.s4 1983009808
        %v8956 = vunpack.c.0.s8 %v8955
        %v8957 = vperm.slane %v8953, %v8956
        %v8958 = vrot.slane %v8957, 4
        %v8959 = vsel %vm8310, %v8958, %v8951
        %v8961 = vunpack.c.l.s4 1934713408
        %v8962 = vunpack.c.0.s8 %v8961
        %v8963 = vperm.slane %v8959, %v8962
        %v8964 = vsel %vm8310, %v8379, %v8372
        %v8966 = vunpack.c.l.s4 1983009808
        %v8967 = vunpack.c.0.s8 %v8966
        %v8968 = vperm.slane %v8964, %v8967
        %v8969 = vrot.slane %v8380, 4
        %v8970 = vsel %vm8310, %v8969, %v8378
        %v8972 = vunpack.c.l.s4 1983009808
        %v8973 = vunpack.c.0.s8 %v8972
        %v8974 = vperm.slane %v8970, %v8973
        %v8975 = vrot.slane %v8974, 4
        %v8976 = vsel %vm8310, %v8975, %v8968
        %v8978 = vunpack.c.l.s4 1934713408
        %v8979 = vunpack.c.0.s8 %v8978
        %v8980 = vperm.slane %v8976, %v8979
        %v8981 = vsel %vm8310, %v8398, %v8391
        %v8983 = vunpack.c.l.s4 1983009808
        %v8984 = vunpack.c.0.s8 %v8983
        %v8985 = vperm.slane %v8981, %v8984
        %v8986 = vrot.slane %v8399, 4
        %v8987 = vsel %vm8310, %v8986, %v8397
        %v8989 = vunpack.c.l.s4 1983009808
        %v8990 = vunpack.c.0.s8 %v8989
        %v8991 = vperm.slane %v8987, %v8990
        %v8992 = vrot.slane %v8991, 4
        %v8993 = vsel %vm8310, %v8992, %v8985
        %v8995 = vunpack.c.l.s4 1934713408
        %v8996 = vunpack.c.0.s8 %v8995
        %v8997 = vperm.slane %v8993, %v8996
        %v8998 = vsel %vm8310, %v8417, %v8410
        %v9000 = vunpack.c.l.s4 1983009808
        %v9001 = vunpack.c.0.s8 %v9000
        %v9002 = vperm.slane %v8998, %v9001
        %v9003 = vrot.slane %v8418, 4
        %v9004 = vsel %vm8310, %v9003, %v8416
        %v9006 = vunpack.c.l.s4 1983009808
        %v9007 = vunpack.c.0.s8 %v9006
        %v9008 = vperm.slane %v9004, %v9007
        %v9009 = vrot.slane %v9008, 4
        %v9010 = vsel %vm8310, %v9009, %v9002
        %v9012 = vunpack.c.l.s4 1934713408
        %v9013 = vunpack.c.0.s8 %v9012
        %v9014 = vperm.slane %v9010, %v9013
        %v9015 = vsel %vm8310, %v8436, %v8429
        %v9017 = vunpack.c.l.s4 1983009808
        %v9018 = vunpack.c.0.s8 %v9017
        %v9019 = vperm.slane %v9015, %v9018
        %v9020 = vrot.slane %v8437, 4
        %v9021 = vsel %vm8310, %v9020, %v8435
        %v9023 = vunpack.c.l.s4 1983009808
        %v9024 = vunpack.c.0.s8 %v9023
        %v9025 = vperm.slane %v9021, %v9024
        %v9026 = vrot.slane %v9025, 4
        %v9027 = vsel %vm8310, %v9026, %v9019
        %v9029 = vunpack.c.l.s4 1934713408
        %v9030 = vunpack.c.0.s8 %v9029
        %v9031 = vperm.slane %v9027, %v9030
        %v9032 = vsel %vm8310, %v8455, %v8448
        %v9034 = vunpack.c.l.s4 1983009808
        %v9035 = vunpack.c.0.s8 %v9034
        %v9036 = vperm.slane %v9032, %v9035
        %v9037 = vrot.slane %v8456, 4
        %v9038 = vsel %vm8310, %v9037, %v8454
        %v9040 = vunpack.c.l.s4 1983009808
        %v9041 = vunpack.c.0.s8 %v9040
        %v9042 = vperm.slane %v9038, %v9041
        %v9043 = vrot.slane %v9042, 4
        %v9044 = vsel %vm8310, %v9043, %v9036
        %v9046 = vunpack.c.l.s4 1934713408
        %v9047 = vunpack.c.0.s8 %v9046
        %v9048 = vperm.slane %v9044, %v9047
        %v9049 = vsel %vm8310, %v8474, %v8467
        %v9051 = vunpack.c.l.s4 1983009808
        %v9052 = vunpack.c.0.s8 %v9051
        %v9053 = vperm.slane %v9049, %v9052
        %v9054 = vrot.slane %v8475, 4
        %v9055 = vsel %vm8310, %v9054, %v8473
        %v9057 = vunpack.c.l.s4 1983009808
        %v9058 = vunpack.c.0.s8 %v9057
        %v9059 = vperm.slane %v9055, %v9058
        %v9060 = vrot.slane %v9059, 4
        %v9061 = vsel %vm8310, %v9060, %v9053
        %v9063 = vunpack.c.l.s4 1934713408
        %v9064 = vunpack.c.0.s8 %v9063
        %v9065 = vperm.slane %v9061, %v9064
        %v9066 = vsel %vm8310, %v8493, %v8486
        %v9068 = vunpack.c.l.s4 1983009808
        %v9069 = vunpack.c.0.s8 %v9068
        %v9070 = vperm.slane %v9066, %v9069
        %v9071 = vrot.slane %v8494, 4
        %v9072 = vsel %vm8310, %v9071, %v8492
        %v9074 = vunpack.c.l.s4 1983009808
        %v9075 = vunpack.c.0.s8 %v9074
        %v9076 = vperm.slane %v9072, %v9075
        %v9077 = vrot.slane %v9076, 4
        %v9078 = vsel %vm8310, %v9077, %v9070
        %v9080 = vunpack.c.l.s4 1934713408
        %v9081 = vunpack.c.0.s8 %v9080
        %v9082 = vperm.slane %v9078, %v9081
        %v9083 = vsel %vm8310, %v8512, %v8505
        %v9085 = vunpack.c.l.s4 1983009808
        %v9086 = vunpack.c.0.s8 %v9085
        %v9087 = vperm.slane %v9083, %v9086
        %v9088 = vrot.slane %v8513, 4
        %v9089 = vsel %vm8310, %v9088, %v8511
        %v9091 = vunpack.c.l.s4 1983009808
        %v9092 = vunpack.c.0.s8 %v9091
        %v9093 = vperm.slane %v9089, %v9092
        %v9094 = vrot.slane %v9093, 4
        %v9095 = vsel %vm8310, %v9094, %v9087
        %v9097 = vunpack.c.l.s4 1934713408
        %v9098 = vunpack.c.0.s8 %v9097
        %v9099 = vperm.slane %v9095, %v9098
        %v9100 = vsel %vm8310, %v8531, %v8524
        %v9102 = vunpack.c.l.s4 1983009808
        %v9103 = vunpack.c.0.s8 %v9102
        %v9104 = vperm.slane %v9100, %v9103
        %v9105 = vrot.slane %v8532, 4
        %v9106 = vsel %vm8310, %v9105, %v8530
        %v9108 = vunpack.c.l.s4 1983009808
        %v9109 = vunpack.c.0.s8 %v9108
        %v9110 = vperm.slane %v9106, %v9109
        %v9111 = vrot.slane %v9110, 4
        %v9112 = vsel %vm8310, %v9111, %v9104
        %v9114 = vunpack.c.l.s4 1934713408
        %v9115 = vunpack.c.0.s8 %v9114
        %v9116 = vperm.slane %v9112, %v9115
        %v9117 = vsel %vm8310, %v8550, %v8543
        %v9119 = vunpack.c.l.s4 1983009808
        %v9120 = vunpack.c.0.s8 %v9119
        %v9121 = vperm.slane %v9117, %v9120
        %v9122 = vrot.slane %v8551, 4
        %v9123 = vsel %vm8310, %v9122, %v8549
        %v9125 = vunpack.c.l.s4 1983009808
        %v9126 = vunpack.c.0.s8 %v9125
        %v9127 = vperm.slane %v9123, %v9126
        %v9128 = vrot.slane %v9127, 4
        %v9129 = vsel %vm8310, %v9128, %v9121
        %v9131 = vunpack.c.l.s4 1934713408
        %v9132 = vunpack.c.0.s8 %v9131
        %v9133 = vperm.slane %v9129, %v9132
        %v9134 = vsel %vm8310, %v8569, %v8562
        %v9136 = vunpack.c.l.s4 1983009808
        %v9137 = vunpack.c.0.s8 %v9136
        %v9138 = vperm.slane %v9134, %v9137
        %v9139 = vrot.slane %v8570, 4
        %v9140 = vsel %vm8310, %v9139, %v8568
        %v9142 = vunpack.c.l.s4 1983009808
        %v9143 = vunpack.c.0.s8 %v9142
        %v9144 = vperm.slane %v9140, %v9143
        %v9145 = vrot.slane %v9144, 4
        %v9146 = vsel %vm8310, %v9145, %v9138
        %v9148 = vunpack.c.l.s4 1934713408
        %v9149 = vunpack.c.0.s8 %v9148
        %v9150 = vperm.slane %v9146, %v9149
        %v9151 = vsel %vm8310, %v8588, %v8581
        %v9153 = vunpack.c.l.s4 1983009808
        %v9154 = vunpack.c.0.s8 %v9153
        %v9155 = vperm.slane %v9151, %v9154
        %v9156 = vrot.slane %v8589, 4
        %v9157 = vsel %vm8310, %v9156, %v8587
        %v9159 = vunpack.c.l.s4 1983009808
        %v9160 = vunpack.c.0.s8 %v9159
        %v9161 = vperm.slane %v9157, %v9160
        %v9162 = vrot.slane %v9161, 4
        %v9163 = vsel %vm8310, %v9162, %v9155
        %v9165 = vunpack.c.l.s4 1934713408
        %v9166 = vunpack.c.0.s8 %v9165
        %v9167 = vperm.slane %v9163, %v9166
        %v9168 = vsel %vm8310, %v8607, %v8600
        %v9170 = vunpack.c.l.s4 1983009808
        %v9171 = vunpack.c.0.s8 %v9170
        %v9172 = vperm.slane %v9168, %v9171
        %v9173 = vrot.slane %v8608, 4
        %v9174 = vsel %vm8310, %v9173, %v8606
        %v9176 = vunpack.c.l.s4 1983009808
        %v9177 = vunpack.c.0.s8 %v9176
        %v9178 = vperm.slane %v9174, %v9177
        %v9179 = vrot.slane %v9178, 4
        %v9180 = vsel %vm8310, %v9179, %v9172
        %v9182 = vunpack.c.l.s4 1934713408
        %v9183 = vunpack.c.0.s8 %v9182
        %v9184 = vperm.slane %v9180, %v9183
        %v9185 = vsel %vm8310, %v8626, %v8619
        %v9187 = vunpack.c.l.s4 1983009808
        %v9188 = vunpack.c.0.s8 %v9187
        %v9189 = vperm.slane %v9185, %v9188
        %v9190 = vrot.slane %v8627, 4
        %v9191 = vsel %vm8310, %v9190, %v8625
        %v9193 = vunpack.c.l.s4 1983009808
        %v9194 = vunpack.c.0.s8 %v9193
        %v9195 = vperm.slane %v9191, %v9194
        %v9196 = vrot.slane %v9195, 4
        %v9197 = vsel %vm8310, %v9196, %v9189
        %v9199 = vunpack.c.l.s4 1934713408
        %v9200 = vunpack.c.0.s8 %v9199
        %v9201 = vperm.slane %v9197, %v9200
        %v9202 = vsel %vm8310, %v8645, %v8638
        %v9204 = vunpack.c.l.s4 1983009808
        %v9205 = vunpack.c.0.s8 %v9204
        %v9206 = vperm.slane %v9202, %v9205
        %v9207 = vrot.slane %v8646, 4
        %v9208 = vsel %vm8310, %v9207, %v8644
        %v9210 = vunpack.c.l.s4 1983009808
        %v9211 = vunpack.c.0.s8 %v9210
        %v9212 = vperm.slane %v9208, %v9211
        %v9213 = vrot.slane %v9212, 4
        %v9214 = vsel %vm8310, %v9213, %v9206
        %v9216 = vunpack.c.l.s4 1934713408
        %v9217 = vunpack.c.0.s8 %v9216
        %v9218 = vperm.slane %v9214, %v9217
        %v9219 = vsel %vm8310, %v8664, %v8657
        %v9221 = vunpack.c.l.s4 1983009808
        %v9222 = vunpack.c.0.s8 %v9221
        %v9223 = vperm.slane %v9219, %v9222
        %v9224 = vrot.slane %v8665, 4
        %v9225 = vsel %vm8310, %v9224, %v8663
        %v9227 = vunpack.c.l.s4 1983009808
        %v9228 = vunpack.c.0.s8 %v9227
        %v9229 = vperm.slane %v9225, %v9228
        %v9230 = vrot.slane %v9229, 4
        %v9231 = vsel %vm8310, %v9230, %v9223
        %v9233 = vunpack.c.l.s4 1934713408
        %v9234 = vunpack.c.0.s8 %v9233
        %v9235 = vperm.slane %v9231, %v9234
        %v9236 = vsel %vm8310, %v8683, %v8676
        %v9238 = vunpack.c.l.s4 1983009808
        %v9239 = vunpack.c.0.s8 %v9238
        %v9240 = vperm.slane %v9236, %v9239
        %v9241 = vrot.slane %v8684, 4
        %v9242 = vsel %vm8310, %v9241, %v8682
        %v9244 = vunpack.c.l.s4 1983009808
        %v9245 = vunpack.c.0.s8 %v9244
        %v9246 = vperm.slane %v9242, %v9245
        %v9247 = vrot.slane %v9246, 4
        %v9248 = vsel %vm8310, %v9247, %v9240
        %v9250 = vunpack.c.l.s4 1934713408
        %v9251 = vunpack.c.0.s8 %v9250
        %v9252 = vperm.slane %v9248, %v9251
        %v9253 = vsel %vm8310, %v8702, %v8695
        %v9255 = vunpack.c.l.s4 1983009808
        %v9256 = vunpack.c.0.s8 %v9255
        %v9257 = vperm.slane %v9253, %v9256
        %v9258 = vrot.slane %v8703, 4
        %v9259 = vsel %vm8310, %v9258, %v8701
        %v9261 = vunpack.c.l.s4 1983009808
        %v9262 = vunpack.c.0.s8 %v9261
        %v9263 = vperm.slane %v9259, %v9262
        %v9264 = vrot.slane %v9263, 4
        %v9265 = vsel %vm8310, %v9264, %v9257
        %v9267 = vunpack.c.l.s4 1934713408
        %v9268 = vunpack.c.0.s8 %v9267
        %v9269 = vperm.slane %v9265, %v9268
        %v9270 = vsel %vm8310, %v8721, %v8714
        %v9272 = vunpack.c.l.s4 1983009808
        %v9273 = vunpack.c.0.s8 %v9272
        %v9274 = vperm.slane %v9270, %v9273
        %v9275 = vrot.slane %v8722, 4
        %v9276 = vsel %vm8310, %v9275, %v8720
        %v9278 = vunpack.c.l.s4 1983009808
        %v9279 = vunpack.c.0.s8 %v9278
        %v9280 = vperm.slane %v9276, %v9279
        %v9281 = vrot.slane %v9280, 4
        %v9282 = vsel %vm8310, %v9281, %v9274
        %v9284 = vunpack.c.l.s4 1934713408
        %v9285 = vunpack.c.0.s8 %v9284
        %v9286 = vperm.slane %v9282, %v9285
        %v9287 = vsel %vm8310, %v8740, %v8733
        %v9289 = vunpack.c.l.s4 1983009808
        %v9290 = vunpack.c.0.s8 %v9289
        %v9291 = vperm.slane %v9287, %v9290
        %v9292 = vrot.slane %v8741, 4
        %v9293 = vsel %vm8310, %v9292, %v8739
        %v9295 = vunpack.c.l.s4 1983009808
        %v9296 = vunpack.c.0.s8 %v9295
        %v9297 = vperm.slane %v9293, %v9296
        %v9298 = vrot.slane %v9297, 4
        %v9299 = vsel %vm8310, %v9298, %v9291
        %v9301 = vunpack.c.l.s4 1934713408
        %v9302 = vunpack.c.0.s8 %v9301
        %v9303 = vperm.slane %v9299, %v9302
        %v9304 = vsel %vm8310, %v8759, %v8752
        %v9306 = vunpack.c.l.s4 1983009808
        %v9307 = vunpack.c.0.s8 %v9306
        %v9308 = vperm.slane %v9304, %v9307
        %v9309 = vrot.slane %v8760, 4
        %v9310 = vsel %vm8310, %v9309, %v8758
        %v9312 = vunpack.c.l.s4 1983009808
        %v9313 = vunpack.c.0.s8 %v9312
        %v9314 = vperm.slane %v9310, %v9313
        %v9315 = vrot.slane %v9314, 4
        %v9316 = vsel %vm8310, %v9315, %v9308
        %v9318 = vunpack.c.l.s4 1934713408
        %v9319 = vunpack.c.0.s8 %v9318
        %v9320 = vperm.slane %v9316, %v9319
        %v9321 = vsel %vm8310, %v8778, %v8771
        %v9323 = vunpack.c.l.s4 1983009808
        %v9324 = vunpack.c.0.s8 %v9323
        %v9325 = vperm.slane %v9321, %v9324
        %v9326 = vrot.slane %v8779, 4
        %v9327 = vsel %vm8310, %v9326, %v8777
        %v9329 = vunpack.c.l.s4 1983009808
        %v9330 = vunpack.c.0.s8 %v9329
        %v9331 = vperm.slane %v9327, %v9330
        %v9332 = vrot.slane %v9331, 4
        %v9333 = vsel %vm8310, %v9332, %v9325
        %v9335 = vunpack.c.l.s4 1934713408
        %v9336 = vunpack.c.0.s8 %v9335
        %v9337 = vperm.slane %v9333, %v9336
        %v9338 = vsel %vm8310, %v8797, %v8790
        %v9340 = vunpack.c.l.s4 1983009808
        %v9341 = vunpack.c.0.s8 %v9340
        %v9342 = vperm.slane %v9338, %v9341
        %v9343 = vrot.slane %v8798, 4
        %v9344 = vsel %vm8310, %v9343, %v8796
        %v9346 = vunpack.c.l.s4 1983009808
        %v9347 = vunpack.c.0.s8 %v9346
        %v9348 = vperm.slane %v9344, %v9347
        %v9349 = vrot.slane %v9348, 4
        %v9350 = vsel %vm8310, %v9349, %v9342
        %v9352 = vunpack.c.l.s4 1934713408
        %v9353 = vunpack.c.0.s8 %v9352
        %v9354 = vperm.slane %v9350, %v9353
        %v9355 = vsel %vm8310, %v8816, %v8809
        %v9357 = vunpack.c.l.s4 1983009808
        %v9358 = vunpack.c.0.s8 %v9357
        %v9359 = vperm.slane %v9355, %v9358
        %v9360 = vrot.slane %v8817, 4
        %v9361 = vsel %vm8310, %v9360, %v8815
        %v9363 = vunpack.c.l.s4 1983009808
        %v9364 = vunpack.c.0.s8 %v9363
        %v9365 = vperm.slane %v9361, %v9364
        %v9366 = vrot.slane %v9365, 4
        %v9367 = vsel %vm8310, %v9366, %v9359
        %v9369 = vunpack.c.l.s4 1934713408
        %v9370 = vunpack.c.0.s8 %v9369
        %v9371 = vperm.slane %v9367, %v9370
        %v9372 = vsel %vm8310, %v8835, %v8828
        %v9374 = vunpack.c.l.s4 1983009808
        %v9375 = vunpack.c.0.s8 %v9374
        %v9376 = vperm.slane %v9372, %v9375
        %v9377 = vrot.slane %v8836, 4
        %v9378 = vsel %vm8310, %v9377, %v8834
        %v9380 = vunpack.c.l.s4 1983009808
        %v9381 = vunpack.c.0.s8 %v9380
        %v9382 = vperm.slane %v9378, %v9381
        %v9383 = vrot.slane %v9382, 4
        %v9384 = vsel %vm8310, %v9383, %v9376
        %v9386 = vunpack.c.l.s4 1934713408
        %v9387 = vunpack.c.0.s8 %v9386
        %v9388 = vperm.slane %v9384, %v9387
        %v9389 = vsel %vm8310, %v8854, %v8847
        %v9391 = vunpack.c.l.s4 1983009808
        %v9392 = vunpack.c.0.s8 %v9391
        %v9393 = vperm.slane %v9389, %v9392
        %v9394 = vrot.slane %v8855, 4
        %v9395 = vsel %vm8310, %v9394, %v8853
        %v9397 = vunpack.c.l.s4 1983009808
        %v9398 = vunpack.c.0.s8 %v9397
        %v9399 = vperm.slane %v9395, %v9398
        %v9400 = vrot.slane %v9399, 4
        %v9401 = vsel %vm8310, %v9400, %v9393
        %v9403 = vunpack.c.l.s4 1934713408
        %v9404 = vunpack.c.0.s8 %v9403
        %v9405 = vperm.slane %v9401, %v9404
        %v9406 = vsel %vm8310, %v8873, %v8866
        %v9408 = vunpack.c.l.s4 1983009808
        %v9409 = vunpack.c.0.s8 %v9408
        %v9410 = vperm.slane %v9406, %v9409
        %v9411 = vrot.slane %v8874, 4
        %v9412 = vsel %vm8310, %v9411, %v8872
        %v9414 = vunpack.c.l.s4 1983009808
        %v9415 = vunpack.c.0.s8 %v9414
        %v9416 = vperm.slane %v9412, %v9415
        %v9417 = vrot.slane %v9416, 4
        %v9418 = vsel %vm8310, %v9417, %v9410
        %v9420 = vunpack.c.l.s4 1934713408
        %v9421 = vunpack.c.0.s8 %v9420
        %v9422 = vperm.slane %v9418, %v9421
        %v9423 = vsel %vm8310, %v8892, %v8885
        %v9425 = vunpack.c.l.s4 1983009808
        %v9426 = vunpack.c.0.s8 %v9425
        %v9427 = vperm.slane %v9423, %v9426
        %v9428 = vrot.slane %v8893, 4
        %v9429 = vsel %vm8310, %v9428, %v8891
        %v9431 = vunpack.c.l.s4 1983009808
        %v9432 = vunpack.c.0.s8 %v9431
        %v9433 = vperm.slane %v9429, %v9432
        %v9434 = vrot.slane %v9433, 4
        %v9435 = vsel %vm8310, %v9434, %v9427
        %v9437 = vunpack.c.l.s4 1934713408
        %v9438 = vunpack.c.0.s8 %v9437
        %v9439 = vperm.slane %v9435, %v9438
        %v9440 = vsel %vm8310, %v8911, %v8904
        %v9442 = vunpack.c.l.s4 1983009808
        %v9443 = vunpack.c.0.s8 %v9442
        %v9444 = vperm.slane %v9440, %v9443
        %v9445 = vrot.slane %v8912, 4
        %v9446 = vsel %vm8310, %v9445, %v8910
        %v9448 = vunpack.c.l.s4 1983009808
        %v9449 = vunpack.c.0.s8 %v9448
        %v9450 = vperm.slane %v9446, %v9449
        %v9451 = vrot.slane %v9450, 4
        %v9452 = vsel %vm8310, %v9451, %v9444
        %v9454 = vunpack.c.l.s4 1934713408
        %v9455 = vunpack.c.0.s8 %v9454
        %v9456 = vperm.slane %v9452, %v9455
        %v9459 = vpack.i.b16 %v8946, %v8929
        %v9460 = vshrl.u32 %v8929, 16
        %v9461 = vshrl.u32 %v8946, 16
        %v9462 = vpack.i.b16 %v9461, %v9460
        %v9465 = vpack.i.b16 %v8980, %v8963
        %v9466 = vshrl.u32 %v8963, 16
        %v9467 = vshrl.u32 %v8980, 16
        %v9468 = vpack.i.b16 %v9467, %v9466
        %v9471 = vpack.i.b16 %v9014, %v8997
        %v9472 = vshrl.u32 %v8997, 16
        %v9473 = vshrl.u32 %v9014, 16
        %v9474 = vpack.i.b16 %v9473, %v9472
        %v9477 = vpack.i.b16 %v9048, %v9031
        %v9478 = vshrl.u32 %v9031, 16
        %v9479 = vshrl.u32 %v9048, 16
        %v9480 = vpack.i.b16 %v9479, %v9478
        %v9483 = vpack.i.b16 %v9082, %v9065
        %v9484 = vshrl.u32 %v9065, 16
        %v9485 = vshrl.u32 %v9082, 16
        %v9486 = vpack.i.b16 %v9485, %v9484
        %v9489 = vpack.i.b16 %v9116, %v9099
        %v9490 = vshrl.u32 %v9099, 16
        %v9491 = vshrl.u32 %v9116, 16
        %v9492 = vpack.i.b16 %v9491, %v9490
        %v9495 = vpack.i.b16 %v9150, %v9133
        %v9496 = vshrl.u32 %v9133, 16
        %v9497 = vshrl.u32 %v9150, 16
        %v9498 = vpack.i.b16 %v9497, %v9496
        %v9501 = vpack.i.b16 %v9184, %v9167
        %v9502 = vshrl.u32 %v9167, 16
        %v9503 = vshrl.u32 %v9184, 16
        %v9504 = vpack.i.b16 %v9503, %v9502
        %v9507 = vpack.i.b16 %v9218, %v9201
        %v9508 = vshrl.u32 %v9201, 16
        %v9509 = vshrl.u32 %v9218, 16
        %v9510 = vpack.i.b16 %v9509, %v9508
        %v9513 = vpack.i.b16 %v9252, %v9235
        %v9514 = vshrl.u32 %v9235, 16
        %v9515 = vshrl.u32 %v9252, 16
        %v9516 = vpack.i.b16 %v9515, %v9514
        %v9519 = vpack.i.b16 %v9286, %v9269
        %v9520 = vshrl.u32 %v9269, 16
        %v9521 = vshrl.u32 %v9286, 16
        %v9522 = vpack.i.b16 %v9521, %v9520
        %v9525 = vpack.i.b16 %v9320, %v9303
        %v9526 = vshrl.u32 %v9303, 16
        %v9527 = vshrl.u32 %v9320, 16
        %v9528 = vpack.i.b16 %v9527, %v9526
        %v9531 = vpack.i.b16 %v9354, %v9337
        %v9532 = vshrl.u32 %v9337, 16
        %v9533 = vshrl.u32 %v9354, 16
        %v9534 = vpack.i.b16 %v9533, %v9532
        %v9537 = vpack.i.b16 %v9388, %v9371
        %v9538 = vshrl.u32 %v9371, 16
        %v9539 = vshrl.u32 %v9388, 16
        %v9540 = vpack.i.b16 %v9539, %v9538
        %v9543 = vpack.i.b16 %v9422, %v9405
        %v9544 = vshrl.u32 %v9405, 16
        %v9545 = vshrl.u32 %v9422, 16
        %v9546 = vpack.i.b16 %v9545, %v9544
        %v9549 = vpack.i.b16 %v9456, %v9439
        %v9550 = vshrl.u32 %v9439, 16
        %v9551 = vshrl.u32 %v9456, 16
        %v9552 = vpack.i.b16 %v9551, %v9550
        %v9553 = vld [vmem:[%s598] sm:$0xff]
        %v9554 = vld [vmem:[%s598 + $0x8] sm:$0xff]
        %v9555 = vld [vmem:[%s598 + $0x10] sm:$0xff]
        %v9556 = vld [vmem:[%s598 + $0x18] sm:$0xff]
        %v9557 = vld [vmem:[%s598 + $0x20] sm:$0xff]
        %v9558 = vld [vmem:[%s598 + $0x28] sm:$0xff]
        %v9559 = vld [vmem:[%s598 + $0x30] sm:$0xff]
        %v9560 = vld [vmem:[%s598 + $0x38] sm:$0xff]
        %v9561 = vld [vmem:[%s598 + $0x40] sm:$0xff]
        %v9562 = vld [vmem:[%s598 + $0x48] sm:$0xff]
        %v9563 = vld [vmem:[%s598 + $0x50] sm:$0xff]
        %v9564 = vld [vmem:[%s598 + $0x58] sm:$0xff]
        %v9565 = vld [vmem:[%s598 + $0x60] sm:$0xff]
        %v9566 = vld [vmem:[%s598 + $0x68] sm:$0xff]
        %v9567 = vld [vmem:[%s598 + $0x70] sm:$0xff]
        %v9568 = vld [vmem:[%s598 + $0x78] sm:$0xff]
        %v9569 = vld [vmem:[%s598 + $0x80] sm:$0xff]
        %v9570 = vld [vmem:[%s598 + $0x88] sm:$0xff]
        %v9571 = vld [vmem:[%s598 + $0x90] sm:$0xff]
        %v9572 = vld [vmem:[%s598 + $0x98] sm:$0xff]
        %v9573 = vld [vmem:[%s598 + $0xa0] sm:$0xff]
        %v9574 = vld [vmem:[%s598 + $0xa8] sm:$0xff]
        %v9575 = vld [vmem:[%s598 + $0xb0] sm:$0xff]
        %v9576 = vld [vmem:[%s598 + $0xb8] sm:$0xff]
        %v9577 = vld [vmem:[%s598 + $0xc0] sm:$0xff]
        %v9578 = vld [vmem:[%s598 + $0xc8] sm:$0xff]
        %v9579 = vld [vmem:[%s598 + $0xd0] sm:$0xff]
        %v9580 = vld [vmem:[%s598 + $0xd8] sm:$0xff]
        %v9581 = vld [vmem:[%s598 + $0xe0] sm:$0xff]
        %v9582 = vld [vmem:[%s598 + $0xe8] sm:$0xff]
        %v9583 = vld [vmem:[%s598 + $0xf0] sm:$0xff]
        %v9584 = vld [vmem:[%s598 + $0xf8] sm:$0xff]
        %v9585 = vld [vmem:[%s588] sm:$0x3]
        %v9587 = vperm.slane %v9585, 0
        %v9588 = vperm.slane %v9585, 1
        %v9591 = vadd.f32 %v9553, %v9587
        %v9592 = vadd.f32 %v9554, %v9588
        %v9593 = vadd.f32 %v9555, %v9587
        %v9594 = vadd.f32 %v9556, %v9588
        %v9595 = vadd.f32 %v9557, %v9587
        %v9596 = vadd.f32 %v9558, %v9588
        %v9597 = vadd.f32 %v9559, %v9587
        %v9598 = vadd.f32 %v9560, %v9588
        %v9599 = vadd.f32 %v9561, %v9587
        %v9600 = vadd.f32 %v9562, %v9588
        %v9601 = vadd.f32 %v9563, %v9587
        %v9602 = vadd.f32 %v9564, %v9588
        %v9603 = vadd.f32 %v9565, %v9587
        %v9604 = vadd.f32 %v9566, %v9588
        %v9605 = vadd.f32 %v9567, %v9587
        %v9606 = vadd.f32 %v9568, %v9588
        %v9607 = vadd.f32 %v9569, %v9587
        %v9608 = vadd.f32 %v9570, %v9588
        %v9609 = vadd.f32 %v9571, %v9587
        %v9610 = vadd.f32 %v9572, %v9588
        %v9611 = vadd.f32 %v9573, %v9587
        %v9612 = vadd.f32 %v9574, %v9588
        %v9613 = vadd.f32 %v9575, %v9587
        %v9614 = vadd.f32 %v9576, %v9588
        %v9615 = vadd.f32 %v9577, %v9587
        %v9616 = vadd.f32 %v9578, %v9588
        %v9617 = vadd.f32 %v9579, %v9587
        %v9618 = vadd.f32 %v9580, %v9588
        %v9619 = vadd.f32 %v9581, %v9587
        %v9620 = vadd.f32 %v9582, %v9588
        %v9621 = vadd.f32 %v9583, %v9587
        %v9622 = vadd.f32 %v9584, %v9588
        %v9623 = vld [vmem:[#allocation2] sm:$0xf]
        %v9624 = vld [vmem:[#allocation2 + $0x4] sm:$0xf]
        %v9625 = vld [vmem:[#allocation2 + $0x8] sm:$0xf]
        %v9626 = vld [vmem:[#allocation2 + $0xc] sm:$0xf]
        %v9627 = vld [vmem:[#allocation2 + $0x10] sm:$0xf]
        %v9628 = vld [vmem:[#allocation2 + $0x14] sm:$0xf]
        %v9629 = vld [vmem:[#allocation2 + $0x18] sm:$0xf]
        %v9630 = vld [vmem:[#allocation2 + $0x1c] sm:$0xf]
        %v9631 = vld [vmem:[#allocation2 + $0x20] sm:$0xf]
        %v9632 = vld [vmem:[#allocation2 + $0x24] sm:$0xf]
        %v9633 = vld [vmem:[#allocation2 + $0x28] sm:$0xf]
        %v9634 = vld [vmem:[#allocation2 + $0x2c] sm:$0xf]
        %v9635 = vld [vmem:[#allocation2 + $0x30] sm:$0xf]
        %v9636 = vld [vmem:[#allocation2 + $0x34] sm:$0xf]
        %v9637 = vld [vmem:[#allocation2 + $0x38] sm:$0xf]
        %v9638 = vld [vmem:[#allocation2 + $0x3c] sm:$0xf]
        %v9639 = vld [vmem:[#allocation2 + $0x40] sm:$0xf]
        %v9640 = vld [vmem:[#allocation2 + $0x44] sm:$0xf]
        %v9641 = vld [vmem:[#allocation2 + $0x48] sm:$0xf]
        %v9642 = vld [vmem:[#allocation2 + $0x4c] sm:$0xf]
        %v9643 = vld [vmem:[#allocation2 + $0x50] sm:$0xf]
        %v9644 = vld [vmem:[#allocation2 + $0x54] sm:$0xf]
        %v9645 = vld [vmem:[#allocation2 + $0x58] sm:$0xf]
        %v9646 = vld [vmem:[#allocation2 + $0x5c] sm:$0xf]
        %v9647 = vld [vmem:[#allocation2 + $0x60] sm:$0xf]
        %v9648 = vld [vmem:[#allocation2 + $0x64] sm:$0xf]
        %v9649 = vld [vmem:[#allocation2 + $0x68] sm:$0xf]
        %v9650 = vld [vmem:[#allocation2 + $0x6c] sm:$0xf]
        %v9651 = vld [vmem:[#allocation2 + $0x70] sm:$0xf]
        %v9652 = vld [vmem:[#allocation2 + $0x74] sm:$0xf]
        %v9653 = vld [vmem:[#allocation2 + $0x78] sm:$0xf]
        %v9654 = vld [vmem:[#allocation2 + $0x7c] sm:$0xf]
        %v9655 = vld [vmem:[#allocation2 + $0x80] sm:$0xf]
        %v9656 = vld [vmem:[#allocation2 + $0x84] sm:$0xf]
        %v9657 = vld [vmem:[#allocation2 + $0x88] sm:$0xf]
        %v9658 = vld [vmem:[#allocation2 + $0x8c] sm:$0xf]
        %v9659 = vld [vmem:[#allocation2 + $0x90] sm:$0xf]
        %v9660 = vld [vmem:[#allocation2 + $0x94] sm:$0xf]
        %v9661 = vld [vmem:[#allocation2 + $0x98] sm:$0xf]
        %v9662 = vld [vmem:[#allocation2 + $0x9c] sm:$0xf]
        %v9663 = vld [vmem:[#allocation2 + $0xa0] sm:$0xf]
        %v9664 = vld [vmem:[#allocation2 + $0xa4] sm:$0xf]
        %v9665 = vld [vmem:[#allocation2 + $0xa8] sm:$0xf]
        %v9666 = vld [vmem:[#allocation2 + $0xac] sm:$0xf]
        %v9667 = vld [vmem:[#allocation2 + $0xb0] sm:$0xf]
        %v9668 = vld [vmem:[#allocation2 + $0xb4] sm:$0xf]
        %v9669 = vld [vmem:[#allocation2 + $0xb8] sm:$0xf]
        %v9670 = vld [vmem:[#allocation2 + $0xbc] sm:$0xf]
        %v9671 = vld [vmem:[#allocation2 + $0xc0] sm:$0xf]
        %v9672 = vld [vmem:[#allocation2 + $0xc4] sm:$0xf]
        %v9673 = vld [vmem:[#allocation2 + $0xc8] sm:$0xf]
        %v9674 = vld [vmem:[#allocation2 + $0xcc] sm:$0xf]
        %v9675 = vld [vmem:[#allocation2 + $0xd0] sm:$0xf]
        %v9676 = vld [vmem:[#allocation2 + $0xd4] sm:$0xf]
        %v9677 = vld [vmem:[#allocation2 + $0xd8] sm:$0xf]
        %v9678 = vld [vmem:[#allocation2 + $0xdc] sm:$0xf]
        %v9679 = vld [vmem:[#allocation2 + $0xe0] sm:$0xf]
        %v9680 = vld [vmem:[#allocation2 + $0xe4] sm:$0xf]
        %v9681 = vld [vmem:[#allocation2 + $0xe8] sm:$0xf]
        %v9682 = vld [vmem:[#allocation2 + $0xec] sm:$0xf]
        %v9683 = vld [vmem:[#allocation2 + $0xf0] sm:$0xf]
        %v9684 = vld [vmem:[#allocation2 + $0xf4] sm:$0xf]
        %v9685 = vld [vmem:[#allocation2 + $0xf8] sm:$0xf]
        %v9686 = vld [vmem:[#allocation2 + $0xfc] sm:$0xf]
        %v9687 = vunpack.c.l.b16 %v9459
        %v9688 = vunpack.c.l.b16 %v9465
        %v9689 = vunpack.c.l.b16 %v9471
        %v9690 = vunpack.c.l.b16 %v9477
        %v9691 = vunpack.c.l.b16 %v9483
        %v9692 = vunpack.c.l.b16 %v9489
        %v9693 = vunpack.c.l.b16 %v9495
        %v9694 = vunpack.c.l.b16 %v9501
        %v9695 = vunpack.c.l.b16 %v9507
        %v9696 = vunpack.c.l.b16 %v9513
        %v9697 = vunpack.c.l.b16 %v9519
        %v9698 = vunpack.c.l.b16 %v9525
        %v9699 = vunpack.c.l.b16 %v9531
        %v9700 = vunpack.c.l.b16 %v9537
        %v9701 = vunpack.c.l.b16 %v9543
        %v9702 = vunpack.c.l.b16 %v9549
        %v9703 = vpack.c.b16 %v9688, %v9687
        %v9704 = vpack.c.b16 %v9690, %v9689
        %v9705 = vpack.c.b16 %v9692, %v9691
        %v9706 = vpack.c.b16 %v9694, %v9693
        %v9707 = vpack.c.b16 %v9696, %v9695
        %v9708 = vpack.c.b16 %v9698, %v9697
        %v9709 = vpack.c.b16 %v9700, %v9699
        %v9710 = vpack.c.b16 %v9702, %v9701
        %v9751 = vunpack.c.l.b16 %v9623
        %v9752 = vunpack.c.l.b16 %v9624
        %v9753 = vunpack.c.l.b16 %v9625
        %v9754 = vunpack.c.l.b16 %v9626
        %v9755 = vunpack.c.l.b16 %v9627
        %v9756 = vunpack.c.l.b16 %v9628
        %v9757 = vunpack.c.l.b16 %v9629
        %v9758 = vunpack.c.l.b16 %v9630
        %v9759 = vunpack.c.l.b16 %v9631
        %v9760 = vunpack.c.l.b16 %v9632
        %v9761 = vunpack.c.l.b16 %v9633
        %v9762 = vunpack.c.l.b16 %v9634
        %v9763 = vunpack.c.l.b16 %v9635
        %v9764 = vunpack.c.l.b16 %v9636
        %v9765 = vunpack.c.l.b16 %v9637
        %v9766 = vunpack.c.l.b16 %v9638
        %v9767 = vunpack.c.l.b16 %v9639
        %v9768 = vunpack.c.l.b16 %v9640
        %v9769 = vunpack.c.l.b16 %v9641
        %v9770 = vunpack.c.l.b16 %v9642
        %v9771 = vunpack.c.l.b16 %v9643
        %v9772 = vunpack.c.l.b16 %v9644
        %v9773 = vunpack.c.l.b16 %v9645
        %v9774 = vunpack.c.l.b16 %v9646
        %v9775 = vunpack.c.l.b16 %v9647
        %v9776 = vunpack.c.l.b16 %v9648
        %v9777 = vunpack.c.l.b16 %v9649
        %v9778 = vunpack.c.l.b16 %v9650
        %v9779 = vunpack.c.l.b16 %v9651
        %v9780 = vunpack.c.l.b16 %v9652
        %v9781 = vunpack.c.l.b16 %v9653
        %v9782 = vunpack.c.l.b16 %v9654
        %v9783 = vpack.c.b16 %v9752, %v9751
        %v9784 = vpack.c.b16 %v9754, %v9753
        %v9785 = vpack.c.b16 %v9756, %v9755
        %v9786 = vpack.c.b16 %v9758, %v9757
        %v9787 = vpack.c.b16 %v9760, %v9759
        %v9788 = vpack.c.b16 %v9762, %v9761
        %v9789 = vpack.c.b16 %v9764, %v9763
        %v9790 = vpack.c.b16 %v9766, %v9765
        %v9791 = vpack.c.b16 %v9768, %v9767
        %v9792 = vpack.c.b16 %v9770, %v9769
        %v9793 = vpack.c.b16 %v9772, %v9771
        %v9794 = vpack.c.b16 %v9774, %v9773
        %v9795 = vpack.c.b16 %v9776, %v9775
        %v9796 = vpack.c.b16 %v9778, %v9777
        %v9797 = vpack.c.b16 %v9780, %v9779
        %v9798 = vpack.c.b16 %v9782, %v9781
        %9815 = vmatpush.bf16.xpose.msra.mxu0 %v9790
        %9816 = vmatpush.bf16.xpose.msra.mxu0 %v9789
        %9817 = vmatpush.bf16.xpose.msra.mxu0 %v9788
        %9818 = vmatpush.bf16.xpose.msra.mxu0 %v9787
        %9819 = vmatpush.bf16.xpose.msra.mxu0 %v9786
        %9820 = vmatpush.bf16.xpose.msra.mxu0 %v9785
        %9821 = vmatpush.bf16.xpose.msra.mxu0 %v9784
        %9822 = vmatpush.bf16.xpose.msra.mxu0 %v9783
        %9823 = vmatmul.bf16.gmra.mxu0 %v9703
        %v9824 = vpop.f32.mrf.mxu0
        %v9825 = vadd.f32 %v9591, %v9824
        %v9826 = vpop.f32.mrf.mxu0
        %v9827 = vadd.f32 %v9593, %v9826
        %9828 = vmatmul.bf16.gmra.mxu0 %v9704
        %v9829 = vpop.f32.mrf.mxu0
        %v9830 = vadd.f32 %v9595, %v9829
        %v9831 = vpop.f32.mrf.mxu0
        %v9832 = vadd.f32 %v9597, %v9831
        %9833 = vmatmul.bf16.gmra.mxu0 %v9705
        %v9834 = vpop.f32.mrf.mxu0
        %v9835 = vadd.f32 %v9599, %v9834
        %v9836 = vpop.f32.mrf.mxu0
        %v9837 = vadd.f32 %v9601, %v9836
        %9838 = vmatmul.bf16.gmra.mxu0 %v9706
        %v9839 = vpop.f32.mrf.mxu0
        %v9840 = vadd.f32 %v9603, %v9839
        %v9841 = vpop.f32.mrf.mxu0
        %v9842 = vadd.f32 %v9605, %v9841
        %9843 = vmatmul.bf16.gmra.mxu0 %v9707
        %v9844 = vpop.f32.mrf.mxu0
        %v9845 = vadd.f32 %v9607, %v9844
        %v9846 = vpop.f32.mrf.mxu0
        %v9847 = vadd.f32 %v9609, %v9846
        %9848 = vmatmul.bf16.gmra.mxu0 %v9708
        %v9849 = vpop.f32.mrf.mxu0
        %v9850 = vadd.f32 %v9611, %v9849
        %v9851 = vpop.f32.mrf.mxu0
        %v9852 = vadd.f32 %v9613, %v9851
        %9853 = vmatmul.bf16.gmra.mxu0 %v9709
        %v9854 = vpop.f32.mrf.mxu0
        %v9855 = vadd.f32 %v9615, %v9854
        %v9856 = vpop.f32.mrf.mxu0
        %v9857 = vadd.f32 %v9617, %v9856
        %9858 = vmatmul.bf16.gmra.mxu0 %v9710
        %v9859 = vpop.f32.mrf.mxu0
        %v9860 = vadd.f32 %v9619, %v9859
        %v9861 = vpop.f32.mrf.mxu0
        %v9862 = vadd.f32 %v9621, %v9861
        %9863 = vdwg.mxu0
        %9864 = vmatpush.bf16.xpose.msra.mxu0 %v9798
        %9865 = vmatpush.bf16.xpose.msra.mxu0 %v9797
        %9866 = vmatpush.bf16.xpose.msra.mxu0 %v9796
        %9867 = vmatpush.bf16.xpose.msra.mxu0 %v9795
        %9868 = vmatpush.bf16.xpose.msra.mxu0 %v9794
        %9869 = vmatpush.bf16.xpose.msra.mxu0 %v9793
        %9870 = vmatpush.bf16.xpose.msra.mxu0 %v9792
        %9871 = vmatpush.bf16.xpose.msra.mxu0 %v9791
        %9872 = vmatmul.bf16.gmra.mxu0 %v9703
        %v9873 = vpop.f32.mrf.mxu0
        %v9874 = vadd.f32 %v9592, %v9873
        %v9875 = vpop.f32.mrf.mxu0
        %v9876 = vadd.f32 %v9594, %v9875
        %9877 = vmatmul.bf16.gmra.mxu0 %v9704
        %v9878 = vpop.f32.mrf.mxu0
        %v9879 = vadd.f32 %v9596, %v9878
        %v9880 = vpop.f32.mrf.mxu0
        %v9881 = vadd.f32 %v9598, %v9880
        %9882 = vmatmul.bf16.gmra.mxu0 %v9705
        %v9883 = vpop.f32.mrf.mxu0
        %v9884 = vadd.f32 %v9600, %v9883
        %v9885 = vpop.f32.mrf.mxu0
        %v9886 = vadd.f32 %v9602, %v9885
        %9887 = vmatmul.bf16.gmra.mxu0 %v9706
        %v9888 = vpop.f32.mrf.mxu0
        %v9889 = vadd.f32 %v9604, %v9888
        %v9890 = vpop.f32.mrf.mxu0
        %v9891 = vadd.f32 %v9606, %v9890
        %9892 = vmatmul.bf16.gmra.mxu0 %v9707
        %v9893 = vpop.f32.mrf.mxu0
        %v9894 = vadd.f32 %v9608, %v9893
        %v9895 = vpop.f32.mrf.mxu0
        %v9896 = vadd.f32 %v9610, %v9895
        %9897 = vmatmul.bf16.gmra.mxu0 %v9708
        %v9898 = vpop.f32.mrf.mxu0
        %v9899 = vadd.f32 %v9612, %v9898
        %v9900 = vpop.f32.mrf.mxu0
        %v9901 = vadd.f32 %v9614, %v9900
        %9902 = vmatmul.bf16.gmra.mxu0 %v9709
        %v9903 = vpop.f32.mrf.mxu0
        %v9904 = vadd.f32 %v9616, %v9903
        %v9905 = vpop.f32.mrf.mxu0
        %v9906 = vadd.f32 %v9618, %v9905
        %9907 = vmatmul.bf16.gmra.mxu0 %v9710
        %v9908 = vpop.f32.mrf.mxu0
        %v9909 = vadd.f32 %v9620, %v9908
        %v9910 = vpop.f32.mrf.mxu0
        %v9911 = vadd.f32 %v9622, %v9910
        %9912 = vdwg.mxu0
        %v9913 = vunpack.c.l.b16 %v9462
        %v9914 = vunpack.c.l.b16 %v9468
        %v9915 = vunpack.c.l.b16 %v9474
        %v9916 = vunpack.c.l.b16 %v9480
        %v9917 = vunpack.c.l.b16 %v9486
        %v9918 = vunpack.c.l.b16 %v9492
        %v9919 = vunpack.c.l.b16 %v9498
        %v9920 = vunpack.c.l.b16 %v9504
        %v9921 = vunpack.c.l.b16 %v9510
        %v9922 = vunpack.c.l.b16 %v9516
        %v9923 = vunpack.c.l.b16 %v9522
        %v9924 = vunpack.c.l.b16 %v9528
        %v9925 = vunpack.c.l.b16 %v9534
        %v9926 = vunpack.c.l.b16 %v9540
        %v9927 = vunpack.c.l.b16 %v9546
        %v9928 = vunpack.c.l.b16 %v9552
        %v9929 = vpack.c.b16 %v9914, %v9913
        %v9930 = vpack.c.b16 %v9916, %v9915
        %v9931 = vpack.c.b16 %v9918, %v9917
        %v9932 = vpack.c.b16 %v9920, %v9919
        %v9933 = vpack.c.b16 %v9922, %v9921
        %v9934 = vpack.c.b16 %v9924, %v9923
        %v9935 = vpack.c.b16 %v9926, %v9925
        %v9936 = vpack.c.b16 %v9928, %v9927
        %v9977 = vunpack.c.l.b16 %v9655
        %v9978 = vunpack.c.l.b16 %v9656
        %v9979 = vunpack.c.l.b16 %v9657
        %v9980 = vunpack.c.l.b16 %v9658
        %v9981 = vunpack.c.l.b16 %v9659
        %v9982 = vunpack.c.l.b16 %v9660
        %v9983 = vunpack.c.l.b16 %v9661
        %v9984 = vunpack.c.l.b16 %v9662
        %v9985 = vunpack.c.l.b16 %v9663
        %v9986 = vunpack.c.l.b16 %v9664
        %v9987 = vunpack.c.l.b16 %v9665
        %v9988 = vunpack.c.l.b16 %v9666
        %v9989 = vunpack.c.l.b16 %v9667
        %v9990 = vunpack.c.l.b16 %v9668
        %v9991 = vunpack.c.l.b16 %v9669
        %v9992 = vunpack.c.l.b16 %v9670
        %v9993 = vunpack.c.l.b16 %v9671
        %v9994 = vunpack.c.l.b16 %v9672
        %v9995 = vunpack.c.l.b16 %v9673
        %v9996 = vunpack.c.l.b16 %v9674
        %v9997 = vunpack.c.l.b16 %v9675
        %v9998 = vunpack.c.l.b16 %v9676
        %v9999 = vunpack.c.l.b16 %v9677
        %v10000 = vunpack.c.l.b16 %v9678
        %v10001 = vunpack.c.l.b16 %v9679
        %v10002 = vunpack.c.l.b16 %v9680
        %v10003 = vunpack.c.l.b16 %v9681
        %v10004 = vunpack.c.l.b16 %v9682
        %v10005 = vunpack.c.l.b16 %v9683
        %v10006 = vunpack.c.l.b16 %v9684
        %v10007 = vunpack.c.l.b16 %v9685
        %v10008 = vunpack.c.l.b16 %v9686
        %v10009 = vpack.c.b16 %v9978, %v9977
        %v10010 = vpack.c.b16 %v9980, %v9979
        %v10011 = vpack.c.b16 %v9982, %v9981
        %v10012 = vpack.c.b16 %v9984, %v9983
        %v10013 = vpack.c.b16 %v9986, %v9985
        %v10014 = vpack.c.b16 %v9988, %v9987
        %v10015 = vpack.c.b16 %v9990, %v9989
        %v10016 = vpack.c.b16 %v9992, %v9991
        %v10017 = vpack.c.b16 %v9994, %v9993
        %v10018 = vpack.c.b16 %v9996, %v9995
        %v10019 = vpack.c.b16 %v9998, %v9997
        %v10020 = vpack.c.b16 %v10000, %v9999
        %v10021 = vpack.c.b16 %v10002, %v10001
        %v10022 = vpack.c.b16 %v10004, %v10003
        %v10023 = vpack.c.b16 %v10006, %v10005
        %v10024 = vpack.c.b16 %v10008, %v10007
        %10041 = vmatpush.bf16.xpose.msra.mxu0 %v10016
        %10042 = vmatpush.bf16.xpose.msra.mxu0 %v10015
        %10043 = vmatpush.bf16.xpose.msra.mxu0 %v10014
        %10044 = vmatpush.bf16.xpose.msra.mxu0 %v10013
        %10045 = vmatpush.bf16.xpose.msra.mxu0 %v10012
        %10046 = vmatpush.bf16.xpose.msra.mxu0 %v10011
        %10047 = vmatpush.bf16.xpose.msra.mxu0 %v10010
        %10048 = vmatpush.bf16.xpose.msra.mxu0 %v10009
        %10049 = vmatmul.bf16.gmra.mxu0 %v9929
        %v10050 = vpop.f32.mrf.mxu0
        %v10051 = vadd.f32 %v9591, %v10050
        %v10052 = vpop.f32.mrf.mxu0
        %v10053 = vadd.f32 %v9593, %v10052
        %10054 = vmatmul.bf16.gmra.mxu0 %v9930
        %v10055 = vpop.f32.mrf.mxu0
        %v10056 = vadd.f32 %v9595, %v10055
        %v10057 = vpop.f32.mrf.mxu0
        %v10058 = vadd.f32 %v9597, %v10057
        %10059 = vmatmul.bf16.gmra.mxu0 %v9931
        %v10060 = vpop.f32.mrf.mxu0
        %v10061 = vadd.f32 %v9599, %v10060
        %v10062 = vpop.f32.mrf.mxu0
        %v10063 = vadd.f32 %v9601, %v10062
        %10064 = vmatmul.bf16.gmra.mxu0 %v9932
        %v10065 = vpop.f32.mrf.mxu0
        %v10066 = vadd.f32 %v9603, %v10065
        %v10067 = vpop.f32.mrf.mxu0
        %v10068 = vadd.f32 %v9605, %v10067
        %10069 = vmatmul.bf16.gmra.mxu0 %v9933
        %v10070 = vpop.f32.mrf.mxu0
        %v10071 = vadd.f32 %v9607, %v10070
        %v10072 = vpop.f32.mrf.mxu0
        %v10073 = vadd.f32 %v9609, %v10072
        %10074 = vmatmul.bf16.gmra.mxu0 %v9934
        %v10075 = vpop.f32.mrf.mxu0
        %v10076 = vadd.f32 %v9611, %v10075
        %v10077 = vpop.f32.mrf.mxu0
        %v10078 = vadd.f32 %v9613, %v10077
        %10079 = vmatmul.bf16.gmra.mxu0 %v9935
        %v10080 = vpop.f32.mrf.mxu0
        %v10081 = vadd.f32 %v9615, %v10080
        %v10082 = vpop.f32.mrf.mxu0
        %v10083 = vadd.f32 %v9617, %v10082
        %10084 = vmatmul.bf16.gmra.mxu0 %v9936
        %v10085 = vpop.f32.mrf.mxu0
        %v10086 = vadd.f32 %v9619, %v10085
        %v10087 = vpop.f32.mrf.mxu0
        %v10088 = vadd.f32 %v9621, %v10087
        %10089 = vdwg.mxu0
        %10090 = vmatpush.bf16.xpose.msra.mxu0 %v10024
        %10091 = vmatpush.bf16.xpose.msra.mxu0 %v10023
        %10092 = vmatpush.bf16.xpose.msra.mxu0 %v10022
        %10093 = vmatpush.bf16.xpose.msra.mxu0 %v10021
        %10094 = vmatpush.bf16.xpose.msra.mxu0 %v10020
        %10095 = vmatpush.bf16.xpose.msra.mxu0 %v10019
        %10096 = vmatpush.bf16.xpose.msra.mxu0 %v10018
        %10097 = vmatpush.bf16.xpose.msra.mxu0 %v10017
        %10098 = vmatmul.bf16.gmra.mxu0 %v9929
        %v10099 = vpop.f32.mrf.mxu0
        %v10100 = vadd.f32 %v9592, %v10099
        %v10101 = vpop.f32.mrf.mxu0
        %v10102 = vadd.f32 %v9594, %v10101
        %10103 = vmatmul.bf16.gmra.mxu0 %v9930
        %v10104 = vpop.f32.mrf.mxu0
        %v10105 = vadd.f32 %v9596, %v10104
        %v10106 = vpop.f32.mrf.mxu0
        %v10107 = vadd.f32 %v9598, %v10106
        %10108 = vmatmul.bf16.gmra.mxu0 %v9931
        %v10109 = vpop.f32.mrf.mxu0
        %v10110 = vadd.f32 %v9600, %v10109
        %v10111 = vpop.f32.mrf.mxu0
        %v10112 = vadd.f32 %v9602, %v10111
        %10113 = vmatmul.bf16.gmra.mxu0 %v9932
        %v10114 = vpop.f32.mrf.mxu0
        %v10115 = vadd.f32 %v9604, %v10114
        %v10116 = vpop.f32.mrf.mxu0
        %v10117 = vadd.f32 %v9606, %v10116
        %10118 = vmatmul.bf16.gmra.mxu0 %v9933
        %v10119 = vpop.f32.mrf.mxu0
        %v10120 = vadd.f32 %v9608, %v10119
        %v10121 = vpop.f32.mrf.mxu0
        %v10122 = vadd.f32 %v9610, %v10121
        %10123 = vmatmul.bf16.gmra.mxu0 %v9934
        %v10124 = vpop.f32.mrf.mxu0
        %v10125 = vadd.f32 %v9612, %v10124
        %v10126 = vpop.f32.mrf.mxu0
        %v10127 = vadd.f32 %v9614, %v10126
        %10128 = vmatmul.bf16.gmra.mxu0 %v9935
        %v10129 = vpop.f32.mrf.mxu0
        %v10130 = vadd.f32 %v9616, %v10129
        %v10131 = vpop.f32.mrf.mxu0
        %v10132 = vadd.f32 %v9618, %v10131
        %10133 = vmatmul.bf16.gmra.mxu0 %v9936
        %v10134 = vpop.f32.mrf.mxu0
        %v10135 = vadd.f32 %v9620, %v10134
        %v10136 = vpop.f32.mrf.mxu0
        %v10137 = vadd.f32 %v9622, %v10136
        %10138 = vdwg.mxu0
        %v10139 = vmax.f32 %v9825, %v9874
        %10140 = vmax.xlane.f32.xlu0 %v10139
        %v10141 = vpop.xlane.xlu0 %10140
        %v10142 = vmax.f32 %v9827, %v9876
        %10143 = vmax.xlane.f32.xlu0 %v10142
        %v10144 = vpop.xlane.xlu0 %10143
        %v10145 = vmax.f32 %v9830, %v9879
        %10146 = vmax.xlane.f32.xlu0 %v10145
        %v10147 = vpop.xlane.xlu0 %10146
        %v10148 = vmax.f32 %v9832, %v9881
        %10149 = vmax.xlane.f32.xlu0 %v10148
        %v10150 = vpop.xlane.xlu0 %10149
        %v10151 = vmax.f32 %v9835, %v9884
        %10152 = vmax.xlane.f32.xlu0 %v10151
        %v10153 = vpop.xlane.xlu0 %10152
        %v10154 = vmax.f32 %v9837, %v9886
        %10155 = vmax.xlane.f32.xlu0 %v10154
        %v10156 = vpop.xlane.xlu0 %10155
        %v10157 = vmax.f32 %v9840, %v9889
        %10158 = vmax.xlane.f32.xlu0 %v10157
        %v10159 = vpop.xlane.xlu0 %10158
        %v10160 = vmax.f32 %v9842, %v9891
        %10161 = vmax.xlane.f32.xlu0 %v10160
        %v10162 = vpop.xlane.xlu0 %10161
        %v10163 = vmax.f32 %v9845, %v9894
        %10164 = vmax.xlane.f32.xlu0 %v10163
        %v10165 = vpop.xlane.xlu0 %10164
        %v10166 = vmax.f32 %v9847, %v9896
        %10167 = vmax.xlane.f32.xlu0 %v10166
        %v10168 = vpop.xlane.xlu0 %10167
        %v10169 = vmax.f32 %v9850, %v9899
        %10170 = vmax.xlane.f32.xlu0 %v10169
        %v10171 = vpop.xlane.xlu0 %10170
        %v10172 = vmax.f32 %v9852, %v9901
        %10173 = vmax.xlane.f32.xlu0 %v10172
        %v10174 = vpop.xlane.xlu0 %10173
        %v10175 = vmax.f32 %v9855, %v9904
        %10176 = vmax.xlane.f32.xlu0 %v10175
        %v10177 = vpop.xlane.xlu0 %10176
        %v10178 = vmax.f32 %v9857, %v9906
        %10179 = vmax.xlane.f32.xlu0 %v10178
        %v10180 = vpop.xlane.xlu0 %10179
        %v10181 = vmax.f32 %v9860, %v9909
        %10182 = vmax.xlane.f32.xlu0 %v10181
        %v10183 = vpop.xlane.xlu0 %10182
        %v10184 = vmax.f32 %v9862, %v9911
        %10185 = vmax.xlane.f32.xlu0 %v10184
        %v10186 = vpop.xlane.xlu0 %10185
        %v10187 = vmax.f32 %v10051, %v10100
        %10188 = vmax.xlane.f32.xlu0 %v10187
        %v10189 = vpop.xlane.xlu0 %10188
        %v10190 = vmax.f32 %v10053, %v10102
        %10191 = vmax.xlane.f32.xlu0 %v10190
        %v10192 = vpop.xlane.xlu0 %10191
        %v10193 = vmax.f32 %v10056, %v10105
        %10194 = vmax.xlane.f32.xlu0 %v10193
        %v10195 = vpop.xlane.xlu0 %10194
        %v10196 = vmax.f32 %v10058, %v10107
        %10197 = vmax.xlane.f32.xlu0 %v10196
        %v10198 = vpop.xlane.xlu0 %10197
        %v10199 = vmax.f32 %v10061, %v10110
        %10200 = vmax.xlane.f32.xlu0 %v10199
        %v10201 = vpop.xlane.xlu0 %10200
        %v10202 = vmax.f32 %v10063, %v10112
        %10203 = vmax.xlane.f32.xlu0 %v10202
        %v10204 = vpop.xlane.xlu0 %10203
        %v10205 = vmax.f32 %v10066, %v10115
        %10206 = vmax.xlane.f32.xlu0 %v10205
        %v10207 = vpop.xlane.xlu0 %10206
        %v10208 = vmax.f32 %v10068, %v10117
        %10209 = vmax.xlane.f32.xlu0 %v10208
        %v10210 = vpop.xlane.xlu0 %10209
        %v10211 = vmax.f32 %v10071, %v10120
        %10212 = vmax.xlane.f32.xlu0 %v10211
        %v10213 = vpop.xlane.xlu0 %10212
        %v10214 = vmax.f32 %v10073, %v10122
        %10215 = vmax.xlane.f32.xlu0 %v10214
        %v10216 = vpop.xlane.xlu0 %10215
        %v10217 = vmax.f32 %v10076, %v10125
        %10218 = vmax.xlane.f32.xlu0 %v10217
        %v10219 = vpop.xlane.xlu0 %10218
        %v10220 = vmax.f32 %v10078, %v10127
        %10221 = vmax.xlane.f32.xlu0 %v10220
        %v10222 = vpop.xlane.xlu0 %10221
        %v10223 = vmax.f32 %v10081, %v10130
        %10224 = vmax.xlane.f32.xlu0 %v10223
        %v10225 = vpop.xlane.xlu0 %10224
        %v10226 = vmax.f32 %v10083, %v10132
        %10227 = vmax.xlane.f32.xlu0 %v10226
        %v10228 = vpop.xlane.xlu0 %10227
        %v10229 = vmax.f32 %v10086, %v10135
        %10230 = vmax.xlane.f32.xlu0 %v10229
        %v10231 = vpop.xlane.xlu0 %10230
        %v10232 = vmax.f32 %v10088, %v10137
        %10233 = vmax.xlane.f32.xlu0 %v10232
        %v10234 = vpop.xlane.xlu0 %10233
        %v10235 = vsub.f32 %v9825, %v10141
        %v10236 = vsub.f32 %v9874, %v10141
        %v10237 = vsub.f32 %v9827, %v10144
        %v10238 = vsub.f32 %v9876, %v10144
        %v10239 = vsub.f32 %v9830, %v10147
        %v10240 = vsub.f32 %v9879, %v10147
        %v10241 = vsub.f32 %v9832, %v10150
        %v10242 = vsub.f32 %v9881, %v10150
        %v10243 = vsub.f32 %v9835, %v10153
        %v10244 = vsub.f32 %v9884, %v10153
        %v10245 = vsub.f32 %v9837, %v10156
        %v10246 = vsub.f32 %v9886, %v10156
        %v10247 = vsub.f32 %v9840, %v10159
        %v10248 = vsub.f32 %v9889, %v10159
        %v10249 = vsub.f32 %v9842, %v10162
        %v10250 = vsub.f32 %v9891, %v10162
        %v10251 = vsub.f32 %v9845, %v10165
        %v10252 = vsub.f32 %v9894, %v10165
        %v10253 = vsub.f32 %v9847, %v10168
        %v10254 = vsub.f32 %v9896, %v10168
        %v10255 = vsub.f32 %v9850, %v10171
        %v10256 = vsub.f32 %v9899, %v10171
        %v10257 = vsub.f32 %v9852, %v10174
        %v10258 = vsub.f32 %v9901, %v10174
        %v10259 = vsub.f32 %v9855, %v10177
        %v10260 = vsub.f32 %v9904, %v10177
        %v10261 = vsub.f32 %v9857, %v10180
        %v10262 = vsub.f32 %v9906, %v10180
        %v10263 = vsub.f32 %v9860, %v10183
        %v10264 = vsub.f32 %v9909, %v10183
        %v10265 = vsub.f32 %v9862, %v10186
        %v10266 = vsub.f32 %v9911, %v10186
        %v10267 = vsub.f32 %v10051, %v10189
        %v10268 = vsub.f32 %v10100, %v10189
        %v10269 = vsub.f32 %v10053, %v10192
        %v10270 = vsub.f32 %v10102, %v10192
        %v10271 = vsub.f32 %v10056, %v10195
        %v10272 = vsub.f32 %v10105, %v10195
        %v10273 = vsub.f32 %v10058, %v10198
        %v10274 = vsub.f32 %v10107, %v10198
        %v10275 = vsub.f32 %v10061, %v10201
        %v10276 = vsub.f32 %v10110, %v10201
        %v10277 = vsub.f32 %v10063, %v10204
        %v10278 = vsub.f32 %v10112, %v10204
        %v10279 = vsub.f32 %v10066, %v10207
        %v10280 = vsub.f32 %v10115, %v10207
        %v10281 = vsub.f32 %v10068, %v10210
        %v10282 = vsub.f32 %v10117, %v10210
        %v10283 = vsub.f32 %v10071, %v10213
        %v10284 = vsub.f32 %v10120, %v10213
        %v10285 = vsub.f32 %v10073, %v10216
        %v10286 = vsub.f32 %v10122, %v10216
        %v10287 = vsub.f32 %v10076, %v10219
        %v10288 = vsub.f32 %v10125, %v10219
        %v10289 = vsub.f32 %v10078, %v10222
        %v10290 = vsub.f32 %v10127, %v10222
        %v10291 = vsub.f32 %v10081, %v10225
        %v10292 = vsub.f32 %v10130, %v10225
        %v10293 = vsub.f32 %v10083, %v10228
        %v10294 = vsub.f32 %v10132, %v10228
        %v10295 = vsub.f32 %v10086, %v10231
        %v10296 = vsub.f32 %v10135, %v10231
        %v10297 = vsub.f32 %v10088, %v10234
        %v10298 = vsub.f32 %v10137, %v10234
        %v10299 = vmul.f32 %v10235, 1.442695
        %v10300 = vpow.pop %v10299
        %v10301 = vmul.f32 %v10236, 1.442695
        %v10302 = vpow.pop %v10301
        %v10303 = vmul.f32 %v10237, 1.442695
        %v10304 = vpow.pop %v10303
        %v10305 = vmul.f32 %v10238, 1.442695
        %v10306 = vpow.pop %v10305
        %v10307 = vmul.f32 %v10239, 1.442695
        %v10308 = vpow.pop %v10307
        %v10309 = vmul.f32 %v10240, 1.442695
        %v10310 = vpow.pop %v10309
        %v10311 = vmul.f32 %v10241, 1.442695
        %v10312 = vpow.pop %v10311
        %v10313 = vmul.f32 %v10242, 1.442695
        %v10314 = vpow.pop %v10313
        %v10315 = vmul.f32 %v10243, 1.442695
        %v10316 = vpow.pop %v10315
        %v10317 = vmul.f32 %v10244, 1.442695
        %v10318 = vpow.pop %v10317
        %v10319 = vmul.f32 %v10245, 1.442695
        %v10320 = vpow.pop %v10319
        %v10321 = vmul.f32 %v10246, 1.442695
        %v10322 = vpow.pop %v10321
        %v10323 = vmul.f32 %v10247, 1.442695
        %v10324 = vpow.pop %v10323
        %v10325 = vmul.f32 %v10248, 1.442695
        %v10326 = vpow.pop %v10325
        %v10327 = vmul.f32 %v10249, 1.442695
        %v10328 = vpow.pop %v10327
        %v10329 = vmul.f32 %v10250, 1.442695
        %v10330 = vpow.pop %v10329
        %v10331 = vmul.f32 %v10251, 1.442695
        %v10332 = vpow.pop %v10331
        %v10333 = vmul.f32 %v10252, 1.442695
        %v10334 = vpow.pop %v10333
        %v10335 = vmul.f32 %v10253, 1.442695
        %v10336 = vpow.pop %v10335
        %v10337 = vmul.f32 %v10254, 1.442695
        %v10338 = vpow.pop %v10337
        %v10339 = vmul.f32 %v10255, 1.442695
        %v10340 = vpow.pop %v10339
        %v10341 = vmul.f32 %v10256, 1.442695
        %v10342 = vpow.pop %v10341
        %v10343 = vmul.f32 %v10257, 1.442695
        %v10344 = vpow.pop %v10343
        %v10345 = vmul.f32 %v10258, 1.442695
        %v10346 = vpow.pop %v10345
        %v10347 = vmul.f32 %v10259, 1.442695
        %v10348 = vpow.pop %v10347
        %v10349 = vmul.f32 %v10260, 1.442695
        %v10350 = vpow.pop %v10349
        %v10351 = vmul.f32 %v10261, 1.442695
        %v10352 = vpow.pop %v10351
        %v10353 = vmul.f32 %v10262, 1.442695
        %v10354 = vpow.pop %v10353
        %v10355 = vmul.f32 %v10263, 1.442695
        %v10356 = vpow.pop %v10355
        %v10357 = vmul.f32 %v10264, 1.442695
        %v10358 = vpow.pop %v10357
        %v10359 = vmul.f32 %v10265, 1.442695
        %v10360 = vpow.pop %v10359
        %v10361 = vmul.f32 %v10266, 1.442695
        %v10362 = vpow.pop %v10361
        %v10363 = vmul.f32 %v10267, 1.442695
        %v10364 = vpow.pop %v10363
        %v10365 = vmul.f32 %v10268, 1.442695
        %v10366 = vpow.pop %v10365
        %v10367 = vmul.f32 %v10269, 1.442695
        %v10368 = vpow.pop %v10367
        %v10369 = vmul.f32 %v10270, 1.442695
        %v10370 = vpow.pop %v10369
        %v10371 = vmul.f32 %v10271, 1.442695
        %v10372 = vpow.pop %v10371
        %v10373 = vmul.f32 %v10272, 1.442695
        %v10374 = vpow.pop %v10373
        %v10375 = vmul.f32 %v10273, 1.442695
        %v10376 = vpow.pop %v10375
        %v10377 = vmul.f32 %v10274, 1.442695
        %v10378 = vpow.pop %v10377
        %v10379 = vmul.f32 %v10275, 1.442695
        %v10380 = vpow.pop %v10379
        %v10381 = vmul.f32 %v10276, 1.442695
        %v10382 = vpow.pop %v10381
        %v10383 = vmul.f32 %v10277, 1.442695
        %v10384 = vpow.pop %v10383
        %v10385 = vmul.f32 %v10278, 1.442695
        %v10386 = vpow.pop %v10385
        %v10387 = vmul.f32 %v10279, 1.442695
        %v10388 = vpow.pop %v10387
        %v10389 = vmul.f32 %v10280, 1.442695
        %v10390 = vpow.pop %v10389
        %v10391 = vmul.f32 %v10281, 1.442695
        %v10392 = vpow.pop %v10391
        %v10393 = vmul.f32 %v10282, 1.442695
        %v10394 = vpow.pop %v10393
        %v10395 = vmul.f32 %v10283, 1.442695
        %v10396 = vpow.pop %v10395
        %v10397 = vmul.f32 %v10284, 1.442695
        %v10398 = vpow.pop %v10397
        %v10399 = vmul.f32 %v10285, 1.442695
        %v10400 = vpow.pop %v10399
        %v10401 = vmul.f32 %v10286, 1.442695
        %v10402 = vpow.pop %v10401
        %v10403 = vmul.f32 %v10287, 1.442695
        %v10404 = vpow.pop %v10403
        %v10405 = vmul.f32 %v10288, 1.442695
        %v10406 = vpow.pop %v10405
        %v10407 = vmul.f32 %v10289, 1.442695
        %v10408 = vpow.pop %v10407
        %v10409 = vmul.f32 %v10290, 1.442695
        %v10410 = vpow.pop %v10409
        %v10411 = vmul.f32 %v10291, 1.442695
        %v10412 = vpow.pop %v10411
        %v10413 = vmul.f32 %v10292, 1.442695
        %v10414 = vpow.pop %v10413
        %v10415 = vmul.f32 %v10293, 1.442695
        %v10416 = vpow.pop %v10415
        %v10417 = vmul.f32 %v10294, 1.442695
        %v10418 = vpow.pop %v10417
        %v10419 = vmul.f32 %v10295, 1.442695
        %v10420 = vpow.pop %v10419
        %v10421 = vmul.f32 %v10296, 1.442695
        %v10422 = vpow.pop %v10421
        %v10423 = vmul.f32 %v10297, 1.442695
        %v10424 = vpow.pop %v10423
        %v10425 = vmul.f32 %v10298, 1.442695
        %v10426 = vpow.pop %v10425
        %v10427 = vadd.f32 %v10300, %v10302
        %10428 = vadd.xlane.f32.xlu0 %v10427
        %v10429 = vpop.xlane.xlu0 %10428
        %v10430 = vadd.f32 %v10304, %v10306
        %10431 = vadd.xlane.f32.xlu0 %v10430
        %v10432 = vpop.xlane.xlu0 %10431
        %v10433 = vadd.f32 %v10308, %v10310
        %10434 = vadd.xlane.f32.xlu0 %v10433
        %v10435 = vpop.xlane.xlu0 %10434
        %v10436 = vadd.f32 %v10312, %v10314
        %10437 = vadd.xlane.f32.xlu0 %v10436
        %v10438 = vpop.xlane.xlu0 %10437
        %v10439 = vadd.f32 %v10316, %v10318
        %10440 = vadd.xlane.f32.xlu0 %v10439
        %v10441 = vpop.xlane.xlu0 %10440
        %v10442 = vadd.f32 %v10320, %v10322
        %10443 = vadd.xlane.f32.xlu0 %v10442
        %v10444 = vpop.xlane.xlu0 %10443
        %v10445 = vadd.f32 %v10324, %v10326
        %10446 = vadd.xlane.f32.xlu0 %v10445
        %v10447 = vpop.xlane.xlu0 %10446
        %v10448 = vadd.f32 %v10328, %v10330
        %10449 = vadd.xlane.f32.xlu0 %v10448
        %v10450 = vpop.xlane.xlu0 %10449
        %v10451 = vadd.f32 %v10332, %v10334
        %10452 = vadd.xlane.f32.xlu0 %v10451
        %v10453 = vpop.xlane.xlu0 %10452
        %v10454 = vadd.f32 %v10336, %v10338
        %10455 = vadd.xlane.f32.xlu0 %v10454
        %v10456 = vpop.xlane.xlu0 %10455
        %v10457 = vadd.f32 %v10340, %v10342
        %10458 = vadd.xlane.f32.xlu0 %v10457
        %v10459 = vpop.xlane.xlu0 %10458
        %v10460 = vadd.f32 %v10344, %v10346
        %10461 = vadd.xlane.f32.xlu0 %v10460
        %v10462 = vpop.xlane.xlu0 %10461
        %v10463 = vadd.f32 %v10348, %v10350
        %10464 = vadd.xlane.f32.xlu0 %v10463
        %v10465 = vpop.xlane.xlu0 %10464
        %v10466 = vadd.f32 %v10352, %v10354
        %10467 = vadd.xlane.f32.xlu0 %v10466
        %v10468 = vpop.xlane.xlu0 %10467
        %v10469 = vadd.f32 %v10356, %v10358
        %10470 = vadd.xlane.f32.xlu0 %v10469
        %v10471 = vpop.xlane.xlu0 %10470
        %v10472 = vadd.f32 %v10360, %v10362
        %10473 = vadd.xlane.f32.xlu0 %v10472
        %v10474 = vpop.xlane.xlu0 %10473
        %v10475 = vadd.f32 %v10364, %v10366
        %10476 = vadd.xlane.f32.xlu0 %v10475
        %v10477 = vpop.xlane.xlu0 %10476
        %v10478 = vadd.f32 %v10368, %v10370
        %10479 = vadd.xlane.f32.xlu0 %v10478
        %v10480 = vpop.xlane.xlu0 %10479
        %v10481 = vadd.f32 %v10372, %v10374
        %10482 = vadd.xlane.f32.xlu0 %v10481
        %v10483 = vpop.xlane.xlu0 %10482
        %v10484 = vadd.f32 %v10376, %v10378
        %10485 = vadd.xlane.f32.xlu0 %v10484
        %v10486 = vpop.xlane.xlu0 %10485
        %v10487 = vadd.f32 %v10380, %v10382
        %10488 = vadd.xlane.f32.xlu0 %v10487
        %v10489 = vpop.xlane.xlu0 %10488
        %v10490 = vadd.f32 %v10384, %v10386
        %10491 = vadd.xlane.f32.xlu0 %v10490
        %v10492 = vpop.xlane.xlu0 %10491
        %v10493 = vadd.f32 %v10388, %v10390
        %10494 = vadd.xlane.f32.xlu0 %v10493
        %v10495 = vpop.xlane.xlu0 %10494
        %v10496 = vadd.f32 %v10392, %v10394
        %10497 = vadd.xlane.f32.xlu0 %v10496
        %v10498 = vpop.xlane.xlu0 %10497
        %v10499 = vadd.f32 %v10396, %v10398
        %10500 = vadd.xlane.f32.xlu0 %v10499
        %v10501 = vpop.xlane.xlu0 %10500
        %v10502 = vadd.f32 %v10400, %v10402
        %10503 = vadd.xlane.f32.xlu0 %v10502
        %v10504 = vpop.xlane.xlu0 %10503
        %v10505 = vadd.f32 %v10404, %v10406
        %10506 = vadd.xlane.f32.xlu0 %v10505
        %v10507 = vpop.xlane.xlu0 %10506
        %v10508 = vadd.f32 %v10408, %v10410
        %10509 = vadd.xlane.f32.xlu0 %v10508
        %v10510 = vpop.xlane.xlu0 %10509
        %v10511 = vadd.f32 %v10412, %v10414
        %10512 = vadd.xlane.f32.xlu0 %v10511
        %v10513 = vpop.xlane.xlu0 %10512
        %v10514 = vadd.f32 %v10416, %v10418
        %10515 = vadd.xlane.f32.xlu0 %v10514
        %v10516 = vpop.xlane.xlu0 %10515
        %v10517 = vadd.f32 %v10420, %v10422
        %10518 = vadd.xlane.f32.xlu0 %v10517
        %v10519 = vpop.xlane.xlu0 %10518
        %v10520 = vadd.f32 %v10424, %v10426
        %10521 = vadd.xlane.f32.xlu0 %v10520
        %v10522 = vpop.xlane.xlu0 %10521
        %v10523 = vrcp.pop %v10429
        %v10524 = vrcp.pop %v10432
        %v10525 = vrcp.pop %v10435
        %v10526 = vrcp.pop %v10438
        %v10527 = vrcp.pop %v10441
        %v10528 = vrcp.pop %v10444
        %v10529 = vrcp.pop %v10447
        %v10530 = vrcp.pop %v10450
        %v10531 = vrcp.pop %v10453
        %v10532 = vrcp.pop %v10456
        %v10533 = vrcp.pop %v10459
        %v10534 = vrcp.pop %v10462
        %v10535 = vrcp.pop %v10465
        %v10536 = vrcp.pop %v10468
        %v10537 = vrcp.pop %v10471
        %v10538 = vrcp.pop %v10474
        %v10539 = vrcp.pop %v10477
        %v10540 = vrcp.pop %v10480
        %v10541 = vrcp.pop %v10483
        %v10542 = vrcp.pop %v10486
        %v10543 = vrcp.pop %v10489
        %v10544 = vrcp.pop %v10492
        %v10545 = vrcp.pop %v10495
        %v10546 = vrcp.pop %v10498
        %v10547 = vrcp.pop %v10501
        %v10548 = vrcp.pop %v10504
        %v10549 = vrcp.pop %v10507
        %v10550 = vrcp.pop %v10510
        %v10551 = vrcp.pop %v10513
        %v10552 = vrcp.pop %v10516
        %v10553 = vrcp.pop %v10519
        %v10554 = vrcp.pop %v10522
        %v10555 = vmul.f32 %v10429, %v10523
        %v10556 = vmul.f32 %v10432, %v10524
        %v10557 = vmul.f32 %v10435, %v10525
        %v10558 = vmul.f32 %v10438, %v10526
        %v10559 = vmul.f32 %v10441, %v10527
        %v10560 = vmul.f32 %v10444, %v10528
        %v10561 = vmul.f32 %v10447, %v10529
        %v10562 = vmul.f32 %v10450, %v10530
        %v10563 = vmul.f32 %v10453, %v10531
        %v10564 = vmul.f32 %v10456, %v10532
        %v10565 = vmul.f32 %v10459, %v10533
        %v10566 = vmul.f32 %v10462, %v10534
        %v10567 = vmul.f32 %v10465, %v10535
        %v10568 = vmul.f32 %v10468, %v10536
        %v10569 = vmul.f32 %v10471, %v10537
        %v10570 = vmul.f32 %v10474, %v10538
        %v10571 = vmul.f32 %v10477, %v10539
        %v10572 = vmul.f32 %v10480, %v10540
        %v10573 = vmul.f32 %v10483, %v10541
        %v10574 = vmul.f32 %v10486, %v10542
        %v10575 = vmul.f32 %v10489, %v10543
        %v10576 = vmul.f32 %v10492, %v10544
        %v10577 = vmul.f32 %v10495, %v10545
        %v10578 = vmul.f32 %v10498, %v10546
        %v10579 = vmul.f32 %v10501, %v10547
        %v10580 = vmul.f32 %v10504, %v10548
        %v10581 = vmul.f32 %v10507, %v10549
        %v10582 = vmul.f32 %v10510, %v10550
        %v10583 = vmul.f32 %v10513, %v10551
        %v10584 = vmul.f32 %v10516, %v10552
        %v10585 = vmul.f32 %v10519, %v10553
        %v10586 = vmul.f32 %v10522, %v10554
        %v10587 = vsub.f32 2.0, %v10555
        %v10588 = vsub.f32 2.0, %v10556
        %v10589 = vsub.f32 2.0, %v10557
        %v10590 = vsub.f32 2.0, %v10558
        %v10591 = vsub.f32 2.0, %v10559
        %v10592 = vsub.f32 2.0, %v10560
        %v10593 = vsub.f32 2.0, %v10561
        %v10594 = vsub.f32 2.0, %v10562
        %v10595 = vsub.f32 2.0, %v10563
        %v10596 = vsub.f32 2.0, %v10564
        %v10597 = vsub.f32 2.0, %v10565
        %v10598 = vsub.f32 2.0, %v10566
        %v10599 = vsub.f32 2.0, %v10567
        %v10600 = vsub.f32 2.0, %v10568
        %v10601 = vsub.f32 2.0, %v10569
        %v10602 = vsub.f32 2.0, %v10570
        %v10603 = vsub.f32 2.0, %v10571
        %v10604 = vsub.f32 2.0, %v10572
        %v10605 = vsub.f32 2.0, %v10573
        %v10606 = vsub.f32 2.0, %v10574
        %v10607 = vsub.f32 2.0, %v10575
        %v10608 = vsub.f32 2.0, %v10576
        %v10609 = vsub.f32 2.0, %v10577
        %v10610 = vsub.f32 2.0, %v10578
        %v10611 = vsub.f32 2.0, %v10579
        %v10612 = vsub.f32 2.0, %v10580
        %v10613 = vsub.f32 2.0, %v10581
        %v10614 = vsub.f32 2.0, %v10582
        %v10615 = vsub.f32 2.0, %v10583
        %v10616 = vsub.f32 2.0, %v10584
        %v10617 = vsub.f32 2.0, %v10585
        %v10618 = vsub.f32 2.0, %v10586
        %v10619 = vmul.f32 %v10523, %v10587
        %v10620 = vmul.f32 %v10524, %v10588
        %v10621 = vmul.f32 %v10525, %v10589
        %v10622 = vmul.f32 %v10526, %v10590
        %v10623 = vmul.f32 %v10527, %v10591
        %v10624 = vmul.f32 %v10528, %v10592
        %v10625 = vmul.f32 %v10529, %v10593
        %v10626 = vmul.f32 %v10530, %v10594
        %v10627 = vmul.f32 %v10531, %v10595
        %v10628 = vmul.f32 %v10532, %v10596
        %v10629 = vmul.f32 %v10533, %v10597
        %v10630 = vmul.f32 %v10534, %v10598
        %v10631 = vmul.f32 %v10535, %v10599
        %v10632 = vmul.f32 %v10536, %v10600
        %v10633 = vmul.f32 %v10537, %v10601
        %v10634 = vmul.f32 %v10538, %v10602
        %v10635 = vmul.f32 %v10539, %v10603
        %v10636 = vmul.f32 %v10540, %v10604
        %v10637 = vmul.f32 %v10541, %v10605
        %v10638 = vmul.f32 %v10542, %v10606
        %v10639 = vmul.f32 %v10543, %v10607
        %v10640 = vmul.f32 %v10544, %v10608
        %v10641 = vmul.f32 %v10545, %v10609
        %v10642 = vmul.f32 %v10546, %v10610
        %v10643 = vmul.f32 %v10547, %v10611
        %v10644 = vmul.f32 %v10548, %v10612
        %v10645 = vmul.f32 %v10549, %v10613
        %v10646 = vmul.f32 %v10550, %v10614
        %v10647 = vmul.f32 %v10551, %v10615
        %v10648 = vmul.f32 %v10552, %v10616
        %v10649 = vmul.f32 %v10553, %v10617
        %v10650 = vmul.f32 %v10554, %v10618
        %v10651 = vmul.f32 %v10300, %v10619
        %v10652 = vmul.f32 %v10302, %v10619
        %v10653 = vmul.f32 %v10304, %v10620
        %v10654 = vmul.f32 %v10306, %v10620
        %v10655 = vmul.f32 %v10308, %v10621
        %v10656 = vmul.f32 %v10310, %v10621
        %v10657 = vmul.f32 %v10312, %v10622
        %v10658 = vmul.f32 %v10314, %v10622
        %v10659 = vmul.f32 %v10316, %v10623
        %v10660 = vmul.f32 %v10318, %v10623
        %v10661 = vmul.f32 %v10320, %v10624
        %v10662 = vmul.f32 %v10322, %v10624
        %v10663 = vmul.f32 %v10324, %v10625
        %v10664 = vmul.f32 %v10326, %v10625
        %v10665 = vmul.f32 %v10328, %v10626
        %v10666 = vmul.f32 %v10330, %v10626
        %v10667 = vmul.f32 %v10332, %v10627
        %v10668 = vmul.f32 %v10334, %v10627
        %v10669 = vmul.f32 %v10336, %v10628
        %v10670 = vmul.f32 %v10338, %v10628
        %v10671 = vmul.f32 %v10340, %v10629
        %v10672 = vmul.f32 %v10342, %v10629
        %v10673 = vmul.f32 %v10344, %v10630
        %v10674 = vmul.f32 %v10346, %v10630
        %v10675 = vmul.f32 %v10348, %v10631
        %v10676 = vmul.f32 %v10350, %v10631
        %v10677 = vmul.f32 %v10352, %v10632
        %v10678 = vmul.f32 %v10354, %v10632
        %v10679 = vmul.f32 %v10356, %v10633
        %v10680 = vmul.f32 %v10358, %v10633
        %v10681 = vmul.f32 %v10360, %v10634
        %v10682 = vmul.f32 %v10362, %v10634
        %v10683 = vmul.f32 %v10364, %v10635
        %v10684 = vmul.f32 %v10366, %v10635
        %v10685 = vmul.f32 %v10368, %v10636
        %v10686 = vmul.f32 %v10370, %v10636
        %v10687 = vmul.f32 %v10372, %v10637
        %v10688 = vmul.f32 %v10374, %v10637
        %v10689 = vmul.f32 %v10376, %v10638
        %v10690 = vmul.f32 %v10378, %v10638
        %v10691 = vmul.f32 %v10380, %v10639
        %v10692 = vmul.f32 %v10382, %v10639
        %v10693 = vmul.f32 %v10384, %v10640
        %v10694 = vmul.f32 %v10386, %v10640
        %v10695 = vmul.f32 %v10388, %v10641
        %v10696 = vmul.f32 %v10390, %v10641
        %v10697 = vmul.f32 %v10392, %v10642
        %v10698 = vmul.f32 %v10394, %v10642
        %v10699 = vmul.f32 %v10396, %v10643
        %v10700 = vmul.f32 %v10398, %v10643
        %v10701 = vmul.f32 %v10400, %v10644
        %v10702 = vmul.f32 %v10402, %v10644
        %v10703 = vmul.f32 %v10404, %v10645
        %v10704 = vmul.f32 %v10406, %v10645
        %v10705 = vmul.f32 %v10408, %v10646
        %v10706 = vmul.f32 %v10410, %v10646
        %v10707 = vmul.f32 %v10412, %v10647
        %v10708 = vmul.f32 %v10414, %v10647
        %v10709 = vmul.f32 %v10416, %v10648
        %v10710 = vmul.f32 %v10418, %v10648
        %v10711 = vmul.f32 %v10420, %v10649
        %v10712 = vmul.f32 %v10422, %v10649
        %v10713 = vmul.f32 %v10424, %v10650
        %v10714 = vmul.f32 %v10426, %v10650
        %v10715 = vpack.c.bf16 %v10652, %v10651
        %v10716 = vpack.c.bf16 %v10654, %v10653
        %v10717 = vpack.c.bf16 %v10656, %v10655
        %v10718 = vpack.c.bf16 %v10658, %v10657
        %v10719 = vpack.c.bf16 %v10660, %v10659
        %v10720 = vpack.c.bf16 %v10662, %v10661
        %v10721 = vpack.c.bf16 %v10664, %v10663
        %v10722 = vpack.c.bf16 %v10666, %v10665
        %v10723 = vpack.c.bf16 %v10668, %v10667
        %v10724 = vpack.c.bf16 %v10670, %v10669
        %v10725 = vpack.c.bf16 %v10672, %v10671
        %v10726 = vpack.c.bf16 %v10674, %v10673
        %v10727 = vpack.c.bf16 %v10676, %v10675
        %v10728 = vpack.c.bf16 %v10678, %v10677
        %v10729 = vpack.c.bf16 %v10680, %v10679
        %v10730 = vpack.c.bf16 %v10682, %v10681
        %v10731 = vpack.c.bf16 %v10684, %v10683
        %v10732 = vpack.c.bf16 %v10686, %v10685
        %v10733 = vpack.c.bf16 %v10688, %v10687
        %v10734 = vpack.c.bf16 %v10690, %v10689
        %v10735 = vpack.c.bf16 %v10692, %v10691
        %v10736 = vpack.c.bf16 %v10694, %v10693
        %v10737 = vpack.c.bf16 %v10696, %v10695
        %v10738 = vpack.c.bf16 %v10698, %v10697
        %v10739 = vpack.c.bf16 %v10700, %v10699
        %v10740 = vpack.c.bf16 %v10702, %v10701
        %v10741 = vpack.c.bf16 %v10704, %v10703
        %v10742 = vpack.c.bf16 %v10706, %v10705
        %v10743 = vpack.c.bf16 %v10708, %v10707
        %v10744 = vpack.c.bf16 %v10710, %v10709
        %v10745 = vpack.c.bf16 %v10712, %v10711
        %v10746 = vpack.c.bf16 %v10714, %v10713
        %10747 = vst [vmem:[%s681] sm:$0xff] %v10715
        %10748 = vst [vmem:[%s681 + $0x8] sm:$0xff] %v10716
        %10749 = vst [vmem:[%s681 + $0x10] sm:$0xff] %v10717
        %10750 = vst [vmem:[%s681 + $0x18] sm:$0xff] %v10718
        %10751 = vst [vmem:[%s681 + $0x20] sm:$0xff] %v10719
        %10752 = vst [vmem:[%s681 + $0x28] sm:$0xff] %v10720
        %10753 = vst [vmem:[%s681 + $0x30] sm:$0xff] %v10721
        %10754 = vst [vmem:[%s681 + $0x38] sm:$0xff] %v10722
        %10755 = vst [vmem:[%s681 + $0x40] sm:$0xff] %v10723
        %10756 = vst [vmem:[%s681 + $0x48] sm:$0xff] %v10724
        %10757 = vst [vmem:[%s681 + $0x50] sm:$0xff] %v10725
        %10758 = vst [vmem:[%s681 + $0x58] sm:$0xff] %v10726
        %10759 = vst [vmem:[%s681 + $0x60] sm:$0xff] %v10727
        %10760 = vst [vmem:[%s681 + $0x68] sm:$0xff] %v10728
        %10761 = vst [vmem:[%s681 + $0x70] sm:$0xff] %v10729
        %10762 = vst [vmem:[%s681 + $0x78] sm:$0xff] %v10730
        %10763 = vst [vmem:[%s681 + $0x80] sm:$0xff] %v10731
        %10764 = vst [vmem:[%s681 + $0x88] sm:$0xff] %v10732
        %10765 = vst [vmem:[%s681 + $0x90] sm:$0xff] %v10733
        %10766 = vst [vmem:[%s681 + $0x98] sm:$0xff] %v10734
        %10767 = vst [vmem:[%s681 + $0xa0] sm:$0xff] %v10735
        %10768 = vst [vmem:[%s681 + $0xa8] sm:$0xff] %v10736
        %10769 = vst [vmem:[%s681 + $0xb0] sm:$0xff] %v10737
        %10770 = vst [vmem:[%s681 + $0xb8] sm:$0xff] %v10738
        %10771 = vst [vmem:[%s681 + $0xc0] sm:$0xff] %v10739
        %10772 = vst [vmem:[%s681 + $0xc8] sm:$0xff] %v10740
        %10773 = vst [vmem:[%s681 + $0xd0] sm:$0xff] %v10741
        %10774 = vst [vmem:[%s681 + $0xd8] sm:$0xff] %v10742
        %10775 = vst [vmem:[%s681 + $0xe0] sm:$0xff] %v10743
        %10776 = vst [vmem:[%s681 + $0xe8] sm:$0xff] %v10744
        %10777 = vst [vmem:[%s681 + $0xf0] sm:$0xff] %v10745
        %10778 = vst [vmem:[%s681 + $0xf8] sm:$0xff] %v10746
        %v10779 = vld [vmem:[#allocation3] sm:$0xf]
        %v10780 = vld [vmem:[#allocation3 + $0x4] sm:$0xf]
        %v10781 = vld [vmem:[#allocation3 + $0x8] sm:$0xf]
        %v10782 = vld [vmem:[#allocation3 + $0xc] sm:$0xf]
        %v10783 = vld [vmem:[#allocation3 + $0x10] sm:$0xf]
        %v10784 = vld [vmem:[#allocation3 + $0x14] sm:$0xf]
        %v10785 = vld [vmem:[#allocation3 + $0x18] sm:$0xf]
        %v10786 = vld [vmem:[#allocation3 + $0x1c] sm:$0xf]
        %v10787 = vld [vmem:[#allocation3 + $0x20] sm:$0xf]
        %v10788 = vld [vmem:[#allocation3 + $0x24] sm:$0xf]
        %v10789 = vld [vmem:[#allocation3 + $0x28] sm:$0xf]
        %v10790 = vld [vmem:[#allocation3 + $0x2c] sm:$0xf]
        %v10791 = vld [vmem:[#allocation3 + $0x30] sm:$0xf]
        %v10792 = vld [vmem:[#allocation3 + $0x34] sm:$0xf]
        %v10793 = vld [vmem:[#allocation3 + $0x38] sm:$0xf]
        %v10794 = vld [vmem:[#allocation3 + $0x3c] sm:$0xf]
        %v10795 = vld [vmem:[#allocation3 + $0x40] sm:$0xf]
        %v10796 = vld [vmem:[#allocation3 + $0x44] sm:$0xf]
        %v10797 = vld [vmem:[#allocation3 + $0x48] sm:$0xf]
        %v10798 = vld [vmem:[#allocation3 + $0x4c] sm:$0xf]
        %v10799 = vld [vmem:[#allocation3 + $0x50] sm:$0xf]
        %v10800 = vld [vmem:[#allocation3 + $0x54] sm:$0xf]
        %v10801 = vld [vmem:[#allocation3 + $0x58] sm:$0xf]
        %v10802 = vld [vmem:[#allocation3 + $0x5c] sm:$0xf]
        %v10803 = vld [vmem:[#allocation3 + $0x60] sm:$0xf]
        %v10804 = vld [vmem:[#allocation3 + $0x64] sm:$0xf]
        %v10805 = vld [vmem:[#allocation3 + $0x68] sm:$0xf]
        %v10806 = vld [vmem:[#allocation3 + $0x6c] sm:$0xf]
        %v10807 = vld [vmem:[#allocation3 + $0x70] sm:$0xf]
        %v10808 = vld [vmem:[#allocation3 + $0x74] sm:$0xf]
        %v10809 = vld [vmem:[#allocation3 + $0x78] sm:$0xf]
        %v10810 = vld [vmem:[#allocation3 + $0x7c] sm:$0xf]
        %v10811 = vld [vmem:[#allocation3 + $0x80] sm:$0xf]
        %v10812 = vld [vmem:[#allocation3 + $0x84] sm:$0xf]
        %v10813 = vld [vmem:[#allocation3 + $0x88] sm:$0xf]
        %v10814 = vld [vmem:[#allocation3 + $0x8c] sm:$0xf]
        %v10815 = vld [vmem:[#allocation3 + $0x90] sm:$0xf]
        %v10816 = vld [vmem:[#allocation3 + $0x94] sm:$0xf]
        %v10817 = vld [vmem:[#allocation3 + $0x98] sm:$0xf]
        %v10818 = vld [vmem:[#allocation3 + $0x9c] sm:$0xf]
        %v10819 = vld [vmem:[#allocation3 + $0xa0] sm:$0xf]
        %v10820 = vld [vmem:[#allocation3 + $0xa4] sm:$0xf]
        %v10821 = vld [vmem:[#allocation3 + $0xa8] sm:$0xf]
        %v10822 = vld [vmem:[#allocation3 + $0xac] sm:$0xf]
        %v10823 = vld [vmem:[#allocation3 + $0xb0] sm:$0xf]
        %v10824 = vld [vmem:[#allocation3 + $0xb4] sm:$0xf]
        %v10825 = vld [vmem:[#allocation3 + $0xb8] sm:$0xf]
        %v10826 = vld [vmem:[#allocation3 + $0xbc] sm:$0xf]
        %v10827 = vld [vmem:[#allocation3 + $0xc0] sm:$0xf]
        %v10828 = vld [vmem:[#allocation3 + $0xc4] sm:$0xf]
        %v10829 = vld [vmem:[#allocation3 + $0xc8] sm:$0xf]
        %v10830 = vld [vmem:[#allocation3 + $0xcc] sm:$0xf]
        %v10831 = vld [vmem:[#allocation3 + $0xd0] sm:$0xf]
        %v10832 = vld [vmem:[#allocation3 + $0xd4] sm:$0xf]
        %v10833 = vld [vmem:[#allocation3 + $0xd8] sm:$0xf]
        %v10834 = vld [vmem:[#allocation3 + $0xdc] sm:$0xf]
        %v10835 = vld [vmem:[#allocation3 + $0xe0] sm:$0xf]
        %v10836 = vld [vmem:[#allocation3 + $0xe4] sm:$0xf]
        %v10837 = vld [vmem:[#allocation3 + $0xe8] sm:$0xf]
        %v10838 = vld [vmem:[#allocation3 + $0xec] sm:$0xf]
        %v10839 = vld [vmem:[#allocation3 + $0xf0] sm:$0xf]
        %v10840 = vld [vmem:[#allocation3 + $0xf4] sm:$0xf]
        %v10841 = vld [vmem:[#allocation3 + $0xf8] sm:$0xf]
        %v10842 = vld [vmem:[#allocation3 + $0xfc] sm:$0xf]
        %v10859 = vunpack.c.l.b16 %v10715
        %v10860 = vunpack.c.h.b16 %v10715
        %v10861 = vunpack.c.l.b16 %v10716
        %v10862 = vunpack.c.h.b16 %v10716
        %v10863 = vunpack.c.l.b16 %v10717
        %v10864 = vunpack.c.h.b16 %v10717
        %v10865 = vunpack.c.l.b16 %v10718
        %v10866 = vunpack.c.h.b16 %v10718
        %v10867 = vunpack.c.l.b16 %v10719
        %v10868 = vunpack.c.h.b16 %v10719
        %v10869 = vunpack.c.l.b16 %v10720
        %v10870 = vunpack.c.h.b16 %v10720
        %v10871 = vunpack.c.l.b16 %v10721
        %v10872 = vunpack.c.h.b16 %v10721
        %v10873 = vunpack.c.l.b16 %v10722
        %v10874 = vunpack.c.h.b16 %v10722
        %v10875 = vunpack.c.l.b16 %v10723
        %v10876 = vunpack.c.h.b16 %v10723
        %v10877 = vunpack.c.l.b16 %v10724
        %v10878 = vunpack.c.h.b16 %v10724
        %v10879 = vunpack.c.l.b16 %v10725
        %v10880 = vunpack.c.h.b16 %v10725
        %v10881 = vunpack.c.l.b16 %v10726
        %v10882 = vunpack.c.h.b16 %v10726
        %v10883 = vunpack.c.l.b16 %v10727
        %v10884 = vunpack.c.h.b16 %v10727
        %v10885 = vunpack.c.l.b16 %v10728
        %v10886 = vunpack.c.h.b16 %v10728
        %v10887 = vunpack.c.l.b16 %v10729
        %v10888 = vunpack.c.h.b16 %v10729
        %v10889 = vunpack.c.l.b16 %v10730
        %v10890 = vunpack.c.h.b16 %v10730
        %v10891 = vpack.c.b16 %v10861, %v10859
        %v10892 = vpack.c.b16 %v10862, %v10860
        %v10893 = vpack.c.b16 %v10865, %v10863
        %v10894 = vpack.c.b16 %v10866, %v10864
        %v10895 = vpack.c.b16 %v10869, %v10867
        %v10896 = vpack.c.b16 %v10870, %v10868
        %v10897 = vpack.c.b16 %v10873, %v10871
        %v10898 = vpack.c.b16 %v10874, %v10872
        %v10899 = vpack.c.b16 %v10877, %v10875
        %v10900 = vpack.c.b16 %v10878, %v10876
        %v10901 = vpack.c.b16 %v10881, %v10879
        %v10902 = vpack.c.b16 %v10882, %v10880
        %v10903 = vpack.c.b16 %v10885, %v10883
        %v10904 = vpack.c.b16 %v10886, %v10884
        %v10905 = vpack.c.b16 %v10889, %v10887
        %v10906 = vpack.c.b16 %v10890, %v10888
        %v10955 = vunpack.c.l.b16 %v10779
        %v10956 = vunpack.c.l.b16 %v10780
        %v10957 = vunpack.c.l.b16 %v10781
        %v10958 = vunpack.c.l.b16 %v10782
        %v10959 = vunpack.c.l.b16 %v10783
        %v10960 = vunpack.c.l.b16 %v10784
        %v10961 = vunpack.c.l.b16 %v10785
        %v10962 = vunpack.c.l.b16 %v10786
        %v10963 = vunpack.c.l.b16 %v10787
        %v10964 = vunpack.c.l.b16 %v10788
        %v10965 = vunpack.c.l.b16 %v10789
        %v10966 = vunpack.c.l.b16 %v10790
        %v10967 = vunpack.c.l.b16 %v10791
        %v10968 = vunpack.c.l.b16 %v10792
        %v10969 = vunpack.c.l.b16 %v10793
        %v10970 = vunpack.c.l.b16 %v10794
        %v10971 = vunpack.c.l.b16 %v10795
        %v10972 = vunpack.c.l.b16 %v10796
        %v10973 = vunpack.c.l.b16 %v10797
        %v10974 = vunpack.c.l.b16 %v10798
        %v10975 = vunpack.c.l.b16 %v10799
        %v10976 = vunpack.c.l.b16 %v10800
        %v10977 = vunpack.c.l.b16 %v10801
        %v10978 = vunpack.c.l.b16 %v10802
        %v10979 = vunpack.c.l.b16 %v10803
        %v10980 = vunpack.c.l.b16 %v10804
        %v10981 = vunpack.c.l.b16 %v10805
        %v10982 = vunpack.c.l.b16 %v10806
        %v10983 = vunpack.c.l.b16 %v10807
        %v10984 = vunpack.c.l.b16 %v10808
        %v10985 = vunpack.c.l.b16 %v10809
        %v10986 = vunpack.c.l.b16 %v10810
        %v10987 = vpack.c.b16 %v10956, %v10955
        %v10988 = vpack.c.b16 %v10958, %v10957
        %v10989 = vpack.c.b16 %v10960, %v10959
        %v10990 = vpack.c.b16 %v10962, %v10961
        %v10991 = vpack.c.b16 %v10964, %v10963
        %v10992 = vpack.c.b16 %v10966, %v10965
        %v10993 = vpack.c.b16 %v10968, %v10967
        %v10994 = vpack.c.b16 %v10970, %v10969
        %v10995 = vpack.c.b16 %v10972, %v10971
        %v10996 = vpack.c.b16 %v10974, %v10973
        %v10997 = vpack.c.b16 %v10976, %v10975
        %v10998 = vpack.c.b16 %v10978, %v10977
        %v10999 = vpack.c.b16 %v10980, %v10979
        %v11000 = vpack.c.b16 %v10982, %v10981
        %v11001 = vpack.c.b16 %v10984, %v10983
        %v11002 = vpack.c.b16 %v10986, %v10985
        %11019 = vmatpush.bf16.msra.mxu0 %v10994
        %11020 = vmatpush.bf16.msra.mxu0 %v10993
        %11021 = vmatpush.bf16.msra.mxu0 %v10992
        %11022 = vmatpush.bf16.msra.mxu0 %v10991
        %11023 = vmatpush.bf16.msra.mxu0 %v10990
        %11024 = vmatpush.bf16.msra.mxu0 %v10989
        %11025 = vmatpush.bf16.msra.mxu0 %v10988
        %11026 = vmatpush.bf16.msra.mxu0 %v10987
        %11027 = vmatmul.bf16.gmra.mxu0 %v10891
        %v11028 = vpop.f32.mrf.mxu0
        %v11029 = vadd.f32 0.0, %v11028
        %v11030 = vpop.f32.mrf.mxu0
        %v11031 = vadd.f32 0.0, %v11030
        %11032 = vmatmul.bf16.gmra.mxu0 %v10893
        %v11033 = vpop.f32.mrf.mxu0
        %v11034 = vadd.f32 0.0, %v11033
        %v11035 = vpop.f32.mrf.mxu0
        %v11036 = vadd.f32 0.0, %v11035
        %11037 = vmatmul.bf16.gmra.mxu0 %v10895
        %v11038 = vpop.f32.mrf.mxu0
        %v11039 = vadd.f32 0.0, %v11038
        %v11040 = vpop.f32.mrf.mxu0
        %v11041 = vadd.f32 0.0, %v11040
        %11042 = vmatmul.bf16.gmra.mxu0 %v10897
        %v11043 = vpop.f32.mrf.mxu0
        %v11044 = vadd.f32 0.0, %v11043
        %v11045 = vpop.f32.mrf.mxu0
        %v11046 = vadd.f32 0.0, %v11045
        %11047 = vmatmul.bf16.gmra.mxu0 %v10899
        %v11048 = vpop.f32.mrf.mxu0
        %v11049 = vadd.f32 0.0, %v11048
        %v11050 = vpop.f32.mrf.mxu0
        %v11051 = vadd.f32 0.0, %v11050
        %11052 = vmatmul.bf16.gmra.mxu0 %v10901
        %v11053 = vpop.f32.mrf.mxu0
        %v11054 = vadd.f32 0.0, %v11053
        %v11055 = vpop.f32.mrf.mxu0
        %v11056 = vadd.f32 0.0, %v11055
        %11057 = vmatmul.bf16.gmra.mxu0 %v10903
        %v11058 = vpop.f32.mrf.mxu0
        %v11059 = vadd.f32 0.0, %v11058
        %v11060 = vpop.f32.mrf.mxu0
        %v11061 = vadd.f32 0.0, %v11060
        %11062 = vmatmul.bf16.gmra.mxu0 %v10905
        %v11063 = vpop.f32.mrf.mxu0
        %v11064 = vadd.f32 0.0, %v11063
        %v11065 = vpop.f32.mrf.mxu0
        %v11066 = vadd.f32 0.0, %v11065
        %11067 = vdwg.mxu0
        %11068 = vmatpush.bf16.msra.mxu0 %v11002
        %11069 = vmatpush.bf16.msra.mxu0 %v11001
        %11070 = vmatpush.bf16.msra.mxu0 %v11000
        %11071 = vmatpush.bf16.msra.mxu0 %v10999
        %11072 = vmatpush.bf16.msra.mxu0 %v10998
        %11073 = vmatpush.bf16.msra.mxu0 %v10997
        %11074 = vmatpush.bf16.msra.mxu0 %v10996
        %11075 = vmatpush.bf16.msra.mxu0 %v10995
        %11076 = vmatmul.bf16.gmra.mxu0 %v10892
        %v11077 = vpop.f32.mrf.mxu0
        %v11078 = vadd.f32 %v11029, %v11077
        %v11079 = vpop.f32.mrf.mxu0
        %v11080 = vadd.f32 %v11031, %v11079
        %11081 = vmatmul.bf16.gmra.mxu0 %v10894
        %v11082 = vpop.f32.mrf.mxu0
        %v11083 = vadd.f32 %v11034, %v11082
        %v11084 = vpop.f32.mrf.mxu0
        %v11085 = vadd.f32 %v11036, %v11084
        %11086 = vmatmul.bf16.gmra.mxu0 %v10896
        %v11087 = vpop.f32.mrf.mxu0
        %v11088 = vadd.f32 %v11039, %v11087
        %v11089 = vpop.f32.mrf.mxu0
        %v11090 = vadd.f32 %v11041, %v11089
        %11091 = vmatmul.bf16.gmra.mxu0 %v10898
        %v11092 = vpop.f32.mrf.mxu0
        %v11093 = vadd.f32 %v11044, %v11092
        %v11094 = vpop.f32.mrf.mxu0
        %v11095 = vadd.f32 %v11046, %v11094
        %11096 = vmatmul.bf16.gmra.mxu0 %v10900
        %v11097 = vpop.f32.mrf.mxu0
        %v11098 = vadd.f32 %v11049, %v11097
        %v11099 = vpop.f32.mrf.mxu0
        %v11100 = vadd.f32 %v11051, %v11099
        %11101 = vmatmul.bf16.gmra.mxu0 %v10902
        %v11102 = vpop.f32.mrf.mxu0
        %v11103 = vadd.f32 %v11054, %v11102
        %v11104 = vpop.f32.mrf.mxu0
        %v11105 = vadd.f32 %v11056, %v11104
        %11106 = vmatmul.bf16.gmra.mxu0 %v10904
        %v11107 = vpop.f32.mrf.mxu0
        %v11108 = vadd.f32 %v11059, %v11107
        %v11109 = vpop.f32.mrf.mxu0
        %v11110 = vadd.f32 %v11061, %v11109
        %11111 = vmatmul.bf16.gmra.mxu0 %v10906
        %v11112 = vpop.f32.mrf.mxu0
        %v11113 = vadd.f32 %v11064, %v11112
        %v11114 = vpop.f32.mrf.mxu0
        %v11115 = vadd.f32 %v11066, %v11114
        %11116 = vdwg.mxu0
        %v11133 = vunpack.c.l.b16 %v10731
        %v11134 = vunpack.c.h.b16 %v10731
        %v11135 = vunpack.c.l.b16 %v10732
        %v11136 = vunpack.c.h.b16 %v10732
        %v11137 = vunpack.c.l.b16 %v10733
        %v11138 = vunpack.c.h.b16 %v10733
        %v11139 = vunpack.c.l.b16 %v10734
        %v11140 = vunpack.c.h.b16 %v10734
        %v11141 = vunpack.c.l.b16 %v10735
        %v11142 = vunpack.c.h.b16 %v10735
        %v11143 = vunpack.c.l.b16 %v10736
        %v11144 = vunpack.c.h.b16 %v10736
        %v11145 = vunpack.c.l.b16 %v10737
        %v11146 = vunpack.c.h.b16 %v10737
        %v11147 = vunpack.c.l.b16 %v10738
        %v11148 = vunpack.c.h.b16 %v10738
        %v11149 = vunpack.c.l.b16 %v10739
        %v11150 = vunpack.c.h.b16 %v10739
        %v11151 = vunpack.c.l.b16 %v10740
        %v11152 = vunpack.c.h.b16 %v10740
        %v11153 = vunpack.c.l.b16 %v10741
        %v11154 = vunpack.c.h.b16 %v10741
        %v11155 = vunpack.c.l.b16 %v10742
        %v11156 = vunpack.c.h.b16 %v10742
        %v11157 = vunpack.c.l.b16 %v10743
        %v11158 = vunpack.c.h.b16 %v10743
        %v11159 = vunpack.c.l.b16 %v10744
        %v11160 = vunpack.c.h.b16 %v10744
        %v11161 = vunpack.c.l.b16 %v10745
        %v11162 = vunpack.c.h.b16 %v10745
        %v11163 = vunpack.c.l.b16 %v10746
        %v11164 = vunpack.c.h.b16 %v10746
        %v11165 = vpack.c.b16 %v11135, %v11133
        %v11166 = vpack.c.b16 %v11136, %v11134
        %v11167 = vpack.c.b16 %v11139, %v11137
        %v11168 = vpack.c.b16 %v11140, %v11138
        %v11169 = vpack.c.b16 %v11143, %v11141
        %v11170 = vpack.c.b16 %v11144, %v11142
        %v11171 = vpack.c.b16 %v11147, %v11145
        %v11172 = vpack.c.b16 %v11148, %v11146
        %v11173 = vpack.c.b16 %v11151, %v11149
        %v11174 = vpack.c.b16 %v11152, %v11150
        %v11175 = vpack.c.b16 %v11155, %v11153
        %v11176 = vpack.c.b16 %v11156, %v11154
        %v11177 = vpack.c.b16 %v11159, %v11157
        %v11178 = vpack.c.b16 %v11160, %v11158
        %v11179 = vpack.c.b16 %v11163, %v11161
        %v11180 = vpack.c.b16 %v11164, %v11162
        %v11229 = vunpack.c.l.b16 %v10811
        %v11230 = vunpack.c.l.b16 %v10812
        %v11231 = vunpack.c.l.b16 %v10813
        %v11232 = vunpack.c.l.b16 %v10814
        %v11233 = vunpack.c.l.b16 %v10815
        %v11234 = vunpack.c.l.b16 %v10816
        %v11235 = vunpack.c.l.b16 %v10817
        %v11236 = vunpack.c.l.b16 %v10818
        %v11237 = vunpack.c.l.b16 %v10819
        %v11238 = vunpack.c.l.b16 %v10820
        %v11239 = vunpack.c.l.b16 %v10821
        %v11240 = vunpack.c.l.b16 %v10822
        %v11241 = vunpack.c.l.b16 %v10823
        %v11242 = vunpack.c.l.b16 %v10824
        %v11243 = vunpack.c.l.b16 %v10825
        %v11244 = vunpack.c.l.b16 %v10826
        %v11245 = vunpack.c.l.b16 %v10827
        %v11246 = vunpack.c.l.b16 %v10828
        %v11247 = vunpack.c.l.b16 %v10829
        %v11248 = vunpack.c.l.b16 %v10830
        %v11249 = vunpack.c.l.b16 %v10831
        %v11250 = vunpack.c.l.b16 %v10832
        %v11251 = vunpack.c.l.b16 %v10833
        %v11252 = vunpack.c.l.b16 %v10834
        %v11253 = vunpack.c.l.b16 %v10835
        %v11254 = vunpack.c.l.b16 %v10836
        %v11255 = vunpack.c.l.b16 %v10837
        %v11256 = vunpack.c.l.b16 %v10838
        %v11257 = vunpack.c.l.b16 %v10839
        %v11258 = vunpack.c.l.b16 %v10840
        %v11259 = vunpack.c.l.b16 %v10841
        %v11260 = vunpack.c.l.b16 %v10842
        %v11261 = vpack.c.b16 %v11230, %v11229
        %v11262 = vpack.c.b16 %v11232, %v11231
        %v11263 = vpack.c.b16 %v11234, %v11233
        %v11264 = vpack.c.b16 %v11236, %v11235
        %v11265 = vpack.c.b16 %v11238, %v11237
        %v11266 = vpack.c.b16 %v11240, %v11239
        %v11267 = vpack.c.b16 %v11242, %v11241
        %v11268 = vpack.c.b16 %v11244, %v11243
        %v11269 = vpack.c.b16 %v11246, %v11245
        %v11270 = vpack.c.b16 %v11248, %v11247
        %v11271 = vpack.c.b16 %v11250, %v11249
        %v11272 = vpack.c.b16 %v11252, %v11251
        %v11273 = vpack.c.b16 %v11254, %v11253
        %v11274 = vpack.c.b16 %v11256, %v11255
        %v11275 = vpack.c.b16 %v11258, %v11257
        %v11276 = vpack.c.b16 %v11260, %v11259
        %11293 = vmatpush.bf16.msra.mxu0 %v11268
        %11294 = vmatpush.bf16.msra.mxu0 %v11267
        %11295 = vmatpush.bf16.msra.mxu0 %v11266
        %11296 = vmatpush.bf16.msra.mxu0 %v11265
        %11297 = vmatpush.bf16.msra.mxu0 %v11264
        %11298 = vmatpush.bf16.msra.mxu0 %v11263
        %11299 = vmatpush.bf16.msra.mxu0 %v11262
        %11300 = vmatpush.bf16.msra.mxu0 %v11261
        %11301 = vmatmul.bf16.gmra.mxu0 %v11165
        %v11302 = vpop.f32.mrf.mxu0
        %v11303 = vadd.f32 0.0, %v11302
        %v11304 = vpop.f32.mrf.mxu0
        %v11305 = vadd.f32 0.0, %v11304
        %11306 = vmatmul.bf16.gmra.mxu0 %v11167
        %v11307 = vpop.f32.mrf.mxu0
        %v11308 = vadd.f32 0.0, %v11307
        %v11309 = vpop.f32.mrf.mxu0
        %v11310 = vadd.f32 0.0, %v11309
        %11311 = vmatmul.bf16.gmra.mxu0 %v11169
        %v11312 = vpop.f32.mrf.mxu0
        %v11313 = vadd.f32 0.0, %v11312
        %v11314 = vpop.f32.mrf.mxu0
        %v11315 = vadd.f32 0.0, %v11314
        %11316 = vmatmul.bf16.gmra.mxu0 %v11171
        %v11317 = vpop.f32.mrf.mxu0
        %v11318 = vadd.f32 0.0, %v11317
        %v11319 = vpop.f32.mrf.mxu0
        %v11320 = vadd.f32 0.0, %v11319
        %11321 = vmatmul.bf16.gmra.mxu0 %v11173
        %v11322 = vpop.f32.mrf.mxu0
        %v11323 = vadd.f32 0.0, %v11322
        %v11324 = vpop.f32.mrf.mxu0
        %v11325 = vadd.f32 0.0, %v11324
        %11326 = vmatmul.bf16.gmra.mxu0 %v11175
        %v11327 = vpop.f32.mrf.mxu0
        %v11328 = vadd.f32 0.0, %v11327
        %v11329 = vpop.f32.mrf.mxu0
        %v11330 = vadd.f32 0.0, %v11329
        %11331 = vmatmul.bf16.gmra.mxu0 %v11177
        %v11332 = vpop.f32.mrf.mxu0
        %v11333 = vadd.f32 0.0, %v11332
        %v11334 = vpop.f32.mrf.mxu0
        %v11335 = vadd.f32 0.0, %v11334
        %11336 = vmatmul.bf16.gmra.mxu0 %v11179
        %v11337 = vpop.f32.mrf.mxu0
        %v11338 = vadd.f32 0.0, %v11337
        %v11339 = vpop.f32.mrf.mxu0
        %v11340 = vadd.f32 0.0, %v11339
        %11341 = vdwg.mxu0
        %11342 = vmatpush.bf16.msra.mxu0 %v11276
        %11343 = vmatpush.bf16.msra.mxu0 %v11275
        %11344 = vmatpush.bf16.msra.mxu0 %v11274
        %11345 = vmatpush.bf16.msra.mxu0 %v11273
        %11346 = vmatpush.bf16.msra.mxu0 %v11272
        %11347 = vmatpush.bf16.msra.mxu0 %v11271
        %11348 = vmatpush.bf16.msra.mxu0 %v11270
        %11349 = vmatpush.bf16.msra.mxu0 %v11269
        %11350 = vmatmul.bf16.gmra.mxu0 %v11166
        %v11351 = vpop.f32.mrf.mxu0
        %v11352 = vadd.f32 %v11303, %v11351
        %v11353 = vpop.f32.mrf.mxu0
        %v11354 = vadd.f32 %v11305, %v11353
        %11355 = vmatmul.bf16.gmra.mxu0 %v11168
        %v11356 = vpop.f32.mrf.mxu0
        %v11357 = vadd.f32 %v11308, %v11356
        %v11358 = vpop.f32.mrf.mxu0
        %v11359 = vadd.f32 %v11310, %v11358
        %11360 = vmatmul.bf16.gmra.mxu0 %v11170
        %v11361 = vpop.f32.mrf.mxu0
        %v11362 = vadd.f32 %v11313, %v11361
        %v11363 = vpop.f32.mrf.mxu0
        %v11364 = vadd.f32 %v11315, %v11363
        %11365 = vmatmul.bf16.gmra.mxu0 %v11172
        %v11366 = vpop.f32.mrf.mxu0
        %v11367 = vadd.f32 %v11318, %v11366
        %v11368 = vpop.f32.mrf.mxu0
        %v11369 = vadd.f32 %v11320, %v11368
        %11370 = vmatmul.bf16.gmra.mxu0 %v11174
        %v11371 = vpop.f32.mrf.mxu0
        %v11372 = vadd.f32 %v11323, %v11371
        %v11373 = vpop.f32.mrf.mxu0
        %v11374 = vadd.f32 %v11325, %v11373
        %11375 = vmatmul.bf16.gmra.mxu0 %v11176
        %v11376 = vpop.f32.mrf.mxu0
        %v11377 = vadd.f32 %v11328, %v11376
        %v11378 = vpop.f32.mrf.mxu0
        %v11379 = vadd.f32 %v11330, %v11378
        %11380 = vmatmul.bf16.gmra.mxu0 %v11178
        %v11381 = vpop.f32.mrf.mxu0
        %v11382 = vadd.f32 %v11333, %v11381
        %v11383 = vpop.f32.mrf.mxu0
        %v11384 = vadd.f32 %v11335, %v11383
        %11385 = vmatmul.bf16.gmra.mxu0 %v11180
        %v11386 = vpop.f32.mrf.mxu0
        %v11387 = vadd.f32 %v11338, %v11386
        %v11388 = vpop.f32.mrf.mxu0
        %v11389 = vadd.f32 %v11340, %v11388
        %11390 = vdwg.mxu0
        %v11391 = vpack.c.bf16 %v11080, %v11078
        %v11392 = vpack.c.bf16 %v11085, %v11083
        %v11393 = vpack.c.bf16 %v11090, %v11088
        %v11394 = vpack.c.bf16 %v11095, %v11093
        %v11395 = vpack.c.bf16 %v11100, %v11098
        %v11396 = vpack.c.bf16 %v11105, %v11103
        %v11397 = vpack.c.bf16 %v11110, %v11108
        %v11398 = vpack.c.bf16 %v11115, %v11113
        %v11399 = vld [vmem:[#allocation15] sm:$0xff]
        %v11400 = vld [vmem:[#allocation15 + $0x8] sm:$0xff]
        %v11401 = vld [vmem:[#allocation15 + $0x10] sm:$0xff]
        %v11402 = vld [vmem:[#allocation15 + $0x18] sm:$0xff]
        %v11403 = vld [vmem:[#allocation15 + $0x20] sm:$0xff]
        %v11404 = vld [vmem:[#allocation15 + $0x28] sm:$0xff]
        %v11405 = vld [vmem:[#allocation15 + $0x30] sm:$0xff]
        %v11406 = vld [vmem:[#allocation15 + $0x38] sm:$0xff]
        %v11407 = vld [vmem:[#allocation15 + $0x40] sm:$0xff]
        %v11408 = vld [vmem:[#allocation15 + $0x48] sm:$0xff]
        %v11409 = vld [vmem:[#allocation15 + $0x50] sm:$0xff]
        %v11410 = vld [vmem:[#allocation15 + $0x58] sm:$0xff]
        %v11411 = vld [vmem:[#allocation15 + $0x60] sm:$0xff]
        %v11412 = vld [vmem:[#allocation15 + $0x68] sm:$0xff]
        %v11413 = vld [vmem:[#allocation15 + $0x70] sm:$0xff]
        %v11414 = vld [vmem:[#allocation15 + $0x78] sm:$0xff]
        %v11415 = vpack.c.bf16 %v11354, %v11352
        %v11416 = vpack.c.bf16 %v11359, %v11357
        %v11417 = vpack.c.bf16 %v11364, %v11362
        %v11418 = vpack.c.bf16 %v11369, %v11367
        %v11419 = vpack.c.bf16 %v11374, %v11372
        %v11420 = vpack.c.bf16 %v11379, %v11377
        %v11421 = vpack.c.bf16 %v11384, %v11382
        %v11422 = vpack.c.bf16 %v11389, %v11387
        %s11423 = scalar_lea.vmem [#allocation15], 128
        %v11424 = vld [vmem:[%s11423] sm:$0xff]
        %v11425 = vld [vmem:[%s11423 + $0x8] sm:$0xff]
        %v11426 = vld [vmem:[%s11423 + $0x10] sm:$0xff]
        %v11427 = vld [vmem:[%s11423 + $0x18] sm:$0xff]
        %v11428 = vld [vmem:[%s11423 + $0x20] sm:$0xff]
        %v11429 = vld [vmem:[%s11423 + $0x28] sm:$0xff]
        %v11430 = vld [vmem:[%s11423 + $0x30] sm:$0xff]
        %v11431 = vld [vmem:[%s11423 + $0x38] sm:$0xff]
        %v11432 = vld [vmem:[%s11423 + $0x40] sm:$0xff]
        %v11433 = vld [vmem:[%s11423 + $0x48] sm:$0xff]
        %v11434 = vld [vmem:[%s11423 + $0x50] sm:$0xff]
        %v11435 = vld [vmem:[%s11423 + $0x58] sm:$0xff]
        %v11436 = vld [vmem:[%s11423 + $0x60] sm:$0xff]
        %v11437 = vld [vmem:[%s11423 + $0x68] sm:$0xff]
        %v11438 = vld [vmem:[%s11423 + $0x70] sm:$0xff]
        %v11439 = vld [vmem:[%s11423 + $0x78] sm:$0xff]
        %v11456 = vunpack.c.l.b16 %v11424
        %v11457 = vunpack.c.h.b16 %v11424
        %v11458 = vunpack.c.l.b16 %v11425
        %v11459 = vunpack.c.h.b16 %v11425
        %v11460 = vunpack.c.l.b16 %v11426
        %v11461 = vunpack.c.h.b16 %v11426
        %v11462 = vunpack.c.l.b16 %v11427
        %v11463 = vunpack.c.h.b16 %v11427
        %v11464 = vunpack.c.l.b16 %v11428
        %v11465 = vunpack.c.h.b16 %v11428
        %v11466 = vunpack.c.l.b16 %v11429
        %v11467 = vunpack.c.h.b16 %v11429
        %v11468 = vunpack.c.l.b16 %v11430
        %v11469 = vunpack.c.h.b16 %v11430
        %v11470 = vunpack.c.l.b16 %v11431
        %v11471 = vunpack.c.h.b16 %v11431
        %v11472 = vunpack.c.l.b16 %v11432
        %v11473 = vunpack.c.h.b16 %v11432
        %v11474 = vunpack.c.l.b16 %v11433
        %v11475 = vunpack.c.h.b16 %v11433
        %v11476 = vunpack.c.l.b16 %v11434
        %v11477 = vunpack.c.h.b16 %v11434
        %v11478 = vunpack.c.l.b16 %v11435
        %v11479 = vunpack.c.h.b16 %v11435
        %v11480 = vunpack.c.l.b16 %v11436
        %v11481 = vunpack.c.h.b16 %v11436
        %v11482 = vunpack.c.l.b16 %v11437
        %v11483 = vunpack.c.h.b16 %v11437
        %v11484 = vunpack.c.l.b16 %v11438
        %v11485 = vunpack.c.h.b16 %v11438
        %v11486 = vunpack.c.l.b16 %v11439
        %v11487 = vunpack.c.h.b16 %v11439
        %v11488 = vpack.c.b16 %v11458, %v11456
        %v11489 = vpack.c.b16 %v11459, %v11457
        %v11490 = vpack.c.b16 %v11462, %v11460
        %v11491 = vpack.c.b16 %v11463, %v11461
        %v11492 = vpack.c.b16 %v11466, %v11464
        %v11493 = vpack.c.b16 %v11467, %v11465
        %v11494 = vpack.c.b16 %v11470, %v11468
        %v11495 = vpack.c.b16 %v11471, %v11469
        %v11496 = vpack.c.b16 %v11474, %v11472
        %v11497 = vpack.c.b16 %v11475, %v11473
        %v11498 = vpack.c.b16 %v11478, %v11476
        %v11499 = vpack.c.b16 %v11479, %v11477
        %v11500 = vpack.c.b16 %v11482, %v11480
        %v11501 = vpack.c.b16 %v11483, %v11481
        %v11502 = vpack.c.b16 %v11486, %v11484
        %v11503 = vpack.c.b16 %v11487, %v11485
        %11520 = vmatpush.bf16.msra.mxu0 %v11502
        %11521 = vmatpush.bf16.msra.mxu0 %v11500
        %11522 = vmatpush.bf16.msra.mxu0 %v11498
        %11523 = vmatpush.bf16.msra.mxu0 %v11496
        %11524 = vmatpush.bf16.msra.mxu0 %v11494
        %11525 = vmatpush.bf16.msra.mxu0 %v11492
        %11526 = vmatpush.bf16.msra.mxu0 %v11490
        %11527 = vmatpush.bf16.msra.mxu0 %v11488
        %11528 = vmatmul.bf16.gmra.mxu0 %v11415
        %v11529 = vpop.f32.mrf.mxu0
        %v11530 = vadd.f32 0.0, %v11529
        %v11531 = vpop.f32.mrf.mxu0
        %v11532 = vadd.f32 0.0, %v11531
        %11533 = vmatmul.bf16.gmra.mxu0 %v11416
        %v11534 = vpop.f32.mrf.mxu0
        %v11535 = vadd.f32 0.0, %v11534
        %v11536 = vpop.f32.mrf.mxu0
        %v11537 = vadd.f32 0.0, %v11536
        %11538 = vmatmul.bf16.gmra.mxu0 %v11417
        %v11539 = vpop.f32.mrf.mxu0
        %v11540 = vadd.f32 0.0, %v11539
        %v11541 = vpop.f32.mrf.mxu0
        %v11542 = vadd.f32 0.0, %v11541
        %11543 = vmatmul.bf16.gmra.mxu0 %v11418
        %v11544 = vpop.f32.mrf.mxu0
        %v11545 = vadd.f32 0.0, %v11544
        %v11546 = vpop.f32.mrf.mxu0
        %v11547 = vadd.f32 0.0, %v11546
        %11548 = vmatmul.bf16.gmra.mxu0 %v11419
        %v11549 = vpop.f32.mrf.mxu0
        %v11550 = vadd.f32 0.0, %v11549
        %v11551 = vpop.f32.mrf.mxu0
        %v11552 = vadd.f32 0.0, %v11551
        %11553 = vmatmul.bf16.gmra.mxu0 %v11420
        %v11554 = vpop.f32.mrf.mxu0
        %v11555 = vadd.f32 0.0, %v11554
        %v11556 = vpop.f32.mrf.mxu0
        %v11557 = vadd.f32 0.0, %v11556
        %11558 = vmatmul.bf16.gmra.mxu0 %v11421
        %v11559 = vpop.f32.mrf.mxu0
        %v11560 = vadd.f32 0.0, %v11559
        %v11561 = vpop.f32.mrf.mxu0
        %v11562 = vadd.f32 0.0, %v11561
        %11563 = vmatmul.bf16.gmra.mxu0 %v11422
        %v11564 = vpop.f32.mrf.mxu0
        %v11565 = vadd.f32 0.0, %v11564
        %v11566 = vpop.f32.mrf.mxu0
        %v11567 = vadd.f32 0.0, %v11566
        %11568 = vdwg.mxu0
        %11569 = vmatpush.bf16.msra.mxu0 %v11503
        %11570 = vmatpush.bf16.msra.mxu0 %v11501
        %11571 = vmatpush.bf16.msra.mxu0 %v11499
        %11572 = vmatpush.bf16.msra.mxu0 %v11497
        %11573 = vmatpush.bf16.msra.mxu0 %v11495
        %11574 = vmatpush.bf16.msra.mxu0 %v11493
        %11575 = vmatpush.bf16.msra.mxu0 %v11491
        %11576 = vmatpush.bf16.msra.mxu0 %v11489
        %11577 = vmatmul.bf16.gmra.mxu0 %v11415
        %v11578 = vpop.f32.mrf.mxu0
        %v11579 = vadd.f32 0.0, %v11578
        %v11580 = vpop.f32.mrf.mxu0
        %v11581 = vadd.f32 0.0, %v11580
        %11582 = vmatmul.bf16.gmra.mxu0 %v11416
        %v11583 = vpop.f32.mrf.mxu0
        %v11584 = vadd.f32 0.0, %v11583
        %v11585 = vpop.f32.mrf.mxu0
        %v11586 = vadd.f32 0.0, %v11585
        %11587 = vmatmul.bf16.gmra.mxu0 %v11417
        %v11588 = vpop.f32.mrf.mxu0
        %v11589 = vadd.f32 0.0, %v11588
        %v11590 = vpop.f32.mrf.mxu0
        %v11591 = vadd.f32 0.0, %v11590
        %11592 = vmatmul.bf16.gmra.mxu0 %v11418
        %v11593 = vpop.f32.mrf.mxu0
        %v11594 = vadd.f32 0.0, %v11593
        %v11595 = vpop.f32.mrf.mxu0
        %v11596 = vadd.f32 0.0, %v11595
        %11597 = vmatmul.bf16.gmra.mxu0 %v11419
        %v11598 = vpop.f32.mrf.mxu0
        %v11599 = vadd.f32 0.0, %v11598
        %v11600 = vpop.f32.mrf.mxu0
        %v11601 = vadd.f32 0.0, %v11600
        %11602 = vmatmul.bf16.gmra.mxu0 %v11420
        %v11603 = vpop.f32.mrf.mxu0
        %v11604 = vadd.f32 0.0, %v11603
        %v11605 = vpop.f32.mrf.mxu0
        %v11606 = vadd.f32 0.0, %v11605
        %11607 = vmatmul.bf16.gmra.mxu0 %v11421
        %v11608 = vpop.f32.mrf.mxu0
        %v11609 = vadd.f32 0.0, %v11608
        %v11610 = vpop.f32.mrf.mxu0
        %v11611 = vadd.f32 0.0, %v11610
        %11612 = vmatmul.bf16.gmra.mxu0 %v11422
        %v11613 = vpop.f32.mrf.mxu0
        %v11614 = vadd.f32 0.0, %v11613
        %v11615 = vpop.f32.mrf.mxu0
        %v11616 = vadd.f32 0.0, %v11615
        %11617 = vdwg.mxu0
        %v11634 = vunpack.c.l.b16 %v11399
        %v11635 = vunpack.c.h.b16 %v11399
        %v11636 = vunpack.c.l.b16 %v11400
        %v11637 = vunpack.c.h.b16 %v11400
        %v11638 = vunpack.c.l.b16 %v11401
        %v11639 = vunpack.c.h.b16 %v11401
        %v11640 = vunpack.c.l.b16 %v11402
        %v11641 = vunpack.c.h.b16 %v11402
        %v11642 = vunpack.c.l.b16 %v11403
        %v11643 = vunpack.c.h.b16 %v11403
        %v11644 = vunpack.c.l.b16 %v11404
        %v11645 = vunpack.c.h.b16 %v11404
        %v11646 = vunpack.c.l.b16 %v11405
        %v11647 = vunpack.c.h.b16 %v11405
        %v11648 = vunpack.c.l.b16 %v11406
        %v11649 = vunpack.c.h.b16 %v11406
        %v11650 = vunpack.c.l.b16 %v11407
        %v11651 = vunpack.c.h.b16 %v11407
        %v11652 = vunpack.c.l.b16 %v11408
        %v11653 = vunpack.c.h.b16 %v11408
        %v11654 = vunpack.c.l.b16 %v11409
        %v11655 = vunpack.c.h.b16 %v11409
        %v11656 = vunpack.c.l.b16 %v11410
        %v11657 = vunpack.c.h.b16 %v11410
        %v11658 = vunpack.c.l.b16 %v11411
        %v11659 = vunpack.c.h.b16 %v11411
        %v11660 = vunpack.c.l.b16 %v11412
        %v11661 = vunpack.c.h.b16 %v11412
        %v11662 = vunpack.c.l.b16 %v11413
        %v11663 = vunpack.c.h.b16 %v11413
        %v11664 = vunpack.c.l.b16 %v11414
        %v11665 = vunpack.c.h.b16 %v11414
        %v11666 = vpack.c.b16 %v11636, %v11634
        %v11667 = vpack.c.b16 %v11637, %v11635
        %v11668 = vpack.c.b16 %v11640, %v11638
        %v11669 = vpack.c.b16 %v11641, %v11639
        %v11670 = vpack.c.b16 %v11644, %v11642
        %v11671 = vpack.c.b16 %v11645, %v11643
        %v11672 = vpack.c.b16 %v11648, %v11646
        %v11673 = vpack.c.b16 %v11649, %v11647
        %v11674 = vpack.c.b16 %v11652, %v11650
        %v11675 = vpack.c.b16 %v11653, %v11651
        %v11676 = vpack.c.b16 %v11656, %v11654
        %v11677 = vpack.c.b16 %v11657, %v11655
        %v11678 = vpack.c.b16 %v11660, %v11658
        %v11679 = vpack.c.b16 %v11661, %v11659
        %v11680 = vpack.c.b16 %v11664, %v11662
        %v11681 = vpack.c.b16 %v11665, %v11663
        %11698 = vmatpush.bf16.msra.mxu0 %v11680
        %11699 = vmatpush.bf16.msra.mxu0 %v11678
        %11700 = vmatpush.bf16.msra.mxu0 %v11676
        %11701 = vmatpush.bf16.msra.mxu0 %v11674
        %11702 = vmatpush.bf16.msra.mxu0 %v11672
        %11703 = vmatpush.bf16.msra.mxu0 %v11670
        %11704 = vmatpush.bf16.msra.mxu0 %v11668
        %11705 = vmatpush.bf16.msra.mxu0 %v11666
        %11706 = vmatmul.bf16.gmra.mxu0 %v11391
        %v11707 = vpop.f32.mrf.mxu0
        %v11708 = vadd.f32 %v11530, %v11707
        %v11709 = vpop.f32.mrf.mxu0
        %v11710 = vadd.f32 %v11532, %v11709
        %11711 = vmatmul.bf16.gmra.mxu0 %v11392
        %v11712 = vpop.f32.mrf.mxu0
        %v11713 = vadd.f32 %v11535, %v11712
        %v11714 = vpop.f32.mrf.mxu0
        %v11715 = vadd.f32 %v11537, %v11714
        %11716 = vmatmul.bf16.gmra.mxu0 %v11393
        %v11717 = vpop.f32.mrf.mxu0
        %v11718 = vadd.f32 %v11540, %v11717
        %v11719 = vpop.f32.mrf.mxu0
        %v11720 = vadd.f32 %v11542, %v11719
        %11721 = vmatmul.bf16.gmra.mxu0 %v11394
        %v11722 = vpop.f32.mrf.mxu0
        %v11723 = vadd.f32 %v11545, %v11722
        %v11724 = vpop.f32.mrf.mxu0
        %v11725 = vadd.f32 %v11547, %v11724
        %11726 = vmatmul.bf16.gmra.mxu0 %v11395
        %v11727 = vpop.f32.mrf.mxu0
        %v11728 = vadd.f32 %v11550, %v11727
        %v11729 = vpop.f32.mrf.mxu0
        %v11730 = vadd.f32 %v11552, %v11729
        %11731 = vmatmul.bf16.gmra.mxu0 %v11396
        %v11732 = vpop.f32.mrf.mxu0
        %v11733 = vadd.f32 %v11555, %v11732
        %v11734 = vpop.f32.mrf.mxu0
        %v11735 = vadd.f32 %v11557, %v11734
        %11736 = vmatmul.bf16.gmra.mxu0 %v11397
        %v11737 = vpop.f32.mrf.mxu0
        %v11738 = vadd.f32 %v11560, %v11737
        %v11739 = vpop.f32.mrf.mxu0
        %v11740 = vadd.f32 %v11562, %v11739
        %11741 = vmatmul.bf16.gmra.mxu0 %v11398
        %v11742 = vpop.f32.mrf.mxu0
        %v11743 = vadd.f32 %v11565, %v11742
        %v11744 = vpop.f32.mrf.mxu0
        %v11745 = vadd.f32 %v11567, %v11744
        %11746 = vdwg.mxu0
        %11747 = vmatpush.bf16.msra.mxu0 %v11681
        %11748 = vmatpush.bf16.msra.mxu0 %v11679
        %11749 = vmatpush.bf16.msra.mxu0 %v11677
        %11750 = vmatpush.bf16.msra.mxu0 %v11675
        %11751 = vmatpush.bf16.msra.mxu0 %v11673
        %11752 = vmatpush.bf16.msra.mxu0 %v11671
        %11753 = vmatpush.bf16.msra.mxu0 %v11669
        %11754 = vmatpush.bf16.msra.mxu0 %v11667
        %11755 = vmatmul.bf16.gmra.mxu0 %v11391
        %v11756 = vpop.f32.mrf.mxu0
        %v11757 = vadd.f32 %v11579, %v11756
        %v11758 = vpop.f32.mrf.mxu0
        %v11759 = vadd.f32 %v11581, %v11758
        %11760 = vmatmul.bf16.gmra.mxu0 %v11392
        %v11761 = vpop.f32.mrf.mxu0
        %v11762 = vadd.f32 %v11584, %v11761
        %v11763 = vpop.f32.mrf.mxu0
        %v11764 = vadd.f32 %v11586, %v11763
        %11765 = vmatmul.bf16.gmra.mxu0 %v11393
        %v11766 = vpop.f32.mrf.mxu0
        %v11767 = vadd.f32 %v11589, %v11766
        %v11768 = vpop.f32.mrf.mxu0
        %v11769 = vadd.f32 %v11591, %v11768
        %11770 = vmatmul.bf16.gmra.mxu0 %v11394
        %v11771 = vpop.f32.mrf.mxu0
        %v11772 = vadd.f32 %v11594, %v11771
        %v11773 = vpop.f32.mrf.mxu0
        %v11774 = vadd.f32 %v11596, %v11773
        %11775 = vmatmul.bf16.gmra.mxu0 %v11395
        %v11776 = vpop.f32.mrf.mxu0
        %v11777 = vadd.f32 %v11599, %v11776
        %v11778 = vpop.f32.mrf.mxu0
        %v11779 = vadd.f32 %v11601, %v11778
        %11780 = vmatmul.bf16.gmra.mxu0 %v11396
        %v11781 = vpop.f32.mrf.mxu0
        %v11782 = vadd.f32 %v11604, %v11781
        %v11783 = vpop.f32.mrf.mxu0
        %v11784 = vadd.f32 %v11606, %v11783
        %11785 = vmatmul.bf16.gmra.mxu0 %v11397
        %v11786 = vpop.f32.mrf.mxu0
        %v11787 = vadd.f32 %v11609, %v11786
        %v11788 = vpop.f32.mrf.mxu0
        %v11789 = vadd.f32 %v11611, %v11788
        %11790 = vmatmul.bf16.gmra.mxu0 %v11398
        %v11791 = vpop.f32.mrf.mxu0
        %v11792 = vadd.f32 %v11614, %v11791
        %v11793 = vpop.f32.mrf.mxu0
        %v11794 = vadd.f32 %v11616, %v11793
        %11795 = vdwg.mxu0
        %v11796 = vld [vmem:[%s9] sm:$0x3]
        %v11798 = vperm.slane %v11796, 0
        %v11799 = vperm.slane %v11796, 1
        %v11802 = vadd.f32 %v11708, %v11798
        %v11803 = vadd.f32 %v11757, %v11799
        %v11804 = vadd.f32 %v11710, %v11798
        %v11805 = vadd.f32 %v11759, %v11799
        %v11806 = vadd.f32 %v11713, %v11798
        %v11807 = vadd.f32 %v11762, %v11799
        %v11808 = vadd.f32 %v11715, %v11798
        %v11809 = vadd.f32 %v11764, %v11799
        %v11810 = vadd.f32 %v11718, %v11798
        %v11811 = vadd.f32 %v11767, %v11799
        %v11812 = vadd.f32 %v11720, %v11798
        %v11813 = vadd.f32 %v11769, %v11799
        %v11814 = vadd.f32 %v11723, %v11798
        %v11815 = vadd.f32 %v11772, %v11799
        %v11816 = vadd.f32 %v11725, %v11798
        %v11817 = vadd.f32 %v11774, %v11799
        %v11818 = vadd.f32 %v11728, %v11798
        %v11819 = vadd.f32 %v11777, %v11799
        %v11820 = vadd.f32 %v11730, %v11798
        %v11821 = vadd.f32 %v11779, %v11799
        %v11822 = vadd.f32 %v11733, %v11798
        %v11823 = vadd.f32 %v11782, %v11799
        %v11824 = vadd.f32 %v11735, %v11798
        %v11825 = vadd.f32 %v11784, %v11799
        %v11826 = vadd.f32 %v11738, %v11798
        %v11827 = vadd.f32 %v11787, %v11799
        %v11828 = vadd.f32 %v11740, %v11798
        %v11829 = vadd.f32 %v11789, %v11799
        %v11830 = vadd.f32 %v11743, %v11798
        %v11831 = vadd.f32 %v11792, %v11799
        %v11832 = vadd.f32 %v11745, %v11798
        %v11833 = vadd.f32 %v11794, %v11799
        %v11834 = vadd.f32 %v11802, %v7718
        %v11835 = vadd.f32 %v11803, %v7719
        %v11836 = vadd.f32 %v11804, %v7720
        %v11837 = vadd.f32 %v11805, %v7721
        %v11838 = vadd.f32 %v11806, %v7722
        %v11839 = vadd.f32 %v11807, %v7723
        %v11840 = vadd.f32 %v11808, %v7724
        %v11841 = vadd.f32 %v11809, %v7725
        %v11842 = vadd.f32 %v11810, %v7726
        %v11843 = vadd.f32 %v11811, %v7727
        %v11844 = vadd.f32 %v11812, %v7728
        %v11845 = vadd.f32 %v11813, %v7729
        %v11846 = vadd.f32 %v11814, %v7730
        %v11847 = vadd.f32 %v11815, %v7731
        %v11848 = vadd.f32 %v11816, %v7732
        %v11849 = vadd.f32 %v11817, %v7733
        %v11850 = vadd.f32 %v11818, %v7734
        %v11851 = vadd.f32 %v11819, %v7735
        %v11852 = vadd.f32 %v11820, %v7736
        %v11853 = vadd.f32 %v11821, %v7737
        %v11854 = vadd.f32 %v11822, %v7738
        %v11855 = vadd.f32 %v11823, %v7739
        %v11856 = vadd.f32 %v11824, %v7740
        %v11857 = vadd.f32 %v11825, %v7741
        %v11858 = vadd.f32 %v11826, %v7742
        %v11859 = vadd.f32 %v11827, %v7743
        %v11860 = vadd.f32 %v11828, %v7744
        %v11861 = vadd.f32 %v11829, %v7745
        %v11862 = vadd.f32 %v11830, %v7746
        %v11863 = vadd.f32 %v11831, %v7747
        %v11864 = vadd.f32 %v11832, %v7748
        %v11865 = vadd.f32 %v11833, %v7749
        %v11866 = vadd.f32 %v11834, %v11835
        %11867 = vadd.xlane.f32.xlu0 %v11866
        %v11868 = vpop.xlane.xlu0 %11867
        %v11869 = vadd.f32 %v11836, %v11837
        %11870 = vadd.xlane.f32.xlu0 %v11869
        %v11871 = vpop.xlane.xlu0 %11870
        %v11872 = vadd.f32 %v11838, %v11839
        %11873 = vadd.xlane.f32.xlu0 %v11872
        %v11874 = vpop.xlane.xlu0 %11873
        %v11875 = vadd.f32 %v11840, %v11841
        %11876 = vadd.xlane.f32.xlu0 %v11875
        %v11877 = vpop.xlane.xlu0 %11876
        %v11878 = vadd.f32 %v11842, %v11843
        %11879 = vadd.xlane.f32.xlu0 %v11878
        %v11880 = vpop.xlane.xlu0 %11879
        %v11881 = vadd.f32 %v11844, %v11845
        %11882 = vadd.xlane.f32.xlu0 %v11881
        %v11883 = vpop.xlane.xlu0 %11882
        %v11884 = vadd.f32 %v11846, %v11847
        %11885 = vadd.xlane.f32.xlu0 %v11884
        %v11886 = vpop.xlane.xlu0 %11885
        %v11887 = vadd.f32 %v11848, %v11849
        %11888 = vadd.xlane.f32.xlu0 %v11887
        %v11889 = vpop.xlane.xlu0 %11888
        %v11890 = vadd.f32 %v11850, %v11851
        %11891 = vadd.xlane.f32.xlu0 %v11890
        %v11892 = vpop.xlane.xlu0 %11891
        %v11893 = vadd.f32 %v11852, %v11853
        %11894 = vadd.xlane.f32.xlu0 %v11893
        %v11895 = vpop.xlane.xlu0 %11894
        %v11896 = vadd.f32 %v11854, %v11855
        %11897 = vadd.xlane.f32.xlu0 %v11896
        %v11898 = vpop.xlane.xlu0 %11897
        %v11899 = vadd.f32 %v11856, %v11857
        %11900 = vadd.xlane.f32.xlu0 %v11899
        %v11901 = vpop.xlane.xlu0 %11900
        %v11902 = vadd.f32 %v11858, %v11859
        %11903 = vadd.xlane.f32.xlu0 %v11902
        %v11904 = vpop.xlane.xlu0 %11903
        %v11905 = vadd.f32 %v11860, %v11861
        %11906 = vadd.xlane.f32.xlu0 %v11905
        %v11907 = vpop.xlane.xlu0 %11906
        %v11908 = vadd.f32 %v11862, %v11863
        %11909 = vadd.xlane.f32.xlu0 %v11908
        %v11910 = vpop.xlane.xlu0 %11909
        %v11911 = vadd.f32 %v11864, %v11865
        %11912 = vadd.xlane.f32.xlu0 %v11911
        %v11913 = vpop.xlane.xlu0 %11912
        %v11914 = vrcp.pop 256.0
        %v11915 = vmul.f32 256.0, %v11914
        %v11916 = vsub.f32 1.0, %v11915
        %v11917 = vmul.f32 %v11914, %v11916
        %v11918 = vadd.f32 %v11914, %v11917
        %vm11919 = vweird.f32 %v11914
        %v11920 = vsel %vm11919, %v11914, %v11918
        %v11921 = vmul.f32 %v11868, %v11920
        %v11922 = vmul.f32 %v11871, %v11920
        %v11923 = vmul.f32 %v11874, %v11920
        %v11924 = vmul.f32 %v11877, %v11920
        %v11925 = vmul.f32 %v11880, %v11920
        %v11926 = vmul.f32 %v11883, %v11920
        %v11927 = vmul.f32 %v11886, %v11920
        %v11928 = vmul.f32 %v11889, %v11920
        %v11929 = vmul.f32 %v11892, %v11920
        %v11930 = vmul.f32 %v11895, %v11920
        %v11931 = vmul.f32 %v11898, %v11920
        %v11932 = vmul.f32 %v11901, %v11920
        %v11933 = vmul.f32 %v11904, %v11920
        %v11934 = vmul.f32 %v11907, %v11920
        %v11935 = vmul.f32 %v11910, %v11920
        %v11936 = vmul.f32 %v11913, %v11920
        %v11937 = vsub.f32 %v11834, %v11921
        %v11938 = vsub.f32 %v11835, %v11921
        %v11939 = vsub.f32 %v11836, %v11922
        %v11940 = vsub.f32 %v11837, %v11922
        %v11941 = vsub.f32 %v11838, %v11923
        %v11942 = vsub.f32 %v11839, %v11923
        %v11943 = vsub.f32 %v11840, %v11924
        %v11944 = vsub.f32 %v11841, %v11924
        %v11945 = vsub.f32 %v11842, %v11925
        %v11946 = vsub.f32 %v11843, %v11925
        %v11947 = vsub.f32 %v11844, %v11926
        %v11948 = vsub.f32 %v11845, %v11926
        %v11949 = vsub.f32 %v11846, %v11927
        %v11950 = vsub.f32 %v11847, %v11927
        %v11951 = vsub.f32 %v11848, %v11928
        %v11952 = vsub.f32 %v11849, %v11928
        %v11953 = vsub.f32 %v11850, %v11929
        %v11954 = vsub.f32 %v11851, %v11929
        %v11955 = vsub.f32 %v11852, %v11930
        %v11956 = vsub.f32 %v11853, %v11930
        %v11957 = vsub.f32 %v11854, %v11931
        %v11958 = vsub.f32 %v11855, %v11931
        %v11959 = vsub.f32 %v11856, %v11932
        %v11960 = vsub.f32 %v11857, %v11932
        %v11961 = vsub.f32 %v11858, %v11933
        %v11962 = vsub.f32 %v11859, %v11933
        %v11963 = vsub.f32 %v11860, %v11934
        %v11964 = vsub.f32 %v11861, %v11934
        %v11965 = vsub.f32 %v11862, %v11935
        %v11966 = vsub.f32 %v11863, %v11935
        %v11967 = vsub.f32 %v11864, %v11936
        %v11968 = vsub.f32 %v11865, %v11936
        %v11969 = vmul.f32 %v11937, %v11937
        %v11970 = vmul.f32 %v11938, %v11938
        %v11971 = vmul.f32 %v11939, %v11939
        %v11972 = vmul.f32 %v11940, %v11940
        %v11973 = vmul.f32 %v11941, %v11941
        %v11974 = vmul.f32 %v11942, %v11942
        %v11975 = vmul.f32 %v11943, %v11943
        %v11976 = vmul.f32 %v11944, %v11944
        %v11977 = vmul.f32 %v11945, %v11945
        %v11978 = vmul.f32 %v11946, %v11946
        %v11979 = vmul.f32 %v11947, %v11947
        %v11980 = vmul.f32 %v11948, %v11948
        %v11981 = vmul.f32 %v11949, %v11949
        %v11982 = vmul.f32 %v11950, %v11950
        %v11983 = vmul.f32 %v11951, %v11951
        %v11984 = vmul.f32 %v11952, %v11952
        %v11985 = vmul.f32 %v11953, %v11953
        %v11986 = vmul.f32 %v11954, %v11954
        %v11987 = vmul.f32 %v11955, %v11955
        %v11988 = vmul.f32 %v11956, %v11956
        %v11989 = vmul.f32 %v11957, %v11957
        %v11990 = vmul.f32 %v11958, %v11958
        %v11991 = vmul.f32 %v11959, %v11959
        %v11992 = vmul.f32 %v11960, %v11960
        %v11993 = vmul.f32 %v11961, %v11961
        %v11994 = vmul.f32 %v11962, %v11962
        %v11995 = vmul.f32 %v11963, %v11963
        %v11996 = vmul.f32 %v11964, %v11964
        %v11997 = vmul.f32 %v11965, %v11965
        %v11998 = vmul.f32 %v11966, %v11966
        %v11999 = vmul.f32 %v11967, %v11967
        %v12000 = vmul.f32 %v11968, %v11968
        %v12001 = vadd.f32 %v11969, %v11970
        %12002 = vadd.xlane.f32.xlu0 %v12001
        %v12003 = vpop.xlane.xlu0 %12002
        %v12004 = vadd.f32 %v11971, %v11972
        %12005 = vadd.xlane.f32.xlu0 %v12004
        %v12006 = vpop.xlane.xlu0 %12005
        %v12007 = vadd.f32 %v11973, %v11974
        %12008 = vadd.xlane.f32.xlu0 %v12007
        %v12009 = vpop.xlane.xlu0 %12008
        %v12010 = vadd.f32 %v11975, %v11976
        %12011 = vadd.xlane.f32.xlu0 %v12010
        %v12012 = vpop.xlane.xlu0 %12011
        %v12013 = vadd.f32 %v11977, %v11978
        %12014 = vadd.xlane.f32.xlu0 %v12013
        %v12015 = vpop.xlane.xlu0 %12014
        %v12016 = vadd.f32 %v11979, %v11980
        %12017 = vadd.xlane.f32.xlu0 %v12016
        %v12018 = vpop.xlane.xlu0 %12017
        %v12019 = vadd.f32 %v11981, %v11982
        %12020 = vadd.xlane.f32.xlu0 %v12019
        %v12021 = vpop.xlane.xlu0 %12020
        %v12022 = vadd.f32 %v11983, %v11984
        %12023 = vadd.xlane.f32.xlu0 %v12022
        %v12024 = vpop.xlane.xlu0 %12023
        %v12025 = vadd.f32 %v11985, %v11986
        %12026 = vadd.xlane.f32.xlu0 %v12025
        %v12027 = vpop.xlane.xlu0 %12026
        %v12028 = vadd.f32 %v11987, %v11988
        %12029 = vadd.xlane.f32.xlu0 %v12028
        %v12030 = vpop.xlane.xlu0 %12029
        %v12031 = vadd.f32 %v11989, %v11990
        %12032 = vadd.xlane.f32.xlu0 %v12031
        %v12033 = vpop.xlane.xlu0 %12032
        %v12034 = vadd.f32 %v11991, %v11992
        %12035 = vadd.xlane.f32.xlu0 %v12034
        %v12036 = vpop.xlane.xlu0 %12035
        %v12037 = vadd.f32 %v11993, %v11994
        %12038 = vadd.xlane.f32.xlu0 %v12037
        %v12039 = vpop.xlane.xlu0 %12038
        %v12040 = vadd.f32 %v11995, %v11996
        %12041 = vadd.xlane.f32.xlu0 %v12040
        %v12042 = vpop.xlane.xlu0 %12041
        %v12043 = vadd.f32 %v11997, %v11998
        %12044 = vadd.xlane.f32.xlu0 %v12043
        %v12045 = vpop.xlane.xlu0 %12044
        %v12046 = vadd.f32 %v11999, %v12000
        %12047 = vadd.xlane.f32.xlu0 %v12046
        %v12048 = vpop.xlane.xlu0 %12047
        %v12049 = vmul.f32 %v12003, %v11920
        %v12050 = vmul.f32 %v12006, %v11920
        %v12051 = vmul.f32 %v12009, %v11920
        %v12052 = vmul.f32 %v12012, %v11920
        %v12053 = vmul.f32 %v12015, %v11920
        %v12054 = vmul.f32 %v12018, %v11920
        %v12055 = vmul.f32 %v12021, %v11920
        %v12056 = vmul.f32 %v12024, %v11920
        %v12057 = vmul.f32 %v12027, %v11920
        %v12058 = vmul.f32 %v12030, %v11920
        %v12059 = vmul.f32 %v12033, %v11920
        %v12060 = vmul.f32 %v12036, %v11920
        %v12061 = vmul.f32 %v12039, %v11920
        %v12062 = vmul.f32 %v12042, %v11920
        %v12063 = vmul.f32 %v12045, %v11920
        %v12064 = vmul.f32 %v12048, %v11920
        %v12065 = vadd.f32 %v12049, 1e-12
        %v12066 = vadd.f32 %v12050, 1e-12
        %v12067 = vadd.f32 %v12051, 1e-12
        %v12068 = vadd.f32 %v12052, 1e-12
        %v12069 = vadd.f32 %v12053, 1e-12
        %v12070 = vadd.f32 %v12054, 1e-12
        %v12071 = vadd.f32 %v12055, 1e-12
        %v12072 = vadd.f32 %v12056, 1e-12
        %v12073 = vadd.f32 %v12057, 1e-12
        %v12074 = vadd.f32 %v12058, 1e-12
        %v12075 = vadd.f32 %v12059, 1e-12
        %v12076 = vadd.f32 %v12060, 1e-12
        %v12077 = vadd.f32 %v12061, 1e-12
        %v12078 = vadd.f32 %v12062, 1e-12
        %v12079 = vadd.f32 %v12063, 1e-12
        %v12080 = vadd.f32 %v12064, 1e-12
        %v12081 = vrsqrt.pop %v12065
        %v12082 = vmul.f32 %v12081, %v12065
        %v12083 = vmul.f32 %v12082, %v12081
        %v12084 = vmul.f32 0.5, %v12083
        %v12085 = vsub.f32 1.5, %v12084
        %v12086 = vmul.f32 %v12081, %v12085
        %vm12087 = vweird.f32 %v12065
        %vm12088 = vweird.f32 %v12081
        %vm12089 = vmor %vm12087, %vm12088
        %v12090 = vsel %vm12089, %v12081, %v12086
        %v12091 = vrsqrt.pop %v12066
        %v12092 = vmul.f32 %v12091, %v12066
        %v12093 = vmul.f32 %v12092, %v12091
        %v12094 = vmul.f32 0.5, %v12093
        %v12095 = vsub.f32 1.5, %v12094
        %v12096 = vmul.f32 %v12091, %v12095
        %vm12097 = vweird.f32 %v12066
        %vm12098 = vweird.f32 %v12091
        %vm12099 = vmor %vm12097, %vm12098
        %v12100 = vsel %vm12099, %v12091, %v12096
        %v12101 = vrsqrt.pop %v12067
        %v12102 = vmul.f32 %v12101, %v12067
        %v12103 = vmul.f32 %v12102, %v12101
        %v12104 = vmul.f32 0.5, %v12103
        %v12105 = vsub.f32 1.5, %v12104
        %v12106 = vmul.f32 %v12101, %v12105
        %vm12107 = vweird.f32 %v12067
        %vm12108 = vweird.f32 %v12101
        %vm12109 = vmor %vm12107, %vm12108
        %v12110 = vsel %vm12109, %v12101, %v12106
        %v12111 = vrsqrt.pop %v12068
        %v12112 = vmul.f32 %v12111, %v12068
        %v12113 = vmul.f32 %v12112, %v12111
        %v12114 = vmul.f32 0.5, %v12113
        %v12115 = vsub.f32 1.5, %v12114
        %v12116 = vmul.f32 %v12111, %v12115
        %vm12117 = vweird.f32 %v12068
        %vm12118 = vweird.f32 %v12111
        %vm12119 = vmor %vm12117, %vm12118
        %v12120 = vsel %vm12119, %v12111, %v12116
        %v12121 = vrsqrt.pop %v12069
        %v12122 = vmul.f32 %v12121, %v12069
        %v12123 = vmul.f32 %v12122, %v12121
        %v12124 = vmul.f32 0.5, %v12123
        %v12125 = vsub.f32 1.5, %v12124
        %v12126 = vmul.f32 %v12121, %v12125
        %vm12127 = vweird.f32 %v12069
        %vm12128 = vweird.f32 %v12121
        %vm12129 = vmor %vm12127, %vm12128
        %v12130 = vsel %vm12129, %v12121, %v12126
        %v12131 = vrsqrt.pop %v12070
        %v12132 = vmul.f32 %v12131, %v12070
        %v12133 = vmul.f32 %v12132, %v12131
        %v12134 = vmul.f32 0.5, %v12133
        %v12135 = vsub.f32 1.5, %v12134
        %v12136 = vmul.f32 %v12131, %v12135
        %vm12137 = vweird.f32 %v12070
        %vm12138 = vweird.f32 %v12131
        %vm12139 = vmor %vm12137, %vm12138
        %v12140 = vsel %vm12139, %v12131, %v12136
        %v12141 = vrsqrt.pop %v12071
        %v12142 = vmul.f32 %v12141, %v12071
        %v12143 = vmul.f32 %v12142, %v12141
        %v12144 = vmul.f32 0.5, %v12143
        %v12145 = vsub.f32 1.5, %v12144
        %v12146 = vmul.f32 %v12141, %v12145
        %vm12147 = vweird.f32 %v12071
        %vm12148 = vweird.f32 %v12141
        %vm12149 = vmor %vm12147, %vm12148
        %v12150 = vsel %vm12149, %v12141, %v12146
        %v12151 = vrsqrt.pop %v12072
        %v12152 = vmul.f32 %v12151, %v12072
        %v12153 = vmul.f32 %v12152, %v12151
        %v12154 = vmul.f32 0.5, %v12153
        %v12155 = vsub.f32 1.5, %v12154
        %v12156 = vmul.f32 %v12151, %v12155
        %vm12157 = vweird.f32 %v12072
        %vm12158 = vweird.f32 %v12151
        %vm12159 = vmor %vm12157, %vm12158
        %v12160 = vsel %vm12159, %v12151, %v12156
        %v12161 = vrsqrt.pop %v12073
        %v12162 = vmul.f32 %v12161, %v12073
        %v12163 = vmul.f32 %v12162, %v12161
        %v12164 = vmul.f32 0.5, %v12163
        %v12165 = vsub.f32 1.5, %v12164
        %v12166 = vmul.f32 %v12161, %v12165
        %vm12167 = vweird.f32 %v12073
        %vm12168 = vweird.f32 %v12161
        %vm12169 = vmor %vm12167, %vm12168
        %v12170 = vsel %vm12169, %v12161, %v12166
        %v12171 = vrsqrt.pop %v12074
        %v12172 = vmul.f32 %v12171, %v12074
        %v12173 = vmul.f32 %v12172, %v12171
        %v12174 = vmul.f32 0.5, %v12173
        %v12175 = vsub.f32 1.5, %v12174
        %v12176 = vmul.f32 %v12171, %v12175
        %vm12177 = vweird.f32 %v12074
        %vm12178 = vweird.f32 %v12171
        %vm12179 = vmor %vm12177, %vm12178
        %v12180 = vsel %vm12179, %v12171, %v12176
        %v12181 = vrsqrt.pop %v12075
        %v12182 = vmul.f32 %v12181, %v12075
        %v12183 = vmul.f32 %v12182, %v12181
        %v12184 = vmul.f32 0.5, %v12183
        %v12185 = vsub.f32 1.5, %v12184
        %v12186 = vmul.f32 %v12181, %v12185
        %vm12187 = vweird.f32 %v12075
        %vm12188 = vweird.f32 %v12181
        %vm12189 = vmor %vm12187, %vm12188
        %v12190 = vsel %vm12189, %v12181, %v12186
        %v12191 = vrsqrt.pop %v12076
        %v12192 = vmul.f32 %v12191, %v12076
        %v12193 = vmul.f32 %v12192, %v12191
        %v12194 = vmul.f32 0.5, %v12193
        %v12195 = vsub.f32 1.5, %v12194
        %v12196 = vmul.f32 %v12191, %v12195
        %vm12197 = vweird.f32 %v12076
        %vm12198 = vweird.f32 %v12191
        %vm12199 = vmor %vm12197, %vm12198
        %v12200 = vsel %vm12199, %v12191, %v12196
        %v12201 = vrsqrt.pop %v12077
        %v12202 = vmul.f32 %v12201, %v12077
        %v12203 = vmul.f32 %v12202, %v12201
        %v12204 = vmul.f32 0.5, %v12203
        %v12205 = vsub.f32 1.5, %v12204
        %v12206 = vmul.f32 %v12201, %v12205
        %vm12207 = vweird.f32 %v12077
        %vm12208 = vweird.f32 %v12201
        %vm12209 = vmor %vm12207, %vm12208
        %v12210 = vsel %vm12209, %v12201, %v12206
        %v12211 = vrsqrt.pop %v12078
        %v12212 = vmul.f32 %v12211, %v12078
        %v12213 = vmul.f32 %v12212, %v12211
        %v12214 = vmul.f32 0.5, %v12213
        %v12215 = vsub.f32 1.5, %v12214
        %v12216 = vmul.f32 %v12211, %v12215
        %vm12217 = vweird.f32 %v12078
        %vm12218 = vweird.f32 %v12211
        %vm12219 = vmor %vm12217, %vm12218
        %v12220 = vsel %vm12219, %v12211, %v12216
        %v12221 = vrsqrt.pop %v12079
        %v12222 = vmul.f32 %v12221, %v12079
        %v12223 = vmul.f32 %v12222, %v12221
        %v12224 = vmul.f32 0.5, %v12223
        %v12225 = vsub.f32 1.5, %v12224
        %v12226 = vmul.f32 %v12221, %v12225
        %vm12227 = vweird.f32 %v12079
        %vm12228 = vweird.f32 %v12221
        %vm12229 = vmor %vm12227, %vm12228
        %v12230 = vsel %vm12229, %v12221, %v12226
        %v12231 = vrsqrt.pop %v12080
        %v12232 = vmul.f32 %v12231, %v12080
        %v12233 = vmul.f32 %v12232, %v12231
        %v12234 = vmul.f32 0.5, %v12233
        %v12235 = vsub.f32 1.5, %v12234
        %v12236 = vmul.f32 %v12231, %v12235
        %vm12237 = vweird.f32 %v12080
        %vm12238 = vweird.f32 %v12231
        %vm12239 = vmor %vm12237, %vm12238
        %v12240 = vsel %vm12239, %v12231, %v12236
        %v12241 = vmul.f32 %v11937, %v12090
        %v12242 = vmul.f32 %v11938, %v12090
        %v12243 = vmul.f32 %v11939, %v12100
        %v12244 = vmul.f32 %v11940, %v12100
        %v12245 = vmul.f32 %v11941, %v12110
        %v12246 = vmul.f32 %v11942, %v12110
        %v12247 = vmul.f32 %v11943, %v12120
        %v12248 = vmul.f32 %v11944, %v12120
        %v12249 = vmul.f32 %v11945, %v12130
        %v12250 = vmul.f32 %v11946, %v12130
        %v12251 = vmul.f32 %v11947, %v12140
        %v12252 = vmul.f32 %v11948, %v12140
        %v12253 = vmul.f32 %v11949, %v12150
        %v12254 = vmul.f32 %v11950, %v12150
        %v12255 = vmul.f32 %v11951, %v12160
        %v12256 = vmul.f32 %v11952, %v12160
        %v12257 = vmul.f32 %v11953, %v12170
        %v12258 = vmul.f32 %v11954, %v12170
        %v12259 = vmul.f32 %v11955, %v12180
        %v12260 = vmul.f32 %v11956, %v12180
        %v12261 = vmul.f32 %v11957, %v12190
        %v12262 = vmul.f32 %v11958, %v12190
        %v12263 = vmul.f32 %v11959, %v12200
        %v12264 = vmul.f32 %v11960, %v12200
        %v12265 = vmul.f32 %v11961, %v12210
        %v12266 = vmul.f32 %v11962, %v12210
        %v12267 = vmul.f32 %v11963, %v12220
        %v12268 = vmul.f32 %v11964, %v12220
        %v12269 = vmul.f32 %v11965, %v12230
        %v12270 = vmul.f32 %v11966, %v12230
        %v12271 = vmul.f32 %v11967, %v12240
        %v12272 = vmul.f32 %v11968, %v12240
        %v12273 = vld [vmem:[#allocation16] sm:$0x3]
        %v12275 = vperm.slane %v12273, 0
        %v12276 = vperm.slane %v12273, 1
        %v12279 = vmul.f32 %v12241, %v12275
        %v12280 = vmul.f32 %v12242, %v12276
        %v12281 = vmul.f32 %v12243, %v12275
        %v12282 = vmul.f32 %v12244, %v12276
        %v12283 = vmul.f32 %v12245, %v12275
        %v12284 = vmul.f32 %v12246, %v12276
        %v12285 = vmul.f32 %v12247, %v12275
        %v12286 = vmul.f32 %v12248, %v12276
        %v12287 = vmul.f32 %v12249, %v12275
        %v12288 = vmul.f32 %v12250, %v12276
        %v12289 = vmul.f32 %v12251, %v12275
        %v12290 = vmul.f32 %v12252, %v12276
        %v12291 = vmul.f32 %v12253, %v12275
        %v12292 = vmul.f32 %v12254, %v12276
        %v12293 = vmul.f32 %v12255, %v12275
        %v12294 = vmul.f32 %v12256, %v12276
        %v12295 = vmul.f32 %v12257, %v12275
        %v12296 = vmul.f32 %v12258, %v12276
        %v12297 = vmul.f32 %v12259, %v12275
        %v12298 = vmul.f32 %v12260, %v12276
        %v12299 = vmul.f32 %v12261, %v12275
        %v12300 = vmul.f32 %v12262, %v12276
        %v12301 = vmul.f32 %v12263, %v12275
        %v12302 = vmul.f32 %v12264, %v12276
        %v12303 = vmul.f32 %v12265, %v12275
        %v12304 = vmul.f32 %v12266, %v12276
        %v12305 = vmul.f32 %v12267, %v12275
        %v12306 = vmul.f32 %v12268, %v12276
        %v12307 = vmul.f32 %v12269, %v12275
        %v12308 = vmul.f32 %v12270, %v12276
        %v12309 = vmul.f32 %v12271, %v12275
        %v12310 = vmul.f32 %v12272, %v12276
        %v12311 = vld [vmem:[%s11] sm:$0x3]
        %v12313 = vperm.slane %v12311, 0
        %v12314 = vperm.slane %v12311, 1
        %v12317 = vadd.f32 %v12279, %v12313
        %v12318 = vadd.f32 %v12280, %v12314
        %v12319 = vadd.f32 %v12281, %v12313
        %v12320 = vadd.f32 %v12282, %v12314
        %v12321 = vadd.f32 %v12283, %v12313
        %v12322 = vadd.f32 %v12284, %v12314
        %v12323 = vadd.f32 %v12285, %v12313
        %v12324 = vadd.f32 %v12286, %v12314
        %v12325 = vadd.f32 %v12287, %v12313
        %v12326 = vadd.f32 %v12288, %v12314
        %v12327 = vadd.f32 %v12289, %v12313
        %v12328 = vadd.f32 %v12290, %v12314
        %v12329 = vadd.f32 %v12291, %v12313
        %v12330 = vadd.f32 %v12292, %v12314
        %v12331 = vadd.f32 %v12293, %v12313
        %v12332 = vadd.f32 %v12294, %v12314
        %v12333 = vadd.f32 %v12295, %v12313
        %v12334 = vadd.f32 %v12296, %v12314
        %v12335 = vadd.f32 %v12297, %v12313
        %v12336 = vadd.f32 %v12298, %v12314
        %v12337 = vadd.f32 %v12299, %v12313
        %v12338 = vadd.f32 %v12300, %v12314
        %v12339 = vadd.f32 %v12301, %v12313
        %v12340 = vadd.f32 %v12302, %v12314
        %v12341 = vadd.f32 %v12303, %v12313
        %v12342 = vadd.f32 %v12304, %v12314
        %v12343 = vadd.f32 %v12305, %v12313
        %v12344 = vadd.f32 %v12306, %v12314
        %v12345 = vadd.f32 %v12307, %v12313
        %v12346 = vadd.f32 %v12308, %v12314
        %v12347 = vadd.f32 %v12309, %v12313
        %v12348 = vadd.f32 %v12310, %v12314
        %12349 = vst [vmem:[%s674] sm:$0xff] %v12317
        %12350 = vst [vmem:[%s674 + $0x8] sm:$0xff] %v12318
        %12351 = vst [vmem:[%s674 + $0x10] sm:$0xff] %v12319
        %12352 = vst [vmem:[%s674 + $0x18] sm:$0xff] %v12320
        %12353 = vst [vmem:[%s674 + $0x20] sm:$0xff] %v12321
        %12354 = vst [vmem:[%s674 + $0x28] sm:$0xff] %v12322
        %12355 = vst [vmem:[%s674 + $0x30] sm:$0xff] %v12323
        %12356 = vst [vmem:[%s674 + $0x38] sm:$0xff] %v12324
        %12357 = vst [vmem:[%s674 + $0x40] sm:$0xff] %v12325
        %12358 = vst [vmem:[%s674 + $0x48] sm:$0xff] %v12326
        %12359 = vst [vmem:[%s674 + $0x50] sm:$0xff] %v12327
        %12360 = vst [vmem:[%s674 + $0x58] sm:$0xff] %v12328
        %12361 = vst [vmem:[%s674 + $0x60] sm:$0xff] %v12329
        %12362 = vst [vmem:[%s674 + $0x68] sm:$0xff] %v12330
        %12363 = vst [vmem:[%s674 + $0x70] sm:$0xff] %v12331
        %12364 = vst [vmem:[%s674 + $0x78] sm:$0xff] %v12332
        %12365 = vst [vmem:[%s674 + $0x80] sm:$0xff] %v12333
        %12366 = vst [vmem:[%s674 + $0x88] sm:$0xff] %v12334
        %12367 = vst [vmem:[%s674 + $0x90] sm:$0xff] %v12335
        %12368 = vst [vmem:[%s674 + $0x98] sm:$0xff] %v12336
        %12369 = vst [vmem:[%s674 + $0xa0] sm:$0xff] %v12337
        %12370 = vst [vmem:[%s674 + $0xa8] sm:$0xff] %v12338
        %12371 = vst [vmem:[%s674 + $0xb0] sm:$0xff] %v12339
        %12372 = vst [vmem:[%s674 + $0xb8] sm:$0xff] %v12340
        %12373 = vst [vmem:[%s674 + $0xc0] sm:$0xff] %v12341
        %12374 = vst [vmem:[%s674 + $0xc8] sm:$0xff] %v12342
        %12375 = vst [vmem:[%s674 + $0xd0] sm:$0xff] %v12343
        %12376 = vst [vmem:[%s674 + $0xd8] sm:$0xff] %v12344
        %12377 = vst [vmem:[%s674 + $0xe0] sm:$0xff] %v12345
        %12378 = vst [vmem:[%s674 + $0xe8] sm:$0xff] %v12346
        %12379 = vst [vmem:[%s674 + $0xf0] sm:$0xff] %v12347
        %12380 = vst [vmem:[%s674 + $0xf8] sm:$0xff] %v12348
        %s12381 = sand.u32 %s340, 1
        %s12382 = scalar_lea.sflag [#allocation6], %s12381
        %s12383 = sand.u32 %s340, 1
        %s12384 = smul.addr %s12383, 256
        %s12385 = scalar_lea.vmem [#allocation18], %s12384
        %s12386 = sand.u32 %s368, 1
        %s12387 = scalar_lea.sflag [#allocation20], %s12386
        %s12388 = sand.u32 %s368, 1
        %s12389 = smul.addr %s12388, 256
        %s12390 = scalar_lea.vmem [#allocation19], %s12389
        // Predicated region
        $region105: #{tpu_custom_call.1} parent=67 // pred_check
          %p12391 = pneg %p350
        $region106: #{tpu_custom_call.1} parent=67 // pred_check_branch
          %12393 = sbr.rel (%p12391) target = $region108
        $region107: #{tpu_custom_call.1} parent=67 // pred_region
          %s12394 = smul.u32 16, %s47
          %12396 = vsyncadd %s12382, 0
          %s12397 = smul.addr %s12394, 2
          %s12398 = smul.addr %s46, 64
          %s12399 = sadd.s32 %s12397, %s12398
          %s12400 = smul.addr %s12399, 8
          %s12401 = scalar_lea.hbm %s12, %s12400
          %s12402 = sshll.u32 %s12385, 4
          %s12403 = int_to_ptr.vmem [resolvable:$true] %s12402
          %s12404 = sshll.u32 %s12401, 4
          %s12405 = int_to_ptr.hbm [resolvable:$true] %s12404
          %12410 = dma.vmem_to_hbm [thread:$0]  %s12403, 4096, %s12405, %s12382, 256, 256, 16
        $region108: #{tpu_custom_call.1} parent=67 // pred_fallthru
          _
        // Predicated region
        $region109: #{tpu_custom_call.1} parent=67 // pred_check
          %p12411 = pneg %p378
        $region110: #{tpu_custom_call.1} parent=67 // pred_check_branch
          %12413 = sbr.rel (%p12411) target = $region112
        $region111: #{tpu_custom_call.1} parent=67 // pred_region
          #allocation22 [shape = 'u32[6]{0}', space=smem, size = 0x18, scoped, tag = 'DMA stride descriptor']
          %s12414 = smul.u32 16, %s47
          %12416 = vsyncadd %s12387, 0
          %s12417 = smul.addr %s12414, 2
          %s12418 = smul.addr %s46, 128
          %s12419 = sadd.s32 %s12417, %s12418
          %s12420 = smul.addr %s12419, 4
          %s12421 = scalar_lea.hbm %s13, %s12420
          %s12423 = sshll.u32 1, 14
          %s12424 = sxor.u32 4294967295, %s12423
          %s12427 = sshll.u32 7, 18
          %s12428 = sxor.u32 4294967295, %s12427
          %s12429 = sand.u32 0, %s12428
          %s12431 = sor.u32 %s12429, 0
          %s12432 = sshll.u32 %s12390, 4
          %s12433 = int_to_ptr.vmem [resolvable:$true] %s12432
          %s12434 = sshll.u32 %s12421, 4
          %s12435 = int_to_ptr.hbm [resolvable:$true] %s12434
          %12441 = sst [smem:[#allocation22]] 2048
          %s12442 = scalar_lea.smem [#allocation22], 1
          %12443 = sst [smem:[%s12442]] 4096
          %s12444 = scalar_lea.smem [#allocation22], 2
          %12445 = sst [smem:[%s12444]] 16
          %s12446 = scalar_lea.smem [#allocation22], 3
          %12447 = sst [smem:[%s12446]] 128
          %s12448 = scalar_lea.smem [#allocation22], 4
          %12449 = sst [smem:[%s12448]] 128
          %s12450 = scalar_lea.smem [#allocation22], 5
          %12451 = sst [smem:[%s12450]] 8
          %12453 = dma.general %s12433, 4096, %s12435, %s12387, [#allocation21], [#allocation22], %s12431, 0
        $region112: #{tpu_custom_call.1} parent=67 // pred_fallthru
          _
      $region68: #{tpu_custom_call.1} parent=5 // pred_fallthru
        _
      %p12454 = scmp.le.s32.totalorder 2, %s37
      // Predicated region
      $region113: #{tpu_custom_call.1} parent=5 // pred_check
        %p12455 = pneg %p12454
      $region114: #{tpu_custom_call.1} parent=5 // pred_check_branch
        %12457 = sbr.rel (%p12455) target = $region116
      $region115: #{tpu_custom_call.1} parent=5 // pred_region
        %s12458 = ssub.s32 %s37, 2
        // Predicated region
        $region117: #{tpu_custom_call.1} parent=115 // pred_check
          %p12459 = pneg %p356
        $region118: #{tpu_custom_call.1} parent=115 // pred_check_branch
          %12461 = sbr.rel (%p12459) target = $region120
        $region119: #{tpu_custom_call.1} parent=115 // pred_region
          %s12462 = sand.u32 %s341, 1
          %s12463 = scalar_lea.sflag [#allocation6], %s12462
          %s12464 = sand.u32 %s341, 1
          %s12465 = smul.addr %s12464, 256
          %s12466 = scalar_lea.vmem [#allocation18], %s12465
          %12468 = dma.done %s12463, 4096
        $region120: #{tpu_custom_call.1} parent=115 // pred_fallthru
          _
        // Predicated region
        $region121: #{tpu_custom_call.1} parent=115 // pred_check
          %p12469 = pneg %p384
        $region122: #{tpu_custom_call.1} parent=115 // pred_check_branch
          %12471 = sbr.rel (%p12469) target = $region124
        $region123: #{tpu_custom_call.1} parent=115 // pred_region
          %s12472 = sand.u32 %s369, 1
          %s12473 = scalar_lea.sflag [#allocation20], %s12472
          %s12474 = sand.u32 %s369, 1
          %s12475 = smul.addr %s12474, 256
          %s12476 = scalar_lea.vmem [#allocation19], %s12475
          %12478 = dma.done %s12473, 4096
        $region124: #{tpu_custom_call.1} parent=115 // pred_fallthru
          _
      $region116: #{tpu_custom_call.1} parent=5 // pred_fallthru
        _
    $region6: #{tpu_custom_call.1} parent=1 // loop_footer
      %s41 = sadd.s32 1, %s37
    $region7: #{tpu_custom_call.1} parent=1 // loop_footer_branch
      %36 = sbr.rel target = $region3
    $region8: #{tpu_custom_call.1} parent=1 // loop_exit
      _
    %12479 = vsyncpa [#allocation5], 1
    %s12480 = scalar_lea.sflag [#allocation5], 1
    %12481 = vsyncpa %s12480, 1
    %12482 = vsyncpa [#allocation8], 1
    %s12483 = scalar_lea.sflag [#allocation8], 1
    %12484 = vsyncpa %s12483, 1
    %12485 = vsyncpa [#allocation11], 1
    %s12486 = scalar_lea.sflag [#allocation11], 1
    %12487 = vsyncpa %s12486, 1
    %12488 = vsyncpa [#allocation14], 1
    %12489 = vsyncpa [#allocation17], 1
    %12490 = vsyncpa [#allocation6], 1
    %s12491 = scalar_lea.sflag [#allocation6], 1
    %12492 = vsyncpa %s12491, 1
    %12493 = vsyncpa [#allocation20], 1
    %s12494 = scalar_lea.sflag [#allocation20], 1
    %12495 = vsyncpa %s12494, 1

</llo_original>
